<compile_context>
chip_gen: v6e
topology: v6e:2x2x1
jax: 0.10.0
libtpu: 0.0.40
codegen_flags: <defaults>
</compile_context>

<pallas_src>
import functools

import jax
import jax.numpy as jnp
from jax.experimental import pallas as pl
from jax.experimental.pallas import tpu as pltpu


def ggnn_kernel(h0_ref, ann_ref, adj_ref, abias_ref,
                w_slab_ref, w_gio_ref, w_gh_ref, bias_ref,
                w1h_ref, w1a_ref, w2_ref, out_ref,
                *, n_steps, mxu_dtype):
    M, D = h0_ref.shape            # M = Bt * N
    n_slabs = w_slab_ref.shape[0]  # = 2 * n_edge_types
    cdt = mxu_dtype

    def mm(x, w, out_dtype=jnp.float32):
        return jnp.dot(x.astype(cdt), w, preferred_element_type=out_dtype)

    # ---- step-invariant loads (the n_steps loop below is a Python unroll) ----
    h = h0_ref[...]                # [M, D]        f32 hidden state
    adj = adj_ref[...]             # [M, 2*E*M]    [block-diag A_in | A_out]
    a_bias = abias_ref[...]        # [M, 2D]       precomputed bias contribution
    w_slab = w_slab_ref[...]       # [2E, D, 2D]   padded per-edge in/out weights
    w_gio = w_gio_ref[...]         # [3, 2D, D]    z|r|t weights for [a_in|a_out]
    w_gh = w_gh_ref[...]           # [3, D, D]     z|r|t weights for h / r*h
    biases = bias_ref[...]         # [4, D]        bz, br, bt, b1
    bz, br, bt, b1 = [biases[i:i + 1, :] for i in range(4)]

    for _ in range(n_steps):
        h_c = h.astype(cdt)        # cast once per step, reused by all matmuls
        # Edge-major RHS slab [2E*M, 2D]: sublane-stacked per-edge linears.
        # In-blocks write lanes [:D], out-blocks lanes [D:] (zeros baked into
        # w_slab), so the single matmul below yields [a_in | a_out] directly.
        s_cat = jnp.concatenate(
            [mm(h_c, w_slab[j], cdt) for j in range(n_slabs)], axis=0)
        # ONE lane-dense K = 2*E*M adjacency contraction for both directions.
        a_io = jnp.dot(adj, s_cat, preferred_element_type=jnp.float32) + a_bias
        a_c = a_io.astype(cdt)
        # GRU-style gating; all elementwise / transcendental math stays f32.
        z = jax.nn.sigmoid(mm(a_c, w_gio[0]) + mm(h_c, w_gh[0]) + bz)
        r = jax.nn.sigmoid(mm(a_c, w_gio[1]) + mm(h_c, w_gh[1]) + br)
        h_hat = jnp.tanh(mm(a_c, w_gio[2]) + mm(r * h, w_gh[2]) + bt)
        h = (1.0 - z) * h + z * h_hat

    # Output head: Linear(D+A -> D) (split weights) -> tanh -> Linear(D -> 1)
    # as a lane reduce; written as a lane-dense (1, 1, M) row (b2 added in the
    # wrapper).
    ann = ann_ref[...]
    o = jnp.tanh(mm(h, w1h_ref[...]) + mm(ann, w1a_ref[...]) + b1)    # [M, D]
    out_ref[...] = jnp.sum(o * w2_ref[...], axis=-1).reshape(1, 1, M)


def ggnn_forward(h0, ann, adj, params, *, n_steps, n_edge_types,
                 batch_tile=None, matmul_dtype=jnp.float32):
    """Pallas GGNN forward. Returns [B, N] (== torch `output.sum(2)`)."""
    B, N, D = h0.shape
    A = ann.shape[-1]
    E = n_edge_types
    assert adj.shape == (B, N, 2 * N * E)

    # Single-TC chips (v5e / v6e): Bt = B -> grid of 1.  On v7x, batch_tile =
    # B // 2 gives a 2-tile "parallel" grid for the two TensorCores (verify in
    # the trace that the scheduler actually shards it).
    Bt = B if batch_tile is None else min(batch_tile, B)
    assert B % Bt == 0
    G = B // Bt
    M = Bt * N
    assert M % 8 == 0, "Bt * N must be sublane (8) aligned"

    cdt = matmul_dtype            # MXU operand dtype; bf16 OK on v5e/v6e/v7x
    f32 = jnp.float32

    # ------------- wrapper-side (XLA) layout / weight prep, done once ---------
    # Block-diagonal-over-batch adjacency, both directions lane-concatenated:
    #   adj_bd[g*M + b*N + n, k*M + c*N + m] = (b == c) * adj[g*Bt+b, n, k*N+m]
    # k in [0, 2E): k < E -> incoming edge type k, k >= E -> outgoing k - E.
    # (Block-diag costs Bt x the packed adjacency bytes; at production N tile
    #  the contraction dim in the grid instead and re-budget v7x's 64 MiB VMEM.)
    adj4 = adj.reshape(G, Bt, N, 2 * E, N)
    eye = jnp.eye(Bt, dtype=adj.dtype)
    adj_bd = jnp.einsum('bc,gbnkm->gbnkcm', eye, adj4)
    adj_bd = adj_bd.reshape(G * M, 2 * E * M).astype(cdt)

    # Per-edge in/out weights, zero-padded so in-blocks produce lanes [:D] and
    # out-blocks lanes [D:] of the RHS slab.
    zw = jnp.zeros((E, D, D), f32)
    w_slab = jnp.concatenate(
        [jnp.concatenate([params['in_w'], zw], axis=2),
         jnp.concatenate([zw, params['out_w']], axis=2)], axis=0).astype(cdt)

    # Step-invariant bias part of the adjacency contraction:
    #   a_bias[row] = sum_k rowsum_k(adj[row]) * b_pad[k]
    zb = jnp.zeros((E, D), f32)
    b_pad = jnp.concatenate(
        [jnp.concatenate([params['in_b'].reshape(E, D), zb], axis=1),
         jnp.concatenate([zb, params['out_b'].reshape(E, D)], axis=1)],
        axis=0)                                                   # [2E, 2D]
    blocksum = adj.astype(f32).reshape(B * N, 2 * E, N).sum(axis=-1)
    a_bias = blocksum @ b_pad                                     # [B*N, 2D]

    # Gate weights: rows [:2D] act on [a_in|a_out], rows [2D:] act on h / r*h.
    wz, wr, wt = params['wz'], params['wr'], params['wt']
    w_gio = jnp.stack([wz[:2 * D], wr[:2 * D], wt[:2 * D]]).astype(cdt)
    w_gh = jnp.stack([wz[2 * D:], wr[2 * D:], wt[2 * D:]]).astype(cdt)
    biases = jnp.concatenate(
        [params['bz'], params['br'], params['bt'], params['b1']],
        axis=0).astype(f32)                                       # [4, D]

    # Output head: split w1 into h / annotation parts; w2 as a lane-dense row.
    w1_h = params['w1'][:D].astype(cdt)
    w1_a = params['w1'][D:].astype(cdt)
    w2_row = params['w2'].reshape(1, D).astype(f32)

    h0_flat = h0.reshape(B * N, D).astype(f32)
    ann_flat = ann.reshape(B * N, A).astype(f32)

    kernel = functools.partial(ggnn_kernel, n_steps=n_steps, mxu_dtype=cdt)

    def full(shape):
        return pl.BlockSpec(shape, lambda g: (0,) * len(shape))

    in_specs = [
        pl.BlockSpec((M, D), lambda g: (g, 0)),              # h0_flat
        pl.BlockSpec((M, A), lambda g: (g, 0)),              # ann_flat
        pl.BlockSpec((M, 2 * E * M), lambda g: (g, 0)),      # adj_bd (lane-dense)
        pl.BlockSpec((M, 2 * D), lambda g: (g, 0)),          # a_bias
        full((2 * E, D, 2 * D)),                             # w_slab
        full((3, 2 * D, D)),                                 # w_gio
        full((3, D, D)),                                     # w_gh
        full((4, D)),                                        # biases
        full((D, D)),                                        # w1_h
        full((A, D)),                                        # w1_a
        full((1, D)),                                        # w2_row
    ]

    out = pl.pallas_call(
        kernel,
        out_shape=jax.ShapeDtypeStruct((G, 1, M), jnp.float32),
        grid=(G,),
        in_specs=in_specs,
        out_specs=pl.BlockSpec((1, 1, M), lambda g: (g, 0, 0)),
        compiler_params=pltpu.CompilerParams(
            dimension_semantics=("parallel",)),
    )(h0_flat, ann_flat, adj_bd, a_bias, w_slab, w_gio, w_gh, biases,
      w1_h, w1_a, w2_row)

    # Lane-dense (G, 1, M) kernel output -> (B, N); scalar b2 added here.
    return out.reshape(B, N) + params['b2'][0, 0]


def ggnn_reference(h0, ann, adj, params, *, n_steps, n_edge_types):
    """Pure-JAX reference mirroring the PyTorch forward exactly (unfused)."""
    B, N, D = h0.shape
    E = n_edge_types
    h = h0
    A_in = adj[:, :, : N * E]
    A_out = adj[:, :, N * E:]
    for _ in range(n_steps):
        in_states = jnp.concatenate(
            [h @ params["in_w"][e] + params["in_b"][e] for e in range(E)], axis=1)
        out_states = jnp.concatenate(
            [h @ params["out_w"][e] + params["out_b"][e] for e in range(E)], axis=1)
        a_in = jnp.einsum("bnm,bmd->bnd", A_in, in_states)
        a_out = jnp.einsum("bnm,bmd->bnd", A_out, out_states)
        a = jnp.concatenate([a_in, a_out, h], axis=2)
        z = jax.nn.sigmoid(a @ params["wz"] + params["bz"])
        r = jax.nn.sigmoid(a @ params["wr"] + params["br"])
        a2 = jnp.concatenate([a_in, a_out, r * h], axis=2)
        h_hat = jnp.tanh(a2 @ params["wt"] + params["bt"])
        h = (1.0 - z) * h + z * h_hat
    o = jnp.concatenate([h, ann], axis=2)
    o = jnp.tanh(o @ params["w1"] + params["b1"])
    o = o @ params["w2"] + params["b2"]
    return jnp.sum(o, axis=2)


def init_params(key, D, A, E, bias_scale=0.0):
    """nn.Linear init from the module: weight ~ N(0, 0.02), bias = 0.
    bias_scale > 0 gives nonzero test biases to exercise the bias paths."""
    ks = jax.random.split(key, 14)
    nrm = lambda k, shape, s: s * jax.random.normal(k, shape, jnp.float32)
    return dict(
        in_w=nrm(ks[0], (E, D, D), 0.02),  in_b=nrm(ks[7], (E, 1, D), bias_scale),
        out_w=nrm(ks[1], (E, D, D), 0.02), out_b=nrm(ks[8], (E, 1, D), bias_scale),
        wr=nrm(ks[2], (3 * D, D), 0.02),   br=nrm(ks[9], (1, D), bias_scale),
        wz=nrm(ks[3], (3 * D, D), 0.02),   bz=nrm(ks[10], (1, D), bias_scale),
        wt=nrm(ks[4], (3 * D, D), 0.02),   bt=nrm(ks[11], (1, D), bias_scale),
        w1=nrm(ks[5], (D + A, D), 0.02),   b1=nrm(ks[12], (1, D), bias_scale),
        w2=nrm(ks[6], (D, 1), 0.02),       b2=nrm(ks[13], (1, 1), bias_scale),
    )


if __name__ == "__main__":
    B, N, D, A, E, STEPS = 16, 8, 32, 8, 2, 3

    key = jax.random.PRNGKey(0)
    k_ann, k_adj, k_p0, k_p1 = jax.random.split(key, 4)

    annotation = jax.random.normal(k_ann, (B, N, A), jnp.float32)
    # Typical GGNN init: annotation padded with zeros up to state_dim.
    init_hidden_state = jnp.concatenate(
        [annotation, jnp.zeros((B, N, D - A), jnp.float32)], axis=2)
    adj_matrix = jax.random.bernoulli(
        k_adj, 0.3, (B, N, 2 * N * E)).astype(jnp.float32)

    # Spec-faithful init (bias = 0) plus a nonzero-bias variant that exercises
    # the precomputed a_bias / gate-bias paths.
    params0 = init_params(k_p0, D, A, E, bias_scale=0.0)
    params1 = init_params(k_p1, D, A, E, bias_scale=0.05)

    ref0 = ggnn_reference(init_hidden_state, annotation, adj_matrix, params0,
                          n_steps=STEPS, n_edge_types=E)
    ref1 = ggnn_reference(init_hidden_state, annotation, adj_matrix, params1,
                          n_steps=STEPS, n_edge_types=E)

    # f32 MXU path, default Bt = B (grid of 1; best for single-TC v5e / v6e).
    for ref, params in ((ref0, params0), (ref1, params1)):
        out = jax.block_until_ready(
            ggnn_forward(init_hidden_state, annotation, adj_matrix, params,
                         n_steps=STEPS, n_edge_types=E))
        assert out.shape == (B, N), out.shape
        assert jnp.allclose(out, ref, atol=1e-4, rtol=1e-4), \
            float(jnp.max(jnp.abs(out - ref)))

    # Two-tile "parallel" grid (v7x: one tile per TensorCore).
    out2 = jax.block_until_ready(
        ggnn_forward(init_hidden_state, annotation, adj_matrix, params1,
                     n_steps=STEPS, n_edge_types=E, batch_tile=B // 2))
    assert jnp.allclose(out2, ref1, atol=1e-4, rtol=1e-4), \
        float(jnp.max(jnp.abs(out2 - ref1)))

    # bf16 MXU operands (valid on v5e as well as v6e/v7x; adjacency is {0,1} so
    # exact in bf16 — the loosened tolerance covers per-step rounding of h@W).
    out_bf16 = jax.block_until_ready(
        ggnn_forward(init_hidden_state, annotation, adj_matrix, params1,
                     n_steps=STEPS, n_edge_types=E,
                     matmul_dtype=jnp.bfloat16))
    assert jnp.allclose(out_bf16, ref1, atol=3e-3, rtol=5e-2), \
        float(jnp.max(jnp.abs(out_bf16 - ref1)))

    print("KERNEL_OK")
</pallas_src>

<mosaic_0001>
module attributes {stable_mosaic.version = 11 : i64} {
  func.func @ggnn_kernel(%arg0: i32, %arg1: memref<128x32xf32, #tpu.memory_space<vmem>>, %arg2: memref<128x8xf32, #tpu.memory_space<vmem>>, %arg3: memref<128x512xf32, #tpu.memory_space<vmem>>, %arg4: memref<128x64xf32, #tpu.memory_space<vmem>>, %arg5: memref<4x32x64xf32, #tpu.memory_space<vmem>>, %arg6: memref<3x64x32xf32, #tpu.memory_space<vmem>>, %arg7: memref<3x32x32xf32, #tpu.memory_space<vmem>>, %arg8: memref<4x32xf32, #tpu.memory_space<vmem>>, %arg9: memref<32x32xf32, #tpu.memory_space<vmem>>, %arg10: memref<8x32xf32, #tpu.memory_space<vmem>>, %arg11: memref<1x32xf32, #tpu.memory_space<vmem>>, %arg12: memref<1x1x128xf32, #tpu.memory_space<vmem>>) attributes {dimension_semantics = [#tpu.dimension_semantics<parallel>], iteration_bounds = array<i64: 1>, scalar_prefetch = 0 : i64, scratch_operands = 0 : i64, tpu.core_type = #tpu.core_type<tc>, window_params = [{transform_indices = @transform_0, window_bounds = array<i64: 128, 32>}, {transform_indices = @transform_1, window_bounds = array<i64: 128, 8>}, {transform_indices = @transform_2, window_bounds = array<i64: 128, 512>}, {transform_indices = @transform_3, window_bounds = array<i64: 128, 64>}, {pipeline_mode = #tpu.pipeline_mode<synchronous>, transform_indices = @transform_4, window_bounds = array<i64: 4, 32, 64>}, {pipeline_mode = #tpu.pipeline_mode<synchronous>, transform_indices = @transform_5, window_bounds = array<i64: 3, 64, 32>}, {pipeline_mode = #tpu.pipeline_mode<synchronous>, transform_indices = @transform_6, window_bounds = array<i64: 3, 32, 32>}, {pipeline_mode = #tpu.pipeline_mode<synchronous>, transform_indices = @transform_7, window_bounds = array<i64: 4, 32>}, {pipeline_mode = #tpu.pipeline_mode<synchronous>, transform_indices = @transform_8, window_bounds = array<i64: 32, 32>}, {pipeline_mode = #tpu.pipeline_mode<synchronous>, transform_indices = @transform_9, window_bounds = array<i64: 8, 32>}, {pipeline_mode = #tpu.pipeline_mode<synchronous>, transform_indices = @transform_10, window_bounds = array<i64: 1, 32>}, {transform_indices = @transform_11, window_bounds = array<i64: 1, 1, 128>}]} {
    %c0 = arith.constant 0 : index
    %c0_0 = arith.constant 0 : index
    %0 = vector.load %arg1[%c0, %c0_0] : memref<128x32xf32, #tpu.memory_space<vmem>>, vector<128x32xf32>
    %c0_1 = arith.constant 0 : index
    %c0_2 = arith.constant 0 : index
    %1 = vector.load %arg3[%c0_1, %c0_2] : memref<128x512xf32, #tpu.memory_space<vmem>>, vector<128x512xf32>
    %c0_3 = arith.constant 0 : index
    %c0_4 = arith.constant 0 : index
    %2 = vector.load %arg4[%c0_3, %c0_4] : memref<128x64xf32, #tpu.memory_space<vmem>>, vector<128x64xf32>
    %c0_5 = arith.constant 0 : index
    %c0_6 = arith.constant 0 : index
    %c0_7 = arith.constant 0 : index
    %3 = vector.load %arg5[%c0_5, %c0_6, %c0_7] : memref<4x32x64xf32, #tpu.memory_space<vmem>>, vector<4x32x64xf32>
    %c0_8 = arith.constant 0 : index
    %c0_9 = arith.constant 0 : index
    %c0_10 = arith.constant 0 : index
    %4 = vector.load %arg6[%c0_8, %c0_9, %c0_10] : memref<3x64x32xf32, #tpu.memory_space<vmem>>, vector<3x64x32xf32>
    %c0_11 = arith.constant 0 : index
    %c0_12 = arith.constant 0 : index
    %c0_13 = arith.constant 0 : index
    %5 = vector.load %arg7[%c0_11, %c0_12, %c0_13] : memref<3x32x32xf32, #tpu.memory_space<vmem>>, vector<3x32x32xf32>
    %c0_14 = arith.constant 0 : index
    %c0_15 = arith.constant 0 : index
    %6 = vector.load %arg8[%c0_14, %c0_15] : memref<4x32xf32, #tpu.memory_space<vmem>>, vector<4x32xf32>
    %7 = vector.extract_strided_slice %6 {offsets = [0, 0], sizes = [1, 32], strides = [1, 1]} : vector<4x32xf32> to vector<1x32xf32>
    %8 = vector.extract_strided_slice %6 {offsets = [1, 0], sizes = [1, 32], strides = [1, 1]} : vector<4x32xf32> to vector<1x32xf32>
    %9 = vector.extract_strided_slice %6 {offsets = [2, 0], sizes = [1, 32], strides = [1, 1]} : vector<4x32xf32> to vector<1x32xf32>
    %10 = vector.extract_strided_slice %6 {offsets = [3, 0], sizes = [1, 32], strides = [1, 1]} : vector<4x32xf32> to vector<1x32xf32>
    %11 = vector.extract_strided_slice %3 {offsets = [0, 0, 0], sizes = [1, 32, 64], strides = [1, 1, 1]} : vector<4x32x64xf32> to vector<1x32x64xf32>
    %12 = vector.shape_cast %11 : vector<1x32x64xf32> to vector<32x64xf32>
    %cst = arith.constant dense<0.000000e+00> : vector<128x64xf32>
    %13 = tpu.matmul %0, %12, %cst {dimension_numbers = #tpu.dot_dimension_numbers<[1], [0], [0], [1], [0, 0, 1, 1], [], []>} : vector<128x32xf32>, vector<32x64xf32>, vector<128x64xf32> -> vector<128x64xf32>
    %14 = vector.extract_strided_slice %3 {offsets = [1, 0, 0], sizes = [1, 32, 64], strides = [1, 1, 1]} : vector<4x32x64xf32> to vector<1x32x64xf32>
    %15 = vector.shape_cast %14 : vector<1x32x64xf32> to vector<32x64xf32>
    %cst_16 = arith.constant dense<0.000000e+00> : vector<128x64xf32>
    %16 = tpu.matmul %0, %15, %cst_16 {dimension_numbers = #tpu.dot_dimension_numbers<[1], [0], [0], [1], [0, 0, 1, 1], [], []>} : vector<128x32xf32>, vector<32x64xf32>, vector<128x64xf32> -> vector<128x64xf32>
    %17 = vector.extract_strided_slice %3 {offsets = [2, 0, 0], sizes = [1, 32, 64], strides = [1, 1, 1]} : vector<4x32x64xf32> to vector<1x32x64xf32>
    %18 = vector.shape_cast %17 : vector<1x32x64xf32> to vector<32x64xf32>
    %cst_17 = arith.constant dense<0.000000e+00> : vector<128x64xf32>
    %19 = tpu.matmul %0, %18, %cst_17 {dimension_numbers = #tpu.dot_dimension_numbers<[1], [0], [0], [1], [0, 0, 1, 1], [], []>} : vector<128x32xf32>, vector<32x64xf32>, vector<128x64xf32> -> vector<128x64xf32>
    %20 = vector.extract_strided_slice %3 {offsets = [3, 0, 0], sizes = [1, 32, 64], strides = [1, 1, 1]} : vector<4x32x64xf32> to vector<1x32x64xf32>
    %21 = vector.shape_cast %20 : vector<1x32x64xf32> to vector<32x64xf32>
    %cst_18 = arith.constant dense<0.000000e+00> : vector<128x64xf32>
    %22 = tpu.matmul %0, %21, %cst_18 {dimension_numbers = #tpu.dot_dimension_numbers<[1], [0], [0], [1], [0, 0, 1, 1], [], []>} : vector<128x32xf32>, vector<32x64xf32>, vector<128x64xf32> -> vector<128x64xf32>
    %23 = tpu.concatenate %13, %16, %19, %22 in 0 : vector<128x64xf32>, vector<128x64xf32>, vector<128x64xf32>, vector<128x64xf32> -> vector<512x64xf32>
    %cst_19 = arith.constant dense<0.000000e+00> : vector<128x64xf32>
    %24 = tpu.matmul %1, %23, %cst_19 {dimension_numbers = #tpu.dot_dimension_numbers<[1], [0], [0], [1], [0, 0, 1, 1], [], []>} : vector<128x512xf32>, vector<512x64xf32>, vector<128x64xf32> -> vector<128x64xf32>
    %25 = arith.addf %24, %2 : vector<128x64xf32>
    %26 = vector.extract_strided_slice %4 {offsets = [0, 0, 0], sizes = [1, 64, 32], strides = [1, 1, 1]} : vector<3x64x32xf32> to vector<1x64x32xf32>
    %27 = vector.shape_cast %26 : vector<1x64x32xf32> to vector<64x32xf32>
    %cst_20 = arith.constant dense<0.000000e+00> : vector<128x32xf32>
    %28 = tpu.matmul %25, %27, %cst_20 {dimension_numbers = #tpu.dot_dimension_numbers<[1], [0], [0], [1], [0, 0, 1, 1], [], []>} : vector<128x64xf32>, vector<64x32xf32>, vector<128x32xf32> -> vector<128x32xf32>
    %29 = vector.extract_strided_slice %5 {offsets = [0, 0, 0], sizes = [1, 32, 32], strides = [1, 1, 1]} : vector<3x32x32xf32> to vector<1x32x32xf32>
    %30 = vector.shape_cast %29 : vector<1x32x32xf32> to vector<32x32xf32>
    %cst_21 = arith.constant dense<0.000000e+00> : vector<128x32xf32>
    %31 = tpu.matmul %0, %30, %cst_21 {dimension_numbers = #tpu.dot_dimension_numbers<[1], [0], [0], [1], [0, 0, 1, 1], [], []>} : vector<128x32xf32>, vector<32x32xf32>, vector<128x32xf32> -> vector<128x32xf32>
    %32 = arith.addf %28, %31 : vector<128x32xf32>
    %33 = vector.broadcast %7 : vector<1x32xf32> to vector<128x32xf32>
    %34 = arith.addf %32, %33 : vector<128x32xf32>
    %35 = arith.negf %34 : vector<128x32xf32>
    %36 = math.exp %35 : vector<128x32xf32>
    %cst_22 = arith.constant 1.000000e+00 : f32
    %37 = vector.broadcast %cst_22 : f32 to vector<128x32xf32>
    %38 = arith.addf %37, %36 : vector<128x32xf32>
    %39 = arith.divf %37, %38 : vector<128x32xf32>
    %40 = vector.extract_strided_slice %4 {offsets = [1, 0, 0], sizes = [1, 64, 32], strides = [1, 1, 1]} : vector<3x64x32xf32> to vector<1x64x32xf32>
    %41 = vector.shape_cast %40 : vector<1x64x32xf32> to vector<64x32xf32>
    %cst_23 = arith.constant dense<0.000000e+00> : vector<128x32xf32>
    %42 = tpu.matmul %25, %41, %cst_23 {dimension_numbers = #tpu.dot_dimension_numbers<[1], [0], [0], [1], [0, 0, 1, 1], [], []>} : vector<128x64xf32>, vector<64x32xf32>, vector<128x32xf32> -> vector<128x32xf32>
    %43 = vector.extract_strided_slice %5 {offsets = [1, 0, 0], sizes = [1, 32, 32], strides = [1, 1, 1]} : vector<3x32x32xf32> to vector<1x32x32xf32>
    %44 = vector.shape_cast %43 : vector<1x32x32xf32> to vector<32x32xf32>
    %cst_24 = arith.constant dense<0.000000e+00> : vector<128x32xf32>
    %45 = tpu.matmul %0, %44, %cst_24 {dimension_numbers = #tpu.dot_dimension_numbers<[1], [0], [0], [1], [0, 0, 1, 1], [], []>} : vector<128x32xf32>, vector<32x32xf32>, vector<128x32xf32> -> vector<128x32xf32>
    %46 = arith.addf %42, %45 : vector<128x32xf32>
    %47 = vector.broadcast %8 : vector<1x32xf32> to vector<128x32xf32>
    %48 = arith.addf %46, %47 : vector<128x32xf32>
    %49 = arith.negf %48 : vector<128x32xf32>
    %50 = math.exp %49 : vector<128x32xf32>
    %cst_25 = arith.constant 1.000000e+00 : f32
    %51 = vector.broadcast %cst_25 : f32 to vector<128x32xf32>
    %52 = arith.addf %51, %50 : vector<128x32xf32>
    %53 = arith.divf %51, %52 : vector<128x32xf32>
    %54 = vector.extract_strided_slice %4 {offsets = [2, 0, 0], sizes = [1, 64, 32], strides = [1, 1, 1]} : vector<3x64x32xf32> to vector<1x64x32xf32>
    %55 = vector.shape_cast %54 : vector<1x64x32xf32> to vector<64x32xf32>
    %cst_26 = arith.constant dense<0.000000e+00> : vector<128x32xf32>
    %56 = tpu.matmul %25, %55, %cst_26 {dimension_numbers = #tpu.dot_dimension_numbers<[1], [0], [0], [1], [0, 0, 1, 1], [], []>} : vector<128x64xf32>, vector<64x32xf32>, vector<128x32xf32> -> vector<128x32xf32>
    %57 = arith.mulf %53, %0 : vector<128x32xf32>
    %58 = vector.extract_strided_slice %5 {offsets = [2, 0, 0], sizes = [1, 32, 32], strides = [1, 1, 1]} : vector<3x32x32xf32> to vector<1x32x32xf32>
    %59 = vector.shape_cast %58 : vector<1x32x32xf32> to vector<32x32xf32>
    %cst_27 = arith.constant dense<0.000000e+00> : vector<128x32xf32>
    %60 = tpu.matmul %57, %59, %cst_27 {dimension_numbers = #tpu.dot_dimension_numbers<[1], [0], [0], [1], [0, 0, 1, 1], [], []>} : vector<128x32xf32>, vector<32x32xf32>, vector<128x32xf32> -> vector<128x32xf32>
    %61 = arith.addf %56, %60 : vector<128x32xf32>
    %62 = vector.broadcast %9 : vector<1x32xf32> to vector<128x32xf32>
    %63 = arith.addf %61, %62 : vector<128x32xf32>
    %64 = math.tanh %63 : vector<128x32xf32>
    %cst_28 = arith.constant 1.000000e+00 : f32
    %65 = vector.broadcast %cst_28 : f32 to vector<128x32xf32>
    %66 = arith.subf %65, %39 : vector<128x32xf32>
    %67 = arith.mulf %66, %0 : vector<128x32xf32>
    %68 = arith.mulf %39, %64 : vector<128x32xf32>
    %69 = arith.addf %67, %68 : vector<128x32xf32>
    %70 = vector.extract_strided_slice %3 {offsets = [0, 0, 0], sizes = [1, 32, 64], strides = [1, 1, 1]} : vector<4x32x64xf32> to vector<1x32x64xf32>
    %71 = vector.shape_cast %70 : vector<1x32x64xf32> to vector<32x64xf32>
    %cst_29 = arith.constant dense<0.000000e+00> : vector<128x64xf32>
    %72 = tpu.matmul %69, %71, %cst_29 {dimension_numbers = #tpu.dot_dimension_numbers<[1], [0], [0], [1], [0, 0, 1, 1], [], []>} : vector<128x32xf32>, vector<32x64xf32>, vector<128x64xf32> -> vector<128x64xf32>
    %73 = vector.extract_strided_slice %3 {offsets = [1, 0, 0], sizes = [1, 32, 64], strides = [1, 1, 1]} : vector<4x32x64xf32> to vector<1x32x64xf32>
    %74 = vector.shape_cast %73 : vector<1x32x64xf32> to vector<32x64xf32>
    %cst_30 = arith.constant dense<0.000000e+00> : vector<128x64xf32>
    %75 = tpu.matmul %69, %74, %cst_30 {dimension_numbers = #tpu.dot_dimension_numbers<[1], [0], [0], [1], [0, 0, 1, 1], [], []>} : vector<128x32xf32>, vector<32x64xf32>, vector<128x64xf32> -> vector<128x64xf32>
    %76 = vector.extract_strided_slice %3 {offsets = [2, 0, 0], sizes = [1, 32, 64], strides = [1, 1, 1]} : vector<4x32x64xf32> to vector<1x32x64xf32>
    %77 = vector.shape_cast %76 : vector<1x32x64xf32> to vector<32x64xf32>
    %cst_31 = arith.constant dense<0.000000e+00> : vector<128x64xf32>
    %78 = tpu.matmul %69, %77, %cst_31 {dimension_numbers = #tpu.dot_dimension_numbers<[1], [0], [0], [1], [0, 0, 1, 1], [], []>} : vector<128x32xf32>, vector<32x64xf32>, vector<128x64xf32> -> vector<128x64xf32>
    %79 = vector.extract_strided_slice %3 {offsets = [3, 0, 0], sizes = [1, 32, 64], strides = [1, 1, 1]} : vector<4x32x64xf32> to vector<1x32x64xf32>
    %80 = vector.shape_cast %79 : vector<1x32x64xf32> to vector<32x64xf32>
    %cst_32 = arith.constant dense<0.000000e+00> : vector<128x64xf32>
    %81 = tpu.matmul %69, %80, %cst_32 {dimension_numbers = #tpu.dot_dimension_numbers<[1], [0], [0], [1], [0, 0, 1, 1], [], []>} : vector<128x32xf32>, vector<32x64xf32>, vector<128x64xf32> -> vector<128x64xf32>
    %82 = tpu.concatenate %72, %75, %78, %81 in 0 : vector<128x64xf32>, vector<128x64xf32>, vector<128x64xf32>, vector<128x64xf32> -> vector<512x64xf32>
    %cst_33 = arith.constant dense<0.000000e+00> : vector<128x64xf32>
    %83 = tpu.matmul %1, %82, %cst_33 {dimension_numbers = #tpu.dot_dimension_numbers<[1], [0], [0], [1], [0, 0, 1, 1], [], []>} : vector<128x512xf32>, vector<512x64xf32>, vector<128x64xf32> -> vector<128x64xf32>
    %84 = arith.addf %83, %2 : vector<128x64xf32>
    %85 = vector.extract_strided_slice %4 {offsets = [0, 0, 0], sizes = [1, 64, 32], strides = [1, 1, 1]} : vector<3x64x32xf32> to vector<1x64x32xf32>
    %86 = vector.shape_cast %85 : vector<1x64x32xf32> to vector<64x32xf32>
    %cst_34 = arith.constant dense<0.000000e+00> : vector<128x32xf32>
    %87 = tpu.matmul %84, %86, %cst_34 {dimension_numbers = #tpu.dot_dimension_numbers<[1], [0], [0], [1], [0, 0, 1, 1], [], []>} : vector<128x64xf32>, vector<64x32xf32>, vector<128x32xf32> -> vector<128x32xf32>
    %88 = vector.extract_strided_slice %5 {offsets = [0, 0, 0], sizes = [1, 32, 32], strides = [1, 1, 1]} : vector<3x32x32xf32> to vector<1x32x32xf32>
    %89 = vector.shape_cast %88 : vector<1x32x32xf32> to vector<32x32xf32>
    %cst_35 = arith.constant dense<0.000000e+00> : vector<128x32xf32>
    %90 = tpu.matmul %69, %89, %cst_35 {dimension_numbers = #tpu.dot_dimension_numbers<[1], [0], [0], [1], [0, 0, 1, 1], [], []>} : vector<128x32xf32>, vector<32x32xf32>, vector<128x32xf32> -> vector<128x32xf32>
    %91 = arith.addf %87, %90 : vector<128x32xf32>
    %92 = vector.broadcast %7 : vector<1x32xf32> to vector<128x32xf32>
    %93 = arith.addf %91, %92 : vector<128x32xf32>
    %94 = arith.negf %93 : vector<128x32xf32>
    %95 = math.exp %94 : vector<128x32xf32>
    %cst_36 = arith.constant 1.000000e+00 : f32
    %96 = vector.broadcast %cst_36 : f32 to vector<128x32xf32>
    %97 = arith.addf %96, %95 : vector<128x32xf32>
    %98 = arith.divf %96, %97 : vector<128x32xf32>
    %99 = vector.extract_strided_slice %4 {offsets = [1, 0, 0], sizes = [1, 64, 32], strides = [1, 1, 1]} : vector<3x64x32xf32> to vector<1x64x32xf32>
    %100 = vector.shape_cast %99 : vector<1x64x32xf32> to vector<64x32xf32>
    %cst_37 = arith.constant dense<0.000000e+00> : vector<128x32xf32>
    %101 = tpu.matmul %84, %100, %cst_37 {dimension_numbers = #tpu.dot_dimension_numbers<[1], [0], [0], [1], [0, 0, 1, 1], [], []>} : vector<128x64xf32>, vector<64x32xf32>, vector<128x32xf32> -> vector<128x32xf32>
    %102 = vector.extract_strided_slice %5 {offsets = [1, 0, 0], sizes = [1, 32, 32], strides = [1, 1, 1]} : vector<3x32x32xf32> to vector<1x32x32xf32>
    %103 = vector.shape_cast %102 : vector<1x32x32xf32> to vector<32x32xf32>
    %cst_38 = arith.constant dense<0.000000e+00> : vector<128x32xf32>
    %104 = tpu.matmul %69, %103, %cst_38 {dimension_numbers = #tpu.dot_dimension_numbers<[1], [0], [0], [1], [0, 0, 1, 1], [], []>} : vector<128x32xf32>, vector<32x32xf32>, vector<128x32xf32> -> vector<128x32xf32>
    %105 = arith.addf %101, %104 : vector<128x32xf32>
    %106 = vector.broadcast %8 : vector<1x32xf32> to vector<128x32xf32>
    %107 = arith.addf %105, %106 : vector<128x32xf32>
    %108 = arith.negf %107 : vector<128x32xf32>
    %109 = math.exp %108 : vector<128x32xf32>
    %cst_39 = arith.constant 1.000000e+00 : f32
    %110 = vector.broadcast %cst_39 : f32 to vector<128x32xf32>
    %111 = arith.addf %110, %109 : vector<128x32xf32>
    %112 = arith.divf %110, %111 : vector<128x32xf32>
    %113 = vector.extract_strided_slice %4 {offsets = [2, 0, 0], sizes = [1, 64, 32], strides = [1, 1, 1]} : vector<3x64x32xf32> to vector<1x64x32xf32>
    %114 = vector.shape_cast %113 : vector<1x64x32xf32> to vector<64x32xf32>
    %cst_40 = arith.constant dense<0.000000e+00> : vector<128x32xf32>
    %115 = tpu.matmul %84, %114, %cst_40 {dimension_numbers = #tpu.dot_dimension_numbers<[1], [0], [0], [1], [0, 0, 1, 1], [], []>} : vector<128x64xf32>, vector<64x32xf32>, vector<128x32xf32> -> vector<128x32xf32>
    %116 = arith.mulf %112, %69 : vector<128x32xf32>
    %117 = vector.extract_strided_slice %5 {offsets = [2, 0, 0], sizes = [1, 32, 32], strides = [1, 1, 1]} : vector<3x32x32xf32> to vector<1x32x32xf32>
    %118 = vector.shape_cast %117 : vector<1x32x32xf32> to vector<32x32xf32>
    %cst_41 = arith.constant dense<0.000000e+00> : vector<128x32xf32>
    %119 = tpu.matmul %116, %118, %cst_41 {dimension_numbers = #tpu.dot_dimension_numbers<[1], [0], [0], [1], [0, 0, 1, 1], [], []>} : vector<128x32xf32>, vector<32x32xf32>, vector<128x32xf32> -> vector<128x32xf32>
    %120 = arith.addf %115, %119 : vector<128x32xf32>
    %121 = vector.broadcast %9 : vector<1x32xf32> to vector<128x32xf32>
    %122 = arith.addf %120, %121 : vector<128x32xf32>
    %123 = math.tanh %122 : vector<128x32xf32>
    %cst_42 = arith.constant 1.000000e+00 : f32
    %124 = vector.broadcast %cst_42 : f32 to vector<128x32xf32>
    %125 = arith.subf %124, %98 : vector<128x32xf32>
    %126 = arith.mulf %125, %69 : vector<128x32xf32>
    %127 = arith.mulf %98, %123 : vector<128x32xf32>
    %128 = arith.addf %126, %127 : vector<128x32xf32>
    %129 = vector.extract_strided_slice %3 {offsets = [0, 0, 0], sizes = [1, 32, 64], strides = [1, 1, 1]} : vector<4x32x64xf32> to vector<1x32x64xf32>
    %130 = vector.shape_cast %129 : vector<1x32x64xf32> to vector<32x64xf32>
    %cst_43 = arith.constant dense<0.000000e+00> : vector<128x64xf32>
    %131 = tpu.matmul %128, %130, %cst_43 {dimension_numbers = #tpu.dot_dimension_numbers<[1], [0], [0], [1], [0, 0, 1, 1], [], []>} : vector<128x32xf32>, vector<32x64xf32>, vector<128x64xf32> -> vector<128x64xf32>
    %132 = vector.extract_strided_slice %3 {offsets = [1, 0, 0], sizes = [1, 32, 64], strides = [1, 1, 1]} : vector<4x32x64xf32> to vector<1x32x64xf32>
    %133 = vector.shape_cast %132 : vector<1x32x64xf32> to vector<32x64xf32>
    %cst_44 = arith.constant dense<0.000000e+00> : vector<128x64xf32>
    %134 = tpu.matmul %128, %133, %cst_44 {dimension_numbers = #tpu.dot_dimension_numbers<[1], [0], [0], [1], [0, 0, 1, 1], [], []>} : vector<128x32xf32>, vector<32x64xf32>, vector<128x64xf32> -> vector<128x64xf32>
    %135 = vector.extract_strided_slice %3 {offsets = [2, 0, 0], sizes = [1, 32, 64], strides = [1, 1, 1]} : vector<4x32x64xf32> to vector<1x32x64xf32>
    %136 = vector.shape_cast %135 : vector<1x32x64xf32> to vector<32x64xf32>
    %cst_45 = arith.constant dense<0.000000e+00> : vector<128x64xf32>
    %137 = tpu.matmul %128, %136, %cst_45 {dimension_numbers = #tpu.dot_dimension_numbers<[1], [0], [0], [1], [0, 0, 1, 1], [], []>} : vector<128x32xf32>, vector<32x64xf32>, vector<128x64xf32> -> vector<128x64xf32>
    %138 = vector.extract_strided_slice %3 {offsets = [3, 0, 0], sizes = [1, 32, 64], strides = [1, 1, 1]} : vector<4x32x64xf32> to vector<1x32x64xf32>
    %139 = vector.shape_cast %138 : vector<1x32x64xf32> to vector<32x64xf32>
    %cst_46 = arith.constant dense<0.000000e+00> : vector<128x64xf32>
    %140 = tpu.matmul %128, %139, %cst_46 {dimension_numbers = #tpu.dot_dimension_numbers<[1], [0], [0], [1], [0, 0, 1, 1], [], []>} : vector<128x32xf32>, vector<32x64xf32>, vector<128x64xf32> -> vector<128x64xf32>
    %141 = tpu.concatenate %131, %134, %137, %140 in 0 : vector<128x64xf32>, vector<128x64xf32>, vector<128x64xf32>, vector<128x64xf32> -> vector<512x64xf32>
    %cst_47 = arith.constant dense<0.000000e+00> : vector<128x64xf32>
    %142 = tpu.matmul %1, %141, %cst_47 {dimension_numbers = #tpu.dot_dimension_numbers<[1], [0], [0], [1], [0, 0, 1, 1], [], []>} : vector<128x512xf32>, vector<512x64xf32>, vector<128x64xf32> -> vector<128x64xf32>
    %143 = arith.addf %142, %2 : vector<128x64xf32>
    %144 = vector.extract_strided_slice %4 {offsets = [0, 0, 0], sizes = [1, 64, 32], strides = [1, 1, 1]} : vector<3x64x32xf32> to vector<1x64x32xf32>
    %145 = vector.shape_cast %144 : vector<1x64x32xf32> to vector<64x32xf32>
    %cst_48 = arith.constant dense<0.000000e+00> : vector<128x32xf32>
    %146 = tpu.matmul %143, %145, %cst_48 {dimension_numbers = #tpu.dot_dimension_numbers<[1], [0], [0], [1], [0, 0, 1, 1], [], []>} : vector<128x64xf32>, vector<64x32xf32>, vector<128x32xf32> -> vector<128x32xf32>
    %147 = vector.extract_strided_slice %5 {offsets = [0, 0, 0], sizes = [1, 32, 32], strides = [1, 1, 1]} : vector<3x32x32xf32> to vector<1x32x32xf32>
    %148 = vector.shape_cast %147 : vector<1x32x32xf32> to vector<32x32xf32>
    %cst_49 = arith.constant dense<0.000000e+00> : vector<128x32xf32>
    %149 = tpu.matmul %128, %148, %cst_49 {dimension_numbers = #tpu.dot_dimension_numbers<[1], [0], [0], [1], [0, 0, 1, 1], [], []>} : vector<128x32xf32>, vector<32x32xf32>, vector<128x32xf32> -> vector<128x32xf32>
    %150 = arith.addf %146, %149 : vector<128x32xf32>
    %151 = vector.broadcast %7 : vector<1x32xf32> to vector<128x32xf32>
    %152 = arith.addf %150, %151 : vector<128x32xf32>
    %153 = arith.negf %152 : vector<128x32xf32>
    %154 = math.exp %153 : vector<128x32xf32>
    %cst_50 = arith.constant 1.000000e+00 : f32
    %155 = vector.broadcast %cst_50 : f32 to vector<128x32xf32>
    %156 = arith.addf %155, %154 : vector<128x32xf32>
    %157 = arith.divf %155, %156 : vector<128x32xf32>
    %158 = vector.extract_strided_slice %4 {offsets = [1, 0, 0], sizes = [1, 64, 32], strides = [1, 1, 1]} : vector<3x64x32xf32> to vector<1x64x32xf32>
    %159 = vector.shape_cast %158 : vector<1x64x32xf32> to vector<64x32xf32>
    %cst_51 = arith.constant dense<0.000000e+00> : vector<128x32xf32>
    %160 = tpu.matmul %143, %159, %cst_51 {dimension_numbers = #tpu.dot_dimension_numbers<[1], [0], [0], [1], [0, 0, 1, 1], [], []>} : vector<128x64xf32>, vector<64x32xf32>, vector<128x32xf32> -> vector<128x32xf32>
    %161 = vector.extract_strided_slice %5 {offsets = [1, 0, 0], sizes = [1, 32, 32], strides = [1, 1, 1]} : vector<3x32x32xf32> to vector<1x32x32xf32>
    %162 = vector.shape_cast %161 : vector<1x32x32xf32> to vector<32x32xf32>
    %cst_52 = arith.constant dense<0.000000e+00> : vector<128x32xf32>
    %163 = tpu.matmul %128, %162, %cst_52 {dimension_numbers = #tpu.dot_dimension_numbers<[1], [0], [0], [1], [0, 0, 1, 1], [], []>} : vector<128x32xf32>, vector<32x32xf32>, vector<128x32xf32> -> vector<128x32xf32>
    %164 = arith.addf %160, %163 : vector<128x32xf32>
    %165 = vector.broadcast %8 : vector<1x32xf32> to vector<128x32xf32>
    %166 = arith.addf %164, %165 : vector<128x32xf32>
    %167 = arith.negf %166 : vector<128x32xf32>
    %168 = math.exp %167 : vector<128x32xf32>
    %cst_53 = arith.constant 1.000000e+00 : f32
    %169 = vector.broadcast %cst_53 : f32 to vector<128x32xf32>
    %170 = arith.addf %169, %168 : vector<128x32xf32>
    %171 = arith.divf %169, %170 : vector<128x32xf32>
    %172 = vector.extract_strided_slice %4 {offsets = [2, 0, 0], sizes = [1, 64, 32], strides = [1, 1, 1]} : vector<3x64x32xf32> to vector<1x64x32xf32>
    %173 = vector.shape_cast %172 : vector<1x64x32xf32> to vector<64x32xf32>
    %cst_54 = arith.constant dense<0.000000e+00> : vector<128x32xf32>
    %174 = tpu.matmul %143, %173, %cst_54 {dimension_numbers = #tpu.dot_dimension_numbers<[1], [0], [0], [1], [0, 0, 1, 1], [], []>} : vector<128x64xf32>, vector<64x32xf32>, vector<128x32xf32> -> vector<128x32xf32>
    %175 = arith.mulf %171, %128 : vector<128x32xf32>
    %176 = vector.extract_strided_slice %5 {offsets = [2, 0, 0], sizes = [1, 32, 32], strides = [1, 1, 1]} : vector<3x32x32xf32> to vector<1x32x32xf32>
    %177 = vector.shape_cast %176 : vector<1x32x32xf32> to vector<32x32xf32>
    %cst_55 = arith.constant dense<0.000000e+00> : vector<128x32xf32>
    %178 = tpu.matmul %175, %177, %cst_55 {dimension_numbers = #tpu.dot_dimension_numbers<[1], [0], [0], [1], [0, 0, 1, 1], [], []>} : vector<128x32xf32>, vector<32x32xf32>, vector<128x32xf32> -> vector<128x32xf32>
    %179 = arith.addf %174, %178 : vector<128x32xf32>
    %180 = vector.broadcast %9 : vector<1x32xf32> to vector<128x32xf32>
    %181 = arith.addf %179, %180 : vector<128x32xf32>
    %182 = math.tanh %181 : vector<128x32xf32>
    %cst_56 = arith.constant 1.000000e+00 : f32
    %183 = vector.broadcast %cst_56 : f32 to vector<128x32xf32>
    %184 = arith.subf %183, %157 : vector<128x32xf32>
    %185 = arith.mulf %184, %128 : vector<128x32xf32>
    %186 = arith.mulf %157, %182 : vector<128x32xf32>
    %187 = arith.addf %185, %186 : vector<128x32xf32>
    %c0_57 = arith.constant 0 : index
    %c0_58 = arith.constant 0 : index
    %188 = vector.load %arg2[%c0_57, %c0_58] : memref<128x8xf32, #tpu.memory_space<vmem>>, vector<128x8xf32>
    %c0_59 = arith.constant 0 : index
    %c0_60 = arith.constant 0 : index
    %189 = vector.load %arg9[%c0_59, %c0_60] : memref<32x32xf32, #tpu.memory_space<vmem>>, vector<32x32xf32>
    %cst_61 = arith.constant dense<0.000000e+00> : vector<128x32xf32>
    %190 = tpu.matmul %187, %189, %cst_61 {dimension_numbers = #tpu.dot_dimension_numbers<[1], [0], [0], [1], [0, 0, 1, 1], [], []>} : vector<128x32xf32>, vector<32x32xf32>, vector<128x32xf32> -> vector<128x32xf32>
    %c0_62 = arith.constant 0 : index
    %c0_63 = arith.constant 0 : index
    %191 = vector.load %arg10[%c0_62, %c0_63] : memref<8x32xf32, #tpu.memory_space<vmem>>, vector<8x32xf32>
    %cst_64 = arith.constant dense<0.000000e+00> : vector<128x32xf32>
    %192 = tpu.matmul %188, %191, %cst_64 {dimension_numbers = #tpu.dot_dimension_numbers<[1], [0], [0], [1], [0, 0, 1, 1], [], []>} : vector<128x8xf32>, vector<8x32xf32>, vector<128x32xf32> -> vector<128x32xf32>
    %193 = arith.addf %190, %192 : vector<128x32xf32>
    %194 = vector.broadcast %10 : vector<1x32xf32> to vector<128x32xf32>
    %195 = arith.addf %193, %194 : vector<128x32xf32>
    %196 = math.tanh %195 : vector<128x32xf32>
    %c0_65 = arith.constant 0 : index
    %c0_66 = arith.constant 0 : index
    %197 = vector.load %arg11[%c0_65, %c0_66] : memref<1x32xf32, #tpu.memory_space<vmem>>, vector<1x32xf32>
    %198 = vector.broadcast %197 : vector<1x32xf32> to vector<128x32xf32>
    %199 = arith.mulf %196, %198 : vector<128x32xf32>
    %cst_67 = arith.constant dense<0.000000e+00> : vector<128xf32>
    %200 = vector.multi_reduction <add>, %199, %cst_67 [1] : vector<128x32xf32> to vector<128xf32>
    %201 = vector.shape_cast %200 : vector<128xf32> to vector<1x1x128xf32>
    %c0_68 = arith.constant 0 : index
    %c0_69 = arith.constant 0 : index
    %c0_70 = arith.constant 0 : index
    %202 = vector.load %arg12[%c0_68, %c0_69, %c0_70] : memref<1x1x128xf32, #tpu.memory_space<vmem>>, vector<1x1x128xf32>
    tpu.vector_store %arg12[%c0_68, %c0_69, %c0_70], %201 {strides = array<i32>} : memref<1x1x128xf32, #tpu.memory_space<vmem>>, vector<1x1x128xf32>,
    return
  }
  func.func @transform_0(%arg0: i32) -> (i32, i32) {
    %c0_i32 = arith.constant 0 : i32
    %c0_i32_0 = arith.constant 0 : i32
    return %arg0, %c0_i32 : i32, i32
  }
  func.func @transform_1(%arg0: i32) -> (i32, i32) {
    %c0_i32 = arith.constant 0 : i32
    %c0_i32_0 = arith.constant 0 : i32
    return %arg0, %c0_i32 : i32, i32
  }
  func.func @transform_2(%arg0: i32) -> (i32, i32) {
    %c0_i32 = arith.constant 0 : i32
    %c0_i32_0 = arith.constant 0 : i32
    return %arg0, %c0_i32 : i32, i32
  }
  func.func @transform_3(%arg0: i32) -> (i32, i32) {
    %c0_i32 = arith.constant 0 : i32
    %c0_i32_0 = arith.constant 0 : i32
    return %arg0, %c0_i32 : i32, i32
  }
  func.func @transform_4(%arg0: i32) -> (i32, i32, i32) {
    %c0_i32 = arith.constant 0 : i32
    %c0_i32_0 = arith.constant 0 : i32
    %c0_i32_1 = arith.constant 0 : i32
    %c0_i32_2 = arith.constant 0 : i32
    return %c0_i32, %c0_i32_0, %c0_i32_1 : i32, i32, i32
  }
  func.func @transform_5(%arg0: i32) -> (i32, i32, i32) {
    %c0_i32 = arith.constant 0 : i32
    %c0_i32_0 = arith.constant 0 : i32
    %c0_i32_1 = arith.constant 0 : i32
    %c0_i32_2 = arith.constant 0 : i32
    return %c0_i32, %c0_i32_0, %c0_i32_1 : i32, i32, i32
  }
  func.func @transform_6(%arg0: i32) -> (i32, i32, i32) {
    %c0_i32 = arith.constant 0 : i32
    %c0_i32_0 = arith.constant 0 : i32
    %c0_i32_1 = arith.constant 0 : i32
    %c0_i32_2 = arith.constant 0 : i32
    return %c0_i32, %c0_i32_0, %c0_i32_1 : i32, i32, i32
  }
  func.func @transform_7(%arg0: i32) -> (i32, i32) {
    %c0_i32 = arith.constant 0 : i32
    %c0_i32_0 = arith.constant 0 : i32
    %c0_i32_1 = arith.constant 0 : i32
    return %c0_i32, %c0_i32_0 : i32, i32
  }
  func.func @transform_8(%arg0: i32) -> (i32, i32) {
    %c0_i32 = arith.constant 0 : i32
    %c0_i32_0 = arith.constant 0 : i32
    %c0_i32_1 = arith.constant 0 : i32
    return %c0_i32, %c0_i32_0 : i32, i32
  }
  func.func @transform_9(%arg0: i32) -> (i32, i32) {
    %c0_i32 = arith.constant 0 : i32
    %c0_i32_0 = arith.constant 0 : i32
    %c0_i32_1 = arith.constant 0 : i32
    return %c0_i32, %c0_i32_0 : i32, i32
  }
  func.func @transform_10(%arg0: i32) -> (i32, i32) {
    %c0_i32 = arith.constant 0 : i32
    %c0_i32_0 = arith.constant 0 : i32
    %c0_i32_1 = arith.constant 0 : i32
    return %c0_i32, %c0_i32_0 : i32, i32
  }
  func.func @transform_11(%arg0: i32) -> (i32, i32, i32) {
    %c0_i32 = arith.constant 0 : i32
    %c0_i32_0 = arith.constant 0 : i32
    %c0_i32_1 = arith.constant 0 : i32
    return %arg0, %c0_i32, %c0_i32_0 : i32, i32, i32
  }
}

</mosaic_0001>

<llo_original>
// kernel: tpu_custom_call.1
$region0: #{tpu_custom_call.1}
  #allocation0 [shape = 'u32[]', space=smem, size = 0x4, offset = 0x4, fixed_abs, tag = 'smem constant byte address 0x4 - core index']
  #allocation1 [shape = 'u32[144,128]{1,0:T(1,128)}', space=vmem, size = 0x12000, scoped, tag = 'internal scratch']
  %s0 = inlined_call_operand.vmem [shape: f32[128,32], index: 0, kind: input, shape index: {}]
  %s1 = inlined_call_operand.vmem [shape: f32[128,8], index: 1, kind: input, shape index: {}]
  %s2 = inlined_call_operand.vmem [shape: f32[128,512], index: 2, kind: input, shape index: {}]
  %s3 = inlined_call_operand.vmem [shape: f32[128,64], index: 3, kind: input, shape index: {}]
  %s4 = inlined_call_operand.vmem [shape: f32[4,32,64], index: 4, kind: input, shape index: {}]
  %s5 = inlined_call_operand.vmem [shape: f32[3,64,32], index: 5, kind: input, shape index: {}]
  %s6 = inlined_call_operand.hbm [shape: f32[3,32,32], index: 6, kind: input, shape index: {}]
  %s7 = inlined_call_operand.vmem [shape: f32[4,32], index: 7, kind: input, shape index: {}]
  %s8 = inlined_call_operand.vmem [shape: f32[32,32], index: 8, kind: input, shape index: {}]
  %s9 = inlined_call_operand.vmem [shape: f32[8,32], index: 9, kind: input, shape index: {}]
  %s10 = inlined_call_operand.vmem [shape: f32[1,32], index: 10, kind: input, shape index: {}]
  %s11 = inlined_call_operand.hbm [shape: f32[1,1,128], index: 11, kind: output, shape index: {}]
  %s12 = sld [smem:[#allocation0]]
  $region58: #{tpu_custom_call.1} parent=0
    _
  %s14 = ssub.s32 1, %s12
  %s15 = scalar_select 0, %s14, %s12
  $region1: #{tpu_custom_call.1} parent=0
    #allocation2 [shape = 'u8[49152]{0}', space=vmem, size = 0xc000, scoped, tag = 'input window, operand 6, single buffered']
    #allocation3 [shape = 's32[1]{0}', space=sflag, size = 0x4, scoped, tag = 'scoped memory for tpu_custom_call.1']
    #allocation4 [shape = 's32[1]{0}', space=sflag, size = 0x4, scoped, tag = 'scoped memory for tpu_custom_call.1']
    #allocation5 [shape = 'u8[512]{0}', space=vmem, size = 0x400, scoped, tag = 'output window, operand 0, single buffered']
    %16 = vsyncpa [#allocation3], 0
    %17 = vsyncpa [#allocation4], 0
    // Predicated region
    $region2: #{tpu_custom_call.1} parent=1 // pred_check
      _
    $region3: #{tpu_custom_call.1} parent=1 // pred_check_branch
      %19 = sbr.rel (0) target = $region5
    $region4: #{tpu_custom_call.1} parent=1 // pred_region
      _
    $region5: #{tpu_custom_call.1} parent=1 // pred_fallthru
      _
    // Predicated region
    $region6: #{tpu_custom_call.1} parent=1 // pred_check
      _
    $region7: #{tpu_custom_call.1} parent=1 // pred_check_branch
      %21 = sbr.rel (0) target = $region9
    $region8: #{tpu_custom_call.1} parent=1 // pred_region
      _
    $region9: #{tpu_custom_call.1} parent=1 // pred_fallthru
      _
    // Predicated region
    $region10: #{tpu_custom_call.1} parent=1 // pred_check
      _
    $region11: #{tpu_custom_call.1} parent=1 // pred_check_branch
      %23 = sbr.rel (0) target = $region13
    $region12: #{tpu_custom_call.1} parent=1 // pred_region
      _
    $region13: #{tpu_custom_call.1} parent=1 // pred_fallthru
      _
    // Predicated region
    $region14: #{tpu_custom_call.1} parent=1 // pred_check
      _
    $region15: #{tpu_custom_call.1} parent=1 // pred_check_branch
      %25 = sbr.rel (0) target = $region17
    $region16: #{tpu_custom_call.1} parent=1 // pred_region
      _
    $region17: #{tpu_custom_call.1} parent=1 // pred_fallthru
      _
    // Predicated region
    $region18: #{tpu_custom_call.1} parent=1 // pred_check
      _
    $region19: #{tpu_custom_call.1} parent=1 // pred_check_branch
      %27 = sbr.rel (0) target = $region21
    $region20: #{tpu_custom_call.1} parent=1 // pred_region
      _
    $region21: #{tpu_custom_call.1} parent=1 // pred_fallthru
      _
    // Predicated region
    $region22: #{tpu_custom_call.1} parent=1 // pred_check
      _
    $region23: #{tpu_custom_call.1} parent=1 // pred_check_branch
      %29 = sbr.rel (0) target = $region25
    $region24: #{tpu_custom_call.1} parent=1 // pred_region
      _
    $region25: #{tpu_custom_call.1} parent=1 // pred_fallthru
      _
    // Predicated region
    $region26: #{tpu_custom_call.1} parent=1 // pred_check
      _
    $region27: #{tpu_custom_call.1} parent=1 // pred_check_branch
      %31 = sbr.rel (0) target = $region29
    $region28: #{tpu_custom_call.1} parent=1 // pred_region
      %s33 = ssub.s32 1536, 1536
      %34 = vsyncadd [#allocation3], %s33
      %s35 = sshll.u32 [#allocation2], 4
      %s36 = int_to_ptr.vmem [resolvable:$true] %s35
      %41 = dma.hbm_to_vmem [thread:$0]  %s6, 1536, %s36, [#allocation3], 128, 128, 8
    $region29: #{tpu_custom_call.1} parent=1 // pred_fallthru
      _
    // Predicated region
    $region30: #{tpu_custom_call.1} parent=1 // pred_check
      _
    $region31: #{tpu_custom_call.1} parent=1 // pred_check_branch
      %43 = sbr.rel (0) target = $region33
    $region32: #{tpu_custom_call.1} parent=1 // pred_region
      _
    $region33: #{tpu_custom_call.1} parent=1 // pred_fallthru
      _
    // Predicated region
    $region34: #{tpu_custom_call.1} parent=1 // pred_check
      _
    $region35: #{tpu_custom_call.1} parent=1 // pred_check_branch
      %45 = sbr.rel (0) target = $region37
    $region36: #{tpu_custom_call.1} parent=1 // pred_region
      _
    $region37: #{tpu_custom_call.1} parent=1 // pred_fallthru
      _
    // Predicated region
    $region38: #{tpu_custom_call.1} parent=1 // pred_check
      _
    $region39: #{tpu_custom_call.1} parent=1 // pred_check_branch
      %47 = sbr.rel (0) target = $region41
    $region40: #{tpu_custom_call.1} parent=1 // pred_region
      _
    $region41: #{tpu_custom_call.1} parent=1 // pred_fallthru
      _
    // Predicated region
    $region42: #{tpu_custom_call.1} parent=1 // pred_check
      _
    $region43: #{tpu_custom_call.1} parent=1 // pred_check_branch
      %49 = sbr.rel (0) target = $region45
    $region44: #{tpu_custom_call.1} parent=1 // pred_region
      _
    $region45: #{tpu_custom_call.1} parent=1 // pred_fallthru
      _
    // Predicated region
    $region46: #{tpu_custom_call.1} parent=1 // pred_check
      _
    $region47: #{tpu_custom_call.1} parent=1 // pred_check_branch
      %51 = sbr.rel (0) target = $region49
    $region48: #{tpu_custom_call.1} parent=1 // pred_region
      %52 = dma.done [#allocation3], 1536
    $region49: #{tpu_custom_call.1} parent=1 // pred_fallthru
      _
    %v53 = vld [vmem:[%s0] sm:$0xff]
    %v54 = vld [vmem:[%s0 + $0x8] sm:$0xff]
    %v55 = vld [vmem:[%s0 + $0x10] sm:$0xff]
    %v56 = vld [vmem:[%s0 + $0x18] sm:$0xff]
    %v57 = vld [vmem:[%s0 + $0x20] sm:$0xff]
    %v58 = vld [vmem:[%s0 + $0x28] sm:$0xff]
    %v59 = vld [vmem:[%s0 + $0x30] sm:$0xff]
    %v60 = vld [vmem:[%s0 + $0x38] sm:$0xff]
    %v61 = vld [vmem:[%s0 + $0x40] sm:$0xff]
    %v62 = vld [vmem:[%s0 + $0x48] sm:$0xff]
    %v63 = vld [vmem:[%s0 + $0x50] sm:$0xff]
    %v64 = vld [vmem:[%s0 + $0x58] sm:$0xff]
    %v65 = vld [vmem:[%s0 + $0x60] sm:$0xff]
    %v66 = vld [vmem:[%s0 + $0x68] sm:$0xff]
    %v67 = vld [vmem:[%s0 + $0x70] sm:$0xff]
    %v68 = vld [vmem:[%s0 + $0x78] sm:$0xff]
    %v69 = vld [vmem:[%s2] sm:$0xff]
    %v70 = vld [vmem:[%s2 + $0x8] sm:$0xff]
    %v71 = vld [vmem:[%s2 + $0x10] sm:$0xff]
    %v72 = vld [vmem:[%s2 + $0x18] sm:$0xff]
    %v73 = vld [vmem:[%s2 + $0x20] sm:$0xff]
    %v74 = vld [vmem:[%s2 + $0x28] sm:$0xff]
    %v75 = vld [vmem:[%s2 + $0x30] sm:$0xff]
    %v76 = vld [vmem:[%s2 + $0x38] sm:$0xff]
    %v77 = vld [vmem:[%s2 + $0x40] sm:$0xff]
    %v78 = vld [vmem:[%s2 + $0x48] sm:$0xff]
    %v79 = vld [vmem:[%s2 + $0x50] sm:$0xff]
    %v80 = vld [vmem:[%s2 + $0x58] sm:$0xff]
    %v81 = vld [vmem:[%s2 + $0x60] sm:$0xff]
    %v82 = vld [vmem:[%s2 + $0x68] sm:$0xff]
    %v83 = vld [vmem:[%s2 + $0x70] sm:$0xff]
    %v84 = vld [vmem:[%s2 + $0x78] sm:$0xff]
    %v85 = vld [vmem:[%s2 + $0x80] sm:$0xff]
    %v86 = vld [vmem:[%s2 + $0x88] sm:$0xff]
    %v87 = vld [vmem:[%s2 + $0x90] sm:$0xff]
    %v88 = vld [vmem:[%s2 + $0x98] sm:$0xff]
    %v89 = vld [vmem:[%s2 + $0xa0] sm:$0xff]
    %v90 = vld [vmem:[%s2 + $0xa8] sm:$0xff]
    %v91 = vld [vmem:[%s2 + $0xb0] sm:$0xff]
    %v92 = vld [vmem:[%s2 + $0xb8] sm:$0xff]
    %v93 = vld [vmem:[%s2 + $0xc0] sm:$0xff]
    %v94 = vld [vmem:[%s2 + $0xc8] sm:$0xff]
    %v95 = vld [vmem:[%s2 + $0xd0] sm:$0xff]
    %v96 = vld [vmem:[%s2 + $0xd8] sm:$0xff]
    %v97 = vld [vmem:[%s2 + $0xe0] sm:$0xff]
    %v98 = vld [vmem:[%s2 + $0xe8] sm:$0xff]
    %v99 = vld [vmem:[%s2 + $0xf0] sm:$0xff]
    %v100 = vld [vmem:[%s2 + $0xf8] sm:$0xff]
    %v101 = vld [vmem:[%s2 + $0x100] sm:$0xff]
    %v102 = vld [vmem:[%s2 + $0x108] sm:$0xff]
    %v103 = vld [vmem:[%s2 + $0x110] sm:$0xff]
    %v104 = vld [vmem:[%s2 + $0x118] sm:$0xff]
    %v105 = vld [vmem:[%s2 + $0x120] sm:$0xff]
    %v106 = vld [vmem:[%s2 + $0x128] sm:$0xff]
    %v107 = vld [vmem:[%s2 + $0x130] sm:$0xff]
    %v108 = vld [vmem:[%s2 + $0x138] sm:$0xff]
    %v109 = vld [vmem:[%s2 + $0x140] sm:$0xff]
    %v110 = vld [vmem:[%s2 + $0x148] sm:$0xff]
    %v111 = vld [vmem:[%s2 + $0x150] sm:$0xff]
    %v112 = vld [vmem:[%s2 + $0x158] sm:$0xff]
    %v113 = vld [vmem:[%s2 + $0x160] sm:$0xff]
    %v114 = vld [vmem:[%s2 + $0x168] sm:$0xff]
    %v115 = vld [vmem:[%s2 + $0x170] sm:$0xff]
    %v116 = vld [vmem:[%s2 + $0x178] sm:$0xff]
    %v117 = vld [vmem:[%s2 + $0x180] sm:$0xff]
    %v118 = vld [vmem:[%s2 + $0x188] sm:$0xff]
    %v119 = vld [vmem:[%s2 + $0x190] sm:$0xff]
    %v120 = vld [vmem:[%s2 + $0x198] sm:$0xff]
    %v121 = vld [vmem:[%s2 + $0x1a0] sm:$0xff]
    %v122 = vld [vmem:[%s2 + $0x1a8] sm:$0xff]
    %v123 = vld [vmem:[%s2 + $0x1b0] sm:$0xff]
    %v124 = vld [vmem:[%s2 + $0x1b8] sm:$0xff]
    %v125 = vld [vmem:[%s2 + $0x1c0] sm:$0xff]
    %v126 = vld [vmem:[%s2 + $0x1c8] sm:$0xff]
    %v127 = vld [vmem:[%s2 + $0x1d0] sm:$0xff]
    %v128 = vld [vmem:[%s2 + $0x1d8] sm:$0xff]
    %v129 = vld [vmem:[%s2 + $0x1e0] sm:$0xff]
    %v130 = vld [vmem:[%s2 + $0x1e8] sm:$0xff]
    %v131 = vld [vmem:[%s2 + $0x1f0] sm:$0xff]
    %v132 = vld [vmem:[%s2 + $0x1f8] sm:$0xff]
    %v133 = vld [vmem:[%s3] sm:$0xff]
    %v134 = vld [vmem:[%s3 + $0x8] sm:$0xff]
    %v135 = vld [vmem:[%s3 + $0x10] sm:$0xff]
    %v136 = vld [vmem:[%s3 + $0x18] sm:$0xff]
    %v137 = vld [vmem:[%s3 + $0x20] sm:$0xff]
    %v138 = vld [vmem:[%s3 + $0x28] sm:$0xff]
    %v139 = vld [vmem:[%s3 + $0x30] sm:$0xff]
    %v140 = vld [vmem:[%s3 + $0x38] sm:$0xff]
    %v141 = vld [vmem:[%s3 + $0x40] sm:$0xff]
    %v142 = vld [vmem:[%s3 + $0x48] sm:$0xff]
    %v143 = vld [vmem:[%s3 + $0x50] sm:$0xff]
    %v144 = vld [vmem:[%s3 + $0x58] sm:$0xff]
    %v145 = vld [vmem:[%s3 + $0x60] sm:$0xff]
    %v146 = vld [vmem:[%s3 + $0x68] sm:$0xff]
    %v147 = vld [vmem:[%s3 + $0x70] sm:$0xff]
    %v148 = vld [vmem:[%s3 + $0x78] sm:$0xff]
    %v149 = vld [vmem:[%s4] sm:$0xff]
    %v150 = vld [vmem:[%s4 + $0x8] sm:$0xff]
    %v151 = vld [vmem:[%s4 + $0x10] sm:$0xff]
    %v152 = vld [vmem:[%s4 + $0x18] sm:$0xff]
    %v153 = vld [vmem:[%s4 + $0x20] sm:$0xff]
    %v154 = vld [vmem:[%s4 + $0x28] sm:$0xff]
    %v155 = vld [vmem:[%s4 + $0x30] sm:$0xff]
    %v156 = vld [vmem:[%s4 + $0x38] sm:$0xff]
    %v157 = vld [vmem:[%s4 + $0x40] sm:$0xff]
    %v158 = vld [vmem:[%s4 + $0x48] sm:$0xff]
    %v159 = vld [vmem:[%s4 + $0x50] sm:$0xff]
    %v160 = vld [vmem:[%s4 + $0x58] sm:$0xff]
    %v161 = vld [vmem:[%s4 + $0x60] sm:$0xff]
    %v162 = vld [vmem:[%s4 + $0x68] sm:$0xff]
    %v163 = vld [vmem:[%s4 + $0x70] sm:$0xff]
    %v164 = vld [vmem:[%s4 + $0x78] sm:$0xff]
    %v165 = vld [vmem:[%s5] sm:$0xff]
    %v166 = vld [vmem:[%s5 + $0x8] sm:$0xff]
    %v167 = vld [vmem:[%s5 + $0x10] sm:$0xff]
    %v168 = vld [vmem:[%s5 + $0x18] sm:$0xff]
    %v169 = vld [vmem:[%s5 + $0x20] sm:$0xff]
    %v170 = vld [vmem:[%s5 + $0x28] sm:$0xff]
    %v171 = vld [vmem:[%s5 + $0x30] sm:$0xff]
    %v172 = vld [vmem:[%s5 + $0x38] sm:$0xff]
    %v173 = vld [vmem:[%s5 + $0x40] sm:$0xff]
    %v174 = vld [vmem:[%s5 + $0x48] sm:$0xff]
    %v175 = vld [vmem:[%s5 + $0x50] sm:$0xff]
    %v176 = vld [vmem:[%s5 + $0x58] sm:$0xff]
    %v177 = vld [vmem:[%s5 + $0x60] sm:$0xff]
    %v178 = vld [vmem:[%s5 + $0x68] sm:$0xff]
    %v179 = vld [vmem:[%s5 + $0x70] sm:$0xff]
    %v180 = vld [vmem:[%s5 + $0x78] sm:$0xff]
    %v181 = vld [vmem:[%s5 + $0x80] sm:$0xff]
    %v182 = vld [vmem:[%s5 + $0x88] sm:$0xff]
    %v183 = vld [vmem:[%s5 + $0x90] sm:$0xff]
    %v184 = vld [vmem:[%s5 + $0x98] sm:$0xff]
    %v185 = vld [vmem:[%s5 + $0xa0] sm:$0xff]
    %v186 = vld [vmem:[%s5 + $0xa8] sm:$0xff]
    %v187 = vld [vmem:[%s5 + $0xb0] sm:$0xff]
    %v188 = vld [vmem:[%s5 + $0xb8] sm:$0xff]
    %v189 = vld [vmem:[#allocation2] sm:$0xff]
    %v190 = vld [vmem:[#allocation2 + $0x8] sm:$0xff]
    %v191 = vld [vmem:[#allocation2 + $0x10] sm:$0xff]
    %v192 = vld [vmem:[#allocation2 + $0x18] sm:$0xff]
    %v193 = vld [vmem:[#allocation2 + $0x20] sm:$0xff]
    %v194 = vld [vmem:[#allocation2 + $0x28] sm:$0xff]
    %v195 = vld [vmem:[#allocation2 + $0x30] sm:$0xff]
    %v196 = vld [vmem:[#allocation2 + $0x38] sm:$0xff]
    %v197 = vld [vmem:[#allocation2 + $0x40] sm:$0xff]
    %v198 = vld [vmem:[#allocation2 + $0x48] sm:$0xff]
    %v199 = vld [vmem:[#allocation2 + $0x50] sm:$0xff]
    %v200 = vld [vmem:[#allocation2 + $0x58] sm:$0xff]
    %v201 = vld [vmem:[%s7] sm:$0xf]
    %vm202 = vcmask 261120
    %v204 = vsel %vm202, %v53, 0
    %v207 = vsel %vm202, %v54, 0
    %v210 = vsel %vm202, %v55, 0
    %v213 = vsel %vm202, %v56, 0
    %v216 = vsel %vm202, %v57, 0
    %v219 = vsel %vm202, %v58, 0
    %v222 = vsel %vm202, %v59, 0
    %v225 = vsel %vm202, %v60, 0
    %v228 = vsel %vm202, %v61, 0
    %v231 = vsel %vm202, %v62, 0
    %v234 = vsel %vm202, %v63, 0
    %v237 = vsel %vm202, %v64, 0
    %v240 = vsel %vm202, %v65, 0
    %v243 = vsel %vm202, %v66, 0
    %v246 = vsel %vm202, %v67, 0
    %v249 = vsel %vm202, %v68, 0
    %251 = vmatprep.subr.mxu0 0.0
    %252 = vmatpush1.msra.mxu0 0.0
    %253 = vmatprep.subr.mxu0 0.0
    %254 = vmatpush1.msra.mxu0 0.0
    %255 = vmatprep.subr.mxu0 0.0
    %256 = vmatpush1.msra.mxu0 0.0
    %257 = vmatprep.subr.mxu0 0.0
    %258 = vmatpush1.msra.mxu0 0.0
    %259 = vmatprep.subr.mxu0 0.0
    %260 = vmatpush1.msra.mxu0 0.0
    %261 = vmatprep.subr.mxu0 0.0
    %262 = vmatpush1.msra.mxu0 0.0
    %263 = vmatprep.subr.mxu0 0.0
    %264 = vmatpush1.msra.mxu0 0.0
    %265 = vmatprep.subr.mxu0 0.0
    %266 = vmatpush1.msra.mxu0 0.0
    %267 = vmatprep.subr.mxu0 0.0
    %268 = vmatpush1.msra.mxu0 0.0
    %269 = vmatprep.subr.mxu0 0.0
    %270 = vmatpush1.msra.mxu0 0.0
    %271 = vmatprep.subr.mxu0 0.0
    %272 = vmatpush1.msra.mxu0 0.0
    %273 = vmatprep.subr.mxu0 0.0
    %274 = vmatpush1.msra.mxu0 0.0
    %275 = vmatprep.subr.mxu0 0.0
    %276 = vmatpush1.msra.mxu0 %v152
    %277 = vmatprep.subr.mxu0 0.0
    %278 = vmatpush1.msra.mxu0 %v151
    %279 = vmatprep.subr.mxu0 0.0
    %280 = vmatpush1.msra.mxu0 %v150
    %281 = vmatprep.subr.mxu0 0.0
    %282 = vmatpush1.msra.mxu0 %v149
    %283 = vmatprep.subr.mxu0 0.0
    %284 = vmatpush2.msra.mxu0 0.0
    %285 = vmatprep.subr.mxu0 0.0
    %286 = vmatpush2.msra.mxu0 0.0
    %287 = vmatprep.subr.mxu0 0.0
    %288 = vmatpush2.msra.mxu0 0.0
    %289 = vmatprep.subr.mxu0 0.0
    %290 = vmatpush2.msra.mxu0 0.0
    %291 = vmatprep.subr.mxu0 0.0
    %292 = vmatpush2.msra.mxu0 0.0
    %293 = vmatprep.subr.mxu0 0.0
    %294 = vmatpush2.msra.mxu0 0.0
    %295 = vmatprep.subr.mxu0 0.0
    %296 = vmatpush2.msra.mxu0 0.0
    %297 = vmatprep.subr.mxu0 0.0
    %298 = vmatpush2.msra.mxu0 0.0
    %299 = vmatprep.subr.mxu0 0.0
    %300 = vmatpush2.msra.mxu0 0.0
    %301 = vmatprep.subr.mxu0 0.0
    %302 = vmatpush2.msra.mxu0 0.0
    %303 = vmatprep.subr.mxu0 0.0
    %304 = vmatpush2.msra.mxu0 0.0
    %305 = vmatprep.subr.mxu0 0.0
    %306 = vmatpush2.msra.mxu0 0.0
    %307 = vmatprep.subr.mxu0 0.0
    %308 = vmatpush2.msra.mxu0 0.0
    %309 = vmatprep.subr.mxu0 0.0
    %310 = vmatpush2.msra.mxu0 0.0
    %311 = vmatprep.subr.mxu0 0.0
    %312 = vmatpush2.msra.mxu0 0.0
    %313 = vmatprep.subr.mxu0 0.0
    %314 = vmatpush2.msra.mxu0 0.0
    %315 = vmatprep.mubr.f32.mxu0 0.0
    %316 = vmatmul.mubr.f32.gmra.mxu0 %v204
    %v317 = vpop.f32.mrf.mxu0
    %v318 = vadd.f32 0.0, %v317
    %v319 = vpop.f32.mrf.mxu0
    %320 = vmatprep.mubr.f32.mxu0 0.0
    %321 = vmatmul.mubr.f32.gmra.mxu0 %v207
    %v322 = vpop.f32.mrf.mxu0
    %v323 = vadd.f32 0.0, %v322
    %v324 = vpop.f32.mrf.mxu0
    %325 = vmatprep.mubr.f32.mxu0 0.0
    %326 = vmatmul.mubr.f32.gmra.mxu0 %v210
    %v327 = vpop.f32.mrf.mxu0
    %v328 = vadd.f32 0.0, %v327
    %v329 = vpop.f32.mrf.mxu0
    %330 = vmatprep.mubr.f32.mxu0 0.0
    %331 = vmatmul.mubr.f32.gmra.mxu0 %v213
    %v332 = vpop.f32.mrf.mxu0
    %v333 = vadd.f32 0.0, %v332
    %v334 = vpop.f32.mrf.mxu0
    %335 = vmatprep.mubr.f32.mxu0 0.0
    %336 = vmatmul.mubr.f32.gmra.mxu0 %v216
    %v337 = vpop.f32.mrf.mxu0
    %v338 = vadd.f32 0.0, %v337
    %v339 = vpop.f32.mrf.mxu0
    %340 = vmatprep.mubr.f32.mxu0 0.0
    %341 = vmatmul.mubr.f32.gmra.mxu0 %v219
    %v342 = vpop.f32.mrf.mxu0
    %v343 = vadd.f32 0.0, %v342
    %v344 = vpop.f32.mrf.mxu0
    %345 = vmatprep.mubr.f32.mxu0 0.0
    %346 = vmatmul.mubr.f32.gmra.mxu0 %v222
    %v347 = vpop.f32.mrf.mxu0
    %v348 = vadd.f32 0.0, %v347
    %v349 = vpop.f32.mrf.mxu0
    %350 = vmatprep.mubr.f32.mxu0 0.0
    %351 = vmatmul.mubr.f32.gmra.mxu0 %v225
    %v352 = vpop.f32.mrf.mxu0
    %v353 = vadd.f32 0.0, %v352
    %v354 = vpop.f32.mrf.mxu0
    %355 = vmatprep.mubr.f32.mxu0 0.0
    %356 = vmatmul.mubr.f32.gmra.mxu0 %v228
    %v357 = vpop.f32.mrf.mxu0
    %v358 = vadd.f32 0.0, %v357
    %v359 = vpop.f32.mrf.mxu0
    %360 = vmatprep.mubr.f32.mxu0 0.0
    %361 = vmatmul.mubr.f32.gmra.mxu0 %v231
    %v362 = vpop.f32.mrf.mxu0
    %v363 = vadd.f32 0.0, %v362
    %v364 = vpop.f32.mrf.mxu0
    %365 = vmatprep.mubr.f32.mxu0 0.0
    %366 = vmatmul.mubr.f32.gmra.mxu0 %v234
    %v367 = vpop.f32.mrf.mxu0
    %v368 = vadd.f32 0.0, %v367
    %v369 = vpop.f32.mrf.mxu0
    %370 = vmatprep.mubr.f32.mxu0 0.0
    %371 = vmatmul.mubr.f32.gmra.mxu0 %v237
    %v372 = vpop.f32.mrf.mxu0
    %v373 = vadd.f32 0.0, %v372
    %v374 = vpop.f32.mrf.mxu0
    %375 = vmatprep.mubr.f32.mxu0 0.0
    %376 = vmatmul.mubr.f32.gmra.mxu0 %v240
    %v377 = vpop.f32.mrf.mxu0
    %v378 = vadd.f32 0.0, %v377
    %v379 = vpop.f32.mrf.mxu0
    %380 = vmatprep.mubr.f32.mxu0 0.0
    %381 = vmatmul.mubr.f32.gmra.mxu0 %v243
    %v382 = vpop.f32.mrf.mxu0
    %v383 = vadd.f32 0.0, %v382
    %v384 = vpop.f32.mrf.mxu0
    %385 = vmatprep.mubr.f32.mxu0 0.0
    %386 = vmatmul.mubr.f32.gmra.mxu0 %v246
    %v387 = vpop.f32.mrf.mxu0
    %v388 = vadd.f32 0.0, %v387
    %v389 = vpop.f32.mrf.mxu0
    %390 = vmatprep.mubr.f32.mxu0 0.0
    %391 = vmatmul.mubr.f32.gmra.mxu0 %v249
    %v392 = vpop.f32.mrf.mxu0
    %v393 = vadd.f32 0.0, %v392
    %v394 = vpop.f32.mrf.mxu0
    %395 = vdwg.mxu0
    %396 = vmatprep.subr.mxu0 0.0
    %397 = vmatpush1.msra.mxu0 0.0
    %398 = vmatprep.subr.mxu0 0.0
    %399 = vmatpush1.msra.mxu0 0.0
    %400 = vmatprep.subr.mxu0 0.0
    %401 = vmatpush1.msra.mxu0 0.0
    %402 = vmatprep.subr.mxu0 0.0
    %403 = vmatpush1.msra.mxu0 0.0
    %404 = vmatprep.subr.mxu0 0.0
    %405 = vmatpush1.msra.mxu0 0.0
    %406 = vmatprep.subr.mxu0 0.0
    %407 = vmatpush1.msra.mxu0 0.0
    %408 = vmatprep.subr.mxu0 0.0
    %409 = vmatpush1.msra.mxu0 0.0
    %410 = vmatprep.subr.mxu0 0.0
    %411 = vmatpush1.msra.mxu0 0.0
    %412 = vmatprep.subr.mxu0 0.0
    %413 = vmatpush1.msra.mxu0 0.0
    %414 = vmatprep.subr.mxu0 0.0
    %415 = vmatpush1.msra.mxu0 0.0
    %416 = vmatprep.subr.mxu0 0.0
    %417 = vmatpush1.msra.mxu0 0.0
    %418 = vmatprep.subr.mxu0 0.0
    %419 = vmatpush1.msra.mxu0 0.0
    %420 = vmatprep.subr.mxu0 0.0
    %421 = vmatpush1.msra.mxu0 %v156
    %422 = vmatprep.subr.mxu0 0.0
    %423 = vmatpush1.msra.mxu0 %v155
    %424 = vmatprep.subr.mxu0 0.0
    %425 = vmatpush1.msra.mxu0 %v154
    %426 = vmatprep.subr.mxu0 0.0
    %427 = vmatpush1.msra.mxu0 %v153
    %428 = vmatprep.subr.mxu0 0.0
    %429 = vmatpush2.msra.mxu0 0.0
    %430 = vmatprep.subr.mxu0 0.0
    %431 = vmatpush2.msra.mxu0 0.0
    %432 = vmatprep.subr.mxu0 0.0
    %433 = vmatpush2.msra.mxu0 0.0
    %434 = vmatprep.subr.mxu0 0.0
    %435 = vmatpush2.msra.mxu0 0.0
    %436 = vmatprep.subr.mxu0 0.0
    %437 = vmatpush2.msra.mxu0 0.0
    %438 = vmatprep.subr.mxu0 0.0
    %439 = vmatpush2.msra.mxu0 0.0
    %440 = vmatprep.subr.mxu0 0.0
    %441 = vmatpush2.msra.mxu0 0.0
    %442 = vmatprep.subr.mxu0 0.0
    %443 = vmatpush2.msra.mxu0 0.0
    %444 = vmatprep.subr.mxu0 0.0
    %445 = vmatpush2.msra.mxu0 0.0
    %446 = vmatprep.subr.mxu0 0.0
    %447 = vmatpush2.msra.mxu0 0.0
    %448 = vmatprep.subr.mxu0 0.0
    %449 = vmatpush2.msra.mxu0 0.0
    %450 = vmatprep.subr.mxu0 0.0
    %451 = vmatpush2.msra.mxu0 0.0
    %452 = vmatprep.subr.mxu0 0.0
    %453 = vmatpush2.msra.mxu0 0.0
    %454 = vmatprep.subr.mxu0 0.0
    %455 = vmatpush2.msra.mxu0 0.0
    %456 = vmatprep.subr.mxu0 0.0
    %457 = vmatpush2.msra.mxu0 0.0
    %458 = vmatprep.subr.mxu0 0.0
    %459 = vmatpush2.msra.mxu0 0.0
    %460 = vmatprep.mubr.f32.mxu0 0.0
    %461 = vmatmul.mubr.f32.gmra.mxu0 %v204
    %v462 = vpop.f32.mrf.mxu0
    %v463 = vadd.f32 0.0, %v462
    %v464 = vpop.f32.mrf.mxu0
    %465 = vmatprep.mubr.f32.mxu0 0.0
    %466 = vmatmul.mubr.f32.gmra.mxu0 %v207
    %v467 = vpop.f32.mrf.mxu0
    %v468 = vadd.f32 0.0, %v467
    %v469 = vpop.f32.mrf.mxu0
    %470 = vmatprep.mubr.f32.mxu0 0.0
    %471 = vmatmul.mubr.f32.gmra.mxu0 %v210
    %v472 = vpop.f32.mrf.mxu0
    %v473 = vadd.f32 0.0, %v472
    %v474 = vpop.f32.mrf.mxu0
    %475 = vmatprep.mubr.f32.mxu0 0.0
    %476 = vmatmul.mubr.f32.gmra.mxu0 %v213
    %v477 = vpop.f32.mrf.mxu0
    %v478 = vadd.f32 0.0, %v477
    %v479 = vpop.f32.mrf.mxu0
    %480 = vmatprep.mubr.f32.mxu0 0.0
    %481 = vmatmul.mubr.f32.gmra.mxu0 %v216
    %v482 = vpop.f32.mrf.mxu0
    %v483 = vadd.f32 0.0, %v482
    %v484 = vpop.f32.mrf.mxu0
    %485 = vmatprep.mubr.f32.mxu0 0.0
    %486 = vmatmul.mubr.f32.gmra.mxu0 %v219
    %v487 = vpop.f32.mrf.mxu0
    %v488 = vadd.f32 0.0, %v487
    %v489 = vpop.f32.mrf.mxu0
    %490 = vmatprep.mubr.f32.mxu0 0.0
    %491 = vmatmul.mubr.f32.gmra.mxu0 %v222
    %v492 = vpop.f32.mrf.mxu0
    %v493 = vadd.f32 0.0, %v492
    %v494 = vpop.f32.mrf.mxu0
    %495 = vmatprep.mubr.f32.mxu0 0.0
    %496 = vmatmul.mubr.f32.gmra.mxu0 %v225
    %v497 = vpop.f32.mrf.mxu0
    %v498 = vadd.f32 0.0, %v497
    %v499 = vpop.f32.mrf.mxu0
    %500 = vmatprep.mubr.f32.mxu0 0.0
    %501 = vmatmul.mubr.f32.gmra.mxu0 %v228
    %v502 = vpop.f32.mrf.mxu0
    %v503 = vadd.f32 0.0, %v502
    %v504 = vpop.f32.mrf.mxu0
    %505 = vmatprep.mubr.f32.mxu0 0.0
    %506 = vmatmul.mubr.f32.gmra.mxu0 %v231
    %v507 = vpop.f32.mrf.mxu0
    %v508 = vadd.f32 0.0, %v507
    %v509 = vpop.f32.mrf.mxu0
    %510 = vmatprep.mubr.f32.mxu0 0.0
    %511 = vmatmul.mubr.f32.gmra.mxu0 %v234
    %v512 = vpop.f32.mrf.mxu0
    %v513 = vadd.f32 0.0, %v512
    %v514 = vpop.f32.mrf.mxu0
    %515 = vmatprep.mubr.f32.mxu0 0.0
    %516 = vmatmul.mubr.f32.gmra.mxu0 %v237
    %v517 = vpop.f32.mrf.mxu0
    %v518 = vadd.f32 0.0, %v517
    %v519 = vpop.f32.mrf.mxu0
    %520 = vmatprep.mubr.f32.mxu0 0.0
    %521 = vmatmul.mubr.f32.gmra.mxu0 %v240
    %v522 = vpop.f32.mrf.mxu0
    %v523 = vadd.f32 0.0, %v522
    %v524 = vpop.f32.mrf.mxu0
    %525 = vmatprep.mubr.f32.mxu0 0.0
    %526 = vmatmul.mubr.f32.gmra.mxu0 %v243
    %v527 = vpop.f32.mrf.mxu0
    %v528 = vadd.f32 0.0, %v527
    %v529 = vpop.f32.mrf.mxu0
    %530 = vmatprep.mubr.f32.mxu0 0.0
    %531 = vmatmul.mubr.f32.gmra.mxu0 %v246
    %v532 = vpop.f32.mrf.mxu0
    %v533 = vadd.f32 0.0, %v532
    %v534 = vpop.f32.mrf.mxu0
    %535 = vmatprep.mubr.f32.mxu0 0.0
    %536 = vmatmul.mubr.f32.gmra.mxu0 %v249
    %v537 = vpop.f32.mrf.mxu0
    %v538 = vadd.f32 0.0, %v537
    %v539 = vpop.f32.mrf.mxu0
    %540 = vdwg.mxu0
    %541 = vmatprep.subr.mxu0 0.0
    %542 = vmatpush1.msra.mxu0 0.0
    %543 = vmatprep.subr.mxu0 0.0
    %544 = vmatpush1.msra.mxu0 0.0
    %545 = vmatprep.subr.mxu0 0.0
    %546 = vmatpush1.msra.mxu0 0.0
    %547 = vmatprep.subr.mxu0 0.0
    %548 = vmatpush1.msra.mxu0 0.0
    %549 = vmatprep.subr.mxu0 0.0
    %550 = vmatpush1.msra.mxu0 0.0
    %551 = vmatprep.subr.mxu0 0.0
    %552 = vmatpush1.msra.mxu0 0.0
    %553 = vmatprep.subr.mxu0 0.0
    %554 = vmatpush1.msra.mxu0 0.0
    %555 = vmatprep.subr.mxu0 0.0
    %556 = vmatpush1.msra.mxu0 0.0
    %557 = vmatprep.subr.mxu0 0.0
    %558 = vmatpush1.msra.mxu0 0.0
    %559 = vmatprep.subr.mxu0 0.0
    %560 = vmatpush1.msra.mxu0 0.0
    %561 = vmatprep.subr.mxu0 0.0
    %562 = vmatpush1.msra.mxu0 0.0
    %563 = vmatprep.subr.mxu0 0.0
    %564 = vmatpush1.msra.mxu0 0.0
    %565 = vmatprep.subr.mxu0 0.0
    %566 = vmatpush1.msra.mxu0 %v160
    %567 = vmatprep.subr.mxu0 0.0
    %568 = vmatpush1.msra.mxu0 %v159
    %569 = vmatprep.subr.mxu0 0.0
    %570 = vmatpush1.msra.mxu0 %v158
    %571 = vmatprep.subr.mxu0 0.0
    %572 = vmatpush1.msra.mxu0 %v157
    %573 = vmatprep.subr.mxu0 0.0
    %574 = vmatpush2.msra.mxu0 0.0
    %575 = vmatprep.subr.mxu0 0.0
    %576 = vmatpush2.msra.mxu0 0.0
    %577 = vmatprep.subr.mxu0 0.0
    %578 = vmatpush2.msra.mxu0 0.0
    %579 = vmatprep.subr.mxu0 0.0
    %580 = vmatpush2.msra.mxu0 0.0
    %581 = vmatprep.subr.mxu0 0.0
    %582 = vmatpush2.msra.mxu0 0.0
    %583 = vmatprep.subr.mxu0 0.0
    %584 = vmatpush2.msra.mxu0 0.0
    %585 = vmatprep.subr.mxu0 0.0
    %586 = vmatpush2.msra.mxu0 0.0
    %587 = vmatprep.subr.mxu0 0.0
    %588 = vmatpush2.msra.mxu0 0.0
    %589 = vmatprep.subr.mxu0 0.0
    %590 = vmatpush2.msra.mxu0 0.0
    %591 = vmatprep.subr.mxu0 0.0
    %592 = vmatpush2.msra.mxu0 0.0
    %593 = vmatprep.subr.mxu0 0.0
    %594 = vmatpush2.msra.mxu0 0.0
    %595 = vmatprep.subr.mxu0 0.0
    %596 = vmatpush2.msra.mxu0 0.0
    %597 = vmatprep.subr.mxu0 0.0
    %598 = vmatpush2.msra.mxu0 0.0
    %599 = vmatprep.subr.mxu0 0.0
    %600 = vmatpush2.msra.mxu0 0.0
    %601 = vmatprep.subr.mxu0 0.0
    %602 = vmatpush2.msra.mxu0 0.0
    %603 = vmatprep.subr.mxu0 0.0
    %604 = vmatpush2.msra.mxu0 0.0
    %605 = vmatprep.mubr.f32.mxu0 0.0
    %606 = vmatmul.mubr.f32.gmra.mxu0 %v204
    %v607 = vpop.f32.mrf.mxu0
    %v608 = vadd.f32 0.0, %v607
    %v609 = vpop.f32.mrf.mxu0
    %610 = vmatprep.mubr.f32.mxu0 0.0
    %611 = vmatmul.mubr.f32.gmra.mxu0 %v207
    %v612 = vpop.f32.mrf.mxu0
    %v613 = vadd.f32 0.0, %v612
    %v614 = vpop.f32.mrf.mxu0
    %615 = vmatprep.mubr.f32.mxu0 0.0
    %616 = vmatmul.mubr.f32.gmra.mxu0 %v210
    %v617 = vpop.f32.mrf.mxu0
    %v618 = vadd.f32 0.0, %v617
    %v619 = vpop.f32.mrf.mxu0
    %620 = vmatprep.mubr.f32.mxu0 0.0
    %621 = vmatmul.mubr.f32.gmra.mxu0 %v213
    %v622 = vpop.f32.mrf.mxu0
    %v623 = vadd.f32 0.0, %v622
    %v624 = vpop.f32.mrf.mxu0
    %625 = vmatprep.mubr.f32.mxu0 0.0
    %626 = vmatmul.mubr.f32.gmra.mxu0 %v216
    %v627 = vpop.f32.mrf.mxu0
    %v628 = vadd.f32 0.0, %v627
    %v629 = vpop.f32.mrf.mxu0
    %630 = vmatprep.mubr.f32.mxu0 0.0
    %631 = vmatmul.mubr.f32.gmra.mxu0 %v219
    %v632 = vpop.f32.mrf.mxu0
    %v633 = vadd.f32 0.0, %v632
    %v634 = vpop.f32.mrf.mxu0
    %635 = vmatprep.mubr.f32.mxu0 0.0
    %636 = vmatmul.mubr.f32.gmra.mxu0 %v222
    %v637 = vpop.f32.mrf.mxu0
    %v638 = vadd.f32 0.0, %v637
    %v639 = vpop.f32.mrf.mxu0
    %640 = vmatprep.mubr.f32.mxu0 0.0
    %641 = vmatmul.mubr.f32.gmra.mxu0 %v225
    %v642 = vpop.f32.mrf.mxu0
    %v643 = vadd.f32 0.0, %v642
    %v644 = vpop.f32.mrf.mxu0
    %645 = vmatprep.mubr.f32.mxu0 0.0
    %646 = vmatmul.mubr.f32.gmra.mxu0 %v228
    %v647 = vpop.f32.mrf.mxu0
    %v648 = vadd.f32 0.0, %v647
    %v649 = vpop.f32.mrf.mxu0
    %650 = vmatprep.mubr.f32.mxu0 0.0
    %651 = vmatmul.mubr.f32.gmra.mxu0 %v231
    %v652 = vpop.f32.mrf.mxu0
    %v653 = vadd.f32 0.0, %v652
    %v654 = vpop.f32.mrf.mxu0
    %655 = vmatprep.mubr.f32.mxu0 0.0
    %656 = vmatmul.mubr.f32.gmra.mxu0 %v234
    %v657 = vpop.f32.mrf.mxu0
    %v658 = vadd.f32 0.0, %v657
    %v659 = vpop.f32.mrf.mxu0
    %660 = vmatprep.mubr.f32.mxu0 0.0
    %661 = vmatmul.mubr.f32.gmra.mxu0 %v237
    %v662 = vpop.f32.mrf.mxu0
    %v663 = vadd.f32 0.0, %v662
    %v664 = vpop.f32.mrf.mxu0
    %665 = vmatprep.mubr.f32.mxu0 0.0
    %666 = vmatmul.mubr.f32.gmra.mxu0 %v240
    %v667 = vpop.f32.mrf.mxu0
    %v668 = vadd.f32 0.0, %v667
    %v669 = vpop.f32.mrf.mxu0
    %670 = vmatprep.mubr.f32.mxu0 0.0
    %671 = vmatmul.mubr.f32.gmra.mxu0 %v243
    %v672 = vpop.f32.mrf.mxu0
    %v673 = vadd.f32 0.0, %v672
    %v674 = vpop.f32.mrf.mxu0
    %675 = vmatprep.mubr.f32.mxu0 0.0
    %676 = vmatmul.mubr.f32.gmra.mxu0 %v246
    %v677 = vpop.f32.mrf.mxu0
    %v678 = vadd.f32 0.0, %v677
    %v679 = vpop.f32.mrf.mxu0
    %680 = vmatprep.mubr.f32.mxu0 0.0
    %681 = vmatmul.mubr.f32.gmra.mxu0 %v249
    %v682 = vpop.f32.mrf.mxu0
    %v683 = vadd.f32 0.0, %v682
    %v684 = vpop.f32.mrf.mxu0
    %685 = vdwg.mxu0
    %686 = vmatprep.subr.mxu0 0.0
    %687 = vmatpush1.msra.mxu0 0.0
    %688 = vmatprep.subr.mxu0 0.0
    %689 = vmatpush1.msra.mxu0 0.0
    %690 = vmatprep.subr.mxu0 0.0
    %691 = vmatpush1.msra.mxu0 0.0
    %692 = vmatprep.subr.mxu0 0.0
    %693 = vmatpush1.msra.mxu0 0.0
    %694 = vmatprep.subr.mxu0 0.0
    %695 = vmatpush1.msra.mxu0 0.0
    %696 = vmatprep.subr.mxu0 0.0
    %697 = vmatpush1.msra.mxu0 0.0
    %698 = vmatprep.subr.mxu0 0.0
    %699 = vmatpush1.msra.mxu0 0.0
    %700 = vmatprep.subr.mxu0 0.0
    %701 = vmatpush1.msra.mxu0 0.0
    %702 = vmatprep.subr.mxu0 0.0
    %703 = vmatpush1.msra.mxu0 0.0
    %704 = vmatprep.subr.mxu0 0.0
    %705 = vmatpush1.msra.mxu0 0.0
    %706 = vmatprep.subr.mxu0 0.0
    %707 = vmatpush1.msra.mxu0 0.0
    %708 = vmatprep.subr.mxu0 0.0
    %709 = vmatpush1.msra.mxu0 0.0
    %710 = vmatprep.subr.mxu0 0.0
    %711 = vmatpush1.msra.mxu0 %v164
    %712 = vmatprep.subr.mxu0 0.0
    %713 = vmatpush1.msra.mxu0 %v163
    %714 = vmatprep.subr.mxu0 0.0
    %715 = vmatpush1.msra.mxu0 %v162
    %716 = vmatprep.subr.mxu0 0.0
    %717 = vmatpush1.msra.mxu0 %v161
    %718 = vmatprep.subr.mxu0 0.0
    %719 = vmatpush2.msra.mxu0 0.0
    %720 = vmatprep.subr.mxu0 0.0
    %721 = vmatpush2.msra.mxu0 0.0
    %722 = vmatprep.subr.mxu0 0.0
    %723 = vmatpush2.msra.mxu0 0.0
    %724 = vmatprep.subr.mxu0 0.0
    %725 = vmatpush2.msra.mxu0 0.0
    %726 = vmatprep.subr.mxu0 0.0
    %727 = vmatpush2.msra.mxu0 0.0
    %728 = vmatprep.subr.mxu0 0.0
    %729 = vmatpush2.msra.mxu0 0.0
    %730 = vmatprep.subr.mxu0 0.0
    %731 = vmatpush2.msra.mxu0 0.0
    %732 = vmatprep.subr.mxu0 0.0
    %733 = vmatpush2.msra.mxu0 0.0
    %734 = vmatprep.subr.mxu0 0.0
    %735 = vmatpush2.msra.mxu0 0.0
    %736 = vmatprep.subr.mxu0 0.0
    %737 = vmatpush2.msra.mxu0 0.0
    %738 = vmatprep.subr.mxu0 0.0
    %739 = vmatpush2.msra.mxu0 0.0
    %740 = vmatprep.subr.mxu0 0.0
    %741 = vmatpush2.msra.mxu0 0.0
    %742 = vmatprep.subr.mxu0 0.0
    %743 = vmatpush2.msra.mxu0 0.0
    %744 = vmatprep.subr.mxu0 0.0
    %745 = vmatpush2.msra.mxu0 0.0
    %746 = vmatprep.subr.mxu0 0.0
    %747 = vmatpush2.msra.mxu0 0.0
    %748 = vmatprep.subr.mxu0 0.0
    %749 = vmatpush2.msra.mxu0 0.0
    %750 = vmatprep.mubr.f32.mxu0 0.0
    %751 = vmatmul.mubr.f32.gmra.mxu0 %v204
    %v752 = vpop.f32.mrf.mxu0
    %v753 = vadd.f32 0.0, %v752
    %v754 = vpop.f32.mrf.mxu0
    %755 = vmatprep.mubr.f32.mxu0 0.0
    %756 = vmatmul.mubr.f32.gmra.mxu0 %v207
    %v757 = vpop.f32.mrf.mxu0
    %v758 = vadd.f32 0.0, %v757
    %v759 = vpop.f32.mrf.mxu0
    %760 = vmatprep.mubr.f32.mxu0 0.0
    %761 = vmatmul.mubr.f32.gmra.mxu0 %v210
    %v762 = vpop.f32.mrf.mxu0
    %v763 = vadd.f32 0.0, %v762
    %v764 = vpop.f32.mrf.mxu0
    %765 = vmatprep.mubr.f32.mxu0 0.0
    %766 = vmatmul.mubr.f32.gmra.mxu0 %v213
    %v767 = vpop.f32.mrf.mxu0
    %v768 = vadd.f32 0.0, %v767
    %v769 = vpop.f32.mrf.mxu0
    %770 = vmatprep.mubr.f32.mxu0 0.0
    %771 = vmatmul.mubr.f32.gmra.mxu0 %v216
    %v772 = vpop.f32.mrf.mxu0
    %v773 = vadd.f32 0.0, %v772
    %v774 = vpop.f32.mrf.mxu0
    %775 = vmatprep.mubr.f32.mxu0 0.0
    %776 = vmatmul.mubr.f32.gmra.mxu0 %v219
    %v777 = vpop.f32.mrf.mxu0
    %v778 = vadd.f32 0.0, %v777
    %v779 = vpop.f32.mrf.mxu0
    %780 = vmatprep.mubr.f32.mxu0 0.0
    %781 = vmatmul.mubr.f32.gmra.mxu0 %v222
    %v782 = vpop.f32.mrf.mxu0
    %v783 = vadd.f32 0.0, %v782
    %v784 = vpop.f32.mrf.mxu0
    %785 = vmatprep.mubr.f32.mxu0 0.0
    %786 = vmatmul.mubr.f32.gmra.mxu0 %v225
    %v787 = vpop.f32.mrf.mxu0
    %v788 = vadd.f32 0.0, %v787
    %v789 = vpop.f32.mrf.mxu0
    %790 = vmatprep.mubr.f32.mxu0 0.0
    %791 = vmatmul.mubr.f32.gmra.mxu0 %v228
    %v792 = vpop.f32.mrf.mxu0
    %v793 = vadd.f32 0.0, %v792
    %v794 = vpop.f32.mrf.mxu0
    %795 = vmatprep.mubr.f32.mxu0 0.0
    %796 = vmatmul.mubr.f32.gmra.mxu0 %v231
    %v797 = vpop.f32.mrf.mxu0
    %v798 = vadd.f32 0.0, %v797
    %v799 = vpop.f32.mrf.mxu0
    %800 = vmatprep.mubr.f32.mxu0 0.0
    %801 = vmatmul.mubr.f32.gmra.mxu0 %v234
    %v802 = vpop.f32.mrf.mxu0
    %v803 = vadd.f32 0.0, %v802
    %v804 = vpop.f32.mrf.mxu0
    %805 = vmatprep.mubr.f32.mxu0 0.0
    %806 = vmatmul.mubr.f32.gmra.mxu0 %v237
    %v807 = vpop.f32.mrf.mxu0
    %v808 = vadd.f32 0.0, %v807
    %v809 = vpop.f32.mrf.mxu0
    %810 = vmatprep.mubr.f32.mxu0 0.0
    %811 = vmatmul.mubr.f32.gmra.mxu0 %v240
    %v812 = vpop.f32.mrf.mxu0
    %v813 = vadd.f32 0.0, %v812
    %v814 = vpop.f32.mrf.mxu0
    %815 = vmatprep.mubr.f32.mxu0 0.0
    %816 = vmatmul.mubr.f32.gmra.mxu0 %v243
    %v817 = vpop.f32.mrf.mxu0
    %v818 = vadd.f32 0.0, %v817
    %v819 = vpop.f32.mrf.mxu0
    %820 = vmatprep.mubr.f32.mxu0 0.0
    %821 = vmatmul.mubr.f32.gmra.mxu0 %v246
    %v822 = vpop.f32.mrf.mxu0
    %v823 = vadd.f32 0.0, %v822
    %v824 = vpop.f32.mrf.mxu0
    %825 = vmatprep.mubr.f32.mxu0 0.0
    %826 = vmatmul.mubr.f32.gmra.mxu0 %v249
    %v827 = vpop.f32.mrf.mxu0
    %v828 = vadd.f32 0.0, %v827
    %v829 = vpop.f32.mrf.mxu0
    %830 = vdwg.mxu0
    %831 = vmatprep.subr.mxu0 0.0
    %832 = vmatpush1.msra.mxu0 %v393
    %833 = vmatprep.subr.mxu0 0.0
    %834 = vmatpush1.msra.mxu0 %v388
    %835 = vmatprep.subr.mxu0 0.0
    %836 = vmatpush1.msra.mxu0 %v383
    %837 = vmatprep.subr.mxu0 0.0
    %838 = vmatpush1.msra.mxu0 %v378
    %839 = vmatprep.subr.mxu0 0.0
    %840 = vmatpush1.msra.mxu0 %v373
    %841 = vmatprep.subr.mxu0 0.0
    %842 = vmatpush1.msra.mxu0 %v368
    %843 = vmatprep.subr.mxu0 0.0
    %844 = vmatpush1.msra.mxu0 %v363
    %845 = vmatprep.subr.mxu0 0.0
    %846 = vmatpush1.msra.mxu0 %v358
    %847 = vmatprep.subr.mxu0 0.0
    %848 = vmatpush1.msra.mxu0 %v353
    %849 = vmatprep.subr.mxu0 0.0
    %850 = vmatpush1.msra.mxu0 %v348
    %851 = vmatprep.subr.mxu0 0.0
    %852 = vmatpush1.msra.mxu0 %v343
    %853 = vmatprep.subr.mxu0 0.0
    %854 = vmatpush1.msra.mxu0 %v338
    %855 = vmatprep.subr.mxu0 0.0
    %856 = vmatpush1.msra.mxu0 %v333
    %857 = vmatprep.subr.mxu0 0.0
    %858 = vmatpush1.msra.mxu0 %v328
    %859 = vmatprep.subr.mxu0 0.0
    %860 = vmatpush1.msra.mxu0 %v323
    %861 = vmatprep.subr.mxu0 0.0
    %862 = vmatpush1.msra.mxu0 %v318
    %863 = vmatprep.subr.mxu0 0.0
    %864 = vmatpush2.msra.mxu0 %v538
    %865 = vmatprep.subr.mxu0 0.0
    %866 = vmatpush2.msra.mxu0 %v533
    %867 = vmatprep.subr.mxu0 0.0
    %868 = vmatpush2.msra.mxu0 %v528
    %869 = vmatprep.subr.mxu0 0.0
    %870 = vmatpush2.msra.mxu0 %v523
    %871 = vmatprep.subr.mxu0 0.0
    %872 = vmatpush2.msra.mxu0 %v518
    %873 = vmatprep.subr.mxu0 0.0
    %874 = vmatpush2.msra.mxu0 %v513
    %875 = vmatprep.subr.mxu0 0.0
    %876 = vmatpush2.msra.mxu0 %v508
    %877 = vmatprep.subr.mxu0 0.0
    %878 = vmatpush2.msra.mxu0 %v503
    %879 = vmatprep.subr.mxu0 0.0
    %880 = vmatpush2.msra.mxu0 %v498
    %881 = vmatprep.subr.mxu0 0.0
    %882 = vmatpush2.msra.mxu0 %v493
    %883 = vmatprep.subr.mxu0 0.0
    %884 = vmatpush2.msra.mxu0 %v488
    %885 = vmatprep.subr.mxu0 0.0
    %886 = vmatpush2.msra.mxu0 %v483
    %887 = vmatprep.subr.mxu0 0.0
    %888 = vmatpush2.msra.mxu0 %v478
    %889 = vmatprep.subr.mxu0 0.0
    %890 = vmatpush2.msra.mxu0 %v473
    %891 = vmatprep.subr.mxu0 0.0
    %892 = vmatpush2.msra.mxu0 %v468
    %893 = vmatprep.subr.mxu0 0.0
    %894 = vmatpush2.msra.mxu0 %v463
    %895 = vmatprep.mubr.f32.mxu0 %v70
    %896 = vmatmul.mubr.f32.gmra.mxu0 %v69
    %v897 = vpop.f32.mrf.mxu0
    %v898 = vadd.f32 %v133, %v897
    %v899 = vpop.f32.mrf.mxu0
    %900 = vmatprep.mubr.f32.mxu0 %v74
    %901 = vmatmul.mubr.f32.gmra.mxu0 %v73
    %v902 = vpop.f32.mrf.mxu0
    %v903 = vadd.f32 %v134, %v902
    %v904 = vpop.f32.mrf.mxu0
    %905 = vmatprep.mubr.f32.mxu0 %v78
    %906 = vmatmul.mubr.f32.gmra.mxu0 %v77
    %v907 = vpop.f32.mrf.mxu0
    %v908 = vadd.f32 %v135, %v907
    %v909 = vpop.f32.mrf.mxu0
    %910 = vmatprep.mubr.f32.mxu0 %v82
    %911 = vmatmul.mubr.f32.gmra.mxu0 %v81
    %v912 = vpop.f32.mrf.mxu0
    %v913 = vadd.f32 %v136, %v912
    %v914 = vpop.f32.mrf.mxu0
    %915 = vmatprep.mubr.f32.mxu0 %v86
    %916 = vmatmul.mubr.f32.gmra.mxu0 %v85
    %v917 = vpop.f32.mrf.mxu0
    %v918 = vadd.f32 %v137, %v917
    %v919 = vpop.f32.mrf.mxu0
    %920 = vmatprep.mubr.f32.mxu0 %v90
    %921 = vmatmul.mubr.f32.gmra.mxu0 %v89
    %v922 = vpop.f32.mrf.mxu0
    %v923 = vadd.f32 %v138, %v922
    %v924 = vpop.f32.mrf.mxu0
    %925 = vmatprep.mubr.f32.mxu0 %v94
    %926 = vmatmul.mubr.f32.gmra.mxu0 %v93
    %v927 = vpop.f32.mrf.mxu0
    %v928 = vadd.f32 %v139, %v927
    %v929 = vpop.f32.mrf.mxu0
    %930 = vmatprep.mubr.f32.mxu0 %v98
    %931 = vmatmul.mubr.f32.gmra.mxu0 %v97
    %v932 = vpop.f32.mrf.mxu0
    %v933 = vadd.f32 %v140, %v932
    %v934 = vpop.f32.mrf.mxu0
    %935 = vmatprep.mubr.f32.mxu0 %v102
    %936 = vmatmul.mubr.f32.gmra.mxu0 %v101
    %v937 = vpop.f32.mrf.mxu0
    %v938 = vadd.f32 %v141, %v937
    %v939 = vpop.f32.mrf.mxu0
    %940 = vmatprep.mubr.f32.mxu0 %v106
    %941 = vmatmul.mubr.f32.gmra.mxu0 %v105
    %v942 = vpop.f32.mrf.mxu0
    %v943 = vadd.f32 %v142, %v942
    %v944 = vpop.f32.mrf.mxu0
    %945 = vmatprep.mubr.f32.mxu0 %v110
    %946 = vmatmul.mubr.f32.gmra.mxu0 %v109
    %v947 = vpop.f32.mrf.mxu0
    %v948 = vadd.f32 %v143, %v947
    %v949 = vpop.f32.mrf.mxu0
    %950 = vmatprep.mubr.f32.mxu0 %v114
    %951 = vmatmul.mubr.f32.gmra.mxu0 %v113
    %v952 = vpop.f32.mrf.mxu0
    %v953 = vadd.f32 %v144, %v952
    %v954 = vpop.f32.mrf.mxu0
    %955 = vmatprep.mubr.f32.mxu0 %v118
    %956 = vmatmul.mubr.f32.gmra.mxu0 %v117
    %v957 = vpop.f32.mrf.mxu0
    %v958 = vadd.f32 %v145, %v957
    %v959 = vpop.f32.mrf.mxu0
    %960 = vmatprep.mubr.f32.mxu0 %v122
    %961 = vmatmul.mubr.f32.gmra.mxu0 %v121
    %v962 = vpop.f32.mrf.mxu0
    %v963 = vadd.f32 %v146, %v962
    %v964 = vpop.f32.mrf.mxu0
    %965 = vmatprep.mubr.f32.mxu0 %v126
    %966 = vmatmul.mubr.f32.gmra.mxu0 %v125
    %v967 = vpop.f32.mrf.mxu0
    %v968 = vadd.f32 %v147, %v967
    %v969 = vpop.f32.mrf.mxu0
    %970 = vmatprep.mubr.f32.mxu0 %v130
    %971 = vmatmul.mubr.f32.gmra.mxu0 %v129
    %v972 = vpop.f32.mrf.mxu0
    %v973 = vadd.f32 %v148, %v972
    %v974 = vpop.f32.mrf.mxu0
    %975 = vdwg.mxu0
    %976 = vmatprep.subr.mxu0 0.0
    %977 = vmatpush1.msra.mxu0 %v683
    %978 = vmatprep.subr.mxu0 0.0
    %979 = vmatpush1.msra.mxu0 %v678
    %980 = vmatprep.subr.mxu0 0.0
    %981 = vmatpush1.msra.mxu0 %v673
    %982 = vmatprep.subr.mxu0 0.0
    %983 = vmatpush1.msra.mxu0 %v668
    %984 = vmatprep.subr.mxu0 0.0
    %985 = vmatpush1.msra.mxu0 %v663
    %986 = vmatprep.subr.mxu0 0.0
    %987 = vmatpush1.msra.mxu0 %v658
    %988 = vmatprep.subr.mxu0 0.0
    %989 = vmatpush1.msra.mxu0 %v653
    %990 = vmatprep.subr.mxu0 0.0
    %991 = vmatpush1.msra.mxu0 %v648
    %992 = vmatprep.subr.mxu0 0.0
    %993 = vmatpush1.msra.mxu0 %v643
    %994 = vmatprep.subr.mxu0 0.0
    %995 = vmatpush1.msra.mxu0 %v638
    %996 = vmatprep.subr.mxu0 0.0
    %997 = vmatpush1.msra.mxu0 %v633
    %998 = vmatprep.subr.mxu0 0.0
    %999 = vmatpush1.msra.mxu0 %v628
    %1000 = vmatprep.subr.mxu0 0.0
    %1001 = vmatpush1.msra.mxu0 %v623
    %1002 = vmatprep.subr.mxu0 0.0
    %1003 = vmatpush1.msra.mxu0 %v618
    %1004 = vmatprep.subr.mxu0 0.0
    %1005 = vmatpush1.msra.mxu0 %v613
    %1006 = vmatprep.subr.mxu0 0.0
    %1007 = vmatpush1.msra.mxu0 %v608
    %1008 = vmatprep.subr.mxu0 0.0
    %1009 = vmatpush2.msra.mxu0 %v828
    %1010 = vmatprep.subr.mxu0 0.0
    %1011 = vmatpush2.msra.mxu0 %v823
    %1012 = vmatprep.subr.mxu0 0.0
    %1013 = vmatpush2.msra.mxu0 %v818
    %1014 = vmatprep.subr.mxu0 0.0
    %1015 = vmatpush2.msra.mxu0 %v813
    %1016 = vmatprep.subr.mxu0 0.0
    %1017 = vmatpush2.msra.mxu0 %v808
    %1018 = vmatprep.subr.mxu0 0.0
    %1019 = vmatpush2.msra.mxu0 %v803
    %1020 = vmatprep.subr.mxu0 0.0
    %1021 = vmatpush2.msra.mxu0 %v798
    %1022 = vmatprep.subr.mxu0 0.0
    %1023 = vmatpush2.msra.mxu0 %v793
    %1024 = vmatprep.subr.mxu0 0.0
    %1025 = vmatpush2.msra.mxu0 %v788
    %1026 = vmatprep.subr.mxu0 0.0
    %1027 = vmatpush2.msra.mxu0 %v783
    %1028 = vmatprep.subr.mxu0 0.0
    %1029 = vmatpush2.msra.mxu0 %v778
    %1030 = vmatprep.subr.mxu0 0.0
    %1031 = vmatpush2.msra.mxu0 %v773
    %1032 = vmatprep.subr.mxu0 0.0
    %1033 = vmatpush2.msra.mxu0 %v768
    %1034 = vmatprep.subr.mxu0 0.0
    %1035 = vmatpush2.msra.mxu0 %v763
    %1036 = vmatprep.subr.mxu0 0.0
    %1037 = vmatpush2.msra.mxu0 %v758
    %1038 = vmatprep.subr.mxu0 0.0
    %1039 = vmatpush2.msra.mxu0 %v753
    %1040 = vmatprep.mubr.f32.mxu0 %v72
    %1041 = vmatmul.mubr.f32.gmra.mxu0 %v71
    %v1042 = vpop.f32.mrf.mxu0
    %v1043 = vadd.f32 %v898, %v1042
    %v1044 = vpop.f32.mrf.mxu0
    %1045 = vmatprep.mubr.f32.mxu0 %v76
    %1046 = vmatmul.mubr.f32.gmra.mxu0 %v75
    %v1047 = vpop.f32.mrf.mxu0
    %v1048 = vadd.f32 %v903, %v1047
    %v1049 = vpop.f32.mrf.mxu0
    %1050 = vmatprep.mubr.f32.mxu0 %v80
    %1051 = vmatmul.mubr.f32.gmra.mxu0 %v79
    %v1052 = vpop.f32.mrf.mxu0
    %v1053 = vadd.f32 %v908, %v1052
    %v1054 = vpop.f32.mrf.mxu0
    %1055 = vmatprep.mubr.f32.mxu0 %v84
    %1056 = vmatmul.mubr.f32.gmra.mxu0 %v83
    %v1057 = vpop.f32.mrf.mxu0
    %v1058 = vadd.f32 %v913, %v1057
    %v1059 = vpop.f32.mrf.mxu0
    %1060 = vmatprep.mubr.f32.mxu0 %v88
    %1061 = vmatmul.mubr.f32.gmra.mxu0 %v87
    %v1062 = vpop.f32.mrf.mxu0
    %v1063 = vadd.f32 %v918, %v1062
    %v1064 = vpop.f32.mrf.mxu0
    %1065 = vmatprep.mubr.f32.mxu0 %v92
    %1066 = vmatmul.mubr.f32.gmra.mxu0 %v91
    %v1067 = vpop.f32.mrf.mxu0
    %v1068 = vadd.f32 %v923, %v1067
    %v1069 = vpop.f32.mrf.mxu0
    %1070 = vmatprep.mubr.f32.mxu0 %v96
    %1071 = vmatmul.mubr.f32.gmra.mxu0 %v95
    %v1072 = vpop.f32.mrf.mxu0
    %v1073 = vadd.f32 %v928, %v1072
    %v1074 = vpop.f32.mrf.mxu0
    %1075 = vmatprep.mubr.f32.mxu0 %v100
    %1076 = vmatmul.mubr.f32.gmra.mxu0 %v99
    %v1077 = vpop.f32.mrf.mxu0
    %v1078 = vadd.f32 %v933, %v1077
    %v1079 = vpop.f32.mrf.mxu0
    %1080 = vmatprep.mubr.f32.mxu0 %v104
    %1081 = vmatmul.mubr.f32.gmra.mxu0 %v103
    %v1082 = vpop.f32.mrf.mxu0
    %v1083 = vadd.f32 %v938, %v1082
    %v1084 = vpop.f32.mrf.mxu0
    %1085 = vmatprep.mubr.f32.mxu0 %v108
    %1086 = vmatmul.mubr.f32.gmra.mxu0 %v107
    %v1087 = vpop.f32.mrf.mxu0
    %v1088 = vadd.f32 %v943, %v1087
    %v1089 = vpop.f32.mrf.mxu0
    %1090 = vmatprep.mubr.f32.mxu0 %v112
    %1091 = vmatmul.mubr.f32.gmra.mxu0 %v111
    %v1092 = vpop.f32.mrf.mxu0
    %v1093 = vadd.f32 %v948, %v1092
    %v1094 = vpop.f32.mrf.mxu0
    %1095 = vmatprep.mubr.f32.mxu0 %v116
    %1096 = vmatmul.mubr.f32.gmra.mxu0 %v115
    %v1097 = vpop.f32.mrf.mxu0
    %v1098 = vadd.f32 %v953, %v1097
    %v1099 = vpop.f32.mrf.mxu0
    %1100 = vmatprep.mubr.f32.mxu0 %v120
    %1101 = vmatmul.mubr.f32.gmra.mxu0 %v119
    %v1102 = vpop.f32.mrf.mxu0
    %v1103 = vadd.f32 %v958, %v1102
    %v1104 = vpop.f32.mrf.mxu0
    %1105 = vmatprep.mubr.f32.mxu0 %v124
    %1106 = vmatmul.mubr.f32.gmra.mxu0 %v123
    %v1107 = vpop.f32.mrf.mxu0
    %v1108 = vadd.f32 %v963, %v1107
    %v1109 = vpop.f32.mrf.mxu0
    %1110 = vmatprep.mubr.f32.mxu0 %v128
    %1111 = vmatmul.mubr.f32.gmra.mxu0 %v127
    %v1112 = vpop.f32.mrf.mxu0
    %v1113 = vadd.f32 %v968, %v1112
    %v1114 = vpop.f32.mrf.mxu0
    %1115 = vmatprep.mubr.f32.mxu0 %v132
    %1116 = vmatmul.mubr.f32.gmra.mxu0 %v131
    %v1117 = vpop.f32.mrf.mxu0
    %v1118 = vadd.f32 %v973, %v1117
    %v1119 = vpop.f32.mrf.mxu0
    %1120 = vdwg.mxu0
    %1121 = vmatprep.subr.mxu0 0.0
    %1122 = vmatpush1.msra.mxu0 0.0
    %1123 = vmatprep.subr.mxu0 0.0
    %1124 = vmatpush1.msra.mxu0 0.0
    %1125 = vmatprep.subr.mxu0 0.0
    %1126 = vmatpush1.msra.mxu0 0.0
    %1127 = vmatprep.subr.mxu0 0.0
    %1128 = vmatpush1.msra.mxu0 0.0
    %1129 = vmatprep.subr.mxu0 0.0
    %1130 = vmatpush1.msra.mxu0 0.0
    %1131 = vmatprep.subr.mxu0 0.0
    %1132 = vmatpush1.msra.mxu0 0.0
    %1133 = vmatprep.subr.mxu0 0.0
    %1134 = vmatpush1.msra.mxu0 0.0
    %1135 = vmatprep.subr.mxu0 0.0
    %1136 = vmatpush1.msra.mxu0 0.0
    %1137 = vmatprep.subr.mxu0 0.0
    %1138 = vmatpush1.msra.mxu0 0.0
    %1139 = vmatprep.subr.mxu0 0.0
    %1140 = vmatpush1.msra.mxu0 0.0
    %1141 = vmatprep.subr.mxu0 0.0
    %1142 = vmatpush1.msra.mxu0 0.0
    %1143 = vmatprep.subr.mxu0 0.0
    %1144 = vmatpush1.msra.mxu0 0.0
    %1145 = vmatprep.subr.mxu0 0.0
    %1146 = vmatpush1.msra.mxu0 %v192
    %1147 = vmatprep.subr.mxu0 0.0
    %1148 = vmatpush1.msra.mxu0 %v191
    %1149 = vmatprep.subr.mxu0 0.0
    %1150 = vmatpush1.msra.mxu0 %v190
    %1151 = vmatprep.subr.mxu0 0.0
    %1152 = vmatpush1.msra.mxu0 %v189
    %1153 = vmatprep.subr.mxu0 0.0
    %1154 = vmatpush2.msra.mxu0 0.0
    %1155 = vmatprep.subr.mxu0 0.0
    %1156 = vmatpush2.msra.mxu0 0.0
    %1157 = vmatprep.subr.mxu0 0.0
    %1158 = vmatpush2.msra.mxu0 0.0
    %1159 = vmatprep.subr.mxu0 0.0
    %1160 = vmatpush2.msra.mxu0 0.0
    %1161 = vmatprep.subr.mxu0 0.0
    %1162 = vmatpush2.msra.mxu0 0.0
    %1163 = vmatprep.subr.mxu0 0.0
    %1164 = vmatpush2.msra.mxu0 0.0
    %1165 = vmatprep.subr.mxu0 0.0
    %1166 = vmatpush2.msra.mxu0 0.0
    %1167 = vmatprep.subr.mxu0 0.0
    %1168 = vmatpush2.msra.mxu0 0.0
    %1169 = vmatprep.subr.mxu0 0.0
    %1170 = vmatpush2.msra.mxu0 0.0
    %1171 = vmatprep.subr.mxu0 0.0
    %1172 = vmatpush2.msra.mxu0 0.0
    %1173 = vmatprep.subr.mxu0 0.0
    %1174 = vmatpush2.msra.mxu0 0.0
    %1175 = vmatprep.subr.mxu0 0.0
    %1176 = vmatpush2.msra.mxu0 0.0
    %1177 = vmatprep.subr.mxu0 0.0
    %1178 = vmatpush2.msra.mxu0 0.0
    %1179 = vmatprep.subr.mxu0 0.0
    %1180 = vmatpush2.msra.mxu0 0.0
    %1181 = vmatprep.subr.mxu0 0.0
    %1182 = vmatpush2.msra.mxu0 0.0
    %1183 = vmatprep.subr.mxu0 0.0
    %1184 = vmatpush2.msra.mxu0 0.0
    %1185 = vmatprep.mubr.f32.mxu0 0.0
    %1186 = vmatmul.mubr.f32.gmra.mxu0 %v204
    %v1187 = vpop.f32.mrf.mxu0
    %v1188 = vadd.f32 0.0, %v1187
    %v1189 = vpop.f32.mrf.mxu0
    %1190 = vmatprep.mubr.f32.mxu0 0.0
    %1191 = vmatmul.mubr.f32.gmra.mxu0 %v207
    %v1192 = vpop.f32.mrf.mxu0
    %v1193 = vadd.f32 0.0, %v1192
    %v1194 = vpop.f32.mrf.mxu0
    %1195 = vmatprep.mubr.f32.mxu0 0.0
    %1196 = vmatmul.mubr.f32.gmra.mxu0 %v210
    %v1197 = vpop.f32.mrf.mxu0
    %v1198 = vadd.f32 0.0, %v1197
    %v1199 = vpop.f32.mrf.mxu0
    %1200 = vmatprep.mubr.f32.mxu0 0.0
    %1201 = vmatmul.mubr.f32.gmra.mxu0 %v213
    %v1202 = vpop.f32.mrf.mxu0
    %v1203 = vadd.f32 0.0, %v1202
    %v1204 = vpop.f32.mrf.mxu0
    %1205 = vmatprep.mubr.f32.mxu0 0.0
    %1206 = vmatmul.mubr.f32.gmra.mxu0 %v216
    %v1207 = vpop.f32.mrf.mxu0
    %v1208 = vadd.f32 0.0, %v1207
    %v1209 = vpop.f32.mrf.mxu0
    %1210 = vmatprep.mubr.f32.mxu0 0.0
    %1211 = vmatmul.mubr.f32.gmra.mxu0 %v219
    %v1212 = vpop.f32.mrf.mxu0
    %v1213 = vadd.f32 0.0, %v1212
    %v1214 = vpop.f32.mrf.mxu0
    %1215 = vmatprep.mubr.f32.mxu0 0.0
    %1216 = vmatmul.mubr.f32.gmra.mxu0 %v222
    %v1217 = vpop.f32.mrf.mxu0
    %v1218 = vadd.f32 0.0, %v1217
    %v1219 = vpop.f32.mrf.mxu0
    %1220 = vmatprep.mubr.f32.mxu0 0.0
    %1221 = vmatmul.mubr.f32.gmra.mxu0 %v225
    %v1222 = vpop.f32.mrf.mxu0
    %v1223 = vadd.f32 0.0, %v1222
    %v1224 = vpop.f32.mrf.mxu0
    %1225 = vmatprep.mubr.f32.mxu0 0.0
    %1226 = vmatmul.mubr.f32.gmra.mxu0 %v228
    %v1227 = vpop.f32.mrf.mxu0
    %v1228 = vadd.f32 0.0, %v1227
    %v1229 = vpop.f32.mrf.mxu0
    %1230 = vmatprep.mubr.f32.mxu0 0.0
    %1231 = vmatmul.mubr.f32.gmra.mxu0 %v231
    %v1232 = vpop.f32.mrf.mxu0
    %v1233 = vadd.f32 0.0, %v1232
    %v1234 = vpop.f32.mrf.mxu0
    %1235 = vmatprep.mubr.f32.mxu0 0.0
    %1236 = vmatmul.mubr.f32.gmra.mxu0 %v234
    %v1237 = vpop.f32.mrf.mxu0
    %v1238 = vadd.f32 0.0, %v1237
    %v1239 = vpop.f32.mrf.mxu0
    %1240 = vmatprep.mubr.f32.mxu0 0.0
    %1241 = vmatmul.mubr.f32.gmra.mxu0 %v237
    %v1242 = vpop.f32.mrf.mxu0
    %v1243 = vadd.f32 0.0, %v1242
    %v1244 = vpop.f32.mrf.mxu0
    %1245 = vmatprep.mubr.f32.mxu0 0.0
    %1246 = vmatmul.mubr.f32.gmra.mxu0 %v240
    %v1247 = vpop.f32.mrf.mxu0
    %v1248 = vadd.f32 0.0, %v1247
    %v1249 = vpop.f32.mrf.mxu0
    %1250 = vmatprep.mubr.f32.mxu0 0.0
    %1251 = vmatmul.mubr.f32.gmra.mxu0 %v243
    %v1252 = vpop.f32.mrf.mxu0
    %v1253 = vadd.f32 0.0, %v1252
    %v1254 = vpop.f32.mrf.mxu0
    %1255 = vmatprep.mubr.f32.mxu0 0.0
    %1256 = vmatmul.mubr.f32.gmra.mxu0 %v246
    %v1257 = vpop.f32.mrf.mxu0
    %v1258 = vadd.f32 0.0, %v1257
    %v1259 = vpop.f32.mrf.mxu0
    %1260 = vmatprep.mubr.f32.mxu0 0.0
    %1261 = vmatmul.mubr.f32.gmra.mxu0 %v249
    %v1262 = vpop.f32.mrf.mxu0
    %v1263 = vadd.f32 0.0, %v1262
    %v1264 = vpop.f32.mrf.mxu0
    %1265 = vdwg.mxu0
    %vm1266 = vcmask 523264
    %v1268 = vsel %vm1266, %v1043, 0
    %v1271 = vsel %vm1266, %v1048, 0
    %v1274 = vsel %vm1266, %v1053, 0
    %v1277 = vsel %vm1266, %v1058, 0
    %v1280 = vsel %vm1266, %v1063, 0
    %v1283 = vsel %vm1266, %v1068, 0
    %v1286 = vsel %vm1266, %v1073, 0
    %v1289 = vsel %vm1266, %v1078, 0
    %v1292 = vsel %vm1266, %v1083, 0
    %v1295 = vsel %vm1266, %v1088, 0
    %v1298 = vsel %vm1266, %v1093, 0
    %v1301 = vsel %vm1266, %v1098, 0
    %v1304 = vsel %vm1266, %v1103, 0
    %v1307 = vsel %vm1266, %v1108, 0
    %v1310 = vsel %vm1266, %v1113, 0
    %v1313 = vsel %vm1266, %v1118, 0
    %1315 = vmatprep.subr.mxu0 0.0
    %1316 = vmatpush1.msra.mxu0 0.0
    %1317 = vmatprep.subr.mxu0 0.0
    %1318 = vmatpush1.msra.mxu0 0.0
    %1319 = vmatprep.subr.mxu0 0.0
    %1320 = vmatpush1.msra.mxu0 0.0
    %1321 = vmatprep.subr.mxu0 0.0
    %1322 = vmatpush1.msra.mxu0 0.0
    %1323 = vmatprep.subr.mxu0 0.0
    %1324 = vmatpush1.msra.mxu0 0.0
    %1325 = vmatprep.subr.mxu0 0.0
    %1326 = vmatpush1.msra.mxu0 0.0
    %1327 = vmatprep.subr.mxu0 0.0
    %1328 = vmatpush1.msra.mxu0 0.0
    %1329 = vmatprep.subr.mxu0 0.0
    %1330 = vmatpush1.msra.mxu0 0.0
    %1331 = vmatprep.subr.mxu0 0.0
    %1332 = vmatpush1.msra.mxu0 %v172
    %1333 = vmatprep.subr.mxu0 0.0
    %1334 = vmatpush1.msra.mxu0 %v171
    %1335 = vmatprep.subr.mxu0 0.0
    %1336 = vmatpush1.msra.mxu0 %v170
    %1337 = vmatprep.subr.mxu0 0.0
    %1338 = vmatpush1.msra.mxu0 %v169
    %1339 = vmatprep.subr.mxu0 0.0
    %1340 = vmatpush1.msra.mxu0 %v168
    %1341 = vmatprep.subr.mxu0 0.0
    %1342 = vmatpush1.msra.mxu0 %v167
    %1343 = vmatprep.subr.mxu0 0.0
    %1344 = vmatpush1.msra.mxu0 %v166
    %1345 = vmatprep.subr.mxu0 0.0
    %1346 = vmatpush1.msra.mxu0 %v165
    %1347 = vmatprep.subr.mxu0 0.0
    %1348 = vmatpush2.msra.mxu0 0.0
    %1349 = vmatprep.subr.mxu0 0.0
    %1350 = vmatpush2.msra.mxu0 0.0
    %1351 = vmatprep.subr.mxu0 0.0
    %1352 = vmatpush2.msra.mxu0 0.0
    %1353 = vmatprep.subr.mxu0 0.0
    %1354 = vmatpush2.msra.mxu0 0.0
    %1355 = vmatprep.subr.mxu0 0.0
    %1356 = vmatpush2.msra.mxu0 0.0
    %1357 = vmatprep.subr.mxu0 0.0
    %1358 = vmatpush2.msra.mxu0 0.0
    %1359 = vmatprep.subr.mxu0 0.0
    %1360 = vmatpush2.msra.mxu0 0.0
    %1361 = vmatprep.subr.mxu0 0.0
    %1362 = vmatpush2.msra.mxu0 0.0
    %1363 = vmatprep.subr.mxu0 0.0
    %1364 = vmatpush2.msra.mxu0 0.0
    %1365 = vmatprep.subr.mxu0 0.0
    %1366 = vmatpush2.msra.mxu0 0.0
    %1367 = vmatprep.subr.mxu0 0.0
    %1368 = vmatpush2.msra.mxu0 0.0
    %1369 = vmatprep.subr.mxu0 0.0
    %1370 = vmatpush2.msra.mxu0 0.0
    %1371 = vmatprep.subr.mxu0 0.0
    %1372 = vmatpush2.msra.mxu0 0.0
    %1373 = vmatprep.subr.mxu0 0.0
    %1374 = vmatpush2.msra.mxu0 0.0
    %1375 = vmatprep.subr.mxu0 0.0
    %1376 = vmatpush2.msra.mxu0 0.0
    %1377 = vmatprep.subr.mxu0 0.0
    %1378 = vmatpush2.msra.mxu0 0.0
    %1379 = vmatprep.mubr.f32.mxu0 0.0
    %1380 = vmatmul.mubr.f32.gmra.mxu0 %v1268
    %v1381 = vpop.f32.mrf.mxu0
    %v1382 = vadd.f32 %v1188, %v1381
    %v1383 = vpop.f32.mrf.mxu0
    %1384 = vmatprep.mubr.f32.mxu0 0.0
    %1385 = vmatmul.mubr.f32.gmra.mxu0 %v1271
    %v1386 = vpop.f32.mrf.mxu0
    %v1387 = vadd.f32 %v1193, %v1386
    %v1388 = vpop.f32.mrf.mxu0
    %1389 = vmatprep.mubr.f32.mxu0 0.0
    %1390 = vmatmul.mubr.f32.gmra.mxu0 %v1274
    %v1391 = vpop.f32.mrf.mxu0
    %v1392 = vadd.f32 %v1198, %v1391
    %v1393 = vpop.f32.mrf.mxu0
    %1394 = vmatprep.mubr.f32.mxu0 0.0
    %1395 = vmatmul.mubr.f32.gmra.mxu0 %v1277
    %v1396 = vpop.f32.mrf.mxu0
    %v1397 = vadd.f32 %v1203, %v1396
    %v1398 = vpop.f32.mrf.mxu0
    %1399 = vmatprep.mubr.f32.mxu0 0.0
    %1400 = vmatmul.mubr.f32.gmra.mxu0 %v1280
    %v1401 = vpop.f32.mrf.mxu0
    %v1402 = vadd.f32 %v1208, %v1401
    %v1403 = vpop.f32.mrf.mxu0
    %1404 = vmatprep.mubr.f32.mxu0 0.0
    %1405 = vmatmul.mubr.f32.gmra.mxu0 %v1283
    %v1406 = vpop.f32.mrf.mxu0
    %v1407 = vadd.f32 %v1213, %v1406
    %v1408 = vpop.f32.mrf.mxu0
    %1409 = vmatprep.mubr.f32.mxu0 0.0
    %1410 = vmatmul.mubr.f32.gmra.mxu0 %v1286
    %v1411 = vpop.f32.mrf.mxu0
    %v1412 = vadd.f32 %v1218, %v1411
    %v1413 = vpop.f32.mrf.mxu0
    %1414 = vmatprep.mubr.f32.mxu0 0.0
    %1415 = vmatmul.mubr.f32.gmra.mxu0 %v1289
    %v1416 = vpop.f32.mrf.mxu0
    %v1417 = vadd.f32 %v1223, %v1416
    %v1418 = vpop.f32.mrf.mxu0
    %1419 = vmatprep.mubr.f32.mxu0 0.0
    %1420 = vmatmul.mubr.f32.gmra.mxu0 %v1292
    %v1421 = vpop.f32.mrf.mxu0
    %v1422 = vadd.f32 %v1228, %v1421
    %v1423 = vpop.f32.mrf.mxu0
    %1424 = vmatprep.mubr.f32.mxu0 0.0
    %1425 = vmatmul.mubr.f32.gmra.mxu0 %v1295
    %v1426 = vpop.f32.mrf.mxu0
    %v1427 = vadd.f32 %v1233, %v1426
    %v1428 = vpop.f32.mrf.mxu0
    %1429 = vmatprep.mubr.f32.mxu0 0.0
    %1430 = vmatmul.mubr.f32.gmra.mxu0 %v1298
    %v1431 = vpop.f32.mrf.mxu0
    %v1432 = vadd.f32 %v1238, %v1431
    %v1433 = vpop.f32.mrf.mxu0
    %1434 = vmatprep.mubr.f32.mxu0 0.0
    %1435 = vmatmul.mubr.f32.gmra.mxu0 %v1301
    %v1436 = vpop.f32.mrf.mxu0
    %v1437 = vadd.f32 %v1243, %v1436
    %v1438 = vpop.f32.mrf.mxu0
    %1439 = vmatprep.mubr.f32.mxu0 0.0
    %1440 = vmatmul.mubr.f32.gmra.mxu0 %v1304
    %v1441 = vpop.f32.mrf.mxu0
    %v1442 = vadd.f32 %v1248, %v1441
    %v1443 = vpop.f32.mrf.mxu0
    %1444 = vmatprep.mubr.f32.mxu0 0.0
    %1445 = vmatmul.mubr.f32.gmra.mxu0 %v1307
    %v1446 = vpop.f32.mrf.mxu0
    %v1447 = vadd.f32 %v1253, %v1446
    %v1448 = vpop.f32.mrf.mxu0
    %1449 = vmatprep.mubr.f32.mxu0 0.0
    %1450 = vmatmul.mubr.f32.gmra.mxu0 %v1310
    %v1451 = vpop.f32.mrf.mxu0
    %v1452 = vadd.f32 %v1258, %v1451
    %v1453 = vpop.f32.mrf.mxu0
    %1454 = vmatprep.mubr.f32.mxu0 0.0
    %1455 = vmatmul.mubr.f32.gmra.mxu0 %v1313
    %v1456 = vpop.f32.mrf.mxu0
    %v1457 = vadd.f32 %v1263, %v1456
    %v1458 = vpop.f32.mrf.mxu0
    %1459 = vdwg.mxu0
    %v1460 = vlaneseq
    %v1461 = vshrl.u32 %v1460, 7
    %v1462 = vsub.s32 0, %v1461
    %v1463 = vrot.slane %v201, %v1462
    %v1464 = vadd.f32 %v1382, %v1463
    %v1465 = vadd.f32 %v1387, %v1463
    %v1466 = vadd.f32 %v1392, %v1463
    %v1467 = vadd.f32 %v1397, %v1463
    %v1468 = vadd.f32 %v1402, %v1463
    %v1469 = vadd.f32 %v1407, %v1463
    %v1470 = vadd.f32 %v1412, %v1463
    %v1471 = vadd.f32 %v1417, %v1463
    %v1472 = vadd.f32 %v1422, %v1463
    %v1473 = vadd.f32 %v1427, %v1463
    %v1474 = vadd.f32 %v1432, %v1463
    %v1475 = vadd.f32 %v1437, %v1463
    %v1476 = vadd.f32 %v1442, %v1463
    %v1477 = vadd.f32 %v1447, %v1463
    %v1478 = vadd.f32 %v1452, %v1463
    %v1479 = vadd.f32 %v1457, %v1463
    %v1480 = vxor.u32 %v1464, 2147483648
    %v1481 = vxor.u32 %v1465, 2147483648
    %v1482 = vxor.u32 %v1466, 2147483648
    %v1483 = vxor.u32 %v1467, 2147483648
    %v1484 = vxor.u32 %v1468, 2147483648
    %v1485 = vxor.u32 %v1469, 2147483648
    %v1486 = vxor.u32 %v1470, 2147483648
    %v1487 = vxor.u32 %v1471, 2147483648
    %v1488 = vxor.u32 %v1472, 2147483648
    %v1489 = vxor.u32 %v1473, 2147483648
    %v1490 = vxor.u32 %v1474, 2147483648
    %v1491 = vxor.u32 %v1475, 2147483648
    %v1492 = vxor.u32 %v1476, 2147483648
    %v1493 = vxor.u32 %v1477, 2147483648
    %v1494 = vxor.u32 %v1478, 2147483648
    %v1495 = vxor.u32 %v1479, 2147483648
    %v1496 = vmul.f32 %v1480, 1.442695
    %v1497 = vpow.pop %v1496
    %v1498 = vmul.f32 %v1481, 1.442695
    %v1499 = vpow.pop %v1498
    %v1500 = vmul.f32 %v1482, 1.442695
    %v1501 = vpow.pop %v1500
    %v1502 = vmul.f32 %v1483, 1.442695
    %v1503 = vpow.pop %v1502
    %v1504 = vmul.f32 %v1484, 1.442695
    %v1505 = vpow.pop %v1504
    %v1506 = vmul.f32 %v1485, 1.442695
    %v1507 = vpow.pop %v1506
    %v1508 = vmul.f32 %v1486, 1.442695
    %v1509 = vpow.pop %v1508
    %v1510 = vmul.f32 %v1487, 1.442695
    %v1511 = vpow.pop %v1510
    %v1512 = vmul.f32 %v1488, 1.442695
    %v1513 = vpow.pop %v1512
    %v1514 = vmul.f32 %v1489, 1.442695
    %v1515 = vpow.pop %v1514
    %v1516 = vmul.f32 %v1490, 1.442695
    %v1517 = vpow.pop %v1516
    %v1518 = vmul.f32 %v1491, 1.442695
    %v1519 = vpow.pop %v1518
    %v1520 = vmul.f32 %v1492, 1.442695
    %v1521 = vpow.pop %v1520
    %v1522 = vmul.f32 %v1493, 1.442695
    %v1523 = vpow.pop %v1522
    %v1524 = vmul.f32 %v1494, 1.442695
    %v1525 = vpow.pop %v1524
    %v1526 = vmul.f32 %v1495, 1.442695
    %v1527 = vpow.pop %v1526
    %v1528 = vadd.f32 %v1497, 1.0
    %v1529 = vadd.f32 %v1499, 1.0
    %v1530 = vadd.f32 %v1501, 1.0
    %v1531 = vadd.f32 %v1503, 1.0
    %v1532 = vadd.f32 %v1505, 1.0
    %v1533 = vadd.f32 %v1507, 1.0
    %v1534 = vadd.f32 %v1509, 1.0
    %v1535 = vadd.f32 %v1511, 1.0
    %v1536 = vadd.f32 %v1513, 1.0
    %v1537 = vadd.f32 %v1515, 1.0
    %v1538 = vadd.f32 %v1517, 1.0
    %v1539 = vadd.f32 %v1519, 1.0
    %v1540 = vadd.f32 %v1521, 1.0
    %v1541 = vadd.f32 %v1523, 1.0
    %v1542 = vadd.f32 %v1525, 1.0
    %v1543 = vadd.f32 %v1527, 1.0
    %v1544 = vrcp.pop %v1528
    %v1545 = vmul.f32 1.0, %v1544
    %v1546 = vrcp.pop %v1529
    %v1547 = vmul.f32 1.0, %v1546
    %v1548 = vrcp.pop %v1530
    %v1549 = vmul.f32 1.0, %v1548
    %v1550 = vrcp.pop %v1531
    %v1551 = vmul.f32 1.0, %v1550
    %v1552 = vrcp.pop %v1532
    %v1553 = vmul.f32 1.0, %v1552
    %v1554 = vrcp.pop %v1533
    %v1555 = vmul.f32 1.0, %v1554
    %v1556 = vrcp.pop %v1534
    %v1557 = vmul.f32 1.0, %v1556
    %v1558 = vrcp.pop %v1535
    %v1559 = vmul.f32 1.0, %v1558
    %v1560 = vrcp.pop %v1536
    %v1561 = vmul.f32 1.0, %v1560
    %v1562 = vrcp.pop %v1537
    %v1563 = vmul.f32 1.0, %v1562
    %v1564 = vrcp.pop %v1538
    %v1565 = vmul.f32 1.0, %v1564
    %v1566 = vrcp.pop %v1539
    %v1567 = vmul.f32 1.0, %v1566
    %v1568 = vrcp.pop %v1540
    %v1569 = vmul.f32 1.0, %v1568
    %v1570 = vrcp.pop %v1541
    %v1571 = vmul.f32 1.0, %v1570
    %v1572 = vrcp.pop %v1542
    %v1573 = vmul.f32 1.0, %v1572
    %v1574 = vrcp.pop %v1543
    %v1575 = vmul.f32 1.0, %v1574
    %1576 = vmatprep.subr.mxu0 0.0
    %1577 = vmatpush1.msra.mxu0 0.0
    %1578 = vmatprep.subr.mxu0 0.0
    %1579 = vmatpush1.msra.mxu0 0.0
    %1580 = vmatprep.subr.mxu0 0.0
    %1581 = vmatpush1.msra.mxu0 0.0
    %1582 = vmatprep.subr.mxu0 0.0
    %1583 = vmatpush1.msra.mxu0 0.0
    %1584 = vmatprep.subr.mxu0 0.0
    %1585 = vmatpush1.msra.mxu0 0.0
    %1586 = vmatprep.subr.mxu0 0.0
    %1587 = vmatpush1.msra.mxu0 0.0
    %1588 = vmatprep.subr.mxu0 0.0
    %1589 = vmatpush1.msra.mxu0 0.0
    %1590 = vmatprep.subr.mxu0 0.0
    %1591 = vmatpush1.msra.mxu0 0.0
    %1592 = vmatprep.subr.mxu0 0.0
    %1593 = vmatpush1.msra.mxu0 0.0
    %1594 = vmatprep.subr.mxu0 0.0
    %1595 = vmatpush1.msra.mxu0 0.0
    %1596 = vmatprep.subr.mxu0 0.0
    %1597 = vmatpush1.msra.mxu0 0.0
    %1598 = vmatprep.subr.mxu0 0.0
    %1599 = vmatpush1.msra.mxu0 0.0
    %1600 = vmatprep.subr.mxu0 0.0
    %1601 = vmatpush1.msra.mxu0 %v196
    %1602 = vmatprep.subr.mxu0 0.0
    %1603 = vmatpush1.msra.mxu0 %v195
    %1604 = vmatprep.subr.mxu0 0.0
    %1605 = vmatpush1.msra.mxu0 %v194
    %1606 = vmatprep.subr.mxu0 0.0
    %1607 = vmatpush1.msra.mxu0 %v193
    %1608 = vmatprep.subr.mxu0 0.0
    %1609 = vmatpush2.msra.mxu0 0.0
    %1610 = vmatprep.subr.mxu0 0.0
    %1611 = vmatpush2.msra.mxu0 0.0
    %1612 = vmatprep.subr.mxu0 0.0
    %1613 = vmatpush2.msra.mxu0 0.0
    %1614 = vmatprep.subr.mxu0 0.0
    %1615 = vmatpush2.msra.mxu0 0.0
    %1616 = vmatprep.subr.mxu0 0.0
    %1617 = vmatpush2.msra.mxu0 0.0
    %1618 = vmatprep.subr.mxu0 0.0
    %1619 = vmatpush2.msra.mxu0 0.0
    %1620 = vmatprep.subr.mxu0 0.0
    %1621 = vmatpush2.msra.mxu0 0.0
    %1622 = vmatprep.subr.mxu0 0.0
    %1623 = vmatpush2.msra.mxu0 0.0
    %1624 = vmatprep.subr.mxu0 0.0
    %1625 = vmatpush2.msra.mxu0 0.0
    %1626 = vmatprep.subr.mxu0 0.0
    %1627 = vmatpush2.msra.mxu0 0.0
    %1628 = vmatprep.subr.mxu0 0.0
    %1629 = vmatpush2.msra.mxu0 0.0
    %1630 = vmatprep.subr.mxu0 0.0
    %1631 = vmatpush2.msra.mxu0 0.0
    %1632 = vmatprep.subr.mxu0 0.0
    %1633 = vmatpush2.msra.mxu0 0.0
    %1634 = vmatprep.subr.mxu0 0.0
    %1635 = vmatpush2.msra.mxu0 0.0
    %1636 = vmatprep.subr.mxu0 0.0
    %1637 = vmatpush2.msra.mxu0 0.0
    %1638 = vmatprep.subr.mxu0 0.0
    %1639 = vmatpush2.msra.mxu0 0.0
    %1640 = vmatprep.mubr.f32.mxu0 0.0
    %1641 = vmatmul.mubr.f32.gmra.mxu0 %v204
    %v1642 = vpop.f32.mrf.mxu0
    %v1643 = vadd.f32 0.0, %v1642
    %v1644 = vpop.f32.mrf.mxu0
    %1645 = vmatprep.mubr.f32.mxu0 0.0
    %1646 = vmatmul.mubr.f32.gmra.mxu0 %v207
    %v1647 = vpop.f32.mrf.mxu0
    %v1648 = vadd.f32 0.0, %v1647
    %v1649 = vpop.f32.mrf.mxu0
    %1650 = vmatprep.mubr.f32.mxu0 0.0
    %1651 = vmatmul.mubr.f32.gmra.mxu0 %v210
    %v1652 = vpop.f32.mrf.mxu0
    %v1653 = vadd.f32 0.0, %v1652
    %v1654 = vpop.f32.mrf.mxu0
    %1655 = vmatprep.mubr.f32.mxu0 0.0
    %1656 = vmatmul.mubr.f32.gmra.mxu0 %v213
    %v1657 = vpop.f32.mrf.mxu0
    %v1658 = vadd.f32 0.0, %v1657
    %v1659 = vpop.f32.mrf.mxu0
    %1660 = vmatprep.mubr.f32.mxu0 0.0
    %1661 = vmatmul.mubr.f32.gmra.mxu0 %v216
    %v1662 = vpop.f32.mrf.mxu0
    %v1663 = vadd.f32 0.0, %v1662
    %v1664 = vpop.f32.mrf.mxu0
    %1665 = vmatprep.mubr.f32.mxu0 0.0
    %1666 = vmatmul.mubr.f32.gmra.mxu0 %v219
    %v1667 = vpop.f32.mrf.mxu0
    %v1668 = vadd.f32 0.0, %v1667
    %v1669 = vpop.f32.mrf.mxu0
    %1670 = vmatprep.mubr.f32.mxu0 0.0
    %1671 = vmatmul.mubr.f32.gmra.mxu0 %v222
    %v1672 = vpop.f32.mrf.mxu0
    %v1673 = vadd.f32 0.0, %v1672
    %v1674 = vpop.f32.mrf.mxu0
    %1675 = vmatprep.mubr.f32.mxu0 0.0
    %1676 = vmatmul.mubr.f32.gmra.mxu0 %v225
    %v1677 = vpop.f32.mrf.mxu0
    %v1678 = vadd.f32 0.0, %v1677
    %v1679 = vpop.f32.mrf.mxu0
    %1680 = vmatprep.mubr.f32.mxu0 0.0
    %1681 = vmatmul.mubr.f32.gmra.mxu0 %v228
    %v1682 = vpop.f32.mrf.mxu0
    %v1683 = vadd.f32 0.0, %v1682
    %v1684 = vpop.f32.mrf.mxu0
    %1685 = vmatprep.mubr.f32.mxu0 0.0
    %1686 = vmatmul.mubr.f32.gmra.mxu0 %v231
    %v1687 = vpop.f32.mrf.mxu0
    %v1688 = vadd.f32 0.0, %v1687
    %v1689 = vpop.f32.mrf.mxu0
    %1690 = vmatprep.mubr.f32.mxu0 0.0
    %1691 = vmatmul.mubr.f32.gmra.mxu0 %v234
    %v1692 = vpop.f32.mrf.mxu0
    %v1693 = vadd.f32 0.0, %v1692
    %v1694 = vpop.f32.mrf.mxu0
    %1695 = vmatprep.mubr.f32.mxu0 0.0
    %1696 = vmatmul.mubr.f32.gmra.mxu0 %v237
    %v1697 = vpop.f32.mrf.mxu0
    %v1698 = vadd.f32 0.0, %v1697
    %v1699 = vpop.f32.mrf.mxu0
    %1700 = vmatprep.mubr.f32.mxu0 0.0
    %1701 = vmatmul.mubr.f32.gmra.mxu0 %v240
    %v1702 = vpop.f32.mrf.mxu0
    %v1703 = vadd.f32 0.0, %v1702
    %v1704 = vpop.f32.mrf.mxu0
    %1705 = vmatprep.mubr.f32.mxu0 0.0
    %1706 = vmatmul.mubr.f32.gmra.mxu0 %v243
    %v1707 = vpop.f32.mrf.mxu0
    %v1708 = vadd.f32 0.0, %v1707
    %v1709 = vpop.f32.mrf.mxu0
    %1710 = vmatprep.mubr.f32.mxu0 0.0
    %1711 = vmatmul.mubr.f32.gmra.mxu0 %v246
    %v1712 = vpop.f32.mrf.mxu0
    %v1713 = vadd.f32 0.0, %v1712
    %v1714 = vpop.f32.mrf.mxu0
    %1715 = vmatprep.mubr.f32.mxu0 0.0
    %1716 = vmatmul.mubr.f32.gmra.mxu0 %v249
    %v1717 = vpop.f32.mrf.mxu0
    %v1718 = vadd.f32 0.0, %v1717
    %v1719 = vpop.f32.mrf.mxu0
    %1720 = vdwg.mxu0
    %1721 = vmatprep.subr.mxu0 0.0
    %1722 = vmatpush1.msra.mxu0 0.0
    %1723 = vmatprep.subr.mxu0 0.0
    %1724 = vmatpush1.msra.mxu0 0.0
    %1725 = vmatprep.subr.mxu0 0.0
    %1726 = vmatpush1.msra.mxu0 0.0
    %1727 = vmatprep.subr.mxu0 0.0
    %1728 = vmatpush1.msra.mxu0 0.0
    %1729 = vmatprep.subr.mxu0 0.0
    %1730 = vmatpush1.msra.mxu0 0.0
    %1731 = vmatprep.subr.mxu0 0.0
    %1732 = vmatpush1.msra.mxu0 0.0
    %1733 = vmatprep.subr.mxu0 0.0
    %1734 = vmatpush1.msra.mxu0 0.0
    %1735 = vmatprep.subr.mxu0 0.0
    %1736 = vmatpush1.msra.mxu0 0.0
    %1737 = vmatprep.subr.mxu0 0.0
    %1738 = vmatpush1.msra.mxu0 %v180
    %1739 = vmatprep.subr.mxu0 0.0
    %1740 = vmatpush1.msra.mxu0 %v179
    %1741 = vmatprep.subr.mxu0 0.0
    %1742 = vmatpush1.msra.mxu0 %v178
    %1743 = vmatprep.subr.mxu0 0.0
    %1744 = vmatpush1.msra.mxu0 %v177
    %1745 = vmatprep.subr.mxu0 0.0
    %1746 = vmatpush1.msra.mxu0 %v176
    %1747 = vmatprep.subr.mxu0 0.0
    %1748 = vmatpush1.msra.mxu0 %v175
    %1749 = vmatprep.subr.mxu0 0.0
    %1750 = vmatpush1.msra.mxu0 %v174
    %1751 = vmatprep.subr.mxu0 0.0
    %1752 = vmatpush1.msra.mxu0 %v173
    %1753 = vmatprep.subr.mxu0 0.0
    %1754 = vmatpush2.msra.mxu0 0.0
    %1755 = vmatprep.subr.mxu0 0.0
    %1756 = vmatpush2.msra.mxu0 0.0
    %1757 = vmatprep.subr.mxu0 0.0
    %1758 = vmatpush2.msra.mxu0 0.0
    %1759 = vmatprep.subr.mxu0 0.0
    %1760 = vmatpush2.msra.mxu0 0.0
    %1761 = vmatprep.subr.mxu0 0.0
    %1762 = vmatpush2.msra.mxu0 0.0
    %1763 = vmatprep.subr.mxu0 0.0
    %1764 = vmatpush2.msra.mxu0 0.0
    %1765 = vmatprep.subr.mxu0 0.0
    %1766 = vmatpush2.msra.mxu0 0.0
    %1767 = vmatprep.subr.mxu0 0.0
    %1768 = vmatpush2.msra.mxu0 0.0
    %1769 = vmatprep.subr.mxu0 0.0
    %1770 = vmatpush2.msra.mxu0 0.0
    %1771 = vmatprep.subr.mxu0 0.0
    %1772 = vmatpush2.msra.mxu0 0.0
    %1773 = vmatprep.subr.mxu0 0.0
    %1774 = vmatpush2.msra.mxu0 0.0
    %1775 = vmatprep.subr.mxu0 0.0
    %1776 = vmatpush2.msra.mxu0 0.0
    %1777 = vmatprep.subr.mxu0 0.0
    %1778 = vmatpush2.msra.mxu0 0.0
    %1779 = vmatprep.subr.mxu0 0.0
    %1780 = vmatpush2.msra.mxu0 0.0
    %1781 = vmatprep.subr.mxu0 0.0
    %1782 = vmatpush2.msra.mxu0 0.0
    %1783 = vmatprep.subr.mxu0 0.0
    %1784 = vmatpush2.msra.mxu0 0.0
    %1785 = vmatprep.mubr.f32.mxu0 0.0
    %1786 = vmatmul.mubr.f32.gmra.mxu0 %v1268
    %v1787 = vpop.f32.mrf.mxu0
    %v1788 = vadd.f32 %v1643, %v1787
    %v1789 = vpop.f32.mrf.mxu0
    %1790 = vmatprep.mubr.f32.mxu0 0.0
    %1791 = vmatmul.mubr.f32.gmra.mxu0 %v1271
    %v1792 = vpop.f32.mrf.mxu0
    %v1793 = vadd.f32 %v1648, %v1792
    %v1794 = vpop.f32.mrf.mxu0
    %1795 = vmatprep.mubr.f32.mxu0 0.0
    %1796 = vmatmul.mubr.f32.gmra.mxu0 %v1274
    %v1797 = vpop.f32.mrf.mxu0
    %v1798 = vadd.f32 %v1653, %v1797
    %v1799 = vpop.f32.mrf.mxu0
    %1800 = vmatprep.mubr.f32.mxu0 0.0
    %1801 = vmatmul.mubr.f32.gmra.mxu0 %v1277
    %v1802 = vpop.f32.mrf.mxu0
    %v1803 = vadd.f32 %v1658, %v1802
    %v1804 = vpop.f32.mrf.mxu0
    %1805 = vmatprep.mubr.f32.mxu0 0.0
    %1806 = vmatmul.mubr.f32.gmra.mxu0 %v1280
    %v1807 = vpop.f32.mrf.mxu0
    %v1808 = vadd.f32 %v1663, %v1807
    %v1809 = vpop.f32.mrf.mxu0
    %1810 = vmatprep.mubr.f32.mxu0 0.0
    %1811 = vmatmul.mubr.f32.gmra.mxu0 %v1283
    %v1812 = vpop.f32.mrf.mxu0
    %v1813 = vadd.f32 %v1668, %v1812
    %v1814 = vpop.f32.mrf.mxu0
    %1815 = vmatprep.mubr.f32.mxu0 0.0
    %1816 = vmatmul.mubr.f32.gmra.mxu0 %v1286
    %v1817 = vpop.f32.mrf.mxu0
    %v1818 = vadd.f32 %v1673, %v1817
    %v1819 = vpop.f32.mrf.mxu0
    %1820 = vmatprep.mubr.f32.mxu0 0.0
    %1821 = vmatmul.mubr.f32.gmra.mxu0 %v1289
    %v1822 = vpop.f32.mrf.mxu0
    %v1823 = vadd.f32 %v1678, %v1822
    %v1824 = vpop.f32.mrf.mxu0
    %1825 = vmatprep.mubr.f32.mxu0 0.0
    %1826 = vmatmul.mubr.f32.gmra.mxu0 %v1292
    %v1827 = vpop.f32.mrf.mxu0
    %v1828 = vadd.f32 %v1683, %v1827
    %v1829 = vpop.f32.mrf.mxu0
    %1830 = vmatprep.mubr.f32.mxu0 0.0
    %1831 = vmatmul.mubr.f32.gmra.mxu0 %v1295
    %v1832 = vpop.f32.mrf.mxu0
    %v1833 = vadd.f32 %v1688, %v1832
    %v1834 = vpop.f32.mrf.mxu0
    %1835 = vmatprep.mubr.f32.mxu0 0.0
    %1836 = vmatmul.mubr.f32.gmra.mxu0 %v1298
    %v1837 = vpop.f32.mrf.mxu0
    %v1838 = vadd.f32 %v1693, %v1837
    %v1839 = vpop.f32.mrf.mxu0
    %1840 = vmatprep.mubr.f32.mxu0 0.0
    %1841 = vmatmul.mubr.f32.gmra.mxu0 %v1301
    %v1842 = vpop.f32.mrf.mxu0
    %v1843 = vadd.f32 %v1698, %v1842
    %v1844 = vpop.f32.mrf.mxu0
    %1845 = vmatprep.mubr.f32.mxu0 0.0
    %1846 = vmatmul.mubr.f32.gmra.mxu0 %v1304
    %v1847 = vpop.f32.mrf.mxu0
    %v1848 = vadd.f32 %v1703, %v1847
    %v1849 = vpop.f32.mrf.mxu0
    %1850 = vmatprep.mubr.f32.mxu0 0.0
    %1851 = vmatmul.mubr.f32.gmra.mxu0 %v1307
    %v1852 = vpop.f32.mrf.mxu0
    %v1853 = vadd.f32 %v1708, %v1852
    %v1854 = vpop.f32.mrf.mxu0
    %1855 = vmatprep.mubr.f32.mxu0 0.0
    %1856 = vmatmul.mubr.f32.gmra.mxu0 %v1310
    %v1857 = vpop.f32.mrf.mxu0
    %v1858 = vadd.f32 %v1713, %v1857
    %v1859 = vpop.f32.mrf.mxu0
    %1860 = vmatprep.mubr.f32.mxu0 0.0
    %1861 = vmatmul.mubr.f32.gmra.mxu0 %v1313
    %v1862 = vpop.f32.mrf.mxu0
    %v1863 = vadd.f32 %v1718, %v1862
    %v1864 = vpop.f32.mrf.mxu0
    %1865 = vdwg.mxu0
    %v1866 = vlaneseq
    %v1867 = vshrl.u32 %v1866, 7
    %v1868 = vsub.s32 1, %v1867
    %v1869 = vrot.slane %v201, %v1868
    %v1870 = vadd.f32 %v1788, %v1869
    %v1871 = vadd.f32 %v1793, %v1869
    %v1872 = vadd.f32 %v1798, %v1869
    %v1873 = vadd.f32 %v1803, %v1869
    %v1874 = vadd.f32 %v1808, %v1869
    %v1875 = vadd.f32 %v1813, %v1869
    %v1876 = vadd.f32 %v1818, %v1869
    %v1877 = vadd.f32 %v1823, %v1869
    %v1878 = vadd.f32 %v1828, %v1869
    %v1879 = vadd.f32 %v1833, %v1869
    %v1880 = vadd.f32 %v1838, %v1869
    %v1881 = vadd.f32 %v1843, %v1869
    %v1882 = vadd.f32 %v1848, %v1869
    %v1883 = vadd.f32 %v1853, %v1869
    %v1884 = vadd.f32 %v1858, %v1869
    %v1885 = vadd.f32 %v1863, %v1869
    %v1886 = vxor.u32 %v1870, 2147483648
    %v1887 = vxor.u32 %v1871, 2147483648
    %v1888 = vxor.u32 %v1872, 2147483648
    %v1889 = vxor.u32 %v1873, 2147483648
    %v1890 = vxor.u32 %v1874, 2147483648
    %v1891 = vxor.u32 %v1875, 2147483648
    %v1892 = vxor.u32 %v1876, 2147483648
    %v1893 = vxor.u32 %v1877, 2147483648
    %v1894 = vxor.u32 %v1878, 2147483648
    %v1895 = vxor.u32 %v1879, 2147483648
    %v1896 = vxor.u32 %v1880, 2147483648
    %v1897 = vxor.u32 %v1881, 2147483648
    %v1898 = vxor.u32 %v1882, 2147483648
    %v1899 = vxor.u32 %v1883, 2147483648
    %v1900 = vxor.u32 %v1884, 2147483648
    %v1901 = vxor.u32 %v1885, 2147483648
    %v1902 = vmul.f32 %v1886, 1.442695
    %v1903 = vpow.pop %v1902
    %v1904 = vmul.f32 %v1887, 1.442695
    %v1905 = vpow.pop %v1904
    %v1906 = vmul.f32 %v1888, 1.442695
    %v1907 = vpow.pop %v1906
    %v1908 = vmul.f32 %v1889, 1.442695
    %v1909 = vpow.pop %v1908
    %v1910 = vmul.f32 %v1890, 1.442695
    %v1911 = vpow.pop %v1910
    %v1912 = vmul.f32 %v1891, 1.442695
    %v1913 = vpow.pop %v1912
    %v1914 = vmul.f32 %v1892, 1.442695
    %v1915 = vpow.pop %v1914
    %v1916 = vmul.f32 %v1893, 1.442695
    %v1917 = vpow.pop %v1916
    %v1918 = vmul.f32 %v1894, 1.442695
    %v1919 = vpow.pop %v1918
    %v1920 = vmul.f32 %v1895, 1.442695
    %v1921 = vpow.pop %v1920
    %v1922 = vmul.f32 %v1896, 1.442695
    %v1923 = vpow.pop %v1922
    %v1924 = vmul.f32 %v1897, 1.442695
    %v1925 = vpow.pop %v1924
    %v1926 = vmul.f32 %v1898, 1.442695
    %v1927 = vpow.pop %v1926
    %v1928 = vmul.f32 %v1899, 1.442695
    %v1929 = vpow.pop %v1928
    %v1930 = vmul.f32 %v1900, 1.442695
    %v1931 = vpow.pop %v1930
    %v1932 = vmul.f32 %v1901, 1.442695
    %v1933 = vpow.pop %v1932
    %v1934 = vadd.f32 %v1903, 1.0
    %v1935 = vadd.f32 %v1905, 1.0
    %v1936 = vadd.f32 %v1907, 1.0
    %v1937 = vadd.f32 %v1909, 1.0
    %v1938 = vadd.f32 %v1911, 1.0
    %v1939 = vadd.f32 %v1913, 1.0
    %v1940 = vadd.f32 %v1915, 1.0
    %v1941 = vadd.f32 %v1917, 1.0
    %v1942 = vadd.f32 %v1919, 1.0
    %v1943 = vadd.f32 %v1921, 1.0
    %v1944 = vadd.f32 %v1923, 1.0
    %v1945 = vadd.f32 %v1925, 1.0
    %v1946 = vadd.f32 %v1927, 1.0
    %v1947 = vadd.f32 %v1929, 1.0
    %v1948 = vadd.f32 %v1931, 1.0
    %v1949 = vadd.f32 %v1933, 1.0
    %v1950 = vrcp.pop %v1934
    %v1951 = vmul.f32 1.0, %v1950
    %v1952 = vrcp.pop %v1935
    %v1953 = vmul.f32 1.0, %v1952
    %v1954 = vrcp.pop %v1936
    %v1955 = vmul.f32 1.0, %v1954
    %v1956 = vrcp.pop %v1937
    %v1957 = vmul.f32 1.0, %v1956
    %v1958 = vrcp.pop %v1938
    %v1959 = vmul.f32 1.0, %v1958
    %v1960 = vrcp.pop %v1939
    %v1961 = vmul.f32 1.0, %v1960
    %v1962 = vrcp.pop %v1940
    %v1963 = vmul.f32 1.0, %v1962
    %v1964 = vrcp.pop %v1941
    %v1965 = vmul.f32 1.0, %v1964
    %v1966 = vrcp.pop %v1942
    %v1967 = vmul.f32 1.0, %v1966
    %v1968 = vrcp.pop %v1943
    %v1969 = vmul.f32 1.0, %v1968
    %v1970 = vrcp.pop %v1944
    %v1971 = vmul.f32 1.0, %v1970
    %v1972 = vrcp.pop %v1945
    %v1973 = vmul.f32 1.0, %v1972
    %v1974 = vrcp.pop %v1946
    %v1975 = vmul.f32 1.0, %v1974
    %v1976 = vrcp.pop %v1947
    %v1977 = vmul.f32 1.0, %v1976
    %v1978 = vrcp.pop %v1948
    %v1979 = vmul.f32 1.0, %v1978
    %v1980 = vrcp.pop %v1949
    %v1981 = vmul.f32 1.0, %v1980
    %v1982 = vmul.f32 %v1951, %v53
    %v1983 = vmul.f32 %v1953, %v54
    %v1984 = vmul.f32 %v1955, %v55
    %v1985 = vmul.f32 %v1957, %v56
    %v1986 = vmul.f32 %v1959, %v57
    %v1987 = vmul.f32 %v1961, %v58
    %v1988 = vmul.f32 %v1963, %v59
    %v1989 = vmul.f32 %v1965, %v60
    %v1990 = vmul.f32 %v1967, %v61
    %v1991 = vmul.f32 %v1969, %v62
    %v1992 = vmul.f32 %v1971, %v63
    %v1993 = vmul.f32 %v1973, %v64
    %v1994 = vmul.f32 %v1975, %v65
    %v1995 = vmul.f32 %v1977, %v66
    %v1996 = vmul.f32 %v1979, %v67
    %v1997 = vmul.f32 %v1981, %v68
    %v1999 = vsel %vm202, %v1982, 0
    %v2002 = vsel %vm202, %v1983, 0
    %v2005 = vsel %vm202, %v1984, 0
    %v2008 = vsel %vm202, %v1985, 0
    %v2011 = vsel %vm202, %v1986, 0
    %v2014 = vsel %vm202, %v1987, 0
    %v2017 = vsel %vm202, %v1988, 0
    %v2020 = vsel %vm202, %v1989, 0
    %v2023 = vsel %vm202, %v1990, 0
    %v2026 = vsel %vm202, %v1991, 0
    %v2029 = vsel %vm202, %v1992, 0
    %v2032 = vsel %vm202, %v1993, 0
    %v2035 = vsel %vm202, %v1994, 0
    %v2038 = vsel %vm202, %v1995, 0
    %v2041 = vsel %vm202, %v1996, 0
    %v2044 = vsel %vm202, %v1997, 0
    %2046 = vmatprep.subr.mxu0 0.0
    %2047 = vmatpush1.msra.mxu0 0.0
    %2048 = vmatprep.subr.mxu0 0.0
    %2049 = vmatpush1.msra.mxu0 0.0
    %2050 = vmatprep.subr.mxu0 0.0
    %2051 = vmatpush1.msra.mxu0 0.0
    %2052 = vmatprep.subr.mxu0 0.0
    %2053 = vmatpush1.msra.mxu0 0.0
    %2054 = vmatprep.subr.mxu0 0.0
    %2055 = vmatpush1.msra.mxu0 0.0
    %2056 = vmatprep.subr.mxu0 0.0
    %2057 = vmatpush1.msra.mxu0 0.0
    %2058 = vmatprep.subr.mxu0 0.0
    %2059 = vmatpush1.msra.mxu0 0.0
    %2060 = vmatprep.subr.mxu0 0.0
    %2061 = vmatpush1.msra.mxu0 0.0
    %2062 = vmatprep.subr.mxu0 0.0
    %2063 = vmatpush1.msra.mxu0 0.0
    %2064 = vmatprep.subr.mxu0 0.0
    %2065 = vmatpush1.msra.mxu0 0.0
    %2066 = vmatprep.subr.mxu0 0.0
    %2067 = vmatpush1.msra.mxu0 0.0
    %2068 = vmatprep.subr.mxu0 0.0
    %2069 = vmatpush1.msra.mxu0 0.0
    %2070 = vmatprep.subr.mxu0 0.0
    %2071 = vmatpush1.msra.mxu0 %v200
    %2072 = vmatprep.subr.mxu0 0.0
    %2073 = vmatpush1.msra.mxu0 %v199
    %2074 = vmatprep.subr.mxu0 0.0
    %2075 = vmatpush1.msra.mxu0 %v198
    %2076 = vmatprep.subr.mxu0 0.0
    %2077 = vmatpush1.msra.mxu0 %v197
    %2078 = vmatprep.subr.mxu0 0.0
    %2079 = vmatpush2.msra.mxu0 0.0
    %2080 = vmatprep.subr.mxu0 0.0
    %2081 = vmatpush2.msra.mxu0 0.0
    %2082 = vmatprep.subr.mxu0 0.0
    %2083 = vmatpush2.msra.mxu0 0.0
    %2084 = vmatprep.subr.mxu0 0.0
    %2085 = vmatpush2.msra.mxu0 0.0
    %2086 = vmatprep.subr.mxu0 0.0
    %2087 = vmatpush2.msra.mxu0 0.0
    %2088 = vmatprep.subr.mxu0 0.0
    %2089 = vmatpush2.msra.mxu0 0.0
    %2090 = vmatprep.subr.mxu0 0.0
    %2091 = vmatpush2.msra.mxu0 0.0
    %2092 = vmatprep.subr.mxu0 0.0
    %2093 = vmatpush2.msra.mxu0 0.0
    %2094 = vmatprep.subr.mxu0 0.0
    %2095 = vmatpush2.msra.mxu0 0.0
    %2096 = vmatprep.subr.mxu0 0.0
    %2097 = vmatpush2.msra.mxu0 0.0
    %2098 = vmatprep.subr.mxu0 0.0
    %2099 = vmatpush2.msra.mxu0 0.0
    %2100 = vmatprep.subr.mxu0 0.0
    %2101 = vmatpush2.msra.mxu0 0.0
    %2102 = vmatprep.subr.mxu0 0.0
    %2103 = vmatpush2.msra.mxu0 0.0
    %2104 = vmatprep.subr.mxu0 0.0
    %2105 = vmatpush2.msra.mxu0 0.0
    %2106 = vmatprep.subr.mxu0 0.0
    %2107 = vmatpush2.msra.mxu0 0.0
    %2108 = vmatprep.subr.mxu0 0.0
    %2109 = vmatpush2.msra.mxu0 0.0
    %2110 = vmatprep.mubr.f32.mxu0 0.0
    %2111 = vmatmul.mubr.f32.gmra.mxu0 %v1999
    %v2112 = vpop.f32.mrf.mxu0
    %v2113 = vadd.f32 0.0, %v2112
    %v2114 = vpop.f32.mrf.mxu0
    %2115 = vmatprep.mubr.f32.mxu0 0.0
    %2116 = vmatmul.mubr.f32.gmra.mxu0 %v2002
    %v2117 = vpop.f32.mrf.mxu0
    %v2118 = vadd.f32 0.0, %v2117
    %v2119 = vpop.f32.mrf.mxu0
    %2120 = vmatprep.mubr.f32.mxu0 0.0
    %2121 = vmatmul.mubr.f32.gmra.mxu0 %v2005
    %v2122 = vpop.f32.mrf.mxu0
    %v2123 = vadd.f32 0.0, %v2122
    %v2124 = vpop.f32.mrf.mxu0
    %2125 = vmatprep.mubr.f32.mxu0 0.0
    %2126 = vmatmul.mubr.f32.gmra.mxu0 %v2008
    %v2127 = vpop.f32.mrf.mxu0
    %v2128 = vadd.f32 0.0, %v2127
    %v2129 = vpop.f32.mrf.mxu0
    %2130 = vmatprep.mubr.f32.mxu0 0.0
    %2131 = vmatmul.mubr.f32.gmra.mxu0 %v2011
    %v2132 = vpop.f32.mrf.mxu0
    %v2133 = vadd.f32 0.0, %v2132
    %v2134 = vpop.f32.mrf.mxu0
    %2135 = vmatprep.mubr.f32.mxu0 0.0
    %2136 = vmatmul.mubr.f32.gmra.mxu0 %v2014
    %v2137 = vpop.f32.mrf.mxu0
    %v2138 = vadd.f32 0.0, %v2137
    %v2139 = vpop.f32.mrf.mxu0
    %2140 = vmatprep.mubr.f32.mxu0 0.0
    %2141 = vmatmul.mubr.f32.gmra.mxu0 %v2017
    %v2142 = vpop.f32.mrf.mxu0
    %v2143 = vadd.f32 0.0, %v2142
    %v2144 = vpop.f32.mrf.mxu0
    %2145 = vmatprep.mubr.f32.mxu0 0.0
    %2146 = vmatmul.mubr.f32.gmra.mxu0 %v2020
    %v2147 = vpop.f32.mrf.mxu0
    %v2148 = vadd.f32 0.0, %v2147
    %v2149 = vpop.f32.mrf.mxu0
    %2150 = vmatprep.mubr.f32.mxu0 0.0
    %2151 = vmatmul.mubr.f32.gmra.mxu0 %v2023
    %v2152 = vpop.f32.mrf.mxu0
    %v2153 = vadd.f32 0.0, %v2152
    %v2154 = vpop.f32.mrf.mxu0
    %2155 = vmatprep.mubr.f32.mxu0 0.0
    %2156 = vmatmul.mubr.f32.gmra.mxu0 %v2026
    %v2157 = vpop.f32.mrf.mxu0
    %v2158 = vadd.f32 0.0, %v2157
    %v2159 = vpop.f32.mrf.mxu0
    %2160 = vmatprep.mubr.f32.mxu0 0.0
    %2161 = vmatmul.mubr.f32.gmra.mxu0 %v2029
    %v2162 = vpop.f32.mrf.mxu0
    %v2163 = vadd.f32 0.0, %v2162
    %v2164 = vpop.f32.mrf.mxu0
    %2165 = vmatprep.mubr.f32.mxu0 0.0
    %2166 = vmatmul.mubr.f32.gmra.mxu0 %v2032
    %v2167 = vpop.f32.mrf.mxu0
    %v2168 = vadd.f32 0.0, %v2167
    %v2169 = vpop.f32.mrf.mxu0
    %2170 = vmatprep.mubr.f32.mxu0 0.0
    %2171 = vmatmul.mubr.f32.gmra.mxu0 %v2035
    %v2172 = vpop.f32.mrf.mxu0
    %v2173 = vadd.f32 0.0, %v2172
    %v2174 = vpop.f32.mrf.mxu0
    %2175 = vmatprep.mubr.f32.mxu0 0.0
    %2176 = vmatmul.mubr.f32.gmra.mxu0 %v2038
    %v2177 = vpop.f32.mrf.mxu0
    %v2178 = vadd.f32 0.0, %v2177
    %v2179 = vpop.f32.mrf.mxu0
    %2180 = vmatprep.mubr.f32.mxu0 0.0
    %2181 = vmatmul.mubr.f32.gmra.mxu0 %v2041
    %v2182 = vpop.f32.mrf.mxu0
    %v2183 = vadd.f32 0.0, %v2182
    %v2184 = vpop.f32.mrf.mxu0
    %2185 = vmatprep.mubr.f32.mxu0 0.0
    %2186 = vmatmul.mubr.f32.gmra.mxu0 %v2044
    %v2187 = vpop.f32.mrf.mxu0
    %v2188 = vadd.f32 0.0, %v2187
    %v2189 = vpop.f32.mrf.mxu0
    %2190 = vdwg.mxu0
    %2191 = vmatprep.subr.mxu0 0.0
    %2192 = vmatpush1.msra.mxu0 0.0
    %2193 = vmatprep.subr.mxu0 0.0
    %2194 = vmatpush1.msra.mxu0 0.0
    %2195 = vmatprep.subr.mxu0 0.0
    %2196 = vmatpush1.msra.mxu0 0.0
    %2197 = vmatprep.subr.mxu0 0.0
    %2198 = vmatpush1.msra.mxu0 0.0
    %2199 = vmatprep.subr.mxu0 0.0
    %2200 = vmatpush1.msra.mxu0 0.0
    %2201 = vmatprep.subr.mxu0 0.0
    %2202 = vmatpush1.msra.mxu0 0.0
    %2203 = vmatprep.subr.mxu0 0.0
    %2204 = vmatpush1.msra.mxu0 0.0
    %2205 = vmatprep.subr.mxu0 0.0
    %2206 = vmatpush1.msra.mxu0 0.0
    %2207 = vmatprep.subr.mxu0 0.0
    %2208 = vmatpush1.msra.mxu0 %v188
    %2209 = vmatprep.subr.mxu0 0.0
    %2210 = vmatpush1.msra.mxu0 %v187
    %2211 = vmatprep.subr.mxu0 0.0
    %2212 = vmatpush1.msra.mxu0 %v186
    %2213 = vmatprep.subr.mxu0 0.0
    %2214 = vmatpush1.msra.mxu0 %v185
    %2215 = vmatprep.subr.mxu0 0.0
    %2216 = vmatpush1.msra.mxu0 %v184
    %2217 = vmatprep.subr.mxu0 0.0
    %2218 = vmatpush1.msra.mxu0 %v183
    %2219 = vmatprep.subr.mxu0 0.0
    %2220 = vmatpush1.msra.mxu0 %v182
    %2221 = vmatprep.subr.mxu0 0.0
    %2222 = vmatpush1.msra.mxu0 %v181
    %2223 = vmatprep.subr.mxu0 0.0
    %2224 = vmatpush2.msra.mxu0 0.0
    %2225 = vmatprep.subr.mxu0 0.0
    %2226 = vmatpush2.msra.mxu0 0.0
    %2227 = vmatprep.subr.mxu0 0.0
    %2228 = vmatpush2.msra.mxu0 0.0
    %2229 = vmatprep.subr.mxu0 0.0
    %2230 = vmatpush2.msra.mxu0 0.0
    %2231 = vmatprep.subr.mxu0 0.0
    %2232 = vmatpush2.msra.mxu0 0.0
    %2233 = vmatprep.subr.mxu0 0.0
    %2234 = vmatpush2.msra.mxu0 0.0
    %2235 = vmatprep.subr.mxu0 0.0
    %2236 = vmatpush2.msra.mxu0 0.0
    %2237 = vmatprep.subr.mxu0 0.0
    %2238 = vmatpush2.msra.mxu0 0.0
    %2239 = vmatprep.subr.mxu0 0.0
    %2240 = vmatpush2.msra.mxu0 0.0
    %2241 = vmatprep.subr.mxu0 0.0
    %2242 = vmatpush2.msra.mxu0 0.0
    %2243 = vmatprep.subr.mxu0 0.0
    %2244 = vmatpush2.msra.mxu0 0.0
    %2245 = vmatprep.subr.mxu0 0.0
    %2246 = vmatpush2.msra.mxu0 0.0
    %2247 = vmatprep.subr.mxu0 0.0
    %2248 = vmatpush2.msra.mxu0 0.0
    %2249 = vmatprep.subr.mxu0 0.0
    %2250 = vmatpush2.msra.mxu0 0.0
    %2251 = vmatprep.subr.mxu0 0.0
    %2252 = vmatpush2.msra.mxu0 0.0
    %2253 = vmatprep.subr.mxu0 0.0
    %2254 = vmatpush2.msra.mxu0 0.0
    %2255 = vmatprep.mubr.f32.mxu0 0.0
    %2256 = vmatmul.mubr.f32.gmra.mxu0 %v1268
    %v2257 = vpop.f32.mrf.mxu0
    %v2258 = vadd.f32 %v2113, %v2257
    %v2259 = vpop.f32.mrf.mxu0
    %2260 = vmatprep.mubr.f32.mxu0 0.0
    %2261 = vmatmul.mubr.f32.gmra.mxu0 %v1271
    %v2262 = vpop.f32.mrf.mxu0
    %v2263 = vadd.f32 %v2118, %v2262
    %v2264 = vpop.f32.mrf.mxu0
    %2265 = vmatprep.mubr.f32.mxu0 0.0
    %2266 = vmatmul.mubr.f32.gmra.mxu0 %v1274
    %v2267 = vpop.f32.mrf.mxu0
    %v2268 = vadd.f32 %v2123, %v2267
    %v2269 = vpop.f32.mrf.mxu0
    %2270 = vmatprep.mubr.f32.mxu0 0.0
    %2271 = vmatmul.mubr.f32.gmra.mxu0 %v1277
    %v2272 = vpop.f32.mrf.mxu0
    %v2273 = vadd.f32 %v2128, %v2272
    %v2274 = vpop.f32.mrf.mxu0
    %2275 = vmatprep.mubr.f32.mxu0 0.0
    %2276 = vmatmul.mubr.f32.gmra.mxu0 %v1280
    %v2277 = vpop.f32.mrf.mxu0
    %v2278 = vadd.f32 %v2133, %v2277
    %v2279 = vpop.f32.mrf.mxu0
    %2280 = vmatprep.mubr.f32.mxu0 0.0
    %2281 = vmatmul.mubr.f32.gmra.mxu0 %v1283
    %v2282 = vpop.f32.mrf.mxu0
    %v2283 = vadd.f32 %v2138, %v2282
    %v2284 = vpop.f32.mrf.mxu0
    %2285 = vmatprep.mubr.f32.mxu0 0.0
    %2286 = vmatmul.mubr.f32.gmra.mxu0 %v1286
    %v2287 = vpop.f32.mrf.mxu0
    %v2288 = vadd.f32 %v2143, %v2287
    %v2289 = vpop.f32.mrf.mxu0
    %2290 = vmatprep.mubr.f32.mxu0 0.0
    %2291 = vmatmul.mubr.f32.gmra.mxu0 %v1289
    %v2292 = vpop.f32.mrf.mxu0
    %v2293 = vadd.f32 %v2148, %v2292
    %v2294 = vpop.f32.mrf.mxu0
    %2295 = vmatprep.mubr.f32.mxu0 0.0
    %2296 = vmatmul.mubr.f32.gmra.mxu0 %v1292
    %v2297 = vpop.f32.mrf.mxu0
    %v2298 = vadd.f32 %v2153, %v2297
    %v2299 = vpop.f32.mrf.mxu0
    %2300 = vmatprep.mubr.f32.mxu0 0.0
    %2301 = vmatmul.mubr.f32.gmra.mxu0 %v1295
    %v2302 = vpop.f32.mrf.mxu0
    %v2303 = vadd.f32 %v2158, %v2302
    %v2304 = vpop.f32.mrf.mxu0
    %2305 = vmatprep.mubr.f32.mxu0 0.0
    %2306 = vmatmul.mubr.f32.gmra.mxu0 %v1298
    %v2307 = vpop.f32.mrf.mxu0
    %v2308 = vadd.f32 %v2163, %v2307
    %v2309 = vpop.f32.mrf.mxu0
    %2310 = vmatprep.mubr.f32.mxu0 0.0
    %2311 = vmatmul.mubr.f32.gmra.mxu0 %v1301
    %v2312 = vpop.f32.mrf.mxu0
    %v2313 = vadd.f32 %v2168, %v2312
    %v2314 = vpop.f32.mrf.mxu0
    %2315 = vmatprep.mubr.f32.mxu0 0.0
    %2316 = vmatmul.mubr.f32.gmra.mxu0 %v1304
    %v2317 = vpop.f32.mrf.mxu0
    %v2318 = vadd.f32 %v2173, %v2317
    %v2319 = vpop.f32.mrf.mxu0
    %2320 = vmatprep.mubr.f32.mxu0 0.0
    %2321 = vmatmul.mubr.f32.gmra.mxu0 %v1307
    %v2322 = vpop.f32.mrf.mxu0
    %v2323 = vadd.f32 %v2178, %v2322
    %v2324 = vpop.f32.mrf.mxu0
    %2325 = vmatprep.mubr.f32.mxu0 0.0
    %2326 = vmatmul.mubr.f32.gmra.mxu0 %v1310
    %v2327 = vpop.f32.mrf.mxu0
    %v2328 = vadd.f32 %v2183, %v2327
    %v2329 = vpop.f32.mrf.mxu0
    %2330 = vmatprep.mubr.f32.mxu0 0.0
    %2331 = vmatmul.mubr.f32.gmra.mxu0 %v1313
    %v2332 = vpop.f32.mrf.mxu0
    %v2333 = vadd.f32 %v2188, %v2332
    %v2334 = vpop.f32.mrf.mxu0
    %2335 = vdwg.mxu0
    %v2336 = vlaneseq
    %v2337 = vshrl.u32 %v2336, 7
    %v2338 = vsub.s32 2, %v2337
    %v2339 = vrot.slane %v201, %v2338
    %v2340 = vadd.f32 %v2258, %v2339
    %v2341 = vadd.f32 %v2263, %v2339
    %v2342 = vadd.f32 %v2268, %v2339
    %v2343 = vadd.f32 %v2273, %v2339
    %v2344 = vadd.f32 %v2278, %v2339
    %v2345 = vadd.f32 %v2283, %v2339
    %v2346 = vadd.f32 %v2288, %v2339
    %v2347 = vadd.f32 %v2293, %v2339
    %v2348 = vadd.f32 %v2298, %v2339
    %v2349 = vadd.f32 %v2303, %v2339
    %v2350 = vadd.f32 %v2308, %v2339
    %v2351 = vadd.f32 %v2313, %v2339
    %v2352 = vadd.f32 %v2318, %v2339
    %v2353 = vadd.f32 %v2323, %v2339
    %v2354 = vadd.f32 %v2328, %v2339
    %v2355 = vadd.f32 %v2333, %v2339
    %v2356 = vtanh.pop %v2340
    %v2357 = vtanh.pop %v2341
    %v2358 = vtanh.pop %v2342
    %v2359 = vtanh.pop %v2343
    %v2360 = vtanh.pop %v2344
    %v2361 = vtanh.pop %v2345
    %v2362 = vtanh.pop %v2346
    %v2363 = vtanh.pop %v2347
    %v2364 = vtanh.pop %v2348
    %v2365 = vtanh.pop %v2349
    %v2366 = vtanh.pop %v2350
    %v2367 = vtanh.pop %v2351
    %v2368 = vtanh.pop %v2352
    %v2369 = vtanh.pop %v2353
    %v2370 = vtanh.pop %v2354
    %v2371 = vtanh.pop %v2355
    %v2372 = vsub.f32 1.0, %v1545
    %v2373 = vsub.f32 1.0, %v1547
    %v2374 = vsub.f32 1.0, %v1549
    %v2375 = vsub.f32 1.0, %v1551
    %v2376 = vsub.f32 1.0, %v1553
    %v2377 = vsub.f32 1.0, %v1555
    %v2378 = vsub.f32 1.0, %v1557
    %v2379 = vsub.f32 1.0, %v1559
    %v2380 = vsub.f32 1.0, %v1561
    %v2381 = vsub.f32 1.0, %v1563
    %v2382 = vsub.f32 1.0, %v1565
    %v2383 = vsub.f32 1.0, %v1567
    %v2384 = vsub.f32 1.0, %v1569
    %v2385 = vsub.f32 1.0, %v1571
    %v2386 = vsub.f32 1.0, %v1573
    %v2387 = vsub.f32 1.0, %v1575
    %v2388 = vmul.f32 %v2372, %v53
    %v2389 = vmul.f32 %v2373, %v54
    %v2390 = vmul.f32 %v2374, %v55
    %v2391 = vmul.f32 %v2375, %v56
    %v2392 = vmul.f32 %v2376, %v57
    %v2393 = vmul.f32 %v2377, %v58
    %v2394 = vmul.f32 %v2378, %v59
    %v2395 = vmul.f32 %v2379, %v60
    %v2396 = vmul.f32 %v2380, %v61
    %v2397 = vmul.f32 %v2381, %v62
    %v2398 = vmul.f32 %v2382, %v63
    %v2399 = vmul.f32 %v2383, %v64
    %v2400 = vmul.f32 %v2384, %v65
    %v2401 = vmul.f32 %v2385, %v66
    %v2402 = vmul.f32 %v2386, %v67
    %v2403 = vmul.f32 %v2387, %v68
    %v2404 = vmul.f32 %v1545, %v2356
    %v2405 = vmul.f32 %v1547, %v2357
    %v2406 = vmul.f32 %v1549, %v2358
    %v2407 = vmul.f32 %v1551, %v2359
    %v2408 = vmul.f32 %v1553, %v2360
    %v2409 = vmul.f32 %v1555, %v2361
    %v2410 = vmul.f32 %v1557, %v2362
    %v2411 = vmul.f32 %v1559, %v2363
    %v2412 = vmul.f32 %v1561, %v2364
    %v2413 = vmul.f32 %v1563, %v2365
    %v2414 = vmul.f32 %v1565, %v2366
    %v2415 = vmul.f32 %v1567, %v2367
    %v2416 = vmul.f32 %v1569, %v2368
    %v2417 = vmul.f32 %v1571, %v2369
    %v2418 = vmul.f32 %v1573, %v2370
    %v2419 = vmul.f32 %v1575, %v2371
    %v2420 = vadd.f32 %v2388, %v2404
    %v2421 = vadd.f32 %v2389, %v2405
    %v2422 = vadd.f32 %v2390, %v2406
    %v2423 = vadd.f32 %v2391, %v2407
    %v2424 = vadd.f32 %v2392, %v2408
    %v2425 = vadd.f32 %v2393, %v2409
    %v2426 = vadd.f32 %v2394, %v2410
    %v2427 = vadd.f32 %v2395, %v2411
    %v2428 = vadd.f32 %v2396, %v2412
    %v2429 = vadd.f32 %v2397, %v2413
    %v2430 = vadd.f32 %v2398, %v2414
    %v2431 = vadd.f32 %v2399, %v2415
    %v2432 = vadd.f32 %v2400, %v2416
    %v2433 = vadd.f32 %v2401, %v2417
    %v2434 = vadd.f32 %v2402, %v2418
    %v2435 = vadd.f32 %v2403, %v2419
    %v2437 = vsel %vm202, %v2420, 0
    %v2440 = vsel %vm202, %v2421, 0
    %v2443 = vsel %vm202, %v2422, 0
    %v2446 = vsel %vm202, %v2423, 0
    %v2449 = vsel %vm202, %v2424, 0
    %v2452 = vsel %vm202, %v2425, 0
    %v2455 = vsel %vm202, %v2426, 0
    %v2458 = vsel %vm202, %v2427, 0
    %v2461 = vsel %vm202, %v2428, 0
    %v2464 = vsel %vm202, %v2429, 0
    %v2467 = vsel %vm202, %v2430, 0
    %v2470 = vsel %vm202, %v2431, 0
    %v2473 = vsel %vm202, %v2432, 0
    %v2476 = vsel %vm202, %v2433, 0
    %v2479 = vsel %vm202, %v2434, 0
    %v2482 = vsel %vm202, %v2435, 0
    %2484 = vmatprep.subr.mxu0 0.0
    %2485 = vmatpush1.msra.mxu0 0.0
    %2486 = vmatprep.subr.mxu0 0.0
    %2487 = vmatpush1.msra.mxu0 0.0
    %2488 = vmatprep.subr.mxu0 0.0
    %2489 = vmatpush1.msra.mxu0 0.0
    %2490 = vmatprep.subr.mxu0 0.0
    %2491 = vmatpush1.msra.mxu0 0.0
    %2492 = vmatprep.subr.mxu0 0.0
    %2493 = vmatpush1.msra.mxu0 0.0
    %2494 = vmatprep.subr.mxu0 0.0
    %2495 = vmatpush1.msra.mxu0 0.0
    %2496 = vmatprep.subr.mxu0 0.0
    %2497 = vmatpush1.msra.mxu0 0.0
    %2498 = vmatprep.subr.mxu0 0.0
    %2499 = vmatpush1.msra.mxu0 0.0
    %2500 = vmatprep.subr.mxu0 0.0
    %2501 = vmatpush1.msra.mxu0 0.0
    %2502 = vmatprep.subr.mxu0 0.0
    %2503 = vmatpush1.msra.mxu0 0.0
    %2504 = vmatprep.subr.mxu0 0.0
    %2505 = vmatpush1.msra.mxu0 0.0
    %2506 = vmatprep.subr.mxu0 0.0
    %2507 = vmatpush1.msra.mxu0 0.0
    %2508 = vmatprep.subr.mxu0 0.0
    %2509 = vmatpush1.msra.mxu0 %v152
    %2510 = vmatprep.subr.mxu0 0.0
    %2511 = vmatpush1.msra.mxu0 %v151
    %2512 = vmatprep.subr.mxu0 0.0
    %2513 = vmatpush1.msra.mxu0 %v150
    %2514 = vmatprep.subr.mxu0 0.0
    %2515 = vmatpush1.msra.mxu0 %v149
    %2516 = vmatprep.subr.mxu0 0.0
    %2517 = vmatpush2.msra.mxu0 0.0
    %2518 = vmatprep.subr.mxu0 0.0
    %2519 = vmatpush2.msra.mxu0 0.0
    %2520 = vmatprep.subr.mxu0 0.0
    %2521 = vmatpush2.msra.mxu0 0.0
    %2522 = vmatprep.subr.mxu0 0.0
    %2523 = vmatpush2.msra.mxu0 0.0
    %2524 = vmatprep.subr.mxu0 0.0
    %2525 = vmatpush2.msra.mxu0 0.0
    %2526 = vmatprep.subr.mxu0 0.0
    %2527 = vmatpush2.msra.mxu0 0.0
    %2528 = vmatprep.subr.mxu0 0.0
    %2529 = vmatpush2.msra.mxu0 0.0
    %2530 = vmatprep.subr.mxu0 0.0
    %2531 = vmatpush2.msra.mxu0 0.0
    %2532 = vmatprep.subr.mxu0 0.0
    %2533 = vmatpush2.msra.mxu0 0.0
    %2534 = vmatprep.subr.mxu0 0.0
    %2535 = vmatpush2.msra.mxu0 0.0
    %2536 = vmatprep.subr.mxu0 0.0
    %2537 = vmatpush2.msra.mxu0 0.0
    %2538 = vmatprep.subr.mxu0 0.0
    %2539 = vmatpush2.msra.mxu0 0.0
    %2540 = vmatprep.subr.mxu0 0.0
    %2541 = vmatpush2.msra.mxu0 0.0
    %2542 = vmatprep.subr.mxu0 0.0
    %2543 = vmatpush2.msra.mxu0 0.0
    %2544 = vmatprep.subr.mxu0 0.0
    %2545 = vmatpush2.msra.mxu0 0.0
    %2546 = vmatprep.subr.mxu0 0.0
    %2547 = vmatpush2.msra.mxu0 0.0
    %2548 = vmatprep.mubr.f32.mxu0 0.0
    %2549 = vmatmul.mubr.f32.gmra.mxu0 %v2437
    %v2550 = vpop.f32.mrf.mxu0
    %v2551 = vadd.f32 0.0, %v2550
    %v2552 = vpop.f32.mrf.mxu0
    %2553 = vmatprep.mubr.f32.mxu0 0.0
    %2554 = vmatmul.mubr.f32.gmra.mxu0 %v2440
    %v2555 = vpop.f32.mrf.mxu0
    %v2556 = vadd.f32 0.0, %v2555
    %v2557 = vpop.f32.mrf.mxu0
    %2558 = vmatprep.mubr.f32.mxu0 0.0
    %2559 = vmatmul.mubr.f32.gmra.mxu0 %v2443
    %v2560 = vpop.f32.mrf.mxu0
    %v2561 = vadd.f32 0.0, %v2560
    %v2562 = vpop.f32.mrf.mxu0
    %2563 = vmatprep.mubr.f32.mxu0 0.0
    %2564 = vmatmul.mubr.f32.gmra.mxu0 %v2446
    %v2565 = vpop.f32.mrf.mxu0
    %v2566 = vadd.f32 0.0, %v2565
    %v2567 = vpop.f32.mrf.mxu0
    %2568 = vmatprep.mubr.f32.mxu0 0.0
    %2569 = vmatmul.mubr.f32.gmra.mxu0 %v2449
    %v2570 = vpop.f32.mrf.mxu0
    %v2571 = vadd.f32 0.0, %v2570
    %v2572 = vpop.f32.mrf.mxu0
    %2573 = vmatprep.mubr.f32.mxu0 0.0
    %2574 = vmatmul.mubr.f32.gmra.mxu0 %v2452
    %v2575 = vpop.f32.mrf.mxu0
    %v2576 = vadd.f32 0.0, %v2575
    %v2577 = vpop.f32.mrf.mxu0
    %2578 = vmatprep.mubr.f32.mxu0 0.0
    %2579 = vmatmul.mubr.f32.gmra.mxu0 %v2455
    %v2580 = vpop.f32.mrf.mxu0
    %v2581 = vadd.f32 0.0, %v2580
    %v2582 = vpop.f32.mrf.mxu0
    %2583 = vmatprep.mubr.f32.mxu0 0.0
    %2584 = vmatmul.mubr.f32.gmra.mxu0 %v2458
    %v2585 = vpop.f32.mrf.mxu0
    %v2586 = vadd.f32 0.0, %v2585
    %v2587 = vpop.f32.mrf.mxu0
    %2588 = vmatprep.mubr.f32.mxu0 0.0
    %2589 = vmatmul.mubr.f32.gmra.mxu0 %v2461
    %v2590 = vpop.f32.mrf.mxu0
    %v2591 = vadd.f32 0.0, %v2590
    %v2592 = vpop.f32.mrf.mxu0
    %2593 = vmatprep.mubr.f32.mxu0 0.0
    %2594 = vmatmul.mubr.f32.gmra.mxu0 %v2464
    %v2595 = vpop.f32.mrf.mxu0
    %v2596 = vadd.f32 0.0, %v2595
    %v2597 = vpop.f32.mrf.mxu0
    %2598 = vmatprep.mubr.f32.mxu0 0.0
    %2599 = vmatmul.mubr.f32.gmra.mxu0 %v2467
    %v2600 = vpop.f32.mrf.mxu0
    %v2601 = vadd.f32 0.0, %v2600
    %v2602 = vpop.f32.mrf.mxu0
    %2603 = vmatprep.mubr.f32.mxu0 0.0
    %2604 = vmatmul.mubr.f32.gmra.mxu0 %v2470
    %v2605 = vpop.f32.mrf.mxu0
    %v2606 = vadd.f32 0.0, %v2605
    %v2607 = vpop.f32.mrf.mxu0
    %2608 = vmatprep.mubr.f32.mxu0 0.0
    %2609 = vmatmul.mubr.f32.gmra.mxu0 %v2473
    %v2610 = vpop.f32.mrf.mxu0
    %v2611 = vadd.f32 0.0, %v2610
    %v2612 = vpop.f32.mrf.mxu0
    %2613 = vmatprep.mubr.f32.mxu0 0.0
    %2614 = vmatmul.mubr.f32.gmra.mxu0 %v2476
    %v2615 = vpop.f32.mrf.mxu0
    %v2616 = vadd.f32 0.0, %v2615
    %v2617 = vpop.f32.mrf.mxu0
    %2618 = vmatprep.mubr.f32.mxu0 0.0
    %2619 = vmatmul.mubr.f32.gmra.mxu0 %v2479
    %v2620 = vpop.f32.mrf.mxu0
    %v2621 = vadd.f32 0.0, %v2620
    %v2622 = vpop.f32.mrf.mxu0
    %2623 = vmatprep.mubr.f32.mxu0 0.0
    %2624 = vmatmul.mubr.f32.gmra.mxu0 %v2482
    %v2625 = vpop.f32.mrf.mxu0
    %v2626 = vadd.f32 0.0, %v2625
    %v2627 = vpop.f32.mrf.mxu0
    %2628 = vdwg.mxu0
    %2629 = vmatprep.subr.mxu0 0.0
    %2630 = vmatpush1.msra.mxu0 0.0
    %2631 = vmatprep.subr.mxu0 0.0
    %2632 = vmatpush1.msra.mxu0 0.0
    %2633 = vmatprep.subr.mxu0 0.0
    %2634 = vmatpush1.msra.mxu0 0.0
    %2635 = vmatprep.subr.mxu0 0.0
    %2636 = vmatpush1.msra.mxu0 0.0
    %2637 = vmatprep.subr.mxu0 0.0
    %2638 = vmatpush1.msra.mxu0 0.0
    %2639 = vmatprep.subr.mxu0 0.0
    %2640 = vmatpush1.msra.mxu0 0.0
    %2641 = vmatprep.subr.mxu0 0.0
    %2642 = vmatpush1.msra.mxu0 0.0
    %2643 = vmatprep.subr.mxu0 0.0
    %2644 = vmatpush1.msra.mxu0 0.0
    %2645 = vmatprep.subr.mxu0 0.0
    %2646 = vmatpush1.msra.mxu0 0.0
    %2647 = vmatprep.subr.mxu0 0.0
    %2648 = vmatpush1.msra.mxu0 0.0
    %2649 = vmatprep.subr.mxu0 0.0
    %2650 = vmatpush1.msra.mxu0 0.0
    %2651 = vmatprep.subr.mxu0 0.0
    %2652 = vmatpush1.msra.mxu0 0.0
    %2653 = vmatprep.subr.mxu0 0.0
    %2654 = vmatpush1.msra.mxu0 %v156
    %2655 = vmatprep.subr.mxu0 0.0
    %2656 = vmatpush1.msra.mxu0 %v155
    %2657 = vmatprep.subr.mxu0 0.0
    %2658 = vmatpush1.msra.mxu0 %v154
    %2659 = vmatprep.subr.mxu0 0.0
    %2660 = vmatpush1.msra.mxu0 %v153
    %2661 = vmatprep.subr.mxu0 0.0
    %2662 = vmatpush2.msra.mxu0 0.0
    %2663 = vmatprep.subr.mxu0 0.0
    %2664 = vmatpush2.msra.mxu0 0.0
    %2665 = vmatprep.subr.mxu0 0.0
    %2666 = vmatpush2.msra.mxu0 0.0
    %2667 = vmatprep.subr.mxu0 0.0
    %2668 = vmatpush2.msra.mxu0 0.0
    %2669 = vmatprep.subr.mxu0 0.0
    %2670 = vmatpush2.msra.mxu0 0.0
    %2671 = vmatprep.subr.mxu0 0.0
    %2672 = vmatpush2.msra.mxu0 0.0
    %2673 = vmatprep.subr.mxu0 0.0
    %2674 = vmatpush2.msra.mxu0 0.0
    %2675 = vmatprep.subr.mxu0 0.0
    %2676 = vmatpush2.msra.mxu0 0.0
    %2677 = vmatprep.subr.mxu0 0.0
    %2678 = vmatpush2.msra.mxu0 0.0
    %2679 = vmatprep.subr.mxu0 0.0
    %2680 = vmatpush2.msra.mxu0 0.0
    %2681 = vmatprep.subr.mxu0 0.0
    %2682 = vmatpush2.msra.mxu0 0.0
    %2683 = vmatprep.subr.mxu0 0.0
    %2684 = vmatpush2.msra.mxu0 0.0
    %2685 = vmatprep.subr.mxu0 0.0
    %2686 = vmatpush2.msra.mxu0 0.0
    %2687 = vmatprep.subr.mxu0 0.0
    %2688 = vmatpush2.msra.mxu0 0.0
    %2689 = vmatprep.subr.mxu0 0.0
    %2690 = vmatpush2.msra.mxu0 0.0
    %2691 = vmatprep.subr.mxu0 0.0
    %2692 = vmatpush2.msra.mxu0 0.0
    %2693 = vmatprep.mubr.f32.mxu0 0.0
    %2694 = vmatmul.mubr.f32.gmra.mxu0 %v2437
    %v2695 = vpop.f32.mrf.mxu0
    %v2696 = vadd.f32 0.0, %v2695
    %v2697 = vpop.f32.mrf.mxu0
    %2698 = vmatprep.mubr.f32.mxu0 0.0
    %2699 = vmatmul.mubr.f32.gmra.mxu0 %v2440
    %v2700 = vpop.f32.mrf.mxu0
    %v2701 = vadd.f32 0.0, %v2700
    %v2702 = vpop.f32.mrf.mxu0
    %2703 = vmatprep.mubr.f32.mxu0 0.0
    %2704 = vmatmul.mubr.f32.gmra.mxu0 %v2443
    %v2705 = vpop.f32.mrf.mxu0
    %v2706 = vadd.f32 0.0, %v2705
    %v2707 = vpop.f32.mrf.mxu0
    %2708 = vmatprep.mubr.f32.mxu0 0.0
    %2709 = vmatmul.mubr.f32.gmra.mxu0 %v2446
    %v2710 = vpop.f32.mrf.mxu0
    %v2711 = vadd.f32 0.0, %v2710
    %v2712 = vpop.f32.mrf.mxu0
    %2713 = vmatprep.mubr.f32.mxu0 0.0
    %2714 = vmatmul.mubr.f32.gmra.mxu0 %v2449
    %v2715 = vpop.f32.mrf.mxu0
    %v2716 = vadd.f32 0.0, %v2715
    %v2717 = vpop.f32.mrf.mxu0
    %2718 = vmatprep.mubr.f32.mxu0 0.0
    %2719 = vmatmul.mubr.f32.gmra.mxu0 %v2452
    %v2720 = vpop.f32.mrf.mxu0
    %v2721 = vadd.f32 0.0, %v2720
    %v2722 = vpop.f32.mrf.mxu0
    %2723 = vmatprep.mubr.f32.mxu0 0.0
    %2724 = vmatmul.mubr.f32.gmra.mxu0 %v2455
    %v2725 = vpop.f32.mrf.mxu0
    %v2726 = vadd.f32 0.0, %v2725
    %v2727 = vpop.f32.mrf.mxu0
    %2728 = vmatprep.mubr.f32.mxu0 0.0
    %2729 = vmatmul.mubr.f32.gmra.mxu0 %v2458
    %v2730 = vpop.f32.mrf.mxu0
    %v2731 = vadd.f32 0.0, %v2730
    %v2732 = vpop.f32.mrf.mxu0
    %2733 = vmatprep.mubr.f32.mxu0 0.0
    %2734 = vmatmul.mubr.f32.gmra.mxu0 %v2461
    %v2735 = vpop.f32.mrf.mxu0
    %v2736 = vadd.f32 0.0, %v2735
    %v2737 = vpop.f32.mrf.mxu0
    %2738 = vmatprep.mubr.f32.mxu0 0.0
    %2739 = vmatmul.mubr.f32.gmra.mxu0 %v2464
    %v2740 = vpop.f32.mrf.mxu0
    %v2741 = vadd.f32 0.0, %v2740
    %v2742 = vpop.f32.mrf.mxu0
    %2743 = vmatprep.mubr.f32.mxu0 0.0
    %2744 = vmatmul.mubr.f32.gmra.mxu0 %v2467
    %v2745 = vpop.f32.mrf.mxu0
    %v2746 = vadd.f32 0.0, %v2745
    %v2747 = vpop.f32.mrf.mxu0
    %2748 = vmatprep.mubr.f32.mxu0 0.0
    %2749 = vmatmul.mubr.f32.gmra.mxu0 %v2470
    %v2750 = vpop.f32.mrf.mxu0
    %v2751 = vadd.f32 0.0, %v2750
    %v2752 = vpop.f32.mrf.mxu0
    %2753 = vmatprep.mubr.f32.mxu0 0.0
    %2754 = vmatmul.mubr.f32.gmra.mxu0 %v2473
    %v2755 = vpop.f32.mrf.mxu0
    %v2756 = vadd.f32 0.0, %v2755
    %v2757 = vpop.f32.mrf.mxu0
    %2758 = vmatprep.mubr.f32.mxu0 0.0
    %2759 = vmatmul.mubr.f32.gmra.mxu0 %v2476
    %v2760 = vpop.f32.mrf.mxu0
    %v2761 = vadd.f32 0.0, %v2760
    %v2762 = vpop.f32.mrf.mxu0
    %2763 = vmatprep.mubr.f32.mxu0 0.0
    %2764 = vmatmul.mubr.f32.gmra.mxu0 %v2479
    %v2765 = vpop.f32.mrf.mxu0
    %v2766 = vadd.f32 0.0, %v2765
    %v2767 = vpop.f32.mrf.mxu0
    %2768 = vmatprep.mubr.f32.mxu0 0.0
    %2769 = vmatmul.mubr.f32.gmra.mxu0 %v2482
    %v2770 = vpop.f32.mrf.mxu0
    %v2771 = vadd.f32 0.0, %v2770
    %v2772 = vpop.f32.mrf.mxu0
    %2773 = vdwg.mxu0
    %2774 = vmatprep.subr.mxu0 0.0
    %2775 = vmatpush1.msra.mxu0 0.0
    %2776 = vmatprep.subr.mxu0 0.0
    %2777 = vmatpush1.msra.mxu0 0.0
    %2778 = vmatprep.subr.mxu0 0.0
    %2779 = vmatpush1.msra.mxu0 0.0
    %2780 = vmatprep.subr.mxu0 0.0
    %2781 = vmatpush1.msra.mxu0 0.0
    %2782 = vmatprep.subr.mxu0 0.0
    %2783 = vmatpush1.msra.mxu0 0.0
    %2784 = vmatprep.subr.mxu0 0.0
    %2785 = vmatpush1.msra.mxu0 0.0
    %2786 = vmatprep.subr.mxu0 0.0
    %2787 = vmatpush1.msra.mxu0 0.0
    %2788 = vmatprep.subr.mxu0 0.0
    %2789 = vmatpush1.msra.mxu0 0.0
    %2790 = vmatprep.subr.mxu0 0.0
    %2791 = vmatpush1.msra.mxu0 0.0
    %2792 = vmatprep.subr.mxu0 0.0
    %2793 = vmatpush1.msra.mxu0 0.0
    %2794 = vmatprep.subr.mxu0 0.0
    %2795 = vmatpush1.msra.mxu0 0.0
    %2796 = vmatprep.subr.mxu0 0.0
    %2797 = vmatpush1.msra.mxu0 0.0
    %2798 = vmatprep.subr.mxu0 0.0
    %2799 = vmatpush1.msra.mxu0 %v160
    %2800 = vmatprep.subr.mxu0 0.0
    %2801 = vmatpush1.msra.mxu0 %v159
    %2802 = vmatprep.subr.mxu0 0.0
    %2803 = vmatpush1.msra.mxu0 %v158
    %2804 = vmatprep.subr.mxu0 0.0
    %2805 = vmatpush1.msra.mxu0 %v157
    %2806 = vmatprep.subr.mxu0 0.0
    %2807 = vmatpush2.msra.mxu0 0.0
    %2808 = vmatprep.subr.mxu0 0.0
    %2809 = vmatpush2.msra.mxu0 0.0
    %2810 = vmatprep.subr.mxu0 0.0
    %2811 = vmatpush2.msra.mxu0 0.0
    %2812 = vmatprep.subr.mxu0 0.0
    %2813 = vmatpush2.msra.mxu0 0.0
    %2814 = vmatprep.subr.mxu0 0.0
    %2815 = vmatpush2.msra.mxu0 0.0
    %2816 = vmatprep.subr.mxu0 0.0
    %2817 = vmatpush2.msra.mxu0 0.0
    %2818 = vmatprep.subr.mxu0 0.0
    %2819 = vmatpush2.msra.mxu0 0.0
    %2820 = vmatprep.subr.mxu0 0.0
    %2821 = vmatpush2.msra.mxu0 0.0
    %2822 = vmatprep.subr.mxu0 0.0
    %2823 = vmatpush2.msra.mxu0 0.0
    %2824 = vmatprep.subr.mxu0 0.0
    %2825 = vmatpush2.msra.mxu0 0.0
    %2826 = vmatprep.subr.mxu0 0.0
    %2827 = vmatpush2.msra.mxu0 0.0
    %2828 = vmatprep.subr.mxu0 0.0
    %2829 = vmatpush2.msra.mxu0 0.0
    %2830 = vmatprep.subr.mxu0 0.0
    %2831 = vmatpush2.msra.mxu0 0.0
    %2832 = vmatprep.subr.mxu0 0.0
    %2833 = vmatpush2.msra.mxu0 0.0
    %2834 = vmatprep.subr.mxu0 0.0
    %2835 = vmatpush2.msra.mxu0 0.0
    %2836 = vmatprep.subr.mxu0 0.0
    %2837 = vmatpush2.msra.mxu0 0.0
    %2838 = vmatprep.mubr.f32.mxu0 0.0
    %2839 = vmatmul.mubr.f32.gmra.mxu0 %v2437
    %v2840 = vpop.f32.mrf.mxu0
    %v2841 = vadd.f32 0.0, %v2840
    %v2842 = vpop.f32.mrf.mxu0
    %2843 = vmatprep.mubr.f32.mxu0 0.0
    %2844 = vmatmul.mubr.f32.gmra.mxu0 %v2440
    %v2845 = vpop.f32.mrf.mxu0
    %v2846 = vadd.f32 0.0, %v2845
    %v2847 = vpop.f32.mrf.mxu0
    %2848 = vmatprep.mubr.f32.mxu0 0.0
    %2849 = vmatmul.mubr.f32.gmra.mxu0 %v2443
    %v2850 = vpop.f32.mrf.mxu0
    %v2851 = vadd.f32 0.0, %v2850
    %v2852 = vpop.f32.mrf.mxu0
    %2853 = vmatprep.mubr.f32.mxu0 0.0
    %2854 = vmatmul.mubr.f32.gmra.mxu0 %v2446
    %v2855 = vpop.f32.mrf.mxu0
    %v2856 = vadd.f32 0.0, %v2855
    %v2857 = vpop.f32.mrf.mxu0
    %2858 = vmatprep.mubr.f32.mxu0 0.0
    %2859 = vmatmul.mubr.f32.gmra.mxu0 %v2449
    %v2860 = vpop.f32.mrf.mxu0
    %v2861 = vadd.f32 0.0, %v2860
    %v2862 = vpop.f32.mrf.mxu0
    %2863 = vmatprep.mubr.f32.mxu0 0.0
    %2864 = vmatmul.mubr.f32.gmra.mxu0 %v2452
    %v2865 = vpop.f32.mrf.mxu0
    %v2866 = vadd.f32 0.0, %v2865
    %v2867 = vpop.f32.mrf.mxu0
    %2868 = vmatprep.mubr.f32.mxu0 0.0
    %2869 = vmatmul.mubr.f32.gmra.mxu0 %v2455
    %v2870 = vpop.f32.mrf.mxu0
    %v2871 = vadd.f32 0.0, %v2870
    %v2872 = vpop.f32.mrf.mxu0
    %2873 = vmatprep.mubr.f32.mxu0 0.0
    %2874 = vmatmul.mubr.f32.gmra.mxu0 %v2458
    %v2875 = vpop.f32.mrf.mxu0
    %v2876 = vadd.f32 0.0, %v2875
    %v2877 = vpop.f32.mrf.mxu0
    %2878 = vmatprep.mubr.f32.mxu0 0.0
    %2879 = vmatmul.mubr.f32.gmra.mxu0 %v2461
    %v2880 = vpop.f32.mrf.mxu0
    %v2881 = vadd.f32 0.0, %v2880
    %v2882 = vpop.f32.mrf.mxu0
    %2883 = vmatprep.mubr.f32.mxu0 0.0
    %2884 = vmatmul.mubr.f32.gmra.mxu0 %v2464
    %v2885 = vpop.f32.mrf.mxu0
    %v2886 = vadd.f32 0.0, %v2885
    %v2887 = vpop.f32.mrf.mxu0
    %2888 = vmatprep.mubr.f32.mxu0 0.0
    %2889 = vmatmul.mubr.f32.gmra.mxu0 %v2467
    %v2890 = vpop.f32.mrf.mxu0
    %v2891 = vadd.f32 0.0, %v2890
    %v2892 = vpop.f32.mrf.mxu0
    %2893 = vmatprep.mubr.f32.mxu0 0.0
    %2894 = vmatmul.mubr.f32.gmra.mxu0 %v2470
    %v2895 = vpop.f32.mrf.mxu0
    %v2896 = vadd.f32 0.0, %v2895
    %v2897 = vpop.f32.mrf.mxu0
    %2898 = vmatprep.mubr.f32.mxu0 0.0
    %2899 = vmatmul.mubr.f32.gmra.mxu0 %v2473
    %v2900 = vpop.f32.mrf.mxu0
    %v2901 = vadd.f32 0.0, %v2900
    %v2902 = vpop.f32.mrf.mxu0
    %2903 = vmatprep.mubr.f32.mxu0 0.0
    %2904 = vmatmul.mubr.f32.gmra.mxu0 %v2476
    %v2905 = vpop.f32.mrf.mxu0
    %v2906 = vadd.f32 0.0, %v2905
    %v2907 = vpop.f32.mrf.mxu0
    %2908 = vmatprep.mubr.f32.mxu0 0.0
    %2909 = vmatmul.mubr.f32.gmra.mxu0 %v2479
    %v2910 = vpop.f32.mrf.mxu0
    %v2911 = vadd.f32 0.0, %v2910
    %v2912 = vpop.f32.mrf.mxu0
    %2913 = vmatprep.mubr.f32.mxu0 0.0
    %2914 = vmatmul.mubr.f32.gmra.mxu0 %v2482
    %v2915 = vpop.f32.mrf.mxu0
    %v2916 = vadd.f32 0.0, %v2915
    %v2917 = vpop.f32.mrf.mxu0
    %2918 = vdwg.mxu0
    %2919 = vmatprep.subr.mxu0 0.0
    %2920 = vmatpush1.msra.mxu0 0.0
    %2921 = vmatprep.subr.mxu0 0.0
    %2922 = vmatpush1.msra.mxu0 0.0
    %2923 = vmatprep.subr.mxu0 0.0
    %2924 = vmatpush1.msra.mxu0 0.0
    %2925 = vmatprep.subr.mxu0 0.0
    %2926 = vmatpush1.msra.mxu0 0.0
    %2927 = vmatprep.subr.mxu0 0.0
    %2928 = vmatpush1.msra.mxu0 0.0
    %2929 = vmatprep.subr.mxu0 0.0
    %2930 = vmatpush1.msra.mxu0 0.0
    %2931 = vmatprep.subr.mxu0 0.0
    %2932 = vmatpush1.msra.mxu0 0.0
    %2933 = vmatprep.subr.mxu0 0.0
    %2934 = vmatpush1.msra.mxu0 0.0
    %2935 = vmatprep.subr.mxu0 0.0
    %2936 = vmatpush1.msra.mxu0 0.0
    %2937 = vmatprep.subr.mxu0 0.0
    %2938 = vmatpush1.msra.mxu0 0.0
    %2939 = vmatprep.subr.mxu0 0.0
    %2940 = vmatpush1.msra.mxu0 0.0
    %2941 = vmatprep.subr.mxu0 0.0
    %2942 = vmatpush1.msra.mxu0 0.0
    %2943 = vmatprep.subr.mxu0 0.0
    %2944 = vmatpush1.msra.mxu0 %v164
    %2945 = vmatprep.subr.mxu0 0.0
    %2946 = vmatpush1.msra.mxu0 %v163
    %2947 = vmatprep.subr.mxu0 0.0
    %2948 = vmatpush1.msra.mxu0 %v162
    %2949 = vmatprep.subr.mxu0 0.0
    %2950 = vmatpush1.msra.mxu0 %v161
    %2951 = vmatprep.subr.mxu0 0.0
    %2952 = vmatpush2.msra.mxu0 0.0
    %2953 = vmatprep.subr.mxu0 0.0
    %2954 = vmatpush2.msra.mxu0 0.0
    %2955 = vmatprep.subr.mxu0 0.0
    %2956 = vmatpush2.msra.mxu0 0.0
    %2957 = vmatprep.subr.mxu0 0.0
    %2958 = vmatpush2.msra.mxu0 0.0
    %2959 = vmatprep.subr.mxu0 0.0
    %2960 = vmatpush2.msra.mxu0 0.0
    %2961 = vmatprep.subr.mxu0 0.0
    %2962 = vmatpush2.msra.mxu0 0.0
    %2963 = vmatprep.subr.mxu0 0.0
    %2964 = vmatpush2.msra.mxu0 0.0
    %2965 = vmatprep.subr.mxu0 0.0
    %2966 = vmatpush2.msra.mxu0 0.0
    %2967 = vmatprep.subr.mxu0 0.0
    %2968 = vmatpush2.msra.mxu0 0.0
    %2969 = vmatprep.subr.mxu0 0.0
    %2970 = vmatpush2.msra.mxu0 0.0
    %2971 = vmatprep.subr.mxu0 0.0
    %2972 = vmatpush2.msra.mxu0 0.0
    %2973 = vmatprep.subr.mxu0 0.0
    %2974 = vmatpush2.msra.mxu0 0.0
    %2975 = vmatprep.subr.mxu0 0.0
    %2976 = vmatpush2.msra.mxu0 0.0
    %2977 = vmatprep.subr.mxu0 0.0
    %2978 = vmatpush2.msra.mxu0 0.0
    %2979 = vmatprep.subr.mxu0 0.0
    %2980 = vmatpush2.msra.mxu0 0.0
    %2981 = vmatprep.subr.mxu0 0.0
    %2982 = vmatpush2.msra.mxu0 0.0
    %2983 = vmatprep.mubr.f32.mxu0 0.0
    %2984 = vmatmul.mubr.f32.gmra.mxu0 %v2437
    %v2985 = vpop.f32.mrf.mxu0
    %v2986 = vadd.f32 0.0, %v2985
    %v2987 = vpop.f32.mrf.mxu0
    %2988 = vmatprep.mubr.f32.mxu0 0.0
    %2989 = vmatmul.mubr.f32.gmra.mxu0 %v2440
    %v2990 = vpop.f32.mrf.mxu0
    %v2991 = vadd.f32 0.0, %v2990
    %v2992 = vpop.f32.mrf.mxu0
    %2993 = vmatprep.mubr.f32.mxu0 0.0
    %2994 = vmatmul.mubr.f32.gmra.mxu0 %v2443
    %v2995 = vpop.f32.mrf.mxu0
    %v2996 = vadd.f32 0.0, %v2995
    %v2997 = vpop.f32.mrf.mxu0
    %2998 = vmatprep.mubr.f32.mxu0 0.0
    %2999 = vmatmul.mubr.f32.gmra.mxu0 %v2446
    %v3000 = vpop.f32.mrf.mxu0
    %v3001 = vadd.f32 0.0, %v3000
    %v3002 = vpop.f32.mrf.mxu0
    %3003 = vmatprep.mubr.f32.mxu0 0.0
    %3004 = vmatmul.mubr.f32.gmra.mxu0 %v2449
    %v3005 = vpop.f32.mrf.mxu0
    %v3006 = vadd.f32 0.0, %v3005
    %v3007 = vpop.f32.mrf.mxu0
    %3008 = vmatprep.mubr.f32.mxu0 0.0
    %3009 = vmatmul.mubr.f32.gmra.mxu0 %v2452
    %v3010 = vpop.f32.mrf.mxu0
    %v3011 = vadd.f32 0.0, %v3010
    %v3012 = vpop.f32.mrf.mxu0
    %3013 = vmatprep.mubr.f32.mxu0 0.0
    %3014 = vmatmul.mubr.f32.gmra.mxu0 %v2455
    %v3015 = vpop.f32.mrf.mxu0
    %v3016 = vadd.f32 0.0, %v3015
    %v3017 = vpop.f32.mrf.mxu0
    %3018 = vmatprep.mubr.f32.mxu0 0.0
    %3019 = vmatmul.mubr.f32.gmra.mxu0 %v2458
    %v3020 = vpop.f32.mrf.mxu0
    %v3021 = vadd.f32 0.0, %v3020
    %v3022 = vpop.f32.mrf.mxu0
    %3023 = vmatprep.mubr.f32.mxu0 0.0
    %3024 = vmatmul.mubr.f32.gmra.mxu0 %v2461
    %v3025 = vpop.f32.mrf.mxu0
    %v3026 = vadd.f32 0.0, %v3025
    %v3027 = vpop.f32.mrf.mxu0
    %3028 = vmatprep.mubr.f32.mxu0 0.0
    %3029 = vmatmul.mubr.f32.gmra.mxu0 %v2464
    %v3030 = vpop.f32.mrf.mxu0
    %v3031 = vadd.f32 0.0, %v3030
    %v3032 = vpop.f32.mrf.mxu0
    %3033 = vmatprep.mubr.f32.mxu0 0.0
    %3034 = vmatmul.mubr.f32.gmra.mxu0 %v2467
    %v3035 = vpop.f32.mrf.mxu0
    %v3036 = vadd.f32 0.0, %v3035
    %v3037 = vpop.f32.mrf.mxu0
    %3038 = vmatprep.mubr.f32.mxu0 0.0
    %3039 = vmatmul.mubr.f32.gmra.mxu0 %v2470
    %v3040 = vpop.f32.mrf.mxu0
    %v3041 = vadd.f32 0.0, %v3040
    %v3042 = vpop.f32.mrf.mxu0
    %3043 = vmatprep.mubr.f32.mxu0 0.0
    %3044 = vmatmul.mubr.f32.gmra.mxu0 %v2473
    %v3045 = vpop.f32.mrf.mxu0
    %v3046 = vadd.f32 0.0, %v3045
    %v3047 = vpop.f32.mrf.mxu0
    %3048 = vmatprep.mubr.f32.mxu0 0.0
    %3049 = vmatmul.mubr.f32.gmra.mxu0 %v2476
    %v3050 = vpop.f32.mrf.mxu0
    %v3051 = vadd.f32 0.0, %v3050
    %v3052 = vpop.f32.mrf.mxu0
    %3053 = vmatprep.mubr.f32.mxu0 0.0
    %3054 = vmatmul.mubr.f32.gmra.mxu0 %v2479
    %v3055 = vpop.f32.mrf.mxu0
    %v3056 = vadd.f32 0.0, %v3055
    %v3057 = vpop.f32.mrf.mxu0
    %3058 = vmatprep.mubr.f32.mxu0 0.0
    %3059 = vmatmul.mubr.f32.gmra.mxu0 %v2482
    %v3060 = vpop.f32.mrf.mxu0
    %v3061 = vadd.f32 0.0, %v3060
    %v3062 = vpop.f32.mrf.mxu0
    %3063 = vdwg.mxu0
    %3064 = vmatprep.subr.mxu0 0.0
    %3065 = vmatpush1.msra.mxu0 %v2626
    %3066 = vmatprep.subr.mxu0 0.0
    %3067 = vmatpush1.msra.mxu0 %v2621
    %3068 = vmatprep.subr.mxu0 0.0
    %3069 = vmatpush1.msra.mxu0 %v2616
    %3070 = vmatprep.subr.mxu0 0.0
    %3071 = vmatpush1.msra.mxu0 %v2611
    %3072 = vmatprep.subr.mxu0 0.0
    %3073 = vmatpush1.msra.mxu0 %v2606
    %3074 = vmatprep.subr.mxu0 0.0
    %3075 = vmatpush1.msra.mxu0 %v2601
    %3076 = vmatprep.subr.mxu0 0.0
    %3077 = vmatpush1.msra.mxu0 %v2596
    %3078 = vmatprep.subr.mxu0 0.0
    %3079 = vmatpush1.msra.mxu0 %v2591
    %3080 = vmatprep.subr.mxu0 0.0
    %3081 = vmatpush1.msra.mxu0 %v2586
    %3082 = vmatprep.subr.mxu0 0.0
    %3083 = vmatpush1.msra.mxu0 %v2581
    %3084 = vmatprep.subr.mxu0 0.0
    %3085 = vmatpush1.msra.mxu0 %v2576
    %3086 = vmatprep.subr.mxu0 0.0
    %3087 = vmatpush1.msra.mxu0 %v2571
    %3088 = vmatprep.subr.mxu0 0.0
    %3089 = vmatpush1.msra.mxu0 %v2566
    %3090 = vmatprep.subr.mxu0 0.0
    %3091 = vmatpush1.msra.mxu0 %v2561
    %3092 = vmatprep.subr.mxu0 0.0
    %3093 = vmatpush1.msra.mxu0 %v2556
    %3094 = vmatprep.subr.mxu0 0.0
    %3095 = vmatpush1.msra.mxu0 %v2551
    %3096 = vmatprep.subr.mxu0 0.0
    %3097 = vmatpush2.msra.mxu0 %v2771
    %3098 = vmatprep.subr.mxu0 0.0
    %3099 = vmatpush2.msra.mxu0 %v2766
    %3100 = vmatprep.subr.mxu0 0.0
    %3101 = vmatpush2.msra.mxu0 %v2761
    %3102 = vmatprep.subr.mxu0 0.0
    %3103 = vmatpush2.msra.mxu0 %v2756
    %3104 = vmatprep.subr.mxu0 0.0
    %3105 = vmatpush2.msra.mxu0 %v2751
    %3106 = vmatprep.subr.mxu0 0.0
    %3107 = vmatpush2.msra.mxu0 %v2746
    %3108 = vmatprep.subr.mxu0 0.0
    %3109 = vmatpush2.msra.mxu0 %v2741
    %3110 = vmatprep.subr.mxu0 0.0
    %3111 = vmatpush2.msra.mxu0 %v2736
    %3112 = vmatprep.subr.mxu0 0.0
    %3113 = vmatpush2.msra.mxu0 %v2731
    %3114 = vmatprep.subr.mxu0 0.0
    %3115 = vmatpush2.msra.mxu0 %v2726
    %3116 = vmatprep.subr.mxu0 0.0
    %3117 = vmatpush2.msra.mxu0 %v2721
    %3118 = vmatprep.subr.mxu0 0.0
    %3119 = vmatpush2.msra.mxu0 %v2716
    %3120 = vmatprep.subr.mxu0 0.0
    %3121 = vmatpush2.msra.mxu0 %v2711
    %3122 = vmatprep.subr.mxu0 0.0
    %3123 = vmatpush2.msra.mxu0 %v2706
    %3124 = vmatprep.subr.mxu0 0.0
    %3125 = vmatpush2.msra.mxu0 %v2701
    %3126 = vmatprep.subr.mxu0 0.0
    %3127 = vmatpush2.msra.mxu0 %v2696
    %3128 = vmatprep.mubr.f32.mxu0 %v70
    %3129 = vmatmul.mubr.f32.gmra.mxu0 %v69
    %v3130 = vpop.f32.mrf.mxu0
    %v3131 = vadd.f32 %v133, %v3130
    %v3132 = vpop.f32.mrf.mxu0
    %3133 = vmatprep.mubr.f32.mxu0 %v74
    %3134 = vmatmul.mubr.f32.gmra.mxu0 %v73
    %v3135 = vpop.f32.mrf.mxu0
    %v3136 = vadd.f32 %v134, %v3135
    %v3137 = vpop.f32.mrf.mxu0
    %3138 = vmatprep.mubr.f32.mxu0 %v78
    %3139 = vmatmul.mubr.f32.gmra.mxu0 %v77
    %v3140 = vpop.f32.mrf.mxu0
    %v3141 = vadd.f32 %v135, %v3140
    %v3142 = vpop.f32.mrf.mxu0
    %3143 = vmatprep.mubr.f32.mxu0 %v82
    %3144 = vmatmul.mubr.f32.gmra.mxu0 %v81
    %v3145 = vpop.f32.mrf.mxu0
    %v3146 = vadd.f32 %v136, %v3145
    %v3147 = vpop.f32.mrf.mxu0
    %3148 = vmatprep.mubr.f32.mxu0 %v86
    %3149 = vmatmul.mubr.f32.gmra.mxu0 %v85
    %v3150 = vpop.f32.mrf.mxu0
    %v3151 = vadd.f32 %v137, %v3150
    %v3152 = vpop.f32.mrf.mxu0
    %3153 = vmatprep.mubr.f32.mxu0 %v90
    %3154 = vmatmul.mubr.f32.gmra.mxu0 %v89
    %v3155 = vpop.f32.mrf.mxu0
    %v3156 = vadd.f32 %v138, %v3155
    %v3157 = vpop.f32.mrf.mxu0
    %3158 = vmatprep.mubr.f32.mxu0 %v94
    %3159 = vmatmul.mubr.f32.gmra.mxu0 %v93
    %v3160 = vpop.f32.mrf.mxu0
    %v3161 = vadd.f32 %v139, %v3160
    %v3162 = vpop.f32.mrf.mxu0
    %3163 = vmatprep.mubr.f32.mxu0 %v98
    %3164 = vmatmul.mubr.f32.gmra.mxu0 %v97
    %v3165 = vpop.f32.mrf.mxu0
    %v3166 = vadd.f32 %v140, %v3165
    %v3167 = vpop.f32.mrf.mxu0
    %3168 = vmatprep.mubr.f32.mxu0 %v102
    %3169 = vmatmul.mubr.f32.gmra.mxu0 %v101
    %v3170 = vpop.f32.mrf.mxu0
    %v3171 = vadd.f32 %v141, %v3170
    %v3172 = vpop.f32.mrf.mxu0
    %3173 = vmatprep.mubr.f32.mxu0 %v106
    %3174 = vmatmul.mubr.f32.gmra.mxu0 %v105
    %v3175 = vpop.f32.mrf.mxu0
    %v3176 = vadd.f32 %v142, %v3175
    %v3177 = vpop.f32.mrf.mxu0
    %3178 = vmatprep.mubr.f32.mxu0 %v110
    %3179 = vmatmul.mubr.f32.gmra.mxu0 %v109
    %v3180 = vpop.f32.mrf.mxu0
    %v3181 = vadd.f32 %v143, %v3180
    %v3182 = vpop.f32.mrf.mxu0
    %3183 = vmatprep.mubr.f32.mxu0 %v114
    %3184 = vmatmul.mubr.f32.gmra.mxu0 %v113
    %v3185 = vpop.f32.mrf.mxu0
    %v3186 = vadd.f32 %v144, %v3185
    %v3187 = vpop.f32.mrf.mxu0
    %3188 = vmatprep.mubr.f32.mxu0 %v118
    %3189 = vmatmul.mubr.f32.gmra.mxu0 %v117
    %v3190 = vpop.f32.mrf.mxu0
    %v3191 = vadd.f32 %v145, %v3190
    %v3192 = vpop.f32.mrf.mxu0
    %3193 = vmatprep.mubr.f32.mxu0 %v122
    %3194 = vmatmul.mubr.f32.gmra.mxu0 %v121
    %v3195 = vpop.f32.mrf.mxu0
    %v3196 = vadd.f32 %v146, %v3195
    %v3197 = vpop.f32.mrf.mxu0
    %3198 = vmatprep.mubr.f32.mxu0 %v126
    %3199 = vmatmul.mubr.f32.gmra.mxu0 %v125
    %v3200 = vpop.f32.mrf.mxu0
    %v3201 = vadd.f32 %v147, %v3200
    %v3202 = vpop.f32.mrf.mxu0
    %3203 = vmatprep.mubr.f32.mxu0 %v130
    %3204 = vmatmul.mubr.f32.gmra.mxu0 %v129
    %v3205 = vpop.f32.mrf.mxu0
    %v3206 = vadd.f32 %v148, %v3205
    %v3207 = vpop.f32.mrf.mxu0
    %3208 = vdwg.mxu0
    %3209 = vmatprep.subr.mxu0 0.0
    %3210 = vmatpush1.msra.mxu0 %v2916
    %3211 = vmatprep.subr.mxu0 0.0
    %3212 = vmatpush1.msra.mxu0 %v2911
    %3213 = vmatprep.subr.mxu0 0.0
    %3214 = vmatpush1.msra.mxu0 %v2906
    %3215 = vmatprep.subr.mxu0 0.0
    %3216 = vmatpush1.msra.mxu0 %v2901
    %3217 = vmatprep.subr.mxu0 0.0
    %3218 = vmatpush1.msra.mxu0 %v2896
    %3219 = vmatprep.subr.mxu0 0.0
    %3220 = vmatpush1.msra.mxu0 %v2891
    %3221 = vmatprep.subr.mxu0 0.0
    %3222 = vmatpush1.msra.mxu0 %v2886
    %3223 = vmatprep.subr.mxu0 0.0
    %3224 = vmatpush1.msra.mxu0 %v2881
    %3225 = vmatprep.subr.mxu0 0.0
    %3226 = vmatpush1.msra.mxu0 %v2876
    %3227 = vmatprep.subr.mxu0 0.0
    %3228 = vmatpush1.msra.mxu0 %v2871
    %3229 = vmatprep.subr.mxu0 0.0
    %3230 = vmatpush1.msra.mxu0 %v2866
    %3231 = vmatprep.subr.mxu0 0.0
    %3232 = vmatpush1.msra.mxu0 %v2861
    %3233 = vmatprep.subr.mxu0 0.0
    %3234 = vmatpush1.msra.mxu0 %v2856
    %3235 = vmatprep.subr.mxu0 0.0
    %3236 = vmatpush1.msra.mxu0 %v2851
    %3237 = vmatprep.subr.mxu0 0.0
    %3238 = vmatpush1.msra.mxu0 %v2846
    %3239 = vmatprep.subr.mxu0 0.0
    %3240 = vmatpush1.msra.mxu0 %v2841
    %3241 = vmatprep.subr.mxu0 0.0
    %3242 = vmatpush2.msra.mxu0 %v3061
    %3243 = vmatprep.subr.mxu0 0.0
    %3244 = vmatpush2.msra.mxu0 %v3056
    %3245 = vmatprep.subr.mxu0 0.0
    %3246 = vmatpush2.msra.mxu0 %v3051
    %3247 = vmatprep.subr.mxu0 0.0
    %3248 = vmatpush2.msra.mxu0 %v3046
    %3249 = vmatprep.subr.mxu0 0.0
    %3250 = vmatpush2.msra.mxu0 %v3041
    %3251 = vmatprep.subr.mxu0 0.0
    %3252 = vmatpush2.msra.mxu0 %v3036
    %3253 = vmatprep.subr.mxu0 0.0
    %3254 = vmatpush2.msra.mxu0 %v3031
    %3255 = vmatprep.subr.mxu0 0.0
    %3256 = vmatpush2.msra.mxu0 %v3026
    %3257 = vmatprep.subr.mxu0 0.0
    %3258 = vmatpush2.msra.mxu0 %v3021
    %3259 = vmatprep.subr.mxu0 0.0
    %3260 = vmatpush2.msra.mxu0 %v3016
    %3261 = vmatprep.subr.mxu0 0.0
    %3262 = vmatpush2.msra.mxu0 %v3011
    %3263 = vmatprep.subr.mxu0 0.0
    %3264 = vmatpush2.msra.mxu0 %v3006
    %3265 = vmatprep.subr.mxu0 0.0
    %3266 = vmatpush2.msra.mxu0 %v3001
    %3267 = vmatprep.subr.mxu0 0.0
    %3268 = vmatpush2.msra.mxu0 %v2996
    %3269 = vmatprep.subr.mxu0 0.0
    %3270 = vmatpush2.msra.mxu0 %v2991
    %3271 = vmatprep.subr.mxu0 0.0
    %3272 = vmatpush2.msra.mxu0 %v2986
    %3273 = vmatprep.mubr.f32.mxu0 %v72
    %3274 = vmatmul.mubr.f32.gmra.mxu0 %v71
    %v3275 = vpop.f32.mrf.mxu0
    %v3276 = vadd.f32 %v3131, %v3275
    %v3277 = vpop.f32.mrf.mxu0
    %3278 = vmatprep.mubr.f32.mxu0 %v76
    %3279 = vmatmul.mubr.f32.gmra.mxu0 %v75
    %v3280 = vpop.f32.mrf.mxu0
    %v3281 = vadd.f32 %v3136, %v3280
    %v3282 = vpop.f32.mrf.mxu0
    %3283 = vmatprep.mubr.f32.mxu0 %v80
    %3284 = vmatmul.mubr.f32.gmra.mxu0 %v79
    %v3285 = vpop.f32.mrf.mxu0
    %v3286 = vadd.f32 %v3141, %v3285
    %v3287 = vpop.f32.mrf.mxu0
    %3288 = vmatprep.mubr.f32.mxu0 %v84
    %3289 = vmatmul.mubr.f32.gmra.mxu0 %v83
    %v3290 = vpop.f32.mrf.mxu0
    %v3291 = vadd.f32 %v3146, %v3290
    %v3292 = vpop.f32.mrf.mxu0
    %3293 = vmatprep.mubr.f32.mxu0 %v88
    %3294 = vmatmul.mubr.f32.gmra.mxu0 %v87
    %v3295 = vpop.f32.mrf.mxu0
    %v3296 = vadd.f32 %v3151, %v3295
    %v3297 = vpop.f32.mrf.mxu0
    %3298 = vmatprep.mubr.f32.mxu0 %v92
    %3299 = vmatmul.mubr.f32.gmra.mxu0 %v91
    %v3300 = vpop.f32.mrf.mxu0
    %v3301 = vadd.f32 %v3156, %v3300
    %v3302 = vpop.f32.mrf.mxu0
    %3303 = vmatprep.mubr.f32.mxu0 %v96
    %3304 = vmatmul.mubr.f32.gmra.mxu0 %v95
    %v3305 = vpop.f32.mrf.mxu0
    %v3306 = vadd.f32 %v3161, %v3305
    %v3307 = vpop.f32.mrf.mxu0
    %3308 = vmatprep.mubr.f32.mxu0 %v100
    %3309 = vmatmul.mubr.f32.gmra.mxu0 %v99
    %v3310 = vpop.f32.mrf.mxu0
    %v3311 = vadd.f32 %v3166, %v3310
    %v3312 = vpop.f32.mrf.mxu0
    %3313 = vmatprep.mubr.f32.mxu0 %v104
    %3314 = vmatmul.mubr.f32.gmra.mxu0 %v103
    %v3315 = vpop.f32.mrf.mxu0
    %v3316 = vadd.f32 %v3171, %v3315
    %v3317 = vpop.f32.mrf.mxu0
    %3318 = vmatprep.mubr.f32.mxu0 %v108
    %3319 = vmatmul.mubr.f32.gmra.mxu0 %v107
    %v3320 = vpop.f32.mrf.mxu0
    %v3321 = vadd.f32 %v3176, %v3320
    %v3322 = vpop.f32.mrf.mxu0
    %3323 = vmatprep.mubr.f32.mxu0 %v112
    %3324 = vmatmul.mubr.f32.gmra.mxu0 %v111
    %v3325 = vpop.f32.mrf.mxu0
    %v3326 = vadd.f32 %v3181, %v3325
    %v3327 = vpop.f32.mrf.mxu0
    %3328 = vmatprep.mubr.f32.mxu0 %v116
    %3329 = vmatmul.mubr.f32.gmra.mxu0 %v115
    %v3330 = vpop.f32.mrf.mxu0
    %v3331 = vadd.f32 %v3186, %v3330
    %v3332 = vpop.f32.mrf.mxu0
    %3333 = vmatprep.mubr.f32.mxu0 %v120
    %3334 = vmatmul.mubr.f32.gmra.mxu0 %v119
    %v3335 = vpop.f32.mrf.mxu0
    %v3336 = vadd.f32 %v3191, %v3335
    %v3337 = vpop.f32.mrf.mxu0
    %3338 = vmatprep.mubr.f32.mxu0 %v124
    %3339 = vmatmul.mubr.f32.gmra.mxu0 %v123
    %v3340 = vpop.f32.mrf.mxu0
    %v3341 = vadd.f32 %v3196, %v3340
    %v3342 = vpop.f32.mrf.mxu0
    %3343 = vmatprep.mubr.f32.mxu0 %v128
    %3344 = vmatmul.mubr.f32.gmra.mxu0 %v127
    %v3345 = vpop.f32.mrf.mxu0
    %v3346 = vadd.f32 %v3201, %v3345
    %v3347 = vpop.f32.mrf.mxu0
    %3348 = vmatprep.mubr.f32.mxu0 %v132
    %3349 = vmatmul.mubr.f32.gmra.mxu0 %v131
    %v3350 = vpop.f32.mrf.mxu0
    %v3351 = vadd.f32 %v3206, %v3350
    %v3352 = vpop.f32.mrf.mxu0
    %3353 = vdwg.mxu0
    %3354 = vmatprep.subr.mxu0 0.0
    %3355 = vmatpush1.msra.mxu0 0.0
    %3356 = vmatprep.subr.mxu0 0.0
    %3357 = vmatpush1.msra.mxu0 0.0
    %3358 = vmatprep.subr.mxu0 0.0
    %3359 = vmatpush1.msra.mxu0 0.0
    %3360 = vmatprep.subr.mxu0 0.0
    %3361 = vmatpush1.msra.mxu0 0.0
    %3362 = vmatprep.subr.mxu0 0.0
    %3363 = vmatpush1.msra.mxu0 0.0
    %3364 = vmatprep.subr.mxu0 0.0
    %3365 = vmatpush1.msra.mxu0 0.0
    %3366 = vmatprep.subr.mxu0 0.0
    %3367 = vmatpush1.msra.mxu0 0.0
    %3368 = vmatprep.subr.mxu0 0.0
    %3369 = vmatpush1.msra.mxu0 0.0
    %3370 = vmatprep.subr.mxu0 0.0
    %3371 = vmatpush1.msra.mxu0 0.0
    %3372 = vmatprep.subr.mxu0 0.0
    %3373 = vmatpush1.msra.mxu0 0.0
    %3374 = vmatprep.subr.mxu0 0.0
    %3375 = vmatpush1.msra.mxu0 0.0
    %3376 = vmatprep.subr.mxu0 0.0
    %3377 = vmatpush1.msra.mxu0 0.0
    %3378 = vmatprep.subr.mxu0 0.0
    %3379 = vmatpush1.msra.mxu0 %v192
    %3380 = vmatprep.subr.mxu0 0.0
    %3381 = vmatpush1.msra.mxu0 %v191
    %3382 = vmatprep.subr.mxu0 0.0
    %3383 = vmatpush1.msra.mxu0 %v190
    %3384 = vmatprep.subr.mxu0 0.0
    %3385 = vmatpush1.msra.mxu0 %v189
    %3386 = vmatprep.subr.mxu0 0.0
    %3387 = vmatpush2.msra.mxu0 0.0
    %3388 = vmatprep.subr.mxu0 0.0
    %3389 = vmatpush2.msra.mxu0 0.0
    %3390 = vmatprep.subr.mxu0 0.0
    %3391 = vmatpush2.msra.mxu0 0.0
    %3392 = vmatprep.subr.mxu0 0.0
    %3393 = vmatpush2.msra.mxu0 0.0
    %3394 = vmatprep.subr.mxu0 0.0
    %3395 = vmatpush2.msra.mxu0 0.0
    %3396 = vmatprep.subr.mxu0 0.0
    %3397 = vmatpush2.msra.mxu0 0.0
    %3398 = vmatprep.subr.mxu0 0.0
    %3399 = vmatpush2.msra.mxu0 0.0
    %3400 = vmatprep.subr.mxu0 0.0
    %3401 = vmatpush2.msra.mxu0 0.0
    %3402 = vmatprep.subr.mxu0 0.0
    %3403 = vmatpush2.msra.mxu0 0.0
    %3404 = vmatprep.subr.mxu0 0.0
    %3405 = vmatpush2.msra.mxu0 0.0
    %3406 = vmatprep.subr.mxu0 0.0
    %3407 = vmatpush2.msra.mxu0 0.0
    %3408 = vmatprep.subr.mxu0 0.0
    %3409 = vmatpush2.msra.mxu0 0.0
    %3410 = vmatprep.subr.mxu0 0.0
    %3411 = vmatpush2.msra.mxu0 0.0
    %3412 = vmatprep.subr.mxu0 0.0
    %3413 = vmatpush2.msra.mxu0 0.0
    %3414 = vmatprep.subr.mxu0 0.0
    %3415 = vmatpush2.msra.mxu0 0.0
    %3416 = vmatprep.subr.mxu0 0.0
    %3417 = vmatpush2.msra.mxu0 0.0
    %3418 = vmatprep.mubr.f32.mxu0 0.0
    %3419 = vmatmul.mubr.f32.gmra.mxu0 %v2437
    %v3420 = vpop.f32.mrf.mxu0
    %v3421 = vadd.f32 0.0, %v3420
    %v3422 = vpop.f32.mrf.mxu0
    %3423 = vmatprep.mubr.f32.mxu0 0.0
    %3424 = vmatmul.mubr.f32.gmra.mxu0 %v2440
    %v3425 = vpop.f32.mrf.mxu0
    %v3426 = vadd.f32 0.0, %v3425
    %v3427 = vpop.f32.mrf.mxu0
    %3428 = vmatprep.mubr.f32.mxu0 0.0
    %3429 = vmatmul.mubr.f32.gmra.mxu0 %v2443
    %v3430 = vpop.f32.mrf.mxu0
    %v3431 = vadd.f32 0.0, %v3430
    %v3432 = vpop.f32.mrf.mxu0
    %3433 = vmatprep.mubr.f32.mxu0 0.0
    %3434 = vmatmul.mubr.f32.gmra.mxu0 %v2446
    %v3435 = vpop.f32.mrf.mxu0
    %v3436 = vadd.f32 0.0, %v3435
    %v3437 = vpop.f32.mrf.mxu0
    %3438 = vmatprep.mubr.f32.mxu0 0.0
    %3439 = vmatmul.mubr.f32.gmra.mxu0 %v2449
    %v3440 = vpop.f32.mrf.mxu0
    %v3441 = vadd.f32 0.0, %v3440
    %v3442 = vpop.f32.mrf.mxu0
    %3443 = vmatprep.mubr.f32.mxu0 0.0
    %3444 = vmatmul.mubr.f32.gmra.mxu0 %v2452
    %v3445 = vpop.f32.mrf.mxu0
    %v3446 = vadd.f32 0.0, %v3445
    %v3447 = vpop.f32.mrf.mxu0
    %3448 = vmatprep.mubr.f32.mxu0 0.0
    %3449 = vmatmul.mubr.f32.gmra.mxu0 %v2455
    %v3450 = vpop.f32.mrf.mxu0
    %v3451 = vadd.f32 0.0, %v3450
    %v3452 = vpop.f32.mrf.mxu0
    %3453 = vmatprep.mubr.f32.mxu0 0.0
    %3454 = vmatmul.mubr.f32.gmra.mxu0 %v2458
    %v3455 = vpop.f32.mrf.mxu0
    %v3456 = vadd.f32 0.0, %v3455
    %v3457 = vpop.f32.mrf.mxu0
    %3458 = vmatprep.mubr.f32.mxu0 0.0
    %3459 = vmatmul.mubr.f32.gmra.mxu0 %v2461
    %v3460 = vpop.f32.mrf.mxu0
    %v3461 = vadd.f32 0.0, %v3460
    %v3462 = vpop.f32.mrf.mxu0
    %3463 = vmatprep.mubr.f32.mxu0 0.0
    %3464 = vmatmul.mubr.f32.gmra.mxu0 %v2464
    %v3465 = vpop.f32.mrf.mxu0
    %v3466 = vadd.f32 0.0, %v3465
    %v3467 = vpop.f32.mrf.mxu0
    %3468 = vmatprep.mubr.f32.mxu0 0.0
    %3469 = vmatmul.mubr.f32.gmra.mxu0 %v2467
    %v3470 = vpop.f32.mrf.mxu0
    %v3471 = vadd.f32 0.0, %v3470
    %v3472 = vpop.f32.mrf.mxu0
    %3473 = vmatprep.mubr.f32.mxu0 0.0
    %3474 = vmatmul.mubr.f32.gmra.mxu0 %v2470
    %v3475 = vpop.f32.mrf.mxu0
    %v3476 = vadd.f32 0.0, %v3475
    %v3477 = vpop.f32.mrf.mxu0
    %3478 = vmatprep.mubr.f32.mxu0 0.0
    %3479 = vmatmul.mubr.f32.gmra.mxu0 %v2473
    %v3480 = vpop.f32.mrf.mxu0
    %v3481 = vadd.f32 0.0, %v3480
    %v3482 = vpop.f32.mrf.mxu0
    %3483 = vmatprep.mubr.f32.mxu0 0.0
    %3484 = vmatmul.mubr.f32.gmra.mxu0 %v2476
    %v3485 = vpop.f32.mrf.mxu0
    %v3486 = vadd.f32 0.0, %v3485
    %v3487 = vpop.f32.mrf.mxu0
    %3488 = vmatprep.mubr.f32.mxu0 0.0
    %3489 = vmatmul.mubr.f32.gmra.mxu0 %v2479
    %v3490 = vpop.f32.mrf.mxu0
    %v3491 = vadd.f32 0.0, %v3490
    %v3492 = vpop.f32.mrf.mxu0
    %3493 = vmatprep.mubr.f32.mxu0 0.0
    %3494 = vmatmul.mubr.f32.gmra.mxu0 %v2482
    %v3495 = vpop.f32.mrf.mxu0
    %v3496 = vadd.f32 0.0, %v3495
    %v3497 = vpop.f32.mrf.mxu0
    %3498 = vdwg.mxu0
    %v3500 = vsel %vm1266, %v3276, 0
    %v3503 = vsel %vm1266, %v3281, 0
    %v3506 = vsel %vm1266, %v3286, 0
    %v3509 = vsel %vm1266, %v3291, 0
    %v3512 = vsel %vm1266, %v3296, 0
    %v3515 = vsel %vm1266, %v3301, 0
    %v3518 = vsel %vm1266, %v3306, 0
    %v3521 = vsel %vm1266, %v3311, 0
    %v3524 = vsel %vm1266, %v3316, 0
    %v3527 = vsel %vm1266, %v3321, 0
    %v3530 = vsel %vm1266, %v3326, 0
    %v3533 = vsel %vm1266, %v3331, 0
    %v3536 = vsel %vm1266, %v3336, 0
    %v3539 = vsel %vm1266, %v3341, 0
    %v3542 = vsel %vm1266, %v3346, 0
    %v3545 = vsel %vm1266, %v3351, 0
    %3547 = vmatprep.subr.mxu0 0.0
    %3548 = vmatpush1.msra.mxu0 0.0
    %3549 = vmatprep.subr.mxu0 0.0
    %3550 = vmatpush1.msra.mxu0 0.0
    %3551 = vmatprep.subr.mxu0 0.0
    %3552 = vmatpush1.msra.mxu0 0.0
    %3553 = vmatprep.subr.mxu0 0.0
    %3554 = vmatpush1.msra.mxu0 0.0
    %3555 = vmatprep.subr.mxu0 0.0
    %3556 = vmatpush1.msra.mxu0 0.0
    %3557 = vmatprep.subr.mxu0 0.0
    %3558 = vmatpush1.msra.mxu0 0.0
    %3559 = vmatprep.subr.mxu0 0.0
    %3560 = vmatpush1.msra.mxu0 0.0
    %3561 = vmatprep.subr.mxu0 0.0
    %3562 = vmatpush1.msra.mxu0 0.0
    %3563 = vmatprep.subr.mxu0 0.0
    %3564 = vmatpush1.msra.mxu0 %v172
    %3565 = vmatprep.subr.mxu0 0.0
    %3566 = vmatpush1.msra.mxu0 %v171
    %3567 = vmatprep.subr.mxu0 0.0
    %3568 = vmatpush1.msra.mxu0 %v170
    %3569 = vmatprep.subr.mxu0 0.0
    %3570 = vmatpush1.msra.mxu0 %v169
    %3571 = vmatprep.subr.mxu0 0.0
    %3572 = vmatpush1.msra.mxu0 %v168
    %3573 = vmatprep.subr.mxu0 0.0
    %3574 = vmatpush1.msra.mxu0 %v167
    %3575 = vmatprep.subr.mxu0 0.0
    %3576 = vmatpush1.msra.mxu0 %v166
    %3577 = vmatprep.subr.mxu0 0.0
    %3578 = vmatpush1.msra.mxu0 %v165
    %3579 = vmatprep.subr.mxu0 0.0
    %3580 = vmatpush2.msra.mxu0 0.0
    %3581 = vmatprep.subr.mxu0 0.0
    %3582 = vmatpush2.msra.mxu0 0.0
    %3583 = vmatprep.subr.mxu0 0.0
    %3584 = vmatpush2.msra.mxu0 0.0
    %3585 = vmatprep.subr.mxu0 0.0
    %3586 = vmatpush2.msra.mxu0 0.0
    %3587 = vmatprep.subr.mxu0 0.0
    %3588 = vmatpush2.msra.mxu0 0.0
    %3589 = vmatprep.subr.mxu0 0.0
    %3590 = vmatpush2.msra.mxu0 0.0
    %3591 = vmatprep.subr.mxu0 0.0
    %3592 = vmatpush2.msra.mxu0 0.0
    %3593 = vmatprep.subr.mxu0 0.0
    %3594 = vmatpush2.msra.mxu0 0.0
    %3595 = vmatprep.subr.mxu0 0.0
    %3596 = vmatpush2.msra.mxu0 0.0
    %3597 = vmatprep.subr.mxu0 0.0
    %3598 = vmatpush2.msra.mxu0 0.0
    %3599 = vmatprep.subr.mxu0 0.0
    %3600 = vmatpush2.msra.mxu0 0.0
    %3601 = vmatprep.subr.mxu0 0.0
    %3602 = vmatpush2.msra.mxu0 0.0
    %3603 = vmatprep.subr.mxu0 0.0
    %3604 = vmatpush2.msra.mxu0 0.0
    %3605 = vmatprep.subr.mxu0 0.0
    %3606 = vmatpush2.msra.mxu0 0.0
    %3607 = vmatprep.subr.mxu0 0.0
    %3608 = vmatpush2.msra.mxu0 0.0
    %3609 = vmatprep.subr.mxu0 0.0
    %3610 = vmatpush2.msra.mxu0 0.0
    %3611 = vmatprep.mubr.f32.mxu0 0.0
    %3612 = vmatmul.mubr.f32.gmra.mxu0 %v3500
    %v3613 = vpop.f32.mrf.mxu0
    %v3614 = vadd.f32 %v3421, %v3613
    %v3615 = vpop.f32.mrf.mxu0
    %3616 = vmatprep.mubr.f32.mxu0 0.0
    %3617 = vmatmul.mubr.f32.gmra.mxu0 %v3503
    %v3618 = vpop.f32.mrf.mxu0
    %v3619 = vadd.f32 %v3426, %v3618
    %v3620 = vpop.f32.mrf.mxu0
    %3621 = vmatprep.mubr.f32.mxu0 0.0
    %3622 = vmatmul.mubr.f32.gmra.mxu0 %v3506
    %v3623 = vpop.f32.mrf.mxu0
    %v3624 = vadd.f32 %v3431, %v3623
    %v3625 = vpop.f32.mrf.mxu0
    %3626 = vmatprep.mubr.f32.mxu0 0.0
    %3627 = vmatmul.mubr.f32.gmra.mxu0 %v3509
    %v3628 = vpop.f32.mrf.mxu0
    %v3629 = vadd.f32 %v3436, %v3628
    %v3630 = vpop.f32.mrf.mxu0
    %3631 = vmatprep.mubr.f32.mxu0 0.0
    %3632 = vmatmul.mubr.f32.gmra.mxu0 %v3512
    %v3633 = vpop.f32.mrf.mxu0
    %v3634 = vadd.f32 %v3441, %v3633
    %v3635 = vpop.f32.mrf.mxu0
    %3636 = vmatprep.mubr.f32.mxu0 0.0
    %3637 = vmatmul.mubr.f32.gmra.mxu0 %v3515
    %v3638 = vpop.f32.mrf.mxu0
    %v3639 = vadd.f32 %v3446, %v3638
    %v3640 = vpop.f32.mrf.mxu0
    %3641 = vmatprep.mubr.f32.mxu0 0.0
    %3642 = vmatmul.mubr.f32.gmra.mxu0 %v3518
    %v3643 = vpop.f32.mrf.mxu0
    %v3644 = vadd.f32 %v3451, %v3643
    %v3645 = vpop.f32.mrf.mxu0
    %3646 = vmatprep.mubr.f32.mxu0 0.0
    %3647 = vmatmul.mubr.f32.gmra.mxu0 %v3521
    %v3648 = vpop.f32.mrf.mxu0
    %v3649 = vadd.f32 %v3456, %v3648
    %v3650 = vpop.f32.mrf.mxu0
    %3651 = vmatprep.mubr.f32.mxu0 0.0
    %3652 = vmatmul.mubr.f32.gmra.mxu0 %v3524
    %v3653 = vpop.f32.mrf.mxu0
    %v3654 = vadd.f32 %v3461, %v3653
    %v3655 = vpop.f32.mrf.mxu0
    %3656 = vmatprep.mubr.f32.mxu0 0.0
    %3657 = vmatmul.mubr.f32.gmra.mxu0 %v3527
    %v3658 = vpop.f32.mrf.mxu0
    %v3659 = vadd.f32 %v3466, %v3658
    %v3660 = vpop.f32.mrf.mxu0
    %3661 = vmatprep.mubr.f32.mxu0 0.0
    %3662 = vmatmul.mubr.f32.gmra.mxu0 %v3530
    %v3663 = vpop.f32.mrf.mxu0
    %v3664 = vadd.f32 %v3471, %v3663
    %v3665 = vpop.f32.mrf.mxu0
    %3666 = vmatprep.mubr.f32.mxu0 0.0
    %3667 = vmatmul.mubr.f32.gmra.mxu0 %v3533
    %v3668 = vpop.f32.mrf.mxu0
    %v3669 = vadd.f32 %v3476, %v3668
    %v3670 = vpop.f32.mrf.mxu0
    %3671 = vmatprep.mubr.f32.mxu0 0.0
    %3672 = vmatmul.mubr.f32.gmra.mxu0 %v3536
    %v3673 = vpop.f32.mrf.mxu0
    %v3674 = vadd.f32 %v3481, %v3673
    %v3675 = vpop.f32.mrf.mxu0
    %3676 = vmatprep.mubr.f32.mxu0 0.0
    %3677 = vmatmul.mubr.f32.gmra.mxu0 %v3539
    %v3678 = vpop.f32.mrf.mxu0
    %v3679 = vadd.f32 %v3486, %v3678
    %v3680 = vpop.f32.mrf.mxu0
    %3681 = vmatprep.mubr.f32.mxu0 0.0
    %3682 = vmatmul.mubr.f32.gmra.mxu0 %v3542
    %v3683 = vpop.f32.mrf.mxu0
    %v3684 = vadd.f32 %v3491, %v3683
    %v3685 = vpop.f32.mrf.mxu0
    %3686 = vmatprep.mubr.f32.mxu0 0.0
    %3687 = vmatmul.mubr.f32.gmra.mxu0 %v3545
    %v3688 = vpop.f32.mrf.mxu0
    %v3689 = vadd.f32 %v3496, %v3688
    %v3690 = vpop.f32.mrf.mxu0
    %3691 = vdwg.mxu0
    %v3692 = vadd.f32 %v3614, %v1463
    %v3693 = vadd.f32 %v3619, %v1463
    %v3694 = vadd.f32 %v3624, %v1463
    %v3695 = vadd.f32 %v3629, %v1463
    %v3696 = vadd.f32 %v3634, %v1463
    %v3697 = vadd.f32 %v3639, %v1463
    %v3698 = vadd.f32 %v3644, %v1463
    %v3699 = vadd.f32 %v3649, %v1463
    %v3700 = vadd.f32 %v3654, %v1463
    %v3701 = vadd.f32 %v3659, %v1463
    %v3702 = vadd.f32 %v3664, %v1463
    %v3703 = vadd.f32 %v3669, %v1463
    %v3704 = vadd.f32 %v3674, %v1463
    %v3705 = vadd.f32 %v3679, %v1463
    %v3706 = vadd.f32 %v3684, %v1463
    %v3707 = vadd.f32 %v3689, %v1463
    %v3708 = vxor.u32 %v3692, 2147483648
    %v3709 = vxor.u32 %v3693, 2147483648
    %v3710 = vxor.u32 %v3694, 2147483648
    %v3711 = vxor.u32 %v3695, 2147483648
    %v3712 = vxor.u32 %v3696, 2147483648
    %v3713 = vxor.u32 %v3697, 2147483648
    %v3714 = vxor.u32 %v3698, 2147483648
    %v3715 = vxor.u32 %v3699, 2147483648
    %v3716 = vxor.u32 %v3700, 2147483648
    %v3717 = vxor.u32 %v3701, 2147483648
    %v3718 = vxor.u32 %v3702, 2147483648
    %v3719 = vxor.u32 %v3703, 2147483648
    %v3720 = vxor.u32 %v3704, 2147483648
    %v3721 = vxor.u32 %v3705, 2147483648
    %v3722 = vxor.u32 %v3706, 2147483648
    %v3723 = vxor.u32 %v3707, 2147483648
    %v3724 = vmul.f32 %v3708, 1.442695
    %v3725 = vpow.pop %v3724
    %v3726 = vmul.f32 %v3709, 1.442695
    %v3727 = vpow.pop %v3726
    %v3728 = vmul.f32 %v3710, 1.442695
    %v3729 = vpow.pop %v3728
    %v3730 = vmul.f32 %v3711, 1.442695
    %v3731 = vpow.pop %v3730
    %v3732 = vmul.f32 %v3712, 1.442695
    %v3733 = vpow.pop %v3732
    %v3734 = vmul.f32 %v3713, 1.442695
    %v3735 = vpow.pop %v3734
    %v3736 = vmul.f32 %v3714, 1.442695
    %v3737 = vpow.pop %v3736
    %v3738 = vmul.f32 %v3715, 1.442695
    %v3739 = vpow.pop %v3738
    %v3740 = vmul.f32 %v3716, 1.442695
    %v3741 = vpow.pop %v3740
    %v3742 = vmul.f32 %v3717, 1.442695
    %v3743 = vpow.pop %v3742
    %v3744 = vmul.f32 %v3718, 1.442695
    %v3745 = vpow.pop %v3744
    %v3746 = vmul.f32 %v3719, 1.442695
    %v3747 = vpow.pop %v3746
    %v3748 = vmul.f32 %v3720, 1.442695
    %v3749 = vpow.pop %v3748
    %v3750 = vmul.f32 %v3721, 1.442695
    %v3751 = vpow.pop %v3750
    %v3752 = vmul.f32 %v3722, 1.442695
    %v3753 = vpow.pop %v3752
    %v3754 = vmul.f32 %v3723, 1.442695
    %v3755 = vpow.pop %v3754
    %v3756 = vadd.f32 %v3725, 1.0
    %v3757 = vadd.f32 %v3727, 1.0
    %v3758 = vadd.f32 %v3729, 1.0
    %v3759 = vadd.f32 %v3731, 1.0
    %v3760 = vadd.f32 %v3733, 1.0
    %v3761 = vadd.f32 %v3735, 1.0
    %v3762 = vadd.f32 %v3737, 1.0
    %v3763 = vadd.f32 %v3739, 1.0
    %v3764 = vadd.f32 %v3741, 1.0
    %v3765 = vadd.f32 %v3743, 1.0
    %v3766 = vadd.f32 %v3745, 1.0
    %v3767 = vadd.f32 %v3747, 1.0
    %v3768 = vadd.f32 %v3749, 1.0
    %v3769 = vadd.f32 %v3751, 1.0
    %v3770 = vadd.f32 %v3753, 1.0
    %v3771 = vadd.f32 %v3755, 1.0
    %v3772 = vrcp.pop %v3756
    %v3773 = vmul.f32 1.0, %v3772
    %v3774 = vrcp.pop %v3757
    %v3775 = vmul.f32 1.0, %v3774
    %v3776 = vrcp.pop %v3758
    %v3777 = vmul.f32 1.0, %v3776
    %v3778 = vrcp.pop %v3759
    %v3779 = vmul.f32 1.0, %v3778
    %v3780 = vrcp.pop %v3760
    %v3781 = vmul.f32 1.0, %v3780
    %v3782 = vrcp.pop %v3761
    %v3783 = vmul.f32 1.0, %v3782
    %v3784 = vrcp.pop %v3762
    %v3785 = vmul.f32 1.0, %v3784
    %v3786 = vrcp.pop %v3763
    %v3787 = vmul.f32 1.0, %v3786
    %v3788 = vrcp.pop %v3764
    %v3789 = vmul.f32 1.0, %v3788
    %v3790 = vrcp.pop %v3765
    %v3791 = vmul.f32 1.0, %v3790
    %v3792 = vrcp.pop %v3766
    %v3793 = vmul.f32 1.0, %v3792
    %v3794 = vrcp.pop %v3767
    %v3795 = vmul.f32 1.0, %v3794
    %v3796 = vrcp.pop %v3768
    %v3797 = vmul.f32 1.0, %v3796
    %v3798 = vrcp.pop %v3769
    %v3799 = vmul.f32 1.0, %v3798
    %v3800 = vrcp.pop %v3770
    %v3801 = vmul.f32 1.0, %v3800
    %v3802 = vrcp.pop %v3771
    %v3803 = vmul.f32 1.0, %v3802
    %3804 = vmatprep.subr.mxu0 0.0
    %3805 = vmatpush1.msra.mxu0 0.0
    %3806 = vmatprep.subr.mxu0 0.0
    %3807 = vmatpush1.msra.mxu0 0.0
    %3808 = vmatprep.subr.mxu0 0.0
    %3809 = vmatpush1.msra.mxu0 0.0
    %3810 = vmatprep.subr.mxu0 0.0
    %3811 = vmatpush1.msra.mxu0 0.0
    %3812 = vmatprep.subr.mxu0 0.0
    %3813 = vmatpush1.msra.mxu0 0.0
    %3814 = vmatprep.subr.mxu0 0.0
    %3815 = vmatpush1.msra.mxu0 0.0
    %3816 = vmatprep.subr.mxu0 0.0
    %3817 = vmatpush1.msra.mxu0 0.0
    %3818 = vmatprep.subr.mxu0 0.0
    %3819 = vmatpush1.msra.mxu0 0.0
    %3820 = vmatprep.subr.mxu0 0.0
    %3821 = vmatpush1.msra.mxu0 0.0
    %3822 = vmatprep.subr.mxu0 0.0
    %3823 = vmatpush1.msra.mxu0 0.0
    %3824 = vmatprep.subr.mxu0 0.0
    %3825 = vmatpush1.msra.mxu0 0.0
    %3826 = vmatprep.subr.mxu0 0.0
    %3827 = vmatpush1.msra.mxu0 0.0
    %3828 = vmatprep.subr.mxu0 0.0
    %3829 = vmatpush1.msra.mxu0 %v196
    %3830 = vmatprep.subr.mxu0 0.0
    %3831 = vmatpush1.msra.mxu0 %v195
    %3832 = vmatprep.subr.mxu0 0.0
    %3833 = vmatpush1.msra.mxu0 %v194
    %3834 = vmatprep.subr.mxu0 0.0
    %3835 = vmatpush1.msra.mxu0 %v193
    %3836 = vmatprep.subr.mxu0 0.0
    %3837 = vmatpush2.msra.mxu0 0.0
    %3838 = vmatprep.subr.mxu0 0.0
    %3839 = vmatpush2.msra.mxu0 0.0
    %3840 = vmatprep.subr.mxu0 0.0
    %3841 = vmatpush2.msra.mxu0 0.0
    %3842 = vmatprep.subr.mxu0 0.0
    %3843 = vmatpush2.msra.mxu0 0.0
    %3844 = vmatprep.subr.mxu0 0.0
    %3845 = vmatpush2.msra.mxu0 0.0
    %3846 = vmatprep.subr.mxu0 0.0
    %3847 = vmatpush2.msra.mxu0 0.0
    %3848 = vmatprep.subr.mxu0 0.0
    %3849 = vmatpush2.msra.mxu0 0.0
    %3850 = vmatprep.subr.mxu0 0.0
    %3851 = vmatpush2.msra.mxu0 0.0
    %3852 = vmatprep.subr.mxu0 0.0
    %3853 = vmatpush2.msra.mxu0 0.0
    %3854 = vmatprep.subr.mxu0 0.0
    %3855 = vmatpush2.msra.mxu0 0.0
    %3856 = vmatprep.subr.mxu0 0.0
    %3857 = vmatpush2.msra.mxu0 0.0
    %3858 = vmatprep.subr.mxu0 0.0
    %3859 = vmatpush2.msra.mxu0 0.0
    %3860 = vmatprep.subr.mxu0 0.0
    %3861 = vmatpush2.msra.mxu0 0.0
    %3862 = vmatprep.subr.mxu0 0.0
    %3863 = vmatpush2.msra.mxu0 0.0
    %3864 = vmatprep.subr.mxu0 0.0
    %3865 = vmatpush2.msra.mxu0 0.0
    %3866 = vmatprep.subr.mxu0 0.0
    %3867 = vmatpush2.msra.mxu0 0.0
    %3868 = vmatprep.mubr.f32.mxu0 0.0
    %3869 = vmatmul.mubr.f32.gmra.mxu0 %v2437
    %v3870 = vpop.f32.mrf.mxu0
    %v3871 = vadd.f32 0.0, %v3870
    %v3872 = vpop.f32.mrf.mxu0
    %3873 = vmatprep.mubr.f32.mxu0 0.0
    %3874 = vmatmul.mubr.f32.gmra.mxu0 %v2440
    %v3875 = vpop.f32.mrf.mxu0
    %v3876 = vadd.f32 0.0, %v3875
    %v3877 = vpop.f32.mrf.mxu0
    %3878 = vmatprep.mubr.f32.mxu0 0.0
    %3879 = vmatmul.mubr.f32.gmra.mxu0 %v2443
    %v3880 = vpop.f32.mrf.mxu0
    %v3881 = vadd.f32 0.0, %v3880
    %v3882 = vpop.f32.mrf.mxu0
    %3883 = vmatprep.mubr.f32.mxu0 0.0
    %3884 = vmatmul.mubr.f32.gmra.mxu0 %v2446
    %v3885 = vpop.f32.mrf.mxu0
    %v3886 = vadd.f32 0.0, %v3885
    %v3887 = vpop.f32.mrf.mxu0
    %3888 = vmatprep.mubr.f32.mxu0 0.0
    %3889 = vmatmul.mubr.f32.gmra.mxu0 %v2449
    %v3890 = vpop.f32.mrf.mxu0
    %v3891 = vadd.f32 0.0, %v3890
    %v3892 = vpop.f32.mrf.mxu0
    %3893 = vmatprep.mubr.f32.mxu0 0.0
    %3894 = vmatmul.mubr.f32.gmra.mxu0 %v2452
    %v3895 = vpop.f32.mrf.mxu0
    %v3896 = vadd.f32 0.0, %v3895
    %v3897 = vpop.f32.mrf.mxu0
    %3898 = vmatprep.mubr.f32.mxu0 0.0
    %3899 = vmatmul.mubr.f32.gmra.mxu0 %v2455
    %v3900 = vpop.f32.mrf.mxu0
    %v3901 = vadd.f32 0.0, %v3900
    %v3902 = vpop.f32.mrf.mxu0
    %3903 = vmatprep.mubr.f32.mxu0 0.0
    %3904 = vmatmul.mubr.f32.gmra.mxu0 %v2458
    %v3905 = vpop.f32.mrf.mxu0
    %v3906 = vadd.f32 0.0, %v3905
    %v3907 = vpop.f32.mrf.mxu0
    %3908 = vmatprep.mubr.f32.mxu0 0.0
    %3909 = vmatmul.mubr.f32.gmra.mxu0 %v2461
    %v3910 = vpop.f32.mrf.mxu0
    %v3911 = vadd.f32 0.0, %v3910
    %v3912 = vpop.f32.mrf.mxu0
    %3913 = vmatprep.mubr.f32.mxu0 0.0
    %3914 = vmatmul.mubr.f32.gmra.mxu0 %v2464
    %v3915 = vpop.f32.mrf.mxu0
    %v3916 = vadd.f32 0.0, %v3915
    %v3917 = vpop.f32.mrf.mxu0
    %3918 = vmatprep.mubr.f32.mxu0 0.0
    %3919 = vmatmul.mubr.f32.gmra.mxu0 %v2467
    %v3920 = vpop.f32.mrf.mxu0
    %v3921 = vadd.f32 0.0, %v3920
    %v3922 = vpop.f32.mrf.mxu0
    %3923 = vmatprep.mubr.f32.mxu0 0.0
    %3924 = vmatmul.mubr.f32.gmra.mxu0 %v2470
    %v3925 = vpop.f32.mrf.mxu0
    %v3926 = vadd.f32 0.0, %v3925
    %v3927 = vpop.f32.mrf.mxu0
    %3928 = vmatprep.mubr.f32.mxu0 0.0
    %3929 = vmatmul.mubr.f32.gmra.mxu0 %v2473
    %v3930 = vpop.f32.mrf.mxu0
    %v3931 = vadd.f32 0.0, %v3930
    %v3932 = vpop.f32.mrf.mxu0
    %3933 = vmatprep.mubr.f32.mxu0 0.0
    %3934 = vmatmul.mubr.f32.gmra.mxu0 %v2476
    %v3935 = vpop.f32.mrf.mxu0
    %v3936 = vadd.f32 0.0, %v3935
    %v3937 = vpop.f32.mrf.mxu0
    %3938 = vmatprep.mubr.f32.mxu0 0.0
    %3939 = vmatmul.mubr.f32.gmra.mxu0 %v2479
    %v3940 = vpop.f32.mrf.mxu0
    %v3941 = vadd.f32 0.0, %v3940
    %v3942 = vpop.f32.mrf.mxu0
    %3943 = vmatprep.mubr.f32.mxu0 0.0
    %3944 = vmatmul.mubr.f32.gmra.mxu0 %v2482
    %v3945 = vpop.f32.mrf.mxu0
    %v3946 = vadd.f32 0.0, %v3945
    %v3947 = vpop.f32.mrf.mxu0
    %3948 = vdwg.mxu0
    %3949 = vmatprep.subr.mxu0 0.0
    %3950 = vmatpush1.msra.mxu0 0.0
    %3951 = vmatprep.subr.mxu0 0.0
    %3952 = vmatpush1.msra.mxu0 0.0
    %3953 = vmatprep.subr.mxu0 0.0
    %3954 = vmatpush1.msra.mxu0 0.0
    %3955 = vmatprep.subr.mxu0 0.0
    %3956 = vmatpush1.msra.mxu0 0.0
    %3957 = vmatprep.subr.mxu0 0.0
    %3958 = vmatpush1.msra.mxu0 0.0
    %3959 = vmatprep.subr.mxu0 0.0
    %3960 = vmatpush1.msra.mxu0 0.0
    %3961 = vmatprep.subr.mxu0 0.0
    %3962 = vmatpush1.msra.mxu0 0.0
    %3963 = vmatprep.subr.mxu0 0.0
    %3964 = vmatpush1.msra.mxu0 0.0
    %3965 = vmatprep.subr.mxu0 0.0
    %3966 = vmatpush1.msra.mxu0 %v180
    %3967 = vmatprep.subr.mxu0 0.0
    %3968 = vmatpush1.msra.mxu0 %v179
    %3969 = vmatprep.subr.mxu0 0.0
    %3970 = vmatpush1.msra.mxu0 %v178
    %3971 = vmatprep.subr.mxu0 0.0
    %3972 = vmatpush1.msra.mxu0 %v177
    %3973 = vmatprep.subr.mxu0 0.0
    %3974 = vmatpush1.msra.mxu0 %v176
    %3975 = vmatprep.subr.mxu0 0.0
    %3976 = vmatpush1.msra.mxu0 %v175
    %3977 = vmatprep.subr.mxu0 0.0
    %3978 = vmatpush1.msra.mxu0 %v174
    %3979 = vmatprep.subr.mxu0 0.0
    %3980 = vmatpush1.msra.mxu0 %v173
    %3981 = vmatprep.subr.mxu0 0.0
    %3982 = vmatpush2.msra.mxu0 0.0
    %3983 = vmatprep.subr.mxu0 0.0
    %3984 = vmatpush2.msra.mxu0 0.0
    %3985 = vmatprep.subr.mxu0 0.0
    %3986 = vmatpush2.msra.mxu0 0.0
    %3987 = vmatprep.subr.mxu0 0.0
    %3988 = vmatpush2.msra.mxu0 0.0
    %3989 = vmatprep.subr.mxu0 0.0
    %3990 = vmatpush2.msra.mxu0 0.0
    %3991 = vmatprep.subr.mxu0 0.0
    %3992 = vmatpush2.msra.mxu0 0.0
    %3993 = vmatprep.subr.mxu0 0.0
    %3994 = vmatpush2.msra.mxu0 0.0
    %3995 = vmatprep.subr.mxu0 0.0
    %3996 = vmatpush2.msra.mxu0 0.0
    %3997 = vmatprep.subr.mxu0 0.0
    %3998 = vmatpush2.msra.mxu0 0.0
    %3999 = vmatprep.subr.mxu0 0.0
    %4000 = vmatpush2.msra.mxu0 0.0
    %4001 = vmatprep.subr.mxu0 0.0
    %4002 = vmatpush2.msra.mxu0 0.0
    %4003 = vmatprep.subr.mxu0 0.0
    %4004 = vmatpush2.msra.mxu0 0.0
    %4005 = vmatprep.subr.mxu0 0.0
    %4006 = vmatpush2.msra.mxu0 0.0
    %4007 = vmatprep.subr.mxu0 0.0
    %4008 = vmatpush2.msra.mxu0 0.0
    %4009 = vmatprep.subr.mxu0 0.0
    %4010 = vmatpush2.msra.mxu0 0.0
    %4011 = vmatprep.subr.mxu0 0.0
    %4012 = vmatpush2.msra.mxu0 0.0
    %4013 = vmatprep.mubr.f32.mxu0 0.0
    %4014 = vmatmul.mubr.f32.gmra.mxu0 %v3500
    %v4015 = vpop.f32.mrf.mxu0
    %v4016 = vadd.f32 %v3871, %v4015
    %v4017 = vpop.f32.mrf.mxu0
    %4018 = vmatprep.mubr.f32.mxu0 0.0
    %4019 = vmatmul.mubr.f32.gmra.mxu0 %v3503
    %v4020 = vpop.f32.mrf.mxu0
    %v4021 = vadd.f32 %v3876, %v4020
    %v4022 = vpop.f32.mrf.mxu0
    %4023 = vmatprep.mubr.f32.mxu0 0.0
    %4024 = vmatmul.mubr.f32.gmra.mxu0 %v3506
    %v4025 = vpop.f32.mrf.mxu0
    %v4026 = vadd.f32 %v3881, %v4025
    %v4027 = vpop.f32.mrf.mxu0
    %4028 = vmatprep.mubr.f32.mxu0 0.0
    %4029 = vmatmul.mubr.f32.gmra.mxu0 %v3509
    %v4030 = vpop.f32.mrf.mxu0
    %v4031 = vadd.f32 %v3886, %v4030
    %v4032 = vpop.f32.mrf.mxu0
    %4033 = vmatprep.mubr.f32.mxu0 0.0
    %4034 = vmatmul.mubr.f32.gmra.mxu0 %v3512
    %v4035 = vpop.f32.mrf.mxu0
    %v4036 = vadd.f32 %v3891, %v4035
    %v4037 = vpop.f32.mrf.mxu0
    %4038 = vmatprep.mubr.f32.mxu0 0.0
    %4039 = vmatmul.mubr.f32.gmra.mxu0 %v3515
    %v4040 = vpop.f32.mrf.mxu0
    %v4041 = vadd.f32 %v3896, %v4040
    %v4042 = vpop.f32.mrf.mxu0
    %4043 = vmatprep.mubr.f32.mxu0 0.0
    %4044 = vmatmul.mubr.f32.gmra.mxu0 %v3518
    %v4045 = vpop.f32.mrf.mxu0
    %v4046 = vadd.f32 %v3901, %v4045
    %v4047 = vpop.f32.mrf.mxu0
    %4048 = vmatprep.mubr.f32.mxu0 0.0
    %4049 = vmatmul.mubr.f32.gmra.mxu0 %v3521
    %v4050 = vpop.f32.mrf.mxu0
    %v4051 = vadd.f32 %v3906, %v4050
    %v4052 = vpop.f32.mrf.mxu0
    %4053 = vmatprep.mubr.f32.mxu0 0.0
    %4054 = vmatmul.mubr.f32.gmra.mxu0 %v3524
    %v4055 = vpop.f32.mrf.mxu0
    %v4056 = vadd.f32 %v3911, %v4055
    %v4057 = vpop.f32.mrf.mxu0
    %4058 = vmatprep.mubr.f32.mxu0 0.0
    %4059 = vmatmul.mubr.f32.gmra.mxu0 %v3527
    %v4060 = vpop.f32.mrf.mxu0
    %v4061 = vadd.f32 %v3916, %v4060
    %v4062 = vpop.f32.mrf.mxu0
    %4063 = vmatprep.mubr.f32.mxu0 0.0
    %4064 = vmatmul.mubr.f32.gmra.mxu0 %v3530
    %v4065 = vpop.f32.mrf.mxu0
    %v4066 = vadd.f32 %v3921, %v4065
    %v4067 = vpop.f32.mrf.mxu0
    %4068 = vmatprep.mubr.f32.mxu0 0.0
    %4069 = vmatmul.mubr.f32.gmra.mxu0 %v3533
    %v4070 = vpop.f32.mrf.mxu0
    %v4071 = vadd.f32 %v3926, %v4070
    %v4072 = vpop.f32.mrf.mxu0
    %4073 = vmatprep.mubr.f32.mxu0 0.0
    %4074 = vmatmul.mubr.f32.gmra.mxu0 %v3536
    %v4075 = vpop.f32.mrf.mxu0
    %v4076 = vadd.f32 %v3931, %v4075
    %v4077 = vpop.f32.mrf.mxu0
    %4078 = vmatprep.mubr.f32.mxu0 0.0
    %4079 = vmatmul.mubr.f32.gmra.mxu0 %v3539
    %v4080 = vpop.f32.mrf.mxu0
    %v4081 = vadd.f32 %v3936, %v4080
    %v4082 = vpop.f32.mrf.mxu0
    %4083 = vmatprep.mubr.f32.mxu0 0.0
    %4084 = vmatmul.mubr.f32.gmra.mxu0 %v3542
    %v4085 = vpop.f32.mrf.mxu0
    %v4086 = vadd.f32 %v3941, %v4085
    %v4087 = vpop.f32.mrf.mxu0
    %4088 = vmatprep.mubr.f32.mxu0 0.0
    %4089 = vmatmul.mubr.f32.gmra.mxu0 %v3545
    %v4090 = vpop.f32.mrf.mxu0
    %v4091 = vadd.f32 %v3946, %v4090
    %v4092 = vpop.f32.mrf.mxu0
    %4093 = vdwg.mxu0
    %v4094 = vadd.f32 %v4016, %v1869
    %v4095 = vadd.f32 %v4021, %v1869
    %v4096 = vadd.f32 %v4026, %v1869
    %v4097 = vadd.f32 %v4031, %v1869
    %v4098 = vadd.f32 %v4036, %v1869
    %v4099 = vadd.f32 %v4041, %v1869
    %v4100 = vadd.f32 %v4046, %v1869
    %v4101 = vadd.f32 %v4051, %v1869
    %v4102 = vadd.f32 %v4056, %v1869
    %v4103 = vadd.f32 %v4061, %v1869
    %v4104 = vadd.f32 %v4066, %v1869
    %v4105 = vadd.f32 %v4071, %v1869
    %v4106 = vadd.f32 %v4076, %v1869
    %v4107 = vadd.f32 %v4081, %v1869
    %v4108 = vadd.f32 %v4086, %v1869
    %v4109 = vadd.f32 %v4091, %v1869
    %v4110 = vxor.u32 %v4094, 2147483648
    %v4111 = vxor.u32 %v4095, 2147483648
    %v4112 = vxor.u32 %v4096, 2147483648
    %v4113 = vxor.u32 %v4097, 2147483648
    %v4114 = vxor.u32 %v4098, 2147483648
    %v4115 = vxor.u32 %v4099, 2147483648
    %v4116 = vxor.u32 %v4100, 2147483648
    %v4117 = vxor.u32 %v4101, 2147483648
    %v4118 = vxor.u32 %v4102, 2147483648
    %v4119 = vxor.u32 %v4103, 2147483648
    %v4120 = vxor.u32 %v4104, 2147483648
    %v4121 = vxor.u32 %v4105, 2147483648
    %v4122 = vxor.u32 %v4106, 2147483648
    %v4123 = vxor.u32 %v4107, 2147483648
    %v4124 = vxor.u32 %v4108, 2147483648
    %v4125 = vxor.u32 %v4109, 2147483648
    %v4126 = vmul.f32 %v4110, 1.442695
    %v4127 = vpow.pop %v4126
    %v4128 = vmul.f32 %v4111, 1.442695
    %v4129 = vpow.pop %v4128
    %v4130 = vmul.f32 %v4112, 1.442695
    %v4131 = vpow.pop %v4130
    %v4132 = vmul.f32 %v4113, 1.442695
    %v4133 = vpow.pop %v4132
    %v4134 = vmul.f32 %v4114, 1.442695
    %v4135 = vpow.pop %v4134
    %v4136 = vmul.f32 %v4115, 1.442695
    %v4137 = vpow.pop %v4136
    %v4138 = vmul.f32 %v4116, 1.442695
    %v4139 = vpow.pop %v4138
    %v4140 = vmul.f32 %v4117, 1.442695
    %v4141 = vpow.pop %v4140
    %v4142 = vmul.f32 %v4118, 1.442695
    %v4143 = vpow.pop %v4142
    %v4144 = vmul.f32 %v4119, 1.442695
    %v4145 = vpow.pop %v4144
    %v4146 = vmul.f32 %v4120, 1.442695
    %v4147 = vpow.pop %v4146
    %v4148 = vmul.f32 %v4121, 1.442695
    %v4149 = vpow.pop %v4148
    %v4150 = vmul.f32 %v4122, 1.442695
    %v4151 = vpow.pop %v4150
    %v4152 = vmul.f32 %v4123, 1.442695
    %v4153 = vpow.pop %v4152
    %v4154 = vmul.f32 %v4124, 1.442695
    %v4155 = vpow.pop %v4154
    %v4156 = vmul.f32 %v4125, 1.442695
    %v4157 = vpow.pop %v4156
    %v4158 = vadd.f32 %v4127, 1.0
    %v4159 = vadd.f32 %v4129, 1.0
    %v4160 = vadd.f32 %v4131, 1.0
    %v4161 = vadd.f32 %v4133, 1.0
    %v4162 = vadd.f32 %v4135, 1.0
    %v4163 = vadd.f32 %v4137, 1.0
    %v4164 = vadd.f32 %v4139, 1.0
    %v4165 = vadd.f32 %v4141, 1.0
    %v4166 = vadd.f32 %v4143, 1.0
    %v4167 = vadd.f32 %v4145, 1.0
    %v4168 = vadd.f32 %v4147, 1.0
    %v4169 = vadd.f32 %v4149, 1.0
    %v4170 = vadd.f32 %v4151, 1.0
    %v4171 = vadd.f32 %v4153, 1.0
    %v4172 = vadd.f32 %v4155, 1.0
    %v4173 = vadd.f32 %v4157, 1.0
    %v4174 = vrcp.pop %v4158
    %v4175 = vmul.f32 1.0, %v4174
    %v4176 = vrcp.pop %v4159
    %v4177 = vmul.f32 1.0, %v4176
    %v4178 = vrcp.pop %v4160
    %v4179 = vmul.f32 1.0, %v4178
    %v4180 = vrcp.pop %v4161
    %v4181 = vmul.f32 1.0, %v4180
    %v4182 = vrcp.pop %v4162
    %v4183 = vmul.f32 1.0, %v4182
    %v4184 = vrcp.pop %v4163
    %v4185 = vmul.f32 1.0, %v4184
    %v4186 = vrcp.pop %v4164
    %v4187 = vmul.f32 1.0, %v4186
    %v4188 = vrcp.pop %v4165
    %v4189 = vmul.f32 1.0, %v4188
    %v4190 = vrcp.pop %v4166
    %v4191 = vmul.f32 1.0, %v4190
    %v4192 = vrcp.pop %v4167
    %v4193 = vmul.f32 1.0, %v4192
    %v4194 = vrcp.pop %v4168
    %v4195 = vmul.f32 1.0, %v4194
    %v4196 = vrcp.pop %v4169
    %v4197 = vmul.f32 1.0, %v4196
    %v4198 = vrcp.pop %v4170
    %v4199 = vmul.f32 1.0, %v4198
    %v4200 = vrcp.pop %v4171
    %v4201 = vmul.f32 1.0, %v4200
    %v4202 = vrcp.pop %v4172
    %v4203 = vmul.f32 1.0, %v4202
    %v4204 = vrcp.pop %v4173
    %v4205 = vmul.f32 1.0, %v4204
    %v4206 = vmul.f32 %v4175, %v2420
    %v4207 = vmul.f32 %v4177, %v2421
    %v4208 = vmul.f32 %v4179, %v2422
    %v4209 = vmul.f32 %v4181, %v2423
    %v4210 = vmul.f32 %v4183, %v2424
    %v4211 = vmul.f32 %v4185, %v2425
    %v4212 = vmul.f32 %v4187, %v2426
    %v4213 = vmul.f32 %v4189, %v2427
    %v4214 = vmul.f32 %v4191, %v2428
    %v4215 = vmul.f32 %v4193, %v2429
    %v4216 = vmul.f32 %v4195, %v2430
    %v4217 = vmul.f32 %v4197, %v2431
    %v4218 = vmul.f32 %v4199, %v2432
    %v4219 = vmul.f32 %v4201, %v2433
    %v4220 = vmul.f32 %v4203, %v2434
    %v4221 = vmul.f32 %v4205, %v2435
    %v4223 = vsel %vm202, %v4206, 0
    %v4226 = vsel %vm202, %v4207, 0
    %v4229 = vsel %vm202, %v4208, 0
    %v4232 = vsel %vm202, %v4209, 0
    %v4235 = vsel %vm202, %v4210, 0
    %v4238 = vsel %vm202, %v4211, 0
    %v4241 = vsel %vm202, %v4212, 0
    %v4244 = vsel %vm202, %v4213, 0
    %v4247 = vsel %vm202, %v4214, 0
    %v4250 = vsel %vm202, %v4215, 0
    %v4253 = vsel %vm202, %v4216, 0
    %v4256 = vsel %vm202, %v4217, 0
    %v4259 = vsel %vm202, %v4218, 0
    %v4262 = vsel %vm202, %v4219, 0
    %v4265 = vsel %vm202, %v4220, 0
    %v4268 = vsel %vm202, %v4221, 0
    %4270 = vmatprep.subr.mxu0 0.0
    %4271 = vmatpush1.msra.mxu0 0.0
    %4272 = vmatprep.subr.mxu0 0.0
    %4273 = vmatpush1.msra.mxu0 0.0
    %4274 = vmatprep.subr.mxu0 0.0
    %4275 = vmatpush1.msra.mxu0 0.0
    %4276 = vmatprep.subr.mxu0 0.0
    %4277 = vmatpush1.msra.mxu0 0.0
    %4278 = vmatprep.subr.mxu0 0.0
    %4279 = vmatpush1.msra.mxu0 0.0
    %4280 = vmatprep.subr.mxu0 0.0
    %4281 = vmatpush1.msra.mxu0 0.0
    %4282 = vmatprep.subr.mxu0 0.0
    %4283 = vmatpush1.msra.mxu0 0.0
    %4284 = vmatprep.subr.mxu0 0.0
    %4285 = vmatpush1.msra.mxu0 0.0
    %4286 = vmatprep.subr.mxu0 0.0
    %4287 = vmatpush1.msra.mxu0 0.0
    %4288 = vmatprep.subr.mxu0 0.0
    %4289 = vmatpush1.msra.mxu0 0.0
    %4290 = vmatprep.subr.mxu0 0.0
    %4291 = vmatpush1.msra.mxu0 0.0
    %4292 = vmatprep.subr.mxu0 0.0
    %4293 = vmatpush1.msra.mxu0 0.0
    %4294 = vmatprep.subr.mxu0 0.0
    %4295 = vmatpush1.msra.mxu0 %v200
    %4296 = vmatprep.subr.mxu0 0.0
    %4297 = vmatpush1.msra.mxu0 %v199
    %4298 = vmatprep.subr.mxu0 0.0
    %4299 = vmatpush1.msra.mxu0 %v198
    %4300 = vmatprep.subr.mxu0 0.0
    %4301 = vmatpush1.msra.mxu0 %v197
    %4302 = vmatprep.subr.mxu0 0.0
    %4303 = vmatpush2.msra.mxu0 0.0
    %4304 = vmatprep.subr.mxu0 0.0
    %4305 = vmatpush2.msra.mxu0 0.0
    %4306 = vmatprep.subr.mxu0 0.0
    %4307 = vmatpush2.msra.mxu0 0.0
    %4308 = vmatprep.subr.mxu0 0.0
    %4309 = vmatpush2.msra.mxu0 0.0
    %4310 = vmatprep.subr.mxu0 0.0
    %4311 = vmatpush2.msra.mxu0 0.0
    %4312 = vmatprep.subr.mxu0 0.0
    %4313 = vmatpush2.msra.mxu0 0.0
    %4314 = vmatprep.subr.mxu0 0.0
    %4315 = vmatpush2.msra.mxu0 0.0
    %4316 = vmatprep.subr.mxu0 0.0
    %4317 = vmatpush2.msra.mxu0 0.0
    %4318 = vmatprep.subr.mxu0 0.0
    %4319 = vmatpush2.msra.mxu0 0.0
    %4320 = vmatprep.subr.mxu0 0.0
    %4321 = vmatpush2.msra.mxu0 0.0
    %4322 = vmatprep.subr.mxu0 0.0
    %4323 = vmatpush2.msra.mxu0 0.0
    %4324 = vmatprep.subr.mxu0 0.0
    %4325 = vmatpush2.msra.mxu0 0.0
    %4326 = vmatprep.subr.mxu0 0.0
    %4327 = vmatpush2.msra.mxu0 0.0
    %4328 = vmatprep.subr.mxu0 0.0
    %4329 = vmatpush2.msra.mxu0 0.0
    %4330 = vmatprep.subr.mxu0 0.0
    %4331 = vmatpush2.msra.mxu0 0.0
    %4332 = vmatprep.subr.mxu0 0.0
    %4333 = vmatpush2.msra.mxu0 0.0
    %4334 = vmatprep.mubr.f32.mxu0 0.0
    %4335 = vmatmul.mubr.f32.gmra.mxu0 %v4223
    %v4336 = vpop.f32.mrf.mxu0
    %v4337 = vadd.f32 0.0, %v4336
    %v4338 = vpop.f32.mrf.mxu0
    %4339 = vmatprep.mubr.f32.mxu0 0.0
    %4340 = vmatmul.mubr.f32.gmra.mxu0 %v4226
    %v4341 = vpop.f32.mrf.mxu0
    %v4342 = vadd.f32 0.0, %v4341
    %v4343 = vpop.f32.mrf.mxu0
    %4344 = vmatprep.mubr.f32.mxu0 0.0
    %4345 = vmatmul.mubr.f32.gmra.mxu0 %v4229
    %v4346 = vpop.f32.mrf.mxu0
    %v4347 = vadd.f32 0.0, %v4346
    %v4348 = vpop.f32.mrf.mxu0
    %4349 = vmatprep.mubr.f32.mxu0 0.0
    %4350 = vmatmul.mubr.f32.gmra.mxu0 %v4232
    %v4351 = vpop.f32.mrf.mxu0
    %v4352 = vadd.f32 0.0, %v4351
    %v4353 = vpop.f32.mrf.mxu0
    %4354 = vmatprep.mubr.f32.mxu0 0.0
    %4355 = vmatmul.mubr.f32.gmra.mxu0 %v4235
    %v4356 = vpop.f32.mrf.mxu0
    %v4357 = vadd.f32 0.0, %v4356
    %v4358 = vpop.f32.mrf.mxu0
    %4359 = vmatprep.mubr.f32.mxu0 0.0
    %4360 = vmatmul.mubr.f32.gmra.mxu0 %v4238
    %v4361 = vpop.f32.mrf.mxu0
    %v4362 = vadd.f32 0.0, %v4361
    %v4363 = vpop.f32.mrf.mxu0
    %4364 = vmatprep.mubr.f32.mxu0 0.0
    %4365 = vmatmul.mubr.f32.gmra.mxu0 %v4241
    %v4366 = vpop.f32.mrf.mxu0
    %v4367 = vadd.f32 0.0, %v4366
    %v4368 = vpop.f32.mrf.mxu0
    %4369 = vmatprep.mubr.f32.mxu0 0.0
    %4370 = vmatmul.mubr.f32.gmra.mxu0 %v4244
    %v4371 = vpop.f32.mrf.mxu0
    %v4372 = vadd.f32 0.0, %v4371
    %v4373 = vpop.f32.mrf.mxu0
    %4374 = vmatprep.mubr.f32.mxu0 0.0
    %4375 = vmatmul.mubr.f32.gmra.mxu0 %v4247
    %v4376 = vpop.f32.mrf.mxu0
    %v4377 = vadd.f32 0.0, %v4376
    %v4378 = vpop.f32.mrf.mxu0
    %4379 = vmatprep.mubr.f32.mxu0 0.0
    %4380 = vmatmul.mubr.f32.gmra.mxu0 %v4250
    %v4381 = vpop.f32.mrf.mxu0
    %v4382 = vadd.f32 0.0, %v4381
    %v4383 = vpop.f32.mrf.mxu0
    %4384 = vmatprep.mubr.f32.mxu0 0.0
    %4385 = vmatmul.mubr.f32.gmra.mxu0 %v4253
    %v4386 = vpop.f32.mrf.mxu0
    %v4387 = vadd.f32 0.0, %v4386
    %v4388 = vpop.f32.mrf.mxu0
    %4389 = vmatprep.mubr.f32.mxu0 0.0
    %4390 = vmatmul.mubr.f32.gmra.mxu0 %v4256
    %v4391 = vpop.f32.mrf.mxu0
    %v4392 = vadd.f32 0.0, %v4391
    %v4393 = vpop.f32.mrf.mxu0
    %4394 = vmatprep.mubr.f32.mxu0 0.0
    %4395 = vmatmul.mubr.f32.gmra.mxu0 %v4259
    %v4396 = vpop.f32.mrf.mxu0
    %v4397 = vadd.f32 0.0, %v4396
    %v4398 = vpop.f32.mrf.mxu0
    %4399 = vmatprep.mubr.f32.mxu0 0.0
    %4400 = vmatmul.mubr.f32.gmra.mxu0 %v4262
    %v4401 = vpop.f32.mrf.mxu0
    %v4402 = vadd.f32 0.0, %v4401
    %v4403 = vpop.f32.mrf.mxu0
    %4404 = vmatprep.mubr.f32.mxu0 0.0
    %4405 = vmatmul.mubr.f32.gmra.mxu0 %v4265
    %v4406 = vpop.f32.mrf.mxu0
    %v4407 = vadd.f32 0.0, %v4406
    %v4408 = vpop.f32.mrf.mxu0
    %4409 = vmatprep.mubr.f32.mxu0 0.0
    %4410 = vmatmul.mubr.f32.gmra.mxu0 %v4268
    %v4411 = vpop.f32.mrf.mxu0
    %v4412 = vadd.f32 0.0, %v4411
    %v4413 = vpop.f32.mrf.mxu0
    %4414 = vdwg.mxu0
    %4415 = vmatprep.subr.mxu0 0.0
    %4416 = vmatpush1.msra.mxu0 0.0
    %4417 = vmatprep.subr.mxu0 0.0
    %4418 = vmatpush1.msra.mxu0 0.0
    %4419 = vmatprep.subr.mxu0 0.0
    %4420 = vmatpush1.msra.mxu0 0.0
    %4421 = vmatprep.subr.mxu0 0.0
    %4422 = vmatpush1.msra.mxu0 0.0
    %4423 = vmatprep.subr.mxu0 0.0
    %4424 = vmatpush1.msra.mxu0 0.0
    %4425 = vmatprep.subr.mxu0 0.0
    %4426 = vmatpush1.msra.mxu0 0.0
    %4427 = vmatprep.subr.mxu0 0.0
    %4428 = vmatpush1.msra.mxu0 0.0
    %4429 = vmatprep.subr.mxu0 0.0
    %4430 = vmatpush1.msra.mxu0 0.0
    %4431 = vmatprep.subr.mxu0 0.0
    %4432 = vmatpush1.msra.mxu0 %v188
    %4433 = vmatprep.subr.mxu0 0.0
    %4434 = vmatpush1.msra.mxu0 %v187
    %4435 = vmatprep.subr.mxu0 0.0
    %4436 = vmatpush1.msra.mxu0 %v186
    %4437 = vmatprep.subr.mxu0 0.0
    %4438 = vmatpush1.msra.mxu0 %v185
    %4439 = vmatprep.subr.mxu0 0.0
    %4440 = vmatpush1.msra.mxu0 %v184
    %4441 = vmatprep.subr.mxu0 0.0
    %4442 = vmatpush1.msra.mxu0 %v183
    %4443 = vmatprep.subr.mxu0 0.0
    %4444 = vmatpush1.msra.mxu0 %v182
    %4445 = vmatprep.subr.mxu0 0.0
    %4446 = vmatpush1.msra.mxu0 %v181
    %4447 = vmatprep.subr.mxu0 0.0
    %4448 = vmatpush2.msra.mxu0 0.0
    %4449 = vmatprep.subr.mxu0 0.0
    %4450 = vmatpush2.msra.mxu0 0.0
    %4451 = vmatprep.subr.mxu0 0.0
    %4452 = vmatpush2.msra.mxu0 0.0
    %4453 = vmatprep.subr.mxu0 0.0
    %4454 = vmatpush2.msra.mxu0 0.0
    %4455 = vmatprep.subr.mxu0 0.0
    %4456 = vmatpush2.msra.mxu0 0.0
    %4457 = vmatprep.subr.mxu0 0.0
    %4458 = vmatpush2.msra.mxu0 0.0
    %4459 = vmatprep.subr.mxu0 0.0
    %4460 = vmatpush2.msra.mxu0 0.0
    %4461 = vmatprep.subr.mxu0 0.0
    %4462 = vmatpush2.msra.mxu0 0.0
    %4463 = vmatprep.subr.mxu0 0.0
    %4464 = vmatpush2.msra.mxu0 0.0
    %4465 = vmatprep.subr.mxu0 0.0
    %4466 = vmatpush2.msra.mxu0 0.0
    %4467 = vmatprep.subr.mxu0 0.0
    %4468 = vmatpush2.msra.mxu0 0.0
    %4469 = vmatprep.subr.mxu0 0.0
    %4470 = vmatpush2.msra.mxu0 0.0
    %4471 = vmatprep.subr.mxu0 0.0
    %4472 = vmatpush2.msra.mxu0 0.0
    %4473 = vmatprep.subr.mxu0 0.0
    %4474 = vmatpush2.msra.mxu0 0.0
    %4475 = vmatprep.subr.mxu0 0.0
    %4476 = vmatpush2.msra.mxu0 0.0
    %4477 = vmatprep.subr.mxu0 0.0
    %4478 = vmatpush2.msra.mxu0 0.0
    %4479 = vmatprep.mubr.f32.mxu0 0.0
    %4480 = vmatmul.mubr.f32.gmra.mxu0 %v3500
    %v4481 = vpop.f32.mrf.mxu0
    %v4482 = vadd.f32 %v4337, %v4481
    %v4483 = vpop.f32.mrf.mxu0
    %4484 = vmatprep.mubr.f32.mxu0 0.0
    %4485 = vmatmul.mubr.f32.gmra.mxu0 %v3503
    %v4486 = vpop.f32.mrf.mxu0
    %v4487 = vadd.f32 %v4342, %v4486
    %v4488 = vpop.f32.mrf.mxu0
    %4489 = vmatprep.mubr.f32.mxu0 0.0
    %4490 = vmatmul.mubr.f32.gmra.mxu0 %v3506
    %v4491 = vpop.f32.mrf.mxu0
    %v4492 = vadd.f32 %v4347, %v4491
    %v4493 = vpop.f32.mrf.mxu0
    %4494 = vmatprep.mubr.f32.mxu0 0.0
    %4495 = vmatmul.mubr.f32.gmra.mxu0 %v3509
    %v4496 = vpop.f32.mrf.mxu0
    %v4497 = vadd.f32 %v4352, %v4496
    %v4498 = vpop.f32.mrf.mxu0
    %4499 = vmatprep.mubr.f32.mxu0 0.0
    %4500 = vmatmul.mubr.f32.gmra.mxu0 %v3512
    %v4501 = vpop.f32.mrf.mxu0
    %v4502 = vadd.f32 %v4357, %v4501
    %v4503 = vpop.f32.mrf.mxu0
    %4504 = vmatprep.mubr.f32.mxu0 0.0
    %4505 = vmatmul.mubr.f32.gmra.mxu0 %v3515
    %v4506 = vpop.f32.mrf.mxu0
    %v4507 = vadd.f32 %v4362, %v4506
    %v4508 = vpop.f32.mrf.mxu0
    %4509 = vmatprep.mubr.f32.mxu0 0.0
    %4510 = vmatmul.mubr.f32.gmra.mxu0 %v3518
    %v4511 = vpop.f32.mrf.mxu0
    %v4512 = vadd.f32 %v4367, %v4511
    %v4513 = vpop.f32.mrf.mxu0
    %4514 = vmatprep.mubr.f32.mxu0 0.0
    %4515 = vmatmul.mubr.f32.gmra.mxu0 %v3521
    %v4516 = vpop.f32.mrf.mxu0
    %v4517 = vadd.f32 %v4372, %v4516
    %v4518 = vpop.f32.mrf.mxu0
    %4519 = vmatprep.mubr.f32.mxu0 0.0
    %4520 = vmatmul.mubr.f32.gmra.mxu0 %v3524
    %v4521 = vpop.f32.mrf.mxu0
    %v4522 = vadd.f32 %v4377, %v4521
    %v4523 = vpop.f32.mrf.mxu0
    %4524 = vmatprep.mubr.f32.mxu0 0.0
    %4525 = vmatmul.mubr.f32.gmra.mxu0 %v3527
    %v4526 = vpop.f32.mrf.mxu0
    %v4527 = vadd.f32 %v4382, %v4526
    %v4528 = vpop.f32.mrf.mxu0
    %4529 = vmatprep.mubr.f32.mxu0 0.0
    %4530 = vmatmul.mubr.f32.gmra.mxu0 %v3530
    %v4531 = vpop.f32.mrf.mxu0
    %v4532 = vadd.f32 %v4387, %v4531
    %v4533 = vpop.f32.mrf.mxu0
    %4534 = vmatprep.mubr.f32.mxu0 0.0
    %4535 = vmatmul.mubr.f32.gmra.mxu0 %v3533
    %v4536 = vpop.f32.mrf.mxu0
    %v4537 = vadd.f32 %v4392, %v4536
    %v4538 = vpop.f32.mrf.mxu0
    %4539 = vmatprep.mubr.f32.mxu0 0.0
    %4540 = vmatmul.mubr.f32.gmra.mxu0 %v3536
    %v4541 = vpop.f32.mrf.mxu0
    %v4542 = vadd.f32 %v4397, %v4541
    %v4543 = vpop.f32.mrf.mxu0
    %4544 = vmatprep.mubr.f32.mxu0 0.0
    %4545 = vmatmul.mubr.f32.gmra.mxu0 %v3539
    %v4546 = vpop.f32.mrf.mxu0
    %v4547 = vadd.f32 %v4402, %v4546
    %v4548 = vpop.f32.mrf.mxu0
    %4549 = vmatprep.mubr.f32.mxu0 0.0
    %4550 = vmatmul.mubr.f32.gmra.mxu0 %v3542
    %v4551 = vpop.f32.mrf.mxu0
    %v4552 = vadd.f32 %v4407, %v4551
    %v4553 = vpop.f32.mrf.mxu0
    %4554 = vmatprep.mubr.f32.mxu0 0.0
    %4555 = vmatmul.mubr.f32.gmra.mxu0 %v3545
    %v4556 = vpop.f32.mrf.mxu0
    %v4557 = vadd.f32 %v4412, %v4556
    %v4558 = vpop.f32.mrf.mxu0
    %4559 = vdwg.mxu0
    %v4560 = vadd.f32 %v4482, %v2339
    %v4561 = vadd.f32 %v4487, %v2339
    %v4562 = vadd.f32 %v4492, %v2339
    %v4563 = vadd.f32 %v4497, %v2339
    %v4564 = vadd.f32 %v4502, %v2339
    %v4565 = vadd.f32 %v4507, %v2339
    %v4566 = vadd.f32 %v4512, %v2339
    %v4567 = vadd.f32 %v4517, %v2339
    %v4568 = vadd.f32 %v4522, %v2339
    %v4569 = vadd.f32 %v4527, %v2339
    %v4570 = vadd.f32 %v4532, %v2339
    %v4571 = vadd.f32 %v4537, %v2339
    %v4572 = vadd.f32 %v4542, %v2339
    %v4573 = vadd.f32 %v4547, %v2339
    %v4574 = vadd.f32 %v4552, %v2339
    %v4575 = vadd.f32 %v4557, %v2339
    %v4576 = vtanh.pop %v4560
    %v4577 = vtanh.pop %v4561
    %v4578 = vtanh.pop %v4562
    %v4579 = vtanh.pop %v4563
    %v4580 = vtanh.pop %v4564
    %v4581 = vtanh.pop %v4565
    %v4582 = vtanh.pop %v4566
    %v4583 = vtanh.pop %v4567
    %v4584 = vtanh.pop %v4568
    %v4585 = vtanh.pop %v4569
    %v4586 = vtanh.pop %v4570
    %v4587 = vtanh.pop %v4571
    %v4588 = vtanh.pop %v4572
    %v4589 = vtanh.pop %v4573
    %v4590 = vtanh.pop %v4574
    %v4591 = vtanh.pop %v4575
    %v4592 = vsub.f32 1.0, %v3773
    %v4593 = vsub.f32 1.0, %v3775
    %v4594 = vsub.f32 1.0, %v3777
    %v4595 = vsub.f32 1.0, %v3779
    %v4596 = vsub.f32 1.0, %v3781
    %v4597 = vsub.f32 1.0, %v3783
    %v4598 = vsub.f32 1.0, %v3785
    %v4599 = vsub.f32 1.0, %v3787
    %v4600 = vsub.f32 1.0, %v3789
    %v4601 = vsub.f32 1.0, %v3791
    %v4602 = vsub.f32 1.0, %v3793
    %v4603 = vsub.f32 1.0, %v3795
    %v4604 = vsub.f32 1.0, %v3797
    %v4605 = vsub.f32 1.0, %v3799
    %v4606 = vsub.f32 1.0, %v3801
    %v4607 = vsub.f32 1.0, %v3803
    %v4608 = vmul.f32 %v4592, %v2420
    %v4609 = vmul.f32 %v4593, %v2421
    %v4610 = vmul.f32 %v4594, %v2422
    %v4611 = vmul.f32 %v4595, %v2423
    %v4612 = vmul.f32 %v4596, %v2424
    %v4613 = vmul.f32 %v4597, %v2425
    %v4614 = vmul.f32 %v4598, %v2426
    %v4615 = vmul.f32 %v4599, %v2427
    %v4616 = vmul.f32 %v4600, %v2428
    %v4617 = vmul.f32 %v4601, %v2429
    %v4618 = vmul.f32 %v4602, %v2430
    %v4619 = vmul.f32 %v4603, %v2431
    %v4620 = vmul.f32 %v4604, %v2432
    %v4621 = vmul.f32 %v4605, %v2433
    %v4622 = vmul.f32 %v4606, %v2434
    %v4623 = vmul.f32 %v4607, %v2435
    %v4624 = vmul.f32 %v3773, %v4576
    %v4625 = vmul.f32 %v3775, %v4577
    %v4626 = vmul.f32 %v3777, %v4578
    %v4627 = vmul.f32 %v3779, %v4579
    %v4628 = vmul.f32 %v3781, %v4580
    %v4629 = vmul.f32 %v3783, %v4581
    %v4630 = vmul.f32 %v3785, %v4582
    %v4631 = vmul.f32 %v3787, %v4583
    %v4632 = vmul.f32 %v3789, %v4584
    %v4633 = vmul.f32 %v3791, %v4585
    %v4634 = vmul.f32 %v3793, %v4586
    %v4635 = vmul.f32 %v3795, %v4587
    %v4636 = vmul.f32 %v3797, %v4588
    %v4637 = vmul.f32 %v3799, %v4589
    %v4638 = vmul.f32 %v3801, %v4590
    %v4639 = vmul.f32 %v3803, %v4591
    %v4640 = vadd.f32 %v4608, %v4624
    %v4641 = vadd.f32 %v4609, %v4625
    %v4642 = vadd.f32 %v4610, %v4626
    %v4643 = vadd.f32 %v4611, %v4627
    %v4644 = vadd.f32 %v4612, %v4628
    %v4645 = vadd.f32 %v4613, %v4629
    %v4646 = vadd.f32 %v4614, %v4630
    %v4647 = vadd.f32 %v4615, %v4631
    %v4648 = vadd.f32 %v4616, %v4632
    %v4649 = vadd.f32 %v4617, %v4633
    %v4650 = vadd.f32 %v4618, %v4634
    %v4651 = vadd.f32 %v4619, %v4635
    %v4652 = vadd.f32 %v4620, %v4636
    %v4653 = vadd.f32 %v4621, %v4637
    %v4654 = vadd.f32 %v4622, %v4638
    %v4655 = vadd.f32 %v4623, %v4639
    %v4657 = vsel %vm202, %v4640, 0
    %v4660 = vsel %vm202, %v4641, 0
    %v4663 = vsel %vm202, %v4642, 0
    %v4666 = vsel %vm202, %v4643, 0
    %v4669 = vsel %vm202, %v4644, 0
    %v4672 = vsel %vm202, %v4645, 0
    %v4675 = vsel %vm202, %v4646, 0
    %v4678 = vsel %vm202, %v4647, 0
    %v4681 = vsel %vm202, %v4648, 0
    %v4684 = vsel %vm202, %v4649, 0
    %v4687 = vsel %vm202, %v4650, 0
    %v4690 = vsel %vm202, %v4651, 0
    %v4693 = vsel %vm202, %v4652, 0
    %v4696 = vsel %vm202, %v4653, 0
    %v4699 = vsel %vm202, %v4654, 0
    %v4702 = vsel %vm202, %v4655, 0
    %4704 = vmatprep.subr.mxu0 0.0
    %4705 = vmatpush1.msra.mxu0 0.0
    %4706 = vmatprep.subr.mxu0 0.0
    %4707 = vmatpush1.msra.mxu0 0.0
    %4708 = vmatprep.subr.mxu0 0.0
    %4709 = vmatpush1.msra.mxu0 0.0
    %4710 = vmatprep.subr.mxu0 0.0
    %4711 = vmatpush1.msra.mxu0 0.0
    %4712 = vmatprep.subr.mxu0 0.0
    %4713 = vmatpush1.msra.mxu0 0.0
    %4714 = vmatprep.subr.mxu0 0.0
    %4715 = vmatpush1.msra.mxu0 0.0
    %4716 = vmatprep.subr.mxu0 0.0
    %4717 = vmatpush1.msra.mxu0 0.0
    %4718 = vmatprep.subr.mxu0 0.0
    %4719 = vmatpush1.msra.mxu0 0.0
    %4720 = vmatprep.subr.mxu0 0.0
    %4721 = vmatpush1.msra.mxu0 0.0
    %4722 = vmatprep.subr.mxu0 0.0
    %4723 = vmatpush1.msra.mxu0 0.0
    %4724 = vmatprep.subr.mxu0 0.0
    %4725 = vmatpush1.msra.mxu0 0.0
    %4726 = vmatprep.subr.mxu0 0.0
    %4727 = vmatpush1.msra.mxu0 0.0
    %4728 = vmatprep.subr.mxu0 0.0
    %4729 = vmatpush1.msra.mxu0 %v152
    %4730 = vmatprep.subr.mxu0 0.0
    %4731 = vmatpush1.msra.mxu0 %v151
    %4732 = vmatprep.subr.mxu0 0.0
    %4733 = vmatpush1.msra.mxu0 %v150
    %4734 = vmatprep.subr.mxu0 0.0
    %4735 = vmatpush1.msra.mxu0 %v149
    %4736 = vmatprep.subr.mxu0 0.0
    %4737 = vmatpush2.msra.mxu0 0.0
    %4738 = vmatprep.subr.mxu0 0.0
    %4739 = vmatpush2.msra.mxu0 0.0
    %4740 = vmatprep.subr.mxu0 0.0
    %4741 = vmatpush2.msra.mxu0 0.0
    %4742 = vmatprep.subr.mxu0 0.0
    %4743 = vmatpush2.msra.mxu0 0.0
    %4744 = vmatprep.subr.mxu0 0.0
    %4745 = vmatpush2.msra.mxu0 0.0
    %4746 = vmatprep.subr.mxu0 0.0
    %4747 = vmatpush2.msra.mxu0 0.0
    %4748 = vmatprep.subr.mxu0 0.0
    %4749 = vmatpush2.msra.mxu0 0.0
    %4750 = vmatprep.subr.mxu0 0.0
    %4751 = vmatpush2.msra.mxu0 0.0
    %4752 = vmatprep.subr.mxu0 0.0
    %4753 = vmatpush2.msra.mxu0 0.0
    %4754 = vmatprep.subr.mxu0 0.0
    %4755 = vmatpush2.msra.mxu0 0.0
    %4756 = vmatprep.subr.mxu0 0.0
    %4757 = vmatpush2.msra.mxu0 0.0
    %4758 = vmatprep.subr.mxu0 0.0
    %4759 = vmatpush2.msra.mxu0 0.0
    %4760 = vmatprep.subr.mxu0 0.0
    %4761 = vmatpush2.msra.mxu0 0.0
    %4762 = vmatprep.subr.mxu0 0.0
    %4763 = vmatpush2.msra.mxu0 0.0
    %4764 = vmatprep.subr.mxu0 0.0
    %4765 = vmatpush2.msra.mxu0 0.0
    %4766 = vmatprep.subr.mxu0 0.0
    %4767 = vmatpush2.msra.mxu0 0.0
    %4768 = vmatprep.mubr.f32.mxu0 0.0
    %4769 = vmatmul.mubr.f32.gmra.mxu0 %v4657
    %v4770 = vpop.f32.mrf.mxu0
    %v4771 = vadd.f32 0.0, %v4770
    %v4772 = vpop.f32.mrf.mxu0
    %4773 = vmatprep.mubr.f32.mxu0 0.0
    %4774 = vmatmul.mubr.f32.gmra.mxu0 %v4660
    %v4775 = vpop.f32.mrf.mxu0
    %v4776 = vadd.f32 0.0, %v4775
    %v4777 = vpop.f32.mrf.mxu0
    %4778 = vmatprep.mubr.f32.mxu0 0.0
    %4779 = vmatmul.mubr.f32.gmra.mxu0 %v4663
    %v4780 = vpop.f32.mrf.mxu0
    %v4781 = vadd.f32 0.0, %v4780
    %v4782 = vpop.f32.mrf.mxu0
    %4783 = vmatprep.mubr.f32.mxu0 0.0
    %4784 = vmatmul.mubr.f32.gmra.mxu0 %v4666
    %v4785 = vpop.f32.mrf.mxu0
    %v4786 = vadd.f32 0.0, %v4785
    %v4787 = vpop.f32.mrf.mxu0
    %4788 = vmatprep.mubr.f32.mxu0 0.0
    %4789 = vmatmul.mubr.f32.gmra.mxu0 %v4669
    %v4790 = vpop.f32.mrf.mxu0
    %v4791 = vadd.f32 0.0, %v4790
    %v4792 = vpop.f32.mrf.mxu0
    %4793 = vmatprep.mubr.f32.mxu0 0.0
    %4794 = vmatmul.mubr.f32.gmra.mxu0 %v4672
    %v4795 = vpop.f32.mrf.mxu0
    %v4796 = vadd.f32 0.0, %v4795
    %v4797 = vpop.f32.mrf.mxu0
    %4798 = vmatprep.mubr.f32.mxu0 0.0
    %4799 = vmatmul.mubr.f32.gmra.mxu0 %v4675
    %v4800 = vpop.f32.mrf.mxu0
    %v4801 = vadd.f32 0.0, %v4800
    %v4802 = vpop.f32.mrf.mxu0
    %4803 = vmatprep.mubr.f32.mxu0 0.0
    %4804 = vmatmul.mubr.f32.gmra.mxu0 %v4678
    %v4805 = vpop.f32.mrf.mxu0
    %v4806 = vadd.f32 0.0, %v4805
    %v4807 = vpop.f32.mrf.mxu0
    %4808 = vmatprep.mubr.f32.mxu0 0.0
    %4809 = vmatmul.mubr.f32.gmra.mxu0 %v4681
    %v4810 = vpop.f32.mrf.mxu0
    %v4811 = vadd.f32 0.0, %v4810
    %v4812 = vpop.f32.mrf.mxu0
    %4813 = vmatprep.mubr.f32.mxu0 0.0
    %4814 = vmatmul.mubr.f32.gmra.mxu0 %v4684
    %v4815 = vpop.f32.mrf.mxu0
    %v4816 = vadd.f32 0.0, %v4815
    %v4817 = vpop.f32.mrf.mxu0
    %4818 = vmatprep.mubr.f32.mxu0 0.0
    %4819 = vmatmul.mubr.f32.gmra.mxu0 %v4687
    %v4820 = vpop.f32.mrf.mxu0
    %v4821 = vadd.f32 0.0, %v4820
    %v4822 = vpop.f32.mrf.mxu0
    %4823 = vmatprep.mubr.f32.mxu0 0.0
    %4824 = vmatmul.mubr.f32.gmra.mxu0 %v4690
    %v4825 = vpop.f32.mrf.mxu0
    %v4826 = vadd.f32 0.0, %v4825
    %v4827 = vpop.f32.mrf.mxu0
    %4828 = vmatprep.mubr.f32.mxu0 0.0
    %4829 = vmatmul.mubr.f32.gmra.mxu0 %v4693
    %v4830 = vpop.f32.mrf.mxu0
    %v4831 = vadd.f32 0.0, %v4830
    %v4832 = vpop.f32.mrf.mxu0
    %4833 = vmatprep.mubr.f32.mxu0 0.0
    %4834 = vmatmul.mubr.f32.gmra.mxu0 %v4696
    %v4835 = vpop.f32.mrf.mxu0
    %v4836 = vadd.f32 0.0, %v4835
    %v4837 = vpop.f32.mrf.mxu0
    %4838 = vmatprep.mubr.f32.mxu0 0.0
    %4839 = vmatmul.mubr.f32.gmra.mxu0 %v4699
    %v4840 = vpop.f32.mrf.mxu0
    %v4841 = vadd.f32 0.0, %v4840
    %v4842 = vpop.f32.mrf.mxu0
    %4843 = vmatprep.mubr.f32.mxu0 0.0
    %4844 = vmatmul.mubr.f32.gmra.mxu0 %v4702
    %v4845 = vpop.f32.mrf.mxu0
    %v4846 = vadd.f32 0.0, %v4845
    %v4847 = vpop.f32.mrf.mxu0
    %4848 = vdwg.mxu0
    %4849 = vmatprep.subr.mxu0 0.0
    %4850 = vmatpush1.msra.mxu0 0.0
    %4851 = vmatprep.subr.mxu0 0.0
    %4852 = vmatpush1.msra.mxu0 0.0
    %4853 = vmatprep.subr.mxu0 0.0
    %4854 = vmatpush1.msra.mxu0 0.0
    %4855 = vmatprep.subr.mxu0 0.0
    %4856 = vmatpush1.msra.mxu0 0.0
    %4857 = vmatprep.subr.mxu0 0.0
    %4858 = vmatpush1.msra.mxu0 0.0
    %4859 = vmatprep.subr.mxu0 0.0
    %4860 = vmatpush1.msra.mxu0 0.0
    %4861 = vmatprep.subr.mxu0 0.0
    %4862 = vmatpush1.msra.mxu0 0.0
    %4863 = vmatprep.subr.mxu0 0.0
    %4864 = vmatpush1.msra.mxu0 0.0
    %4865 = vmatprep.subr.mxu0 0.0
    %4866 = vmatpush1.msra.mxu0 0.0
    %4867 = vmatprep.subr.mxu0 0.0
    %4868 = vmatpush1.msra.mxu0 0.0
    %4869 = vmatprep.subr.mxu0 0.0
    %4870 = vmatpush1.msra.mxu0 0.0
    %4871 = vmatprep.subr.mxu0 0.0
    %4872 = vmatpush1.msra.mxu0 0.0
    %4873 = vmatprep.subr.mxu0 0.0
    %4874 = vmatpush1.msra.mxu0 %v156
    %4875 = vmatprep.subr.mxu0 0.0
    %4876 = vmatpush1.msra.mxu0 %v155
    %4877 = vmatprep.subr.mxu0 0.0
    %4878 = vmatpush1.msra.mxu0 %v154
    %4879 = vmatprep.subr.mxu0 0.0
    %4880 = vmatpush1.msra.mxu0 %v153
    %4881 = vmatprep.subr.mxu0 0.0
    %4882 = vmatpush2.msra.mxu0 0.0
    %4883 = vmatprep.subr.mxu0 0.0
    %4884 = vmatpush2.msra.mxu0 0.0
    %4885 = vmatprep.subr.mxu0 0.0
    %4886 = vmatpush2.msra.mxu0 0.0
    %4887 = vmatprep.subr.mxu0 0.0
    %4888 = vmatpush2.msra.mxu0 0.0
    %4889 = vmatprep.subr.mxu0 0.0
    %4890 = vmatpush2.msra.mxu0 0.0
    %4891 = vmatprep.subr.mxu0 0.0
    %4892 = vmatpush2.msra.mxu0 0.0
    %4893 = vmatprep.subr.mxu0 0.0
    %4894 = vmatpush2.msra.mxu0 0.0
    %4895 = vmatprep.subr.mxu0 0.0
    %4896 = vmatpush2.msra.mxu0 0.0
    %4897 = vmatprep.subr.mxu0 0.0
    %4898 = vmatpush2.msra.mxu0 0.0
    %4899 = vmatprep.subr.mxu0 0.0
    %4900 = vmatpush2.msra.mxu0 0.0
    %4901 = vmatprep.subr.mxu0 0.0
    %4902 = vmatpush2.msra.mxu0 0.0
    %4903 = vmatprep.subr.mxu0 0.0
    %4904 = vmatpush2.msra.mxu0 0.0
    %4905 = vmatprep.subr.mxu0 0.0
    %4906 = vmatpush2.msra.mxu0 0.0
    %4907 = vmatprep.subr.mxu0 0.0
    %4908 = vmatpush2.msra.mxu0 0.0
    %4909 = vmatprep.subr.mxu0 0.0
    %4910 = vmatpush2.msra.mxu0 0.0
    %4911 = vmatprep.subr.mxu0 0.0
    %4912 = vmatpush2.msra.mxu0 0.0
    %4913 = vmatprep.mubr.f32.mxu0 0.0
    %4914 = vmatmul.mubr.f32.gmra.mxu0 %v4657
    %v4915 = vpop.f32.mrf.mxu0
    %v4916 = vadd.f32 0.0, %v4915
    %v4917 = vpop.f32.mrf.mxu0
    %4918 = vmatprep.mubr.f32.mxu0 0.0
    %4919 = vmatmul.mubr.f32.gmra.mxu0 %v4660
    %v4920 = vpop.f32.mrf.mxu0
    %v4921 = vadd.f32 0.0, %v4920
    %v4922 = vpop.f32.mrf.mxu0
    %4923 = vmatprep.mubr.f32.mxu0 0.0
    %4924 = vmatmul.mubr.f32.gmra.mxu0 %v4663
    %v4925 = vpop.f32.mrf.mxu0
    %v4926 = vadd.f32 0.0, %v4925
    %v4927 = vpop.f32.mrf.mxu0
    %4928 = vmatprep.mubr.f32.mxu0 0.0
    %4929 = vmatmul.mubr.f32.gmra.mxu0 %v4666
    %v4930 = vpop.f32.mrf.mxu0
    %v4931 = vadd.f32 0.0, %v4930
    %v4932 = vpop.f32.mrf.mxu0
    %4933 = vmatprep.mubr.f32.mxu0 0.0
    %4934 = vmatmul.mubr.f32.gmra.mxu0 %v4669
    %v4935 = vpop.f32.mrf.mxu0
    %v4936 = vadd.f32 0.0, %v4935
    %v4937 = vpop.f32.mrf.mxu0
    %4938 = vmatprep.mubr.f32.mxu0 0.0
    %4939 = vmatmul.mubr.f32.gmra.mxu0 %v4672
    %v4940 = vpop.f32.mrf.mxu0
    %v4941 = vadd.f32 0.0, %v4940
    %v4942 = vpop.f32.mrf.mxu0
    %4943 = vmatprep.mubr.f32.mxu0 0.0
    %4944 = vmatmul.mubr.f32.gmra.mxu0 %v4675
    %v4945 = vpop.f32.mrf.mxu0
    %v4946 = vadd.f32 0.0, %v4945
    %v4947 = vpop.f32.mrf.mxu0
    %4948 = vmatprep.mubr.f32.mxu0 0.0
    %4949 = vmatmul.mubr.f32.gmra.mxu0 %v4678
    %v4950 = vpop.f32.mrf.mxu0
    %v4951 = vadd.f32 0.0, %v4950
    %v4952 = vpop.f32.mrf.mxu0
    %4953 = vmatprep.mubr.f32.mxu0 0.0
    %4954 = vmatmul.mubr.f32.gmra.mxu0 %v4681
    %v4955 = vpop.f32.mrf.mxu0
    %v4956 = vadd.f32 0.0, %v4955
    %v4957 = vpop.f32.mrf.mxu0
    %4958 = vmatprep.mubr.f32.mxu0 0.0
    %4959 = vmatmul.mubr.f32.gmra.mxu0 %v4684
    %v4960 = vpop.f32.mrf.mxu0
    %v4961 = vadd.f32 0.0, %v4960
    %v4962 = vpop.f32.mrf.mxu0
    %4963 = vmatprep.mubr.f32.mxu0 0.0
    %4964 = vmatmul.mubr.f32.gmra.mxu0 %v4687
    %v4965 = vpop.f32.mrf.mxu0
    %v4966 = vadd.f32 0.0, %v4965
    %v4967 = vpop.f32.mrf.mxu0
    %4968 = vmatprep.mubr.f32.mxu0 0.0
    %4969 = vmatmul.mubr.f32.gmra.mxu0 %v4690
    %v4970 = vpop.f32.mrf.mxu0
    %v4971 = vadd.f32 0.0, %v4970
    %v4972 = vpop.f32.mrf.mxu0
    %4973 = vmatprep.mubr.f32.mxu0 0.0
    %4974 = vmatmul.mubr.f32.gmra.mxu0 %v4693
    %v4975 = vpop.f32.mrf.mxu0
    %v4976 = vadd.f32 0.0, %v4975
    %v4977 = vpop.f32.mrf.mxu0
    %4978 = vmatprep.mubr.f32.mxu0 0.0
    %4979 = vmatmul.mubr.f32.gmra.mxu0 %v4696
    %v4980 = vpop.f32.mrf.mxu0
    %v4981 = vadd.f32 0.0, %v4980
    %v4982 = vpop.f32.mrf.mxu0
    %4983 = vmatprep.mubr.f32.mxu0 0.0
    %4984 = vmatmul.mubr.f32.gmra.mxu0 %v4699
    %v4985 = vpop.f32.mrf.mxu0
    %v4986 = vadd.f32 0.0, %v4985
    %v4987 = vpop.f32.mrf.mxu0
    %4988 = vmatprep.mubr.f32.mxu0 0.0
    %4989 = vmatmul.mubr.f32.gmra.mxu0 %v4702
    %v4990 = vpop.f32.mrf.mxu0
    %v4991 = vadd.f32 0.0, %v4990
    %v4992 = vpop.f32.mrf.mxu0
    %4993 = vdwg.mxu0
    %4994 = vmatprep.subr.mxu0 0.0
    %4995 = vmatpush1.msra.mxu0 0.0
    %4996 = vmatprep.subr.mxu0 0.0
    %4997 = vmatpush1.msra.mxu0 0.0
    %4998 = vmatprep.subr.mxu0 0.0
    %4999 = vmatpush1.msra.mxu0 0.0
    %5000 = vmatprep.subr.mxu0 0.0
    %5001 = vmatpush1.msra.mxu0 0.0
    %5002 = vmatprep.subr.mxu0 0.0
    %5003 = vmatpush1.msra.mxu0 0.0
    %5004 = vmatprep.subr.mxu0 0.0
    %5005 = vmatpush1.msra.mxu0 0.0
    %5006 = vmatprep.subr.mxu0 0.0
    %5007 = vmatpush1.msra.mxu0 0.0
    %5008 = vmatprep.subr.mxu0 0.0
    %5009 = vmatpush1.msra.mxu0 0.0
    %5010 = vmatprep.subr.mxu0 0.0
    %5011 = vmatpush1.msra.mxu0 0.0
    %5012 = vmatprep.subr.mxu0 0.0
    %5013 = vmatpush1.msra.mxu0 0.0
    %5014 = vmatprep.subr.mxu0 0.0
    %5015 = vmatpush1.msra.mxu0 0.0
    %5016 = vmatprep.subr.mxu0 0.0
    %5017 = vmatpush1.msra.mxu0 0.0
    %5018 = vmatprep.subr.mxu0 0.0
    %5019 = vmatpush1.msra.mxu0 %v160
    %5020 = vmatprep.subr.mxu0 0.0
    %5021 = vmatpush1.msra.mxu0 %v159
    %5022 = vmatprep.subr.mxu0 0.0
    %5023 = vmatpush1.msra.mxu0 %v158
    %5024 = vmatprep.subr.mxu0 0.0
    %5025 = vmatpush1.msra.mxu0 %v157
    %5026 = vmatprep.subr.mxu0 0.0
    %5027 = vmatpush2.msra.mxu0 0.0
    %5028 = vmatprep.subr.mxu0 0.0
    %5029 = vmatpush2.msra.mxu0 0.0
    %5030 = vmatprep.subr.mxu0 0.0
    %5031 = vmatpush2.msra.mxu0 0.0
    %5032 = vmatprep.subr.mxu0 0.0
    %5033 = vmatpush2.msra.mxu0 0.0
    %5034 = vmatprep.subr.mxu0 0.0
    %5035 = vmatpush2.msra.mxu0 0.0
    %5036 = vmatprep.subr.mxu0 0.0
    %5037 = vmatpush2.msra.mxu0 0.0
    %5038 = vmatprep.subr.mxu0 0.0
    %5039 = vmatpush2.msra.mxu0 0.0
    %5040 = vmatprep.subr.mxu0 0.0
    %5041 = vmatpush2.msra.mxu0 0.0
    %5042 = vmatprep.subr.mxu0 0.0
    %5043 = vmatpush2.msra.mxu0 0.0
    %5044 = vmatprep.subr.mxu0 0.0
    %5045 = vmatpush2.msra.mxu0 0.0
    %5046 = vmatprep.subr.mxu0 0.0
    %5047 = vmatpush2.msra.mxu0 0.0
    %5048 = vmatprep.subr.mxu0 0.0
    %5049 = vmatpush2.msra.mxu0 0.0
    %5050 = vmatprep.subr.mxu0 0.0
    %5051 = vmatpush2.msra.mxu0 0.0
    %5052 = vmatprep.subr.mxu0 0.0
    %5053 = vmatpush2.msra.mxu0 0.0
    %5054 = vmatprep.subr.mxu0 0.0
    %5055 = vmatpush2.msra.mxu0 0.0
    %5056 = vmatprep.subr.mxu0 0.0
    %5057 = vmatpush2.msra.mxu0 0.0
    %5058 = vmatprep.mubr.f32.mxu0 0.0
    %5059 = vmatmul.mubr.f32.gmra.mxu0 %v4657
    %v5060 = vpop.f32.mrf.mxu0
    %v5061 = vadd.f32 0.0, %v5060
    %v5062 = vpop.f32.mrf.mxu0
    %5063 = vmatprep.mubr.f32.mxu0 0.0
    %5064 = vmatmul.mubr.f32.gmra.mxu0 %v4660
    %v5065 = vpop.f32.mrf.mxu0
    %v5066 = vadd.f32 0.0, %v5065
    %v5067 = vpop.f32.mrf.mxu0
    %5068 = vmatprep.mubr.f32.mxu0 0.0
    %5069 = vmatmul.mubr.f32.gmra.mxu0 %v4663
    %v5070 = vpop.f32.mrf.mxu0
    %v5071 = vadd.f32 0.0, %v5070
    %v5072 = vpop.f32.mrf.mxu0
    %5073 = vmatprep.mubr.f32.mxu0 0.0
    %5074 = vmatmul.mubr.f32.gmra.mxu0 %v4666
    %v5075 = vpop.f32.mrf.mxu0
    %v5076 = vadd.f32 0.0, %v5075
    %v5077 = vpop.f32.mrf.mxu0
    %5078 = vmatprep.mubr.f32.mxu0 0.0
    %5079 = vmatmul.mubr.f32.gmra.mxu0 %v4669
    %v5080 = vpop.f32.mrf.mxu0
    %v5081 = vadd.f32 0.0, %v5080
    %v5082 = vpop.f32.mrf.mxu0
    %5083 = vmatprep.mubr.f32.mxu0 0.0
    %5084 = vmatmul.mubr.f32.gmra.mxu0 %v4672
    %v5085 = vpop.f32.mrf.mxu0
    %v5086 = vadd.f32 0.0, %v5085
    %v5087 = vpop.f32.mrf.mxu0
    %5088 = vmatprep.mubr.f32.mxu0 0.0
    %5089 = vmatmul.mubr.f32.gmra.mxu0 %v4675
    %v5090 = vpop.f32.mrf.mxu0
    %v5091 = vadd.f32 0.0, %v5090
    %v5092 = vpop.f32.mrf.mxu0
    %5093 = vmatprep.mubr.f32.mxu0 0.0
    %5094 = vmatmul.mubr.f32.gmra.mxu0 %v4678
    %v5095 = vpop.f32.mrf.mxu0
    %v5096 = vadd.f32 0.0, %v5095
    %v5097 = vpop.f32.mrf.mxu0
    %5098 = vmatprep.mubr.f32.mxu0 0.0
    %5099 = vmatmul.mubr.f32.gmra.mxu0 %v4681
    %v5100 = vpop.f32.mrf.mxu0
    %v5101 = vadd.f32 0.0, %v5100
    %v5102 = vpop.f32.mrf.mxu0
    %5103 = vmatprep.mubr.f32.mxu0 0.0
    %5104 = vmatmul.mubr.f32.gmra.mxu0 %v4684
    %v5105 = vpop.f32.mrf.mxu0
    %v5106 = vadd.f32 0.0, %v5105
    %v5107 = vpop.f32.mrf.mxu0
    %5108 = vmatprep.mubr.f32.mxu0 0.0
    %5109 = vmatmul.mubr.f32.gmra.mxu0 %v4687
    %v5110 = vpop.f32.mrf.mxu0
    %v5111 = vadd.f32 0.0, %v5110
    %v5112 = vpop.f32.mrf.mxu0
    %5113 = vmatprep.mubr.f32.mxu0 0.0
    %5114 = vmatmul.mubr.f32.gmra.mxu0 %v4690
    %v5115 = vpop.f32.mrf.mxu0
    %v5116 = vadd.f32 0.0, %v5115
    %v5117 = vpop.f32.mrf.mxu0
    %5118 = vmatprep.mubr.f32.mxu0 0.0
    %5119 = vmatmul.mubr.f32.gmra.mxu0 %v4693
    %v5120 = vpop.f32.mrf.mxu0
    %v5121 = vadd.f32 0.0, %v5120
    %v5122 = vpop.f32.mrf.mxu0
    %5123 = vmatprep.mubr.f32.mxu0 0.0
    %5124 = vmatmul.mubr.f32.gmra.mxu0 %v4696
    %v5125 = vpop.f32.mrf.mxu0
    %v5126 = vadd.f32 0.0, %v5125
    %v5127 = vpop.f32.mrf.mxu0
    %5128 = vmatprep.mubr.f32.mxu0 0.0
    %5129 = vmatmul.mubr.f32.gmra.mxu0 %v4699
    %v5130 = vpop.f32.mrf.mxu0
    %v5131 = vadd.f32 0.0, %v5130
    %v5132 = vpop.f32.mrf.mxu0
    %5133 = vmatprep.mubr.f32.mxu0 0.0
    %5134 = vmatmul.mubr.f32.gmra.mxu0 %v4702
    %v5135 = vpop.f32.mrf.mxu0
    %v5136 = vadd.f32 0.0, %v5135
    %v5137 = vpop.f32.mrf.mxu0
    %5138 = vdwg.mxu0
    %5139 = vmatprep.subr.mxu0 0.0
    %5140 = vmatpush1.msra.mxu0 0.0
    %5141 = vmatprep.subr.mxu0 0.0
    %5142 = vmatpush1.msra.mxu0 0.0
    %5143 = vmatprep.subr.mxu0 0.0
    %5144 = vmatpush1.msra.mxu0 0.0
    %5145 = vmatprep.subr.mxu0 0.0
    %5146 = vmatpush1.msra.mxu0 0.0
    %5147 = vmatprep.subr.mxu0 0.0
    %5148 = vmatpush1.msra.mxu0 0.0
    %5149 = vmatprep.subr.mxu0 0.0
    %5150 = vmatpush1.msra.mxu0 0.0
    %5151 = vmatprep.subr.mxu0 0.0
    %5152 = vmatpush1.msra.mxu0 0.0
    %5153 = vmatprep.subr.mxu0 0.0
    %5154 = vmatpush1.msra.mxu0 0.0
    %5155 = vmatprep.subr.mxu0 0.0
    %5156 = vmatpush1.msra.mxu0 0.0
    %5157 = vmatprep.subr.mxu0 0.0
    %5158 = vmatpush1.msra.mxu0 0.0
    %5159 = vmatprep.subr.mxu0 0.0
    %5160 = vmatpush1.msra.mxu0 0.0
    %5161 = vmatprep.subr.mxu0 0.0
    %5162 = vmatpush1.msra.mxu0 0.0
    %5163 = vmatprep.subr.mxu0 0.0
    %5164 = vmatpush1.msra.mxu0 %v164
    %5165 = vmatprep.subr.mxu0 0.0
    %5166 = vmatpush1.msra.mxu0 %v163
    %5167 = vmatprep.subr.mxu0 0.0
    %5168 = vmatpush1.msra.mxu0 %v162
    %5169 = vmatprep.subr.mxu0 0.0
    %5170 = vmatpush1.msra.mxu0 %v161
    %5171 = vmatprep.subr.mxu0 0.0
    %5172 = vmatpush2.msra.mxu0 0.0
    %5173 = vmatprep.subr.mxu0 0.0
    %5174 = vmatpush2.msra.mxu0 0.0
    %5175 = vmatprep.subr.mxu0 0.0
    %5176 = vmatpush2.msra.mxu0 0.0
    %5177 = vmatprep.subr.mxu0 0.0
    %5178 = vmatpush2.msra.mxu0 0.0
    %5179 = vmatprep.subr.mxu0 0.0
    %5180 = vmatpush2.msra.mxu0 0.0
    %5181 = vmatprep.subr.mxu0 0.0
    %5182 = vmatpush2.msra.mxu0 0.0
    %5183 = vmatprep.subr.mxu0 0.0
    %5184 = vmatpush2.msra.mxu0 0.0
    %5185 = vmatprep.subr.mxu0 0.0
    %5186 = vmatpush2.msra.mxu0 0.0
    %5187 = vmatprep.subr.mxu0 0.0
    %5188 = vmatpush2.msra.mxu0 0.0
    %5189 = vmatprep.subr.mxu0 0.0
    %5190 = vmatpush2.msra.mxu0 0.0
    %5191 = vmatprep.subr.mxu0 0.0
    %5192 = vmatpush2.msra.mxu0 0.0
    %5193 = vmatprep.subr.mxu0 0.0
    %5194 = vmatpush2.msra.mxu0 0.0
    %5195 = vmatprep.subr.mxu0 0.0
    %5196 = vmatpush2.msra.mxu0 0.0
    %5197 = vmatprep.subr.mxu0 0.0
    %5198 = vmatpush2.msra.mxu0 0.0
    %5199 = vmatprep.subr.mxu0 0.0
    %5200 = vmatpush2.msra.mxu0 0.0
    %5201 = vmatprep.subr.mxu0 0.0
    %5202 = vmatpush2.msra.mxu0 0.0
    %5203 = vmatprep.mubr.f32.mxu0 0.0
    %5204 = vmatmul.mubr.f32.gmra.mxu0 %v4657
    %v5205 = vpop.f32.mrf.mxu0
    %v5206 = vadd.f32 0.0, %v5205
    %v5207 = vpop.f32.mrf.mxu0
    %5208 = vmatprep.mubr.f32.mxu0 0.0
    %5209 = vmatmul.mubr.f32.gmra.mxu0 %v4660
    %v5210 = vpop.f32.mrf.mxu0
    %v5211 = vadd.f32 0.0, %v5210
    %v5212 = vpop.f32.mrf.mxu0
    %5213 = vmatprep.mubr.f32.mxu0 0.0
    %5214 = vmatmul.mubr.f32.gmra.mxu0 %v4663
    %v5215 = vpop.f32.mrf.mxu0
    %v5216 = vadd.f32 0.0, %v5215
    %v5217 = vpop.f32.mrf.mxu0
    %5218 = vmatprep.mubr.f32.mxu0 0.0
    %5219 = vmatmul.mubr.f32.gmra.mxu0 %v4666
    %v5220 = vpop.f32.mrf.mxu0
    %v5221 = vadd.f32 0.0, %v5220
    %v5222 = vpop.f32.mrf.mxu0
    %5223 = vmatprep.mubr.f32.mxu0 0.0
    %5224 = vmatmul.mubr.f32.gmra.mxu0 %v4669
    %v5225 = vpop.f32.mrf.mxu0
    %v5226 = vadd.f32 0.0, %v5225
    %v5227 = vpop.f32.mrf.mxu0
    %5228 = vmatprep.mubr.f32.mxu0 0.0
    %5229 = vmatmul.mubr.f32.gmra.mxu0 %v4672
    %v5230 = vpop.f32.mrf.mxu0
    %v5231 = vadd.f32 0.0, %v5230
    %v5232 = vpop.f32.mrf.mxu0
    %5233 = vmatprep.mubr.f32.mxu0 0.0
    %5234 = vmatmul.mubr.f32.gmra.mxu0 %v4675
    %v5235 = vpop.f32.mrf.mxu0
    %v5236 = vadd.f32 0.0, %v5235
    %v5237 = vpop.f32.mrf.mxu0
    %5238 = vmatprep.mubr.f32.mxu0 0.0
    %5239 = vmatmul.mubr.f32.gmra.mxu0 %v4678
    %v5240 = vpop.f32.mrf.mxu0
    %v5241 = vadd.f32 0.0, %v5240
    %v5242 = vpop.f32.mrf.mxu0
    %5243 = vmatprep.mubr.f32.mxu0 0.0
    %5244 = vmatmul.mubr.f32.gmra.mxu0 %v4681
    %v5245 = vpop.f32.mrf.mxu0
    %v5246 = vadd.f32 0.0, %v5245
    %v5247 = vpop.f32.mrf.mxu0
    %5248 = vmatprep.mubr.f32.mxu0 0.0
    %5249 = vmatmul.mubr.f32.gmra.mxu0 %v4684
    %v5250 = vpop.f32.mrf.mxu0
    %v5251 = vadd.f32 0.0, %v5250
    %v5252 = vpop.f32.mrf.mxu0
    %5253 = vmatprep.mubr.f32.mxu0 0.0
    %5254 = vmatmul.mubr.f32.gmra.mxu0 %v4687
    %v5255 = vpop.f32.mrf.mxu0
    %v5256 = vadd.f32 0.0, %v5255
    %v5257 = vpop.f32.mrf.mxu0
    %5258 = vmatprep.mubr.f32.mxu0 0.0
    %5259 = vmatmul.mubr.f32.gmra.mxu0 %v4690
    %v5260 = vpop.f32.mrf.mxu0
    %v5261 = vadd.f32 0.0, %v5260
    %v5262 = vpop.f32.mrf.mxu0
    %5263 = vmatprep.mubr.f32.mxu0 0.0
    %5264 = vmatmul.mubr.f32.gmra.mxu0 %v4693
    %v5265 = vpop.f32.mrf.mxu0
    %v5266 = vadd.f32 0.0, %v5265
    %v5267 = vpop.f32.mrf.mxu0
    %5268 = vmatprep.mubr.f32.mxu0 0.0
    %5269 = vmatmul.mubr.f32.gmra.mxu0 %v4696
    %v5270 = vpop.f32.mrf.mxu0
    %v5271 = vadd.f32 0.0, %v5270
    %v5272 = vpop.f32.mrf.mxu0
    %5273 = vmatprep.mubr.f32.mxu0 0.0
    %5274 = vmatmul.mubr.f32.gmra.mxu0 %v4699
    %v5275 = vpop.f32.mrf.mxu0
    %v5276 = vadd.f32 0.0, %v5275
    %v5277 = vpop.f32.mrf.mxu0
    %5278 = vmatprep.mubr.f32.mxu0 0.0
    %5279 = vmatmul.mubr.f32.gmra.mxu0 %v4702
    %v5280 = vpop.f32.mrf.mxu0
    %v5281 = vadd.f32 0.0, %v5280
    %v5282 = vpop.f32.mrf.mxu0
    %5283 = vdwg.mxu0
    %5284 = vmatprep.subr.mxu0 0.0
    %5285 = vmatpush1.msra.mxu0 %v4846
    %5286 = vmatprep.subr.mxu0 0.0
    %5287 = vmatpush1.msra.mxu0 %v4841
    %5288 = vmatprep.subr.mxu0 0.0
    %5289 = vmatpush1.msra.mxu0 %v4836
    %5290 = vmatprep.subr.mxu0 0.0
    %5291 = vmatpush1.msra.mxu0 %v4831
    %5292 = vmatprep.subr.mxu0 0.0
    %5293 = vmatpush1.msra.mxu0 %v4826
    %5294 = vmatprep.subr.mxu0 0.0
    %5295 = vmatpush1.msra.mxu0 %v4821
    %5296 = vmatprep.subr.mxu0 0.0
    %5297 = vmatpush1.msra.mxu0 %v4816
    %5298 = vmatprep.subr.mxu0 0.0
    %5299 = vmatpush1.msra.mxu0 %v4811
    %5300 = vmatprep.subr.mxu0 0.0
    %5301 = vmatpush1.msra.mxu0 %v4806
    %5302 = vmatprep.subr.mxu0 0.0
    %5303 = vmatpush1.msra.mxu0 %v4801
    %5304 = vmatprep.subr.mxu0 0.0
    %5305 = vmatpush1.msra.mxu0 %v4796
    %5306 = vmatprep.subr.mxu0 0.0
    %5307 = vmatpush1.msra.mxu0 %v4791
    %5308 = vmatprep.subr.mxu0 0.0
    %5309 = vmatpush1.msra.mxu0 %v4786
    %5310 = vmatprep.subr.mxu0 0.0
    %5311 = vmatpush1.msra.mxu0 %v4781
    %5312 = vmatprep.subr.mxu0 0.0
    %5313 = vmatpush1.msra.mxu0 %v4776
    %5314 = vmatprep.subr.mxu0 0.0
    %5315 = vmatpush1.msra.mxu0 %v4771
    %5316 = vmatprep.subr.mxu0 0.0
    %5317 = vmatpush2.msra.mxu0 %v4991
    %5318 = vmatprep.subr.mxu0 0.0
    %5319 = vmatpush2.msra.mxu0 %v4986
    %5320 = vmatprep.subr.mxu0 0.0
    %5321 = vmatpush2.msra.mxu0 %v4981
    %5322 = vmatprep.subr.mxu0 0.0
    %5323 = vmatpush2.msra.mxu0 %v4976
    %5324 = vmatprep.subr.mxu0 0.0
    %5325 = vmatpush2.msra.mxu0 %v4971
    %5326 = vmatprep.subr.mxu0 0.0
    %5327 = vmatpush2.msra.mxu0 %v4966
    %5328 = vmatprep.subr.mxu0 0.0
    %5329 = vmatpush2.msra.mxu0 %v4961
    %5330 = vmatprep.subr.mxu0 0.0
    %5331 = vmatpush2.msra.mxu0 %v4956
    %5332 = vmatprep.subr.mxu0 0.0
    %5333 = vmatpush2.msra.mxu0 %v4951
    %5334 = vmatprep.subr.mxu0 0.0
    %5335 = vmatpush2.msra.mxu0 %v4946
    %5336 = vmatprep.subr.mxu0 0.0
    %5337 = vmatpush2.msra.mxu0 %v4941
    %5338 = vmatprep.subr.mxu0 0.0
    %5339 = vmatpush2.msra.mxu0 %v4936
    %5340 = vmatprep.subr.mxu0 0.0
    %5341 = vmatpush2.msra.mxu0 %v4931
    %5342 = vmatprep.subr.mxu0 0.0
    %5343 = vmatpush2.msra.mxu0 %v4926
    %5344 = vmatprep.subr.mxu0 0.0
    %5345 = vmatpush2.msra.mxu0 %v4921
    %5346 = vmatprep.subr.mxu0 0.0
    %5347 = vmatpush2.msra.mxu0 %v4916
    %5348 = vmatprep.mubr.f32.mxu0 %v70
    %5349 = vmatmul.mubr.f32.gmra.mxu0 %v69
    %v5350 = vpop.f32.mrf.mxu0
    %v5351 = vadd.f32 %v133, %v5350
    %v5352 = vpop.f32.mrf.mxu0
    %5353 = vmatprep.mubr.f32.mxu0 %v74
    %5354 = vmatmul.mubr.f32.gmra.mxu0 %v73
    %v5355 = vpop.f32.mrf.mxu0
    %v5356 = vadd.f32 %v134, %v5355
    %v5357 = vpop.f32.mrf.mxu0
    %5358 = vmatprep.mubr.f32.mxu0 %v78
    %5359 = vmatmul.mubr.f32.gmra.mxu0 %v77
    %v5360 = vpop.f32.mrf.mxu0
    %v5361 = vadd.f32 %v135, %v5360
    %v5362 = vpop.f32.mrf.mxu0
    %5363 = vmatprep.mubr.f32.mxu0 %v82
    %5364 = vmatmul.mubr.f32.gmra.mxu0 %v81
    %v5365 = vpop.f32.mrf.mxu0
    %v5366 = vadd.f32 %v136, %v5365
    %v5367 = vpop.f32.mrf.mxu0
    %5368 = vmatprep.mubr.f32.mxu0 %v86
    %5369 = vmatmul.mubr.f32.gmra.mxu0 %v85
    %v5370 = vpop.f32.mrf.mxu0
    %v5371 = vadd.f32 %v137, %v5370
    %v5372 = vpop.f32.mrf.mxu0
    %5373 = vmatprep.mubr.f32.mxu0 %v90
    %5374 = vmatmul.mubr.f32.gmra.mxu0 %v89
    %v5375 = vpop.f32.mrf.mxu0
    %v5376 = vadd.f32 %v138, %v5375
    %v5377 = vpop.f32.mrf.mxu0
    %5378 = vmatprep.mubr.f32.mxu0 %v94
    %5379 = vmatmul.mubr.f32.gmra.mxu0 %v93
    %v5380 = vpop.f32.mrf.mxu0
    %v5381 = vadd.f32 %v139, %v5380
    %v5382 = vpop.f32.mrf.mxu0
    %5383 = vmatprep.mubr.f32.mxu0 %v98
    %5384 = vmatmul.mubr.f32.gmra.mxu0 %v97
    %v5385 = vpop.f32.mrf.mxu0
    %v5386 = vadd.f32 %v140, %v5385
    %v5387 = vpop.f32.mrf.mxu0
    %5388 = vmatprep.mubr.f32.mxu0 %v102
    %5389 = vmatmul.mubr.f32.gmra.mxu0 %v101
    %v5390 = vpop.f32.mrf.mxu0
    %v5391 = vadd.f32 %v141, %v5390
    %v5392 = vpop.f32.mrf.mxu0
    %5393 = vmatprep.mubr.f32.mxu0 %v106
    %5394 = vmatmul.mubr.f32.gmra.mxu0 %v105
    %v5395 = vpop.f32.mrf.mxu0
    %v5396 = vadd.f32 %v142, %v5395
    %v5397 = vpop.f32.mrf.mxu0
    %5398 = vmatprep.mubr.f32.mxu0 %v110
    %5399 = vmatmul.mubr.f32.gmra.mxu0 %v109
    %v5400 = vpop.f32.mrf.mxu0
    %v5401 = vadd.f32 %v143, %v5400
    %v5402 = vpop.f32.mrf.mxu0
    %5403 = vmatprep.mubr.f32.mxu0 %v114
    %5404 = vmatmul.mubr.f32.gmra.mxu0 %v113
    %v5405 = vpop.f32.mrf.mxu0
    %v5406 = vadd.f32 %v144, %v5405
    %v5407 = vpop.f32.mrf.mxu0
    %5408 = vmatprep.mubr.f32.mxu0 %v118
    %5409 = vmatmul.mubr.f32.gmra.mxu0 %v117
    %v5410 = vpop.f32.mrf.mxu0
    %v5411 = vadd.f32 %v145, %v5410
    %v5412 = vpop.f32.mrf.mxu0
    %5413 = vmatprep.mubr.f32.mxu0 %v122
    %5414 = vmatmul.mubr.f32.gmra.mxu0 %v121
    %v5415 = vpop.f32.mrf.mxu0
    %v5416 = vadd.f32 %v146, %v5415
    %v5417 = vpop.f32.mrf.mxu0
    %5418 = vmatprep.mubr.f32.mxu0 %v126
    %5419 = vmatmul.mubr.f32.gmra.mxu0 %v125
    %v5420 = vpop.f32.mrf.mxu0
    %v5421 = vadd.f32 %v147, %v5420
    %v5422 = vpop.f32.mrf.mxu0
    %5423 = vmatprep.mubr.f32.mxu0 %v130
    %5424 = vmatmul.mubr.f32.gmra.mxu0 %v129
    %v5425 = vpop.f32.mrf.mxu0
    %v5426 = vadd.f32 %v148, %v5425
    %v5427 = vpop.f32.mrf.mxu0
    %5428 = vdwg.mxu0
    %5429 = vmatprep.subr.mxu0 0.0
    %5430 = vmatpush1.msra.mxu0 %v5136
    %5431 = vmatprep.subr.mxu0 0.0
    %5432 = vmatpush1.msra.mxu0 %v5131
    %5433 = vmatprep.subr.mxu0 0.0
    %5434 = vmatpush1.msra.mxu0 %v5126
    %5435 = vmatprep.subr.mxu0 0.0
    %5436 = vmatpush1.msra.mxu0 %v5121
    %5437 = vmatprep.subr.mxu0 0.0
    %5438 = vmatpush1.msra.mxu0 %v5116
    %5439 = vmatprep.subr.mxu0 0.0
    %5440 = vmatpush1.msra.mxu0 %v5111
    %5441 = vmatprep.subr.mxu0 0.0
    %5442 = vmatpush1.msra.mxu0 %v5106
    %5443 = vmatprep.subr.mxu0 0.0
    %5444 = vmatpush1.msra.mxu0 %v5101
    %5445 = vmatprep.subr.mxu0 0.0
    %5446 = vmatpush1.msra.mxu0 %v5096
    %5447 = vmatprep.subr.mxu0 0.0
    %5448 = vmatpush1.msra.mxu0 %v5091
    %5449 = vmatprep.subr.mxu0 0.0
    %5450 = vmatpush1.msra.mxu0 %v5086
    %5451 = vmatprep.subr.mxu0 0.0
    %5452 = vmatpush1.msra.mxu0 %v5081
    %5453 = vmatprep.subr.mxu0 0.0
    %5454 = vmatpush1.msra.mxu0 %v5076
    %5455 = vmatprep.subr.mxu0 0.0
    %5456 = vmatpush1.msra.mxu0 %v5071
    %5457 = vmatprep.subr.mxu0 0.0
    %5458 = vmatpush1.msra.mxu0 %v5066
    %5459 = vmatprep.subr.mxu0 0.0
    %5460 = vmatpush1.msra.mxu0 %v5061
    %5461 = vmatprep.subr.mxu0 0.0
    %5462 = vmatpush2.msra.mxu0 %v5281
    %5463 = vmatprep.subr.mxu0 0.0
    %5464 = vmatpush2.msra.mxu0 %v5276
    %5465 = vmatprep.subr.mxu0 0.0
    %5466 = vmatpush2.msra.mxu0 %v5271
    %5467 = vmatprep.subr.mxu0 0.0
    %5468 = vmatpush2.msra.mxu0 %v5266
    %5469 = vmatprep.subr.mxu0 0.0
    %5470 = vmatpush2.msra.mxu0 %v5261
    %5471 = vmatprep.subr.mxu0 0.0
    %5472 = vmatpush2.msra.mxu0 %v5256
    %5473 = vmatprep.subr.mxu0 0.0
    %5474 = vmatpush2.msra.mxu0 %v5251
    %5475 = vmatprep.subr.mxu0 0.0
    %5476 = vmatpush2.msra.mxu0 %v5246
    %5477 = vmatprep.subr.mxu0 0.0
    %5478 = vmatpush2.msra.mxu0 %v5241
    %5479 = vmatprep.subr.mxu0 0.0
    %5480 = vmatpush2.msra.mxu0 %v5236
    %5481 = vmatprep.subr.mxu0 0.0
    %5482 = vmatpush2.msra.mxu0 %v5231
    %5483 = vmatprep.subr.mxu0 0.0
    %5484 = vmatpush2.msra.mxu0 %v5226
    %5485 = vmatprep.subr.mxu0 0.0
    %5486 = vmatpush2.msra.mxu0 %v5221
    %5487 = vmatprep.subr.mxu0 0.0
    %5488 = vmatpush2.msra.mxu0 %v5216
    %5489 = vmatprep.subr.mxu0 0.0
    %5490 = vmatpush2.msra.mxu0 %v5211
    %5491 = vmatprep.subr.mxu0 0.0
    %5492 = vmatpush2.msra.mxu0 %v5206
    %5493 = vmatprep.mubr.f32.mxu0 %v72
    %5494 = vmatmul.mubr.f32.gmra.mxu0 %v71
    %v5495 = vpop.f32.mrf.mxu0
    %v5496 = vadd.f32 %v5351, %v5495
    %v5497 = vpop.f32.mrf.mxu0
    %5498 = vmatprep.mubr.f32.mxu0 %v76
    %5499 = vmatmul.mubr.f32.gmra.mxu0 %v75
    %v5500 = vpop.f32.mrf.mxu0
    %v5501 = vadd.f32 %v5356, %v5500
    %v5502 = vpop.f32.mrf.mxu0
    %5503 = vmatprep.mubr.f32.mxu0 %v80
    %5504 = vmatmul.mubr.f32.gmra.mxu0 %v79
    %v5505 = vpop.f32.mrf.mxu0
    %v5506 = vadd.f32 %v5361, %v5505
    %v5507 = vpop.f32.mrf.mxu0
    %5508 = vmatprep.mubr.f32.mxu0 %v84
    %5509 = vmatmul.mubr.f32.gmra.mxu0 %v83
    %v5510 = vpop.f32.mrf.mxu0
    %v5511 = vadd.f32 %v5366, %v5510
    %v5512 = vpop.f32.mrf.mxu0
    %5513 = vmatprep.mubr.f32.mxu0 %v88
    %5514 = vmatmul.mubr.f32.gmra.mxu0 %v87
    %v5515 = vpop.f32.mrf.mxu0
    %v5516 = vadd.f32 %v5371, %v5515
    %v5517 = vpop.f32.mrf.mxu0
    %5518 = vmatprep.mubr.f32.mxu0 %v92
    %5519 = vmatmul.mubr.f32.gmra.mxu0 %v91
    %v5520 = vpop.f32.mrf.mxu0
    %v5521 = vadd.f32 %v5376, %v5520
    %v5522 = vpop.f32.mrf.mxu0
    %5523 = vmatprep.mubr.f32.mxu0 %v96
    %5524 = vmatmul.mubr.f32.gmra.mxu0 %v95
    %v5525 = vpop.f32.mrf.mxu0
    %v5526 = vadd.f32 %v5381, %v5525
    %v5527 = vpop.f32.mrf.mxu0
    %5528 = vmatprep.mubr.f32.mxu0 %v100
    %5529 = vmatmul.mubr.f32.gmra.mxu0 %v99
    %v5530 = vpop.f32.mrf.mxu0
    %v5531 = vadd.f32 %v5386, %v5530
    %v5532 = vpop.f32.mrf.mxu0
    %5533 = vmatprep.mubr.f32.mxu0 %v104
    %5534 = vmatmul.mubr.f32.gmra.mxu0 %v103
    %v5535 = vpop.f32.mrf.mxu0
    %v5536 = vadd.f32 %v5391, %v5535
    %v5537 = vpop.f32.mrf.mxu0
    %5538 = vmatprep.mubr.f32.mxu0 %v108
    %5539 = vmatmul.mubr.f32.gmra.mxu0 %v107
    %v5540 = vpop.f32.mrf.mxu0
    %v5541 = vadd.f32 %v5396, %v5540
    %v5542 = vpop.f32.mrf.mxu0
    %5543 = vmatprep.mubr.f32.mxu0 %v112
    %5544 = vmatmul.mubr.f32.gmra.mxu0 %v111
    %v5545 = vpop.f32.mrf.mxu0
    %v5546 = vadd.f32 %v5401, %v5545
    %v5547 = vpop.f32.mrf.mxu0
    %5548 = vmatprep.mubr.f32.mxu0 %v116
    %5549 = vmatmul.mubr.f32.gmra.mxu0 %v115
    %v5550 = vpop.f32.mrf.mxu0
    %v5551 = vadd.f32 %v5406, %v5550
    %v5552 = vpop.f32.mrf.mxu0
    %5553 = vmatprep.mubr.f32.mxu0 %v120
    %5554 = vmatmul.mubr.f32.gmra.mxu0 %v119
    %v5555 = vpop.f32.mrf.mxu0
    %v5556 = vadd.f32 %v5411, %v5555
    %v5557 = vpop.f32.mrf.mxu0
    %5558 = vmatprep.mubr.f32.mxu0 %v124
    %5559 = vmatmul.mubr.f32.gmra.mxu0 %v123
    %v5560 = vpop.f32.mrf.mxu0
    %v5561 = vadd.f32 %v5416, %v5560
    %v5562 = vpop.f32.mrf.mxu0
    %5563 = vmatprep.mubr.f32.mxu0 %v128
    %5564 = vmatmul.mubr.f32.gmra.mxu0 %v127
    %v5565 = vpop.f32.mrf.mxu0
    %v5566 = vadd.f32 %v5421, %v5565
    %v5567 = vpop.f32.mrf.mxu0
    %5568 = vmatprep.mubr.f32.mxu0 %v132
    %5569 = vmatmul.mubr.f32.gmra.mxu0 %v131
    %v5570 = vpop.f32.mrf.mxu0
    %v5571 = vadd.f32 %v5426, %v5570
    %v5572 = vpop.f32.mrf.mxu0
    %5573 = vdwg.mxu0
    %5574 = vmatprep.subr.mxu0 0.0
    %5575 = vmatpush1.msra.mxu0 0.0
    %5576 = vmatprep.subr.mxu0 0.0
    %5577 = vmatpush1.msra.mxu0 0.0
    %5578 = vmatprep.subr.mxu0 0.0
    %5579 = vmatpush1.msra.mxu0 0.0
    %5580 = vmatprep.subr.mxu0 0.0
    %5581 = vmatpush1.msra.mxu0 0.0
    %5582 = vmatprep.subr.mxu0 0.0
    %5583 = vmatpush1.msra.mxu0 0.0
    %5584 = vmatprep.subr.mxu0 0.0
    %5585 = vmatpush1.msra.mxu0 0.0
    %5586 = vmatprep.subr.mxu0 0.0
    %5587 = vmatpush1.msra.mxu0 0.0
    %5588 = vmatprep.subr.mxu0 0.0
    %5589 = vmatpush1.msra.mxu0 0.0
    %5590 = vmatprep.subr.mxu0 0.0
    %5591 = vmatpush1.msra.mxu0 0.0
    %5592 = vmatprep.subr.mxu0 0.0
    %5593 = vmatpush1.msra.mxu0 0.0
    %5594 = vmatprep.subr.mxu0 0.0
    %5595 = vmatpush1.msra.mxu0 0.0
    %5596 = vmatprep.subr.mxu0 0.0
    %5597 = vmatpush1.msra.mxu0 0.0
    %5598 = vmatprep.subr.mxu0 0.0
    %5599 = vmatpush1.msra.mxu0 %v192
    %5600 = vmatprep.subr.mxu0 0.0
    %5601 = vmatpush1.msra.mxu0 %v191
    %5602 = vmatprep.subr.mxu0 0.0
    %5603 = vmatpush1.msra.mxu0 %v190
    %5604 = vmatprep.subr.mxu0 0.0
    %5605 = vmatpush1.msra.mxu0 %v189
    %5606 = vmatprep.subr.mxu0 0.0
    %5607 = vmatpush2.msra.mxu0 0.0
    %5608 = vmatprep.subr.mxu0 0.0
    %5609 = vmatpush2.msra.mxu0 0.0
    %5610 = vmatprep.subr.mxu0 0.0
    %5611 = vmatpush2.msra.mxu0 0.0
    %5612 = vmatprep.subr.mxu0 0.0
    %5613 = vmatpush2.msra.mxu0 0.0
    %5614 = vmatprep.subr.mxu0 0.0
    %5615 = vmatpush2.msra.mxu0 0.0
    %5616 = vmatprep.subr.mxu0 0.0
    %5617 = vmatpush2.msra.mxu0 0.0
    %5618 = vmatprep.subr.mxu0 0.0
    %5619 = vmatpush2.msra.mxu0 0.0
    %5620 = vmatprep.subr.mxu0 0.0
    %5621 = vmatpush2.msra.mxu0 0.0
    %5622 = vmatprep.subr.mxu0 0.0
    %5623 = vmatpush2.msra.mxu0 0.0
    %5624 = vmatprep.subr.mxu0 0.0
    %5625 = vmatpush2.msra.mxu0 0.0
    %5626 = vmatprep.subr.mxu0 0.0
    %5627 = vmatpush2.msra.mxu0 0.0
    %5628 = vmatprep.subr.mxu0 0.0
    %5629 = vmatpush2.msra.mxu0 0.0
    %5630 = vmatprep.subr.mxu0 0.0
    %5631 = vmatpush2.msra.mxu0 0.0
    %5632 = vmatprep.subr.mxu0 0.0
    %5633 = vmatpush2.msra.mxu0 0.0
    %5634 = vmatprep.subr.mxu0 0.0
    %5635 = vmatpush2.msra.mxu0 0.0
    %5636 = vmatprep.subr.mxu0 0.0
    %5637 = vmatpush2.msra.mxu0 0.0
    %5638 = vmatprep.mubr.f32.mxu0 0.0
    %5639 = vmatmul.mubr.f32.gmra.mxu0 %v4657
    %v5640 = vpop.f32.mrf.mxu0
    %v5641 = vadd.f32 0.0, %v5640
    %v5642 = vpop.f32.mrf.mxu0
    %5643 = vmatprep.mubr.f32.mxu0 0.0
    %5644 = vmatmul.mubr.f32.gmra.mxu0 %v4660
    %v5645 = vpop.f32.mrf.mxu0
    %v5646 = vadd.f32 0.0, %v5645
    %v5647 = vpop.f32.mrf.mxu0
    %5648 = vmatprep.mubr.f32.mxu0 0.0
    %5649 = vmatmul.mubr.f32.gmra.mxu0 %v4663
    %v5650 = vpop.f32.mrf.mxu0
    %v5651 = vadd.f32 0.0, %v5650
    %v5652 = vpop.f32.mrf.mxu0
    %5653 = vmatprep.mubr.f32.mxu0 0.0
    %5654 = vmatmul.mubr.f32.gmra.mxu0 %v4666
    %v5655 = vpop.f32.mrf.mxu0
    %v5656 = vadd.f32 0.0, %v5655
    %v5657 = vpop.f32.mrf.mxu0
    %5658 = vmatprep.mubr.f32.mxu0 0.0
    %5659 = vmatmul.mubr.f32.gmra.mxu0 %v4669
    %v5660 = vpop.f32.mrf.mxu0
    %v5661 = vadd.f32 0.0, %v5660
    %v5662 = vpop.f32.mrf.mxu0
    %5663 = vmatprep.mubr.f32.mxu0 0.0
    %5664 = vmatmul.mubr.f32.gmra.mxu0 %v4672
    %v5665 = vpop.f32.mrf.mxu0
    %v5666 = vadd.f32 0.0, %v5665
    %v5667 = vpop.f32.mrf.mxu0
    %5668 = vmatprep.mubr.f32.mxu0 0.0
    %5669 = vmatmul.mubr.f32.gmra.mxu0 %v4675
    %v5670 = vpop.f32.mrf.mxu0
    %v5671 = vadd.f32 0.0, %v5670
    %v5672 = vpop.f32.mrf.mxu0
    %5673 = vmatprep.mubr.f32.mxu0 0.0
    %5674 = vmatmul.mubr.f32.gmra.mxu0 %v4678
    %v5675 = vpop.f32.mrf.mxu0
    %v5676 = vadd.f32 0.0, %v5675
    %v5677 = vpop.f32.mrf.mxu0
    %5678 = vmatprep.mubr.f32.mxu0 0.0
    %5679 = vmatmul.mubr.f32.gmra.mxu0 %v4681
    %v5680 = vpop.f32.mrf.mxu0
    %v5681 = vadd.f32 0.0, %v5680
    %v5682 = vpop.f32.mrf.mxu0
    %5683 = vmatprep.mubr.f32.mxu0 0.0
    %5684 = vmatmul.mubr.f32.gmra.mxu0 %v4684
    %v5685 = vpop.f32.mrf.mxu0
    %v5686 = vadd.f32 0.0, %v5685
    %v5687 = vpop.f32.mrf.mxu0
    %5688 = vmatprep.mubr.f32.mxu0 0.0
    %5689 = vmatmul.mubr.f32.gmra.mxu0 %v4687
    %v5690 = vpop.f32.mrf.mxu0
    %v5691 = vadd.f32 0.0, %v5690
    %v5692 = vpop.f32.mrf.mxu0
    %5693 = vmatprep.mubr.f32.mxu0 0.0
    %5694 = vmatmul.mubr.f32.gmra.mxu0 %v4690
    %v5695 = vpop.f32.mrf.mxu0
    %v5696 = vadd.f32 0.0, %v5695
    %v5697 = vpop.f32.mrf.mxu0
    %5698 = vmatprep.mubr.f32.mxu0 0.0
    %5699 = vmatmul.mubr.f32.gmra.mxu0 %v4693
    %v5700 = vpop.f32.mrf.mxu0
    %v5701 = vadd.f32 0.0, %v5700
    %v5702 = vpop.f32.mrf.mxu0
    %5703 = vmatprep.mubr.f32.mxu0 0.0
    %5704 = vmatmul.mubr.f32.gmra.mxu0 %v4696
    %v5705 = vpop.f32.mrf.mxu0
    %v5706 = vadd.f32 0.0, %v5705
    %v5707 = vpop.f32.mrf.mxu0
    %5708 = vmatprep.mubr.f32.mxu0 0.0
    %5709 = vmatmul.mubr.f32.gmra.mxu0 %v4699
    %v5710 = vpop.f32.mrf.mxu0
    %v5711 = vadd.f32 0.0, %v5710
    %v5712 = vpop.f32.mrf.mxu0
    %5713 = vmatprep.mubr.f32.mxu0 0.0
    %5714 = vmatmul.mubr.f32.gmra.mxu0 %v4702
    %v5715 = vpop.f32.mrf.mxu0
    %v5716 = vadd.f32 0.0, %v5715
    %v5717 = vpop.f32.mrf.mxu0
    %5718 = vdwg.mxu0
    %v5720 = vsel %vm1266, %v5496, 0
    %v5723 = vsel %vm1266, %v5501, 0
    %v5726 = vsel %vm1266, %v5506, 0
    %v5729 = vsel %vm1266, %v5511, 0
    %v5732 = vsel %vm1266, %v5516, 0
    %v5735 = vsel %vm1266, %v5521, 0
    %v5738 = vsel %vm1266, %v5526, 0
    %v5741 = vsel %vm1266, %v5531, 0
    %v5744 = vsel %vm1266, %v5536, 0
    %v5747 = vsel %vm1266, %v5541, 0
    %v5750 = vsel %vm1266, %v5546, 0
    %v5753 = vsel %vm1266, %v5551, 0
    %v5756 = vsel %vm1266, %v5556, 0
    %v5759 = vsel %vm1266, %v5561, 0
    %v5762 = vsel %vm1266, %v5566, 0
    %v5765 = vsel %vm1266, %v5571, 0
    %5767 = vmatprep.subr.mxu0 0.0
    %5768 = vmatpush1.msra.mxu0 0.0
    %5769 = vmatprep.subr.mxu0 0.0
    %5770 = vmatpush1.msra.mxu0 0.0
    %5771 = vmatprep.subr.mxu0 0.0
    %5772 = vmatpush1.msra.mxu0 0.0
    %5773 = vmatprep.subr.mxu0 0.0
    %5774 = vmatpush1.msra.mxu0 0.0
    %5775 = vmatprep.subr.mxu0 0.0
    %5776 = vmatpush1.msra.mxu0 0.0
    %5777 = vmatprep.subr.mxu0 0.0
    %5778 = vmatpush1.msra.mxu0 0.0
    %5779 = vmatprep.subr.mxu0 0.0
    %5780 = vmatpush1.msra.mxu0 0.0
    %5781 = vmatprep.subr.mxu0 0.0
    %5782 = vmatpush1.msra.mxu0 0.0
    %5783 = vmatprep.subr.mxu0 0.0
    %5784 = vmatpush1.msra.mxu0 %v172
    %5785 = vmatprep.subr.mxu0 0.0
    %5786 = vmatpush1.msra.mxu0 %v171
    %5787 = vmatprep.subr.mxu0 0.0
    %5788 = vmatpush1.msra.mxu0 %v170
    %5789 = vmatprep.subr.mxu0 0.0
    %5790 = vmatpush1.msra.mxu0 %v169
    %5791 = vmatprep.subr.mxu0 0.0
    %5792 = vmatpush1.msra.mxu0 %v168
    %5793 = vmatprep.subr.mxu0 0.0
    %5794 = vmatpush1.msra.mxu0 %v167
    %5795 = vmatprep.subr.mxu0 0.0
    %5796 = vmatpush1.msra.mxu0 %v166
    %5797 = vmatprep.subr.mxu0 0.0
    %5798 = vmatpush1.msra.mxu0 %v165
    %5799 = vmatprep.subr.mxu0 0.0
    %5800 = vmatpush2.msra.mxu0 0.0
    %5801 = vmatprep.subr.mxu0 0.0
    %5802 = vmatpush2.msra.mxu0 0.0
    %5803 = vmatprep.subr.mxu0 0.0
    %5804 = vmatpush2.msra.mxu0 0.0
    %5805 = vmatprep.subr.mxu0 0.0
    %5806 = vmatpush2.msra.mxu0 0.0
    %5807 = vmatprep.subr.mxu0 0.0
    %5808 = vmatpush2.msra.mxu0 0.0
    %5809 = vmatprep.subr.mxu0 0.0
    %5810 = vmatpush2.msra.mxu0 0.0
    %5811 = vmatprep.subr.mxu0 0.0
    %5812 = vmatpush2.msra.mxu0 0.0
    %5813 = vmatprep.subr.mxu0 0.0
    %5814 = vmatpush2.msra.mxu0 0.0
    %5815 = vmatprep.subr.mxu0 0.0
    %5816 = vmatpush2.msra.mxu0 0.0
    %5817 = vmatprep.subr.mxu0 0.0
    %5818 = vmatpush2.msra.mxu0 0.0
    %5819 = vmatprep.subr.mxu0 0.0
    %5820 = vmatpush2.msra.mxu0 0.0
    %5821 = vmatprep.subr.mxu0 0.0
    %5822 = vmatpush2.msra.mxu0 0.0
    %5823 = vmatprep.subr.mxu0 0.0
    %5824 = vmatpush2.msra.mxu0 0.0
    %5825 = vmatprep.subr.mxu0 0.0
    %5826 = vmatpush2.msra.mxu0 0.0
    %5827 = vmatprep.subr.mxu0 0.0
    %5828 = vmatpush2.msra.mxu0 0.0
    %5829 = vmatprep.subr.mxu0 0.0
    %5830 = vmatpush2.msra.mxu0 0.0
    %5831 = vmatprep.mubr.f32.mxu0 0.0
    %5832 = vmatmul.mubr.f32.gmra.mxu0 %v5720
    %v5833 = vpop.f32.mrf.mxu0
    %v5834 = vadd.f32 %v5641, %v5833
    %v5835 = vpop.f32.mrf.mxu0
    %5836 = vmatprep.mubr.f32.mxu0 0.0
    %5837 = vmatmul.mubr.f32.gmra.mxu0 %v5723
    %v5838 = vpop.f32.mrf.mxu0
    %v5839 = vadd.f32 %v5646, %v5838
    %v5840 = vpop.f32.mrf.mxu0
    %5841 = vmatprep.mubr.f32.mxu0 0.0
    %5842 = vmatmul.mubr.f32.gmra.mxu0 %v5726
    %v5843 = vpop.f32.mrf.mxu0
    %v5844 = vadd.f32 %v5651, %v5843
    %v5845 = vpop.f32.mrf.mxu0
    %5846 = vmatprep.mubr.f32.mxu0 0.0
    %5847 = vmatmul.mubr.f32.gmra.mxu0 %v5729
    %v5848 = vpop.f32.mrf.mxu0
    %v5849 = vadd.f32 %v5656, %v5848
    %v5850 = vpop.f32.mrf.mxu0
    %5851 = vmatprep.mubr.f32.mxu0 0.0
    %5852 = vmatmul.mubr.f32.gmra.mxu0 %v5732
    %v5853 = vpop.f32.mrf.mxu0
    %v5854 = vadd.f32 %v5661, %v5853
    %v5855 = vpop.f32.mrf.mxu0
    %5856 = vmatprep.mubr.f32.mxu0 0.0
    %5857 = vmatmul.mubr.f32.gmra.mxu0 %v5735
    %v5858 = vpop.f32.mrf.mxu0
    %v5859 = vadd.f32 %v5666, %v5858
    %v5860 = vpop.f32.mrf.mxu0
    %5861 = vmatprep.mubr.f32.mxu0 0.0
    %5862 = vmatmul.mubr.f32.gmra.mxu0 %v5738
    %v5863 = vpop.f32.mrf.mxu0
    %v5864 = vadd.f32 %v5671, %v5863
    %v5865 = vpop.f32.mrf.mxu0
    %5866 = vmatprep.mubr.f32.mxu0 0.0
    %5867 = vmatmul.mubr.f32.gmra.mxu0 %v5741
    %v5868 = vpop.f32.mrf.mxu0
    %v5869 = vadd.f32 %v5676, %v5868
    %v5870 = vpop.f32.mrf.mxu0
    %5871 = vmatprep.mubr.f32.mxu0 0.0
    %5872 = vmatmul.mubr.f32.gmra.mxu0 %v5744
    %v5873 = vpop.f32.mrf.mxu0
    %v5874 = vadd.f32 %v5681, %v5873
    %v5875 = vpop.f32.mrf.mxu0
    %5876 = vmatprep.mubr.f32.mxu0 0.0
    %5877 = vmatmul.mubr.f32.gmra.mxu0 %v5747
    %v5878 = vpop.f32.mrf.mxu0
    %v5879 = vadd.f32 %v5686, %v5878
    %v5880 = vpop.f32.mrf.mxu0
    %5881 = vmatprep.mubr.f32.mxu0 0.0
    %5882 = vmatmul.mubr.f32.gmra.mxu0 %v5750
    %v5883 = vpop.f32.mrf.mxu0
    %v5884 = vadd.f32 %v5691, %v5883
    %v5885 = vpop.f32.mrf.mxu0
    %5886 = vmatprep.mubr.f32.mxu0 0.0
    %5887 = vmatmul.mubr.f32.gmra.mxu0 %v5753
    %v5888 = vpop.f32.mrf.mxu0
    %v5889 = vadd.f32 %v5696, %v5888
    %v5890 = vpop.f32.mrf.mxu0
    %5891 = vmatprep.mubr.f32.mxu0 0.0
    %5892 = vmatmul.mubr.f32.gmra.mxu0 %v5756
    %v5893 = vpop.f32.mrf.mxu0
    %v5894 = vadd.f32 %v5701, %v5893
    %v5895 = vpop.f32.mrf.mxu0
    %5896 = vmatprep.mubr.f32.mxu0 0.0
    %5897 = vmatmul.mubr.f32.gmra.mxu0 %v5759
    %v5898 = vpop.f32.mrf.mxu0
    %v5899 = vadd.f32 %v5706, %v5898
    %v5900 = vpop.f32.mrf.mxu0
    %5901 = vmatprep.mubr.f32.mxu0 0.0
    %5902 = vmatmul.mubr.f32.gmra.mxu0 %v5762
    %v5903 = vpop.f32.mrf.mxu0
    %v5904 = vadd.f32 %v5711, %v5903
    %v5905 = vpop.f32.mrf.mxu0
    %5906 = vmatprep.mubr.f32.mxu0 0.0
    %5907 = vmatmul.mubr.f32.gmra.mxu0 %v5765
    %v5908 = vpop.f32.mrf.mxu0
    %v5909 = vadd.f32 %v5716, %v5908
    %v5910 = vpop.f32.mrf.mxu0
    %5911 = vdwg.mxu0
    %v5912 = vadd.f32 %v5834, %v1463
    %v5913 = vadd.f32 %v5839, %v1463
    %v5914 = vadd.f32 %v5844, %v1463
    %v5915 = vadd.f32 %v5849, %v1463
    %v5916 = vadd.f32 %v5854, %v1463
    %v5917 = vadd.f32 %v5859, %v1463
    %v5918 = vadd.f32 %v5864, %v1463
    %v5919 = vadd.f32 %v5869, %v1463
    %v5920 = vadd.f32 %v5874, %v1463
    %v5921 = vadd.f32 %v5879, %v1463
    %v5922 = vadd.f32 %v5884, %v1463
    %v5923 = vadd.f32 %v5889, %v1463
    %v5924 = vadd.f32 %v5894, %v1463
    %v5925 = vadd.f32 %v5899, %v1463
    %v5926 = vadd.f32 %v5904, %v1463
    %v5927 = vadd.f32 %v5909, %v1463
    %v5928 = vxor.u32 %v5912, 2147483648
    %v5929 = vxor.u32 %v5913, 2147483648
    %v5930 = vxor.u32 %v5914, 2147483648
    %v5931 = vxor.u32 %v5915, 2147483648
    %v5932 = vxor.u32 %v5916, 2147483648
    %v5933 = vxor.u32 %v5917, 2147483648
    %v5934 = vxor.u32 %v5918, 2147483648
    %v5935 = vxor.u32 %v5919, 2147483648
    %v5936 = vxor.u32 %v5920, 2147483648
    %v5937 = vxor.u32 %v5921, 2147483648
    %v5938 = vxor.u32 %v5922, 2147483648
    %v5939 = vxor.u32 %v5923, 2147483648
    %v5940 = vxor.u32 %v5924, 2147483648
    %v5941 = vxor.u32 %v5925, 2147483648
    %v5942 = vxor.u32 %v5926, 2147483648
    %v5943 = vxor.u32 %v5927, 2147483648
    %v5944 = vmul.f32 %v5928, 1.442695
    %v5945 = vpow.pop %v5944
    %v5946 = vmul.f32 %v5929, 1.442695
    %v5947 = vpow.pop %v5946
    %v5948 = vmul.f32 %v5930, 1.442695
    %v5949 = vpow.pop %v5948
    %v5950 = vmul.f32 %v5931, 1.442695
    %v5951 = vpow.pop %v5950
    %v5952 = vmul.f32 %v5932, 1.442695
    %v5953 = vpow.pop %v5952
    %v5954 = vmul.f32 %v5933, 1.442695
    %v5955 = vpow.pop %v5954
    %v5956 = vmul.f32 %v5934, 1.442695
    %v5957 = vpow.pop %v5956
    %v5958 = vmul.f32 %v5935, 1.442695
    %v5959 = vpow.pop %v5958
    %v5960 = vmul.f32 %v5936, 1.442695
    %v5961 = vpow.pop %v5960
    %v5962 = vmul.f32 %v5937, 1.442695
    %v5963 = vpow.pop %v5962
    %v5964 = vmul.f32 %v5938, 1.442695
    %v5965 = vpow.pop %v5964
    %v5966 = vmul.f32 %v5939, 1.442695
    %v5967 = vpow.pop %v5966
    %v5968 = vmul.f32 %v5940, 1.442695
    %v5969 = vpow.pop %v5968
    %v5970 = vmul.f32 %v5941, 1.442695
    %v5971 = vpow.pop %v5970
    %v5972 = vmul.f32 %v5942, 1.442695
    %v5973 = vpow.pop %v5972
    %v5974 = vmul.f32 %v5943, 1.442695
    %v5975 = vpow.pop %v5974
    %v5976 = vadd.f32 %v5945, 1.0
    %v5977 = vadd.f32 %v5947, 1.0
    %v5978 = vadd.f32 %v5949, 1.0
    %v5979 = vadd.f32 %v5951, 1.0
    %v5980 = vadd.f32 %v5953, 1.0
    %v5981 = vadd.f32 %v5955, 1.0
    %v5982 = vadd.f32 %v5957, 1.0
    %v5983 = vadd.f32 %v5959, 1.0
    %v5984 = vadd.f32 %v5961, 1.0
    %v5985 = vadd.f32 %v5963, 1.0
    %v5986 = vadd.f32 %v5965, 1.0
    %v5987 = vadd.f32 %v5967, 1.0
    %v5988 = vadd.f32 %v5969, 1.0
    %v5989 = vadd.f32 %v5971, 1.0
    %v5990 = vadd.f32 %v5973, 1.0
    %v5991 = vadd.f32 %v5975, 1.0
    %v5992 = vrcp.pop %v5976
    %v5993 = vmul.f32 1.0, %v5992
    %v5994 = vrcp.pop %v5977
    %v5995 = vmul.f32 1.0, %v5994
    %v5996 = vrcp.pop %v5978
    %v5997 = vmul.f32 1.0, %v5996
    %v5998 = vrcp.pop %v5979
    %v5999 = vmul.f32 1.0, %v5998
    %v6000 = vrcp.pop %v5980
    %v6001 = vmul.f32 1.0, %v6000
    %v6002 = vrcp.pop %v5981
    %v6003 = vmul.f32 1.0, %v6002
    %v6004 = vrcp.pop %v5982
    %v6005 = vmul.f32 1.0, %v6004
    %v6006 = vrcp.pop %v5983
    %v6007 = vmul.f32 1.0, %v6006
    %v6008 = vrcp.pop %v5984
    %v6009 = vmul.f32 1.0, %v6008
    %v6010 = vrcp.pop %v5985
    %v6011 = vmul.f32 1.0, %v6010
    %v6012 = vrcp.pop %v5986
    %v6013 = vmul.f32 1.0, %v6012
    %v6014 = vrcp.pop %v5987
    %v6015 = vmul.f32 1.0, %v6014
    %v6016 = vrcp.pop %v5988
    %v6017 = vmul.f32 1.0, %v6016
    %v6018 = vrcp.pop %v5989
    %v6019 = vmul.f32 1.0, %v6018
    %v6020 = vrcp.pop %v5990
    %v6021 = vmul.f32 1.0, %v6020
    %v6022 = vrcp.pop %v5991
    %v6023 = vmul.f32 1.0, %v6022
    %6024 = vmatprep.subr.mxu0 0.0
    %6025 = vmatpush1.msra.mxu0 0.0
    %6026 = vmatprep.subr.mxu0 0.0
    %6027 = vmatpush1.msra.mxu0 0.0
    %6028 = vmatprep.subr.mxu0 0.0
    %6029 = vmatpush1.msra.mxu0 0.0
    %6030 = vmatprep.subr.mxu0 0.0
    %6031 = vmatpush1.msra.mxu0 0.0
    %6032 = vmatprep.subr.mxu0 0.0
    %6033 = vmatpush1.msra.mxu0 0.0
    %6034 = vmatprep.subr.mxu0 0.0
    %6035 = vmatpush1.msra.mxu0 0.0
    %6036 = vmatprep.subr.mxu0 0.0
    %6037 = vmatpush1.msra.mxu0 0.0
    %6038 = vmatprep.subr.mxu0 0.0
    %6039 = vmatpush1.msra.mxu0 0.0
    %6040 = vmatprep.subr.mxu0 0.0
    %6041 = vmatpush1.msra.mxu0 0.0
    %6042 = vmatprep.subr.mxu0 0.0
    %6043 = vmatpush1.msra.mxu0 0.0
    %6044 = vmatprep.subr.mxu0 0.0
    %6045 = vmatpush1.msra.mxu0 0.0
    %6046 = vmatprep.subr.mxu0 0.0
    %6047 = vmatpush1.msra.mxu0 0.0
    %6048 = vmatprep.subr.mxu0 0.0
    %6049 = vmatpush1.msra.mxu0 %v196
    %6050 = vmatprep.subr.mxu0 0.0
    %6051 = vmatpush1.msra.mxu0 %v195
    %6052 = vmatprep.subr.mxu0 0.0
    %6053 = vmatpush1.msra.mxu0 %v194
    %6054 = vmatprep.subr.mxu0 0.0
    %6055 = vmatpush1.msra.mxu0 %v193
    %6056 = vmatprep.subr.mxu0 0.0
    %6057 = vmatpush2.msra.mxu0 0.0
    %6058 = vmatprep.subr.mxu0 0.0
    %6059 = vmatpush2.msra.mxu0 0.0
    %6060 = vmatprep.subr.mxu0 0.0
    %6061 = vmatpush2.msra.mxu0 0.0
    %6062 = vmatprep.subr.mxu0 0.0
    %6063 = vmatpush2.msra.mxu0 0.0
    %6064 = vmatprep.subr.mxu0 0.0
    %6065 = vmatpush2.msra.mxu0 0.0
    %6066 = vmatprep.subr.mxu0 0.0
    %6067 = vmatpush2.msra.mxu0 0.0
    %6068 = vmatprep.subr.mxu0 0.0
    %6069 = vmatpush2.msra.mxu0 0.0
    %6070 = vmatprep.subr.mxu0 0.0
    %6071 = vmatpush2.msra.mxu0 0.0
    %6072 = vmatprep.subr.mxu0 0.0
    %6073 = vmatpush2.msra.mxu0 0.0
    %6074 = vmatprep.subr.mxu0 0.0
    %6075 = vmatpush2.msra.mxu0 0.0
    %6076 = vmatprep.subr.mxu0 0.0
    %6077 = vmatpush2.msra.mxu0 0.0
    %6078 = vmatprep.subr.mxu0 0.0
    %6079 = vmatpush2.msra.mxu0 0.0
    %6080 = vmatprep.subr.mxu0 0.0
    %6081 = vmatpush2.msra.mxu0 0.0
    %6082 = vmatprep.subr.mxu0 0.0
    %6083 = vmatpush2.msra.mxu0 0.0
    %6084 = vmatprep.subr.mxu0 0.0
    %6085 = vmatpush2.msra.mxu0 0.0
    %6086 = vmatprep.subr.mxu0 0.0
    %6087 = vmatpush2.msra.mxu0 0.0
    %6088 = vmatprep.mubr.f32.mxu0 0.0
    %6089 = vmatmul.mubr.f32.gmra.mxu0 %v4657
    %v6090 = vpop.f32.mrf.mxu0
    %v6091 = vadd.f32 0.0, %v6090
    %v6092 = vpop.f32.mrf.mxu0
    %6093 = vmatprep.mubr.f32.mxu0 0.0
    %6094 = vmatmul.mubr.f32.gmra.mxu0 %v4660
    %v6095 = vpop.f32.mrf.mxu0
    %v6096 = vadd.f32 0.0, %v6095
    %v6097 = vpop.f32.mrf.mxu0
    %6098 = vmatprep.mubr.f32.mxu0 0.0
    %6099 = vmatmul.mubr.f32.gmra.mxu0 %v4663
    %v6100 = vpop.f32.mrf.mxu0
    %v6101 = vadd.f32 0.0, %v6100
    %v6102 = vpop.f32.mrf.mxu0
    %6103 = vmatprep.mubr.f32.mxu0 0.0
    %6104 = vmatmul.mubr.f32.gmra.mxu0 %v4666
    %v6105 = vpop.f32.mrf.mxu0
    %v6106 = vadd.f32 0.0, %v6105
    %v6107 = vpop.f32.mrf.mxu0
    %6108 = vmatprep.mubr.f32.mxu0 0.0
    %6109 = vmatmul.mubr.f32.gmra.mxu0 %v4669
    %v6110 = vpop.f32.mrf.mxu0
    %v6111 = vadd.f32 0.0, %v6110
    %v6112 = vpop.f32.mrf.mxu0
    %6113 = vmatprep.mubr.f32.mxu0 0.0
    %6114 = vmatmul.mubr.f32.gmra.mxu0 %v4672
    %v6115 = vpop.f32.mrf.mxu0
    %v6116 = vadd.f32 0.0, %v6115
    %v6117 = vpop.f32.mrf.mxu0
    %6118 = vmatprep.mubr.f32.mxu0 0.0
    %6119 = vmatmul.mubr.f32.gmra.mxu0 %v4675
    %v6120 = vpop.f32.mrf.mxu0
    %v6121 = vadd.f32 0.0, %v6120
    %v6122 = vpop.f32.mrf.mxu0
    %6123 = vmatprep.mubr.f32.mxu0 0.0
    %6124 = vmatmul.mubr.f32.gmra.mxu0 %v4678
    %v6125 = vpop.f32.mrf.mxu0
    %v6126 = vadd.f32 0.0, %v6125
    %v6127 = vpop.f32.mrf.mxu0
    %6128 = vmatprep.mubr.f32.mxu0 0.0
    %6129 = vmatmul.mubr.f32.gmra.mxu0 %v4681
    %v6130 = vpop.f32.mrf.mxu0
    %v6131 = vadd.f32 0.0, %v6130
    %v6132 = vpop.f32.mrf.mxu0
    %6133 = vmatprep.mubr.f32.mxu0 0.0
    %6134 = vmatmul.mubr.f32.gmra.mxu0 %v4684
    %v6135 = vpop.f32.mrf.mxu0
    %v6136 = vadd.f32 0.0, %v6135
    %v6137 = vpop.f32.mrf.mxu0
    %6138 = vmatprep.mubr.f32.mxu0 0.0
    %6139 = vmatmul.mubr.f32.gmra.mxu0 %v4687
    %v6140 = vpop.f32.mrf.mxu0
    %v6141 = vadd.f32 0.0, %v6140
    %v6142 = vpop.f32.mrf.mxu0
    %6143 = vmatprep.mubr.f32.mxu0 0.0
    %6144 = vmatmul.mubr.f32.gmra.mxu0 %v4690
    %v6145 = vpop.f32.mrf.mxu0
    %v6146 = vadd.f32 0.0, %v6145
    %v6147 = vpop.f32.mrf.mxu0
    %6148 = vmatprep.mubr.f32.mxu0 0.0
    %6149 = vmatmul.mubr.f32.gmra.mxu0 %v4693
    %v6150 = vpop.f32.mrf.mxu0
    %v6151 = vadd.f32 0.0, %v6150
    %v6152 = vpop.f32.mrf.mxu0
    %6153 = vmatprep.mubr.f32.mxu0 0.0
    %6154 = vmatmul.mubr.f32.gmra.mxu0 %v4696
    %v6155 = vpop.f32.mrf.mxu0
    %v6156 = vadd.f32 0.0, %v6155
    %v6157 = vpop.f32.mrf.mxu0
    %6158 = vmatprep.mubr.f32.mxu0 0.0
    %6159 = vmatmul.mubr.f32.gmra.mxu0 %v4699
    %v6160 = vpop.f32.mrf.mxu0
    %v6161 = vadd.f32 0.0, %v6160
    %v6162 = vpop.f32.mrf.mxu0
    %6163 = vmatprep.mubr.f32.mxu0 0.0
    %6164 = vmatmul.mubr.f32.gmra.mxu0 %v4702
    %v6165 = vpop.f32.mrf.mxu0
    %v6166 = vadd.f32 0.0, %v6165
    %v6167 = vpop.f32.mrf.mxu0
    %6168 = vdwg.mxu0
    %6169 = vmatprep.subr.mxu0 0.0
    %6170 = vmatpush1.msra.mxu0 0.0
    %6171 = vmatprep.subr.mxu0 0.0
    %6172 = vmatpush1.msra.mxu0 0.0
    %6173 = vmatprep.subr.mxu0 0.0
    %6174 = vmatpush1.msra.mxu0 0.0
    %6175 = vmatprep.subr.mxu0 0.0
    %6176 = vmatpush1.msra.mxu0 0.0
    %6177 = vmatprep.subr.mxu0 0.0
    %6178 = vmatpush1.msra.mxu0 0.0
    %6179 = vmatprep.subr.mxu0 0.0
    %6180 = vmatpush1.msra.mxu0 0.0
    %6181 = vmatprep.subr.mxu0 0.0
    %6182 = vmatpush1.msra.mxu0 0.0
    %6183 = vmatprep.subr.mxu0 0.0
    %6184 = vmatpush1.msra.mxu0 0.0
    %6185 = vmatprep.subr.mxu0 0.0
    %6186 = vmatpush1.msra.mxu0 %v180
    %6187 = vmatprep.subr.mxu0 0.0
    %6188 = vmatpush1.msra.mxu0 %v179
    %6189 = vmatprep.subr.mxu0 0.0
    %6190 = vmatpush1.msra.mxu0 %v178
    %6191 = vmatprep.subr.mxu0 0.0
    %6192 = vmatpush1.msra.mxu0 %v177
    %6193 = vmatprep.subr.mxu0 0.0
    %6194 = vmatpush1.msra.mxu0 %v176
    %6195 = vmatprep.subr.mxu0 0.0
    %6196 = vmatpush1.msra.mxu0 %v175
    %6197 = vmatprep.subr.mxu0 0.0
    %6198 = vmatpush1.msra.mxu0 %v174
    %6199 = vmatprep.subr.mxu0 0.0
    %6200 = vmatpush1.msra.mxu0 %v173
    %6201 = vmatprep.subr.mxu0 0.0
    %6202 = vmatpush2.msra.mxu0 0.0
    %6203 = vmatprep.subr.mxu0 0.0
    %6204 = vmatpush2.msra.mxu0 0.0
    %6205 = vmatprep.subr.mxu0 0.0
    %6206 = vmatpush2.msra.mxu0 0.0
    %6207 = vmatprep.subr.mxu0 0.0
    %6208 = vmatpush2.msra.mxu0 0.0
    %6209 = vmatprep.subr.mxu0 0.0
    %6210 = vmatpush2.msra.mxu0 0.0
    %6211 = vmatprep.subr.mxu0 0.0
    %6212 = vmatpush2.msra.mxu0 0.0
    %6213 = vmatprep.subr.mxu0 0.0
    %6214 = vmatpush2.msra.mxu0 0.0
    %6215 = vmatprep.subr.mxu0 0.0
    %6216 = vmatpush2.msra.mxu0 0.0
    %6217 = vmatprep.subr.mxu0 0.0
    %6218 = vmatpush2.msra.mxu0 0.0
    %6219 = vmatprep.subr.mxu0 0.0
    %6220 = vmatpush2.msra.mxu0 0.0
    %6221 = vmatprep.subr.mxu0 0.0
    %6222 = vmatpush2.msra.mxu0 0.0
    %6223 = vmatprep.subr.mxu0 0.0
    %6224 = vmatpush2.msra.mxu0 0.0
    %6225 = vmatprep.subr.mxu0 0.0
    %6226 = vmatpush2.msra.mxu0 0.0
    %6227 = vmatprep.subr.mxu0 0.0
    %6228 = vmatpush2.msra.mxu0 0.0
    %6229 = vmatprep.subr.mxu0 0.0
    %6230 = vmatpush2.msra.mxu0 0.0
    %6231 = vmatprep.subr.mxu0 0.0
    %6232 = vmatpush2.msra.mxu0 0.0
    %6233 = vmatprep.mubr.f32.mxu0 0.0
    %6234 = vmatmul.mubr.f32.gmra.mxu0 %v5720
    %v6235 = vpop.f32.mrf.mxu0
    %v6236 = vadd.f32 %v6091, %v6235
    %v6237 = vpop.f32.mrf.mxu0
    %6238 = vmatprep.mubr.f32.mxu0 0.0
    %6239 = vmatmul.mubr.f32.gmra.mxu0 %v5723
    %v6240 = vpop.f32.mrf.mxu0
    %v6241 = vadd.f32 %v6096, %v6240
    %v6242 = vpop.f32.mrf.mxu0
    %6243 = vmatprep.mubr.f32.mxu0 0.0
    %6244 = vmatmul.mubr.f32.gmra.mxu0 %v5726
    %v6245 = vpop.f32.mrf.mxu0
    %v6246 = vadd.f32 %v6101, %v6245
    %v6247 = vpop.f32.mrf.mxu0
    %6248 = vmatprep.mubr.f32.mxu0 0.0
    %6249 = vmatmul.mubr.f32.gmra.mxu0 %v5729
    %v6250 = vpop.f32.mrf.mxu0
    %v6251 = vadd.f32 %v6106, %v6250
    %v6252 = vpop.f32.mrf.mxu0
    %6253 = vmatprep.mubr.f32.mxu0 0.0
    %6254 = vmatmul.mubr.f32.gmra.mxu0 %v5732
    %v6255 = vpop.f32.mrf.mxu0
    %v6256 = vadd.f32 %v6111, %v6255
    %v6257 = vpop.f32.mrf.mxu0
    %6258 = vmatprep.mubr.f32.mxu0 0.0
    %6259 = vmatmul.mubr.f32.gmra.mxu0 %v5735
    %v6260 = vpop.f32.mrf.mxu0
    %v6261 = vadd.f32 %v6116, %v6260
    %v6262 = vpop.f32.mrf.mxu0
    %6263 = vmatprep.mubr.f32.mxu0 0.0
    %6264 = vmatmul.mubr.f32.gmra.mxu0 %v5738
    %v6265 = vpop.f32.mrf.mxu0
    %v6266 = vadd.f32 %v6121, %v6265
    %v6267 = vpop.f32.mrf.mxu0
    %6268 = vmatprep.mubr.f32.mxu0 0.0
    %6269 = vmatmul.mubr.f32.gmra.mxu0 %v5741
    %v6270 = vpop.f32.mrf.mxu0
    %v6271 = vadd.f32 %v6126, %v6270
    %v6272 = vpop.f32.mrf.mxu0
    %6273 = vmatprep.mubr.f32.mxu0 0.0
    %6274 = vmatmul.mubr.f32.gmra.mxu0 %v5744
    %v6275 = vpop.f32.mrf.mxu0
    %v6276 = vadd.f32 %v6131, %v6275
    %v6277 = vpop.f32.mrf.mxu0
    %6278 = vmatprep.mubr.f32.mxu0 0.0
    %6279 = vmatmul.mubr.f32.gmra.mxu0 %v5747
    %v6280 = vpop.f32.mrf.mxu0
    %v6281 = vadd.f32 %v6136, %v6280
    %v6282 = vpop.f32.mrf.mxu0
    %6283 = vmatprep.mubr.f32.mxu0 0.0
    %6284 = vmatmul.mubr.f32.gmra.mxu0 %v5750
    %v6285 = vpop.f32.mrf.mxu0
    %v6286 = vadd.f32 %v6141, %v6285
    %v6287 = vpop.f32.mrf.mxu0
    %6288 = vmatprep.mubr.f32.mxu0 0.0
    %6289 = vmatmul.mubr.f32.gmra.mxu0 %v5753
    %v6290 = vpop.f32.mrf.mxu0
    %v6291 = vadd.f32 %v6146, %v6290
    %v6292 = vpop.f32.mrf.mxu0
    %6293 = vmatprep.mubr.f32.mxu0 0.0
    %6294 = vmatmul.mubr.f32.gmra.mxu0 %v5756
    %v6295 = vpop.f32.mrf.mxu0
    %v6296 = vadd.f32 %v6151, %v6295
    %v6297 = vpop.f32.mrf.mxu0
    %6298 = vmatprep.mubr.f32.mxu0 0.0
    %6299 = vmatmul.mubr.f32.gmra.mxu0 %v5759
    %v6300 = vpop.f32.mrf.mxu0
    %v6301 = vadd.f32 %v6156, %v6300
    %v6302 = vpop.f32.mrf.mxu0
    %6303 = vmatprep.mubr.f32.mxu0 0.0
    %6304 = vmatmul.mubr.f32.gmra.mxu0 %v5762
    %v6305 = vpop.f32.mrf.mxu0
    %v6306 = vadd.f32 %v6161, %v6305
    %v6307 = vpop.f32.mrf.mxu0
    %6308 = vmatprep.mubr.f32.mxu0 0.0
    %6309 = vmatmul.mubr.f32.gmra.mxu0 %v5765
    %v6310 = vpop.f32.mrf.mxu0
    %v6311 = vadd.f32 %v6166, %v6310
    %v6312 = vpop.f32.mrf.mxu0
    %6313 = vdwg.mxu0
    %v6314 = vadd.f32 %v6236, %v1869
    %v6315 = vadd.f32 %v6241, %v1869
    %v6316 = vadd.f32 %v6246, %v1869
    %v6317 = vadd.f32 %v6251, %v1869
    %v6318 = vadd.f32 %v6256, %v1869
    %v6319 = vadd.f32 %v6261, %v1869
    %v6320 = vadd.f32 %v6266, %v1869
    %v6321 = vadd.f32 %v6271, %v1869
    %v6322 = vadd.f32 %v6276, %v1869
    %v6323 = vadd.f32 %v6281, %v1869
    %v6324 = vadd.f32 %v6286, %v1869
    %v6325 = vadd.f32 %v6291, %v1869
    %v6326 = vadd.f32 %v6296, %v1869
    %v6327 = vadd.f32 %v6301, %v1869
    %v6328 = vadd.f32 %v6306, %v1869
    %v6329 = vadd.f32 %v6311, %v1869
    %v6330 = vxor.u32 %v6314, 2147483648
    %v6331 = vxor.u32 %v6315, 2147483648
    %v6332 = vxor.u32 %v6316, 2147483648
    %v6333 = vxor.u32 %v6317, 2147483648
    %v6334 = vxor.u32 %v6318, 2147483648
    %v6335 = vxor.u32 %v6319, 2147483648
    %v6336 = vxor.u32 %v6320, 2147483648
    %v6337 = vxor.u32 %v6321, 2147483648
    %v6338 = vxor.u32 %v6322, 2147483648
    %v6339 = vxor.u32 %v6323, 2147483648
    %v6340 = vxor.u32 %v6324, 2147483648
    %v6341 = vxor.u32 %v6325, 2147483648
    %v6342 = vxor.u32 %v6326, 2147483648
    %v6343 = vxor.u32 %v6327, 2147483648
    %v6344 = vxor.u32 %v6328, 2147483648
    %v6345 = vxor.u32 %v6329, 2147483648
    %v6346 = vmul.f32 %v6330, 1.442695
    %v6347 = vpow.pop %v6346
    %v6348 = vmul.f32 %v6331, 1.442695
    %v6349 = vpow.pop %v6348
    %v6350 = vmul.f32 %v6332, 1.442695
    %v6351 = vpow.pop %v6350
    %v6352 = vmul.f32 %v6333, 1.442695
    %v6353 = vpow.pop %v6352
    %v6354 = vmul.f32 %v6334, 1.442695
    %v6355 = vpow.pop %v6354
    %v6356 = vmul.f32 %v6335, 1.442695
    %v6357 = vpow.pop %v6356
    %v6358 = vmul.f32 %v6336, 1.442695
    %v6359 = vpow.pop %v6358
    %v6360 = vmul.f32 %v6337, 1.442695
    %v6361 = vpow.pop %v6360
    %v6362 = vmul.f32 %v6338, 1.442695
    %v6363 = vpow.pop %v6362
    %v6364 = vmul.f32 %v6339, 1.442695
    %v6365 = vpow.pop %v6364
    %v6366 = vmul.f32 %v6340, 1.442695
    %v6367 = vpow.pop %v6366
    %v6368 = vmul.f32 %v6341, 1.442695
    %v6369 = vpow.pop %v6368
    %v6370 = vmul.f32 %v6342, 1.442695
    %v6371 = vpow.pop %v6370
    %v6372 = vmul.f32 %v6343, 1.442695
    %v6373 = vpow.pop %v6372
    %v6374 = vmul.f32 %v6344, 1.442695
    %v6375 = vpow.pop %v6374
    %v6376 = vmul.f32 %v6345, 1.442695
    %v6377 = vpow.pop %v6376
    %v6378 = vadd.f32 %v6347, 1.0
    %v6379 = vadd.f32 %v6349, 1.0
    %v6380 = vadd.f32 %v6351, 1.0
    %v6381 = vadd.f32 %v6353, 1.0
    %v6382 = vadd.f32 %v6355, 1.0
    %v6383 = vadd.f32 %v6357, 1.0
    %v6384 = vadd.f32 %v6359, 1.0
    %v6385 = vadd.f32 %v6361, 1.0
    %v6386 = vadd.f32 %v6363, 1.0
    %v6387 = vadd.f32 %v6365, 1.0
    %v6388 = vadd.f32 %v6367, 1.0
    %v6389 = vadd.f32 %v6369, 1.0
    %v6390 = vadd.f32 %v6371, 1.0
    %v6391 = vadd.f32 %v6373, 1.0
    %v6392 = vadd.f32 %v6375, 1.0
    %v6393 = vadd.f32 %v6377, 1.0
    %v6394 = vrcp.pop %v6378
    %v6395 = vmul.f32 1.0, %v6394
    %v6396 = vrcp.pop %v6379
    %v6397 = vmul.f32 1.0, %v6396
    %v6398 = vrcp.pop %v6380
    %v6399 = vmul.f32 1.0, %v6398
    %v6400 = vrcp.pop %v6381
    %v6401 = vmul.f32 1.0, %v6400
    %v6402 = vrcp.pop %v6382
    %v6403 = vmul.f32 1.0, %v6402
    %v6404 = vrcp.pop %v6383
    %v6405 = vmul.f32 1.0, %v6404
    %v6406 = vrcp.pop %v6384
    %v6407 = vmul.f32 1.0, %v6406
    %v6408 = vrcp.pop %v6385
    %v6409 = vmul.f32 1.0, %v6408
    %v6410 = vrcp.pop %v6386
    %v6411 = vmul.f32 1.0, %v6410
    %v6412 = vrcp.pop %v6387
    %v6413 = vmul.f32 1.0, %v6412
    %v6414 = vrcp.pop %v6388
    %v6415 = vmul.f32 1.0, %v6414
    %v6416 = vrcp.pop %v6389
    %v6417 = vmul.f32 1.0, %v6416
    %v6418 = vrcp.pop %v6390
    %v6419 = vmul.f32 1.0, %v6418
    %v6420 = vrcp.pop %v6391
    %v6421 = vmul.f32 1.0, %v6420
    %v6422 = vrcp.pop %v6392
    %v6423 = vmul.f32 1.0, %v6422
    %v6424 = vrcp.pop %v6393
    %v6425 = vmul.f32 1.0, %v6424
    %v6426 = vmul.f32 %v6395, %v4640
    %v6427 = vmul.f32 %v6397, %v4641
    %v6428 = vmul.f32 %v6399, %v4642
    %v6429 = vmul.f32 %v6401, %v4643
    %v6430 = vmul.f32 %v6403, %v4644
    %v6431 = vmul.f32 %v6405, %v4645
    %v6432 = vmul.f32 %v6407, %v4646
    %v6433 = vmul.f32 %v6409, %v4647
    %v6434 = vmul.f32 %v6411, %v4648
    %v6435 = vmul.f32 %v6413, %v4649
    %v6436 = vmul.f32 %v6415, %v4650
    %v6437 = vmul.f32 %v6417, %v4651
    %v6438 = vmul.f32 %v6419, %v4652
    %v6439 = vmul.f32 %v6421, %v4653
    %v6440 = vmul.f32 %v6423, %v4654
    %v6441 = vmul.f32 %v6425, %v4655
    %v6443 = vsel %vm202, %v6426, 0
    %v6446 = vsel %vm202, %v6427, 0
    %v6449 = vsel %vm202, %v6428, 0
    %v6452 = vsel %vm202, %v6429, 0
    %v6455 = vsel %vm202, %v6430, 0
    %v6458 = vsel %vm202, %v6431, 0
    %v6461 = vsel %vm202, %v6432, 0
    %v6464 = vsel %vm202, %v6433, 0
    %v6467 = vsel %vm202, %v6434, 0
    %v6470 = vsel %vm202, %v6435, 0
    %v6473 = vsel %vm202, %v6436, 0
    %v6476 = vsel %vm202, %v6437, 0
    %v6479 = vsel %vm202, %v6438, 0
    %v6482 = vsel %vm202, %v6439, 0
    %v6485 = vsel %vm202, %v6440, 0
    %v6488 = vsel %vm202, %v6441, 0
    %6490 = vmatprep.subr.mxu0 0.0
    %6491 = vmatpush1.msra.mxu0 0.0
    %6492 = vmatprep.subr.mxu0 0.0
    %6493 = vmatpush1.msra.mxu0 0.0
    %6494 = vmatprep.subr.mxu0 0.0
    %6495 = vmatpush1.msra.mxu0 0.0
    %6496 = vmatprep.subr.mxu0 0.0
    %6497 = vmatpush1.msra.mxu0 0.0
    %6498 = vmatprep.subr.mxu0 0.0
    %6499 = vmatpush1.msra.mxu0 0.0
    %6500 = vmatprep.subr.mxu0 0.0
    %6501 = vmatpush1.msra.mxu0 0.0
    %6502 = vmatprep.subr.mxu0 0.0
    %6503 = vmatpush1.msra.mxu0 0.0
    %6504 = vmatprep.subr.mxu0 0.0
    %6505 = vmatpush1.msra.mxu0 0.0
    %6506 = vmatprep.subr.mxu0 0.0
    %6507 = vmatpush1.msra.mxu0 0.0
    %6508 = vmatprep.subr.mxu0 0.0
    %6509 = vmatpush1.msra.mxu0 0.0
    %6510 = vmatprep.subr.mxu0 0.0
    %6511 = vmatpush1.msra.mxu0 0.0
    %6512 = vmatprep.subr.mxu0 0.0
    %6513 = vmatpush1.msra.mxu0 0.0
    %6514 = vmatprep.subr.mxu0 0.0
    %6515 = vmatpush1.msra.mxu0 %v200
    %6516 = vmatprep.subr.mxu0 0.0
    %6517 = vmatpush1.msra.mxu0 %v199
    %6518 = vmatprep.subr.mxu0 0.0
    %6519 = vmatpush1.msra.mxu0 %v198
    %6520 = vmatprep.subr.mxu0 0.0
    %6521 = vmatpush1.msra.mxu0 %v197
    %6522 = vmatprep.subr.mxu0 0.0
    %6523 = vmatpush2.msra.mxu0 0.0
    %6524 = vmatprep.subr.mxu0 0.0
    %6525 = vmatpush2.msra.mxu0 0.0
    %6526 = vmatprep.subr.mxu0 0.0
    %6527 = vmatpush2.msra.mxu0 0.0
    %6528 = vmatprep.subr.mxu0 0.0
    %6529 = vmatpush2.msra.mxu0 0.0
    %6530 = vmatprep.subr.mxu0 0.0
    %6531 = vmatpush2.msra.mxu0 0.0
    %6532 = vmatprep.subr.mxu0 0.0
    %6533 = vmatpush2.msra.mxu0 0.0
    %6534 = vmatprep.subr.mxu0 0.0
    %6535 = vmatpush2.msra.mxu0 0.0
    %6536 = vmatprep.subr.mxu0 0.0
    %6537 = vmatpush2.msra.mxu0 0.0
    %6538 = vmatprep.subr.mxu0 0.0
    %6539 = vmatpush2.msra.mxu0 0.0
    %6540 = vmatprep.subr.mxu0 0.0
    %6541 = vmatpush2.msra.mxu0 0.0
    %6542 = vmatprep.subr.mxu0 0.0
    %6543 = vmatpush2.msra.mxu0 0.0
    %6544 = vmatprep.subr.mxu0 0.0
    %6545 = vmatpush2.msra.mxu0 0.0
    %6546 = vmatprep.subr.mxu0 0.0
    %6547 = vmatpush2.msra.mxu0 0.0
    %6548 = vmatprep.subr.mxu0 0.0
    %6549 = vmatpush2.msra.mxu0 0.0
    %6550 = vmatprep.subr.mxu0 0.0
    %6551 = vmatpush2.msra.mxu0 0.0
    %6552 = vmatprep.subr.mxu0 0.0
    %6553 = vmatpush2.msra.mxu0 0.0
    %6554 = vmatprep.mubr.f32.mxu0 0.0
    %6555 = vmatmul.mubr.f32.gmra.mxu0 %v6443
    %v6556 = vpop.f32.mrf.mxu0
    %v6557 = vadd.f32 0.0, %v6556
    %v6558 = vpop.f32.mrf.mxu0
    %6559 = vmatprep.mubr.f32.mxu0 0.0
    %6560 = vmatmul.mubr.f32.gmra.mxu0 %v6446
    %v6561 = vpop.f32.mrf.mxu0
    %v6562 = vadd.f32 0.0, %v6561
    %v6563 = vpop.f32.mrf.mxu0
    %6564 = vmatprep.mubr.f32.mxu0 0.0
    %6565 = vmatmul.mubr.f32.gmra.mxu0 %v6449
    %v6566 = vpop.f32.mrf.mxu0
    %v6567 = vadd.f32 0.0, %v6566
    %v6568 = vpop.f32.mrf.mxu0
    %6569 = vmatprep.mubr.f32.mxu0 0.0
    %6570 = vmatmul.mubr.f32.gmra.mxu0 %v6452
    %v6571 = vpop.f32.mrf.mxu0
    %v6572 = vadd.f32 0.0, %v6571
    %v6573 = vpop.f32.mrf.mxu0
    %6574 = vmatprep.mubr.f32.mxu0 0.0
    %6575 = vmatmul.mubr.f32.gmra.mxu0 %v6455
    %v6576 = vpop.f32.mrf.mxu0
    %v6577 = vadd.f32 0.0, %v6576
    %v6578 = vpop.f32.mrf.mxu0
    %6579 = vmatprep.mubr.f32.mxu0 0.0
    %6580 = vmatmul.mubr.f32.gmra.mxu0 %v6458
    %v6581 = vpop.f32.mrf.mxu0
    %v6582 = vadd.f32 0.0, %v6581
    %v6583 = vpop.f32.mrf.mxu0
    %6584 = vmatprep.mubr.f32.mxu0 0.0
    %6585 = vmatmul.mubr.f32.gmra.mxu0 %v6461
    %v6586 = vpop.f32.mrf.mxu0
    %v6587 = vadd.f32 0.0, %v6586
    %v6588 = vpop.f32.mrf.mxu0
    %6589 = vmatprep.mubr.f32.mxu0 0.0
    %6590 = vmatmul.mubr.f32.gmra.mxu0 %v6464
    %v6591 = vpop.f32.mrf.mxu0
    %v6592 = vadd.f32 0.0, %v6591
    %v6593 = vpop.f32.mrf.mxu0
    %6594 = vmatprep.mubr.f32.mxu0 0.0
    %6595 = vmatmul.mubr.f32.gmra.mxu0 %v6467
    %v6596 = vpop.f32.mrf.mxu0
    %v6597 = vadd.f32 0.0, %v6596
    %v6598 = vpop.f32.mrf.mxu0
    %6599 = vmatprep.mubr.f32.mxu0 0.0
    %6600 = vmatmul.mubr.f32.gmra.mxu0 %v6470
    %v6601 = vpop.f32.mrf.mxu0
    %v6602 = vadd.f32 0.0, %v6601
    %v6603 = vpop.f32.mrf.mxu0
    %6604 = vmatprep.mubr.f32.mxu0 0.0
    %6605 = vmatmul.mubr.f32.gmra.mxu0 %v6473
    %v6606 = vpop.f32.mrf.mxu0
    %v6607 = vadd.f32 0.0, %v6606
    %v6608 = vpop.f32.mrf.mxu0
    %6609 = vmatprep.mubr.f32.mxu0 0.0
    %6610 = vmatmul.mubr.f32.gmra.mxu0 %v6476
    %v6611 = vpop.f32.mrf.mxu0
    %v6612 = vadd.f32 0.0, %v6611
    %v6613 = vpop.f32.mrf.mxu0
    %6614 = vmatprep.mubr.f32.mxu0 0.0
    %6615 = vmatmul.mubr.f32.gmra.mxu0 %v6479
    %v6616 = vpop.f32.mrf.mxu0
    %v6617 = vadd.f32 0.0, %v6616
    %v6618 = vpop.f32.mrf.mxu0
    %6619 = vmatprep.mubr.f32.mxu0 0.0
    %6620 = vmatmul.mubr.f32.gmra.mxu0 %v6482
    %v6621 = vpop.f32.mrf.mxu0
    %v6622 = vadd.f32 0.0, %v6621
    %v6623 = vpop.f32.mrf.mxu0
    %6624 = vmatprep.mubr.f32.mxu0 0.0
    %6625 = vmatmul.mubr.f32.gmra.mxu0 %v6485
    %v6626 = vpop.f32.mrf.mxu0
    %v6627 = vadd.f32 0.0, %v6626
    %v6628 = vpop.f32.mrf.mxu0
    %6629 = vmatprep.mubr.f32.mxu0 0.0
    %6630 = vmatmul.mubr.f32.gmra.mxu0 %v6488
    %v6631 = vpop.f32.mrf.mxu0
    %v6632 = vadd.f32 0.0, %v6631
    %v6633 = vpop.f32.mrf.mxu0
    %6634 = vdwg.mxu0
    %6635 = vmatprep.subr.mxu0 0.0
    %6636 = vmatpush1.msra.mxu0 0.0
    %6637 = vmatprep.subr.mxu0 0.0
    %6638 = vmatpush1.msra.mxu0 0.0
    %6639 = vmatprep.subr.mxu0 0.0
    %6640 = vmatpush1.msra.mxu0 0.0
    %6641 = vmatprep.subr.mxu0 0.0
    %6642 = vmatpush1.msra.mxu0 0.0
    %6643 = vmatprep.subr.mxu0 0.0
    %6644 = vmatpush1.msra.mxu0 0.0
    %6645 = vmatprep.subr.mxu0 0.0
    %6646 = vmatpush1.msra.mxu0 0.0
    %6647 = vmatprep.subr.mxu0 0.0
    %6648 = vmatpush1.msra.mxu0 0.0
    %6649 = vmatprep.subr.mxu0 0.0
    %6650 = vmatpush1.msra.mxu0 0.0
    %6651 = vmatprep.subr.mxu0 0.0
    %6652 = vmatpush1.msra.mxu0 %v188
    %6653 = vmatprep.subr.mxu0 0.0
    %6654 = vmatpush1.msra.mxu0 %v187
    %6655 = vmatprep.subr.mxu0 0.0
    %6656 = vmatpush1.msra.mxu0 %v186
    %6657 = vmatprep.subr.mxu0 0.0
    %6658 = vmatpush1.msra.mxu0 %v185
    %6659 = vmatprep.subr.mxu0 0.0
    %6660 = vmatpush1.msra.mxu0 %v184
    %6661 = vmatprep.subr.mxu0 0.0
    %6662 = vmatpush1.msra.mxu0 %v183
    %6663 = vmatprep.subr.mxu0 0.0
    %6664 = vmatpush1.msra.mxu0 %v182
    %6665 = vmatprep.subr.mxu0 0.0
    %6666 = vmatpush1.msra.mxu0 %v181
    %6667 = vmatprep.subr.mxu0 0.0
    %6668 = vmatpush2.msra.mxu0 0.0
    %6669 = vmatprep.subr.mxu0 0.0
    %6670 = vmatpush2.msra.mxu0 0.0
    %6671 = vmatprep.subr.mxu0 0.0
    %6672 = vmatpush2.msra.mxu0 0.0
    %6673 = vmatprep.subr.mxu0 0.0
    %6674 = vmatpush2.msra.mxu0 0.0
    %6675 = vmatprep.subr.mxu0 0.0
    %6676 = vmatpush2.msra.mxu0 0.0
    %6677 = vmatprep.subr.mxu0 0.0
    %6678 = vmatpush2.msra.mxu0 0.0
    %6679 = vmatprep.subr.mxu0 0.0
    %6680 = vmatpush2.msra.mxu0 0.0
    %6681 = vmatprep.subr.mxu0 0.0
    %6682 = vmatpush2.msra.mxu0 0.0
    %6683 = vmatprep.subr.mxu0 0.0
    %6684 = vmatpush2.msra.mxu0 0.0
    %6685 = vmatprep.subr.mxu0 0.0
    %6686 = vmatpush2.msra.mxu0 0.0
    %6687 = vmatprep.subr.mxu0 0.0
    %6688 = vmatpush2.msra.mxu0 0.0
    %6689 = vmatprep.subr.mxu0 0.0
    %6690 = vmatpush2.msra.mxu0 0.0
    %6691 = vmatprep.subr.mxu0 0.0
    %6692 = vmatpush2.msra.mxu0 0.0
    %6693 = vmatprep.subr.mxu0 0.0
    %6694 = vmatpush2.msra.mxu0 0.0
    %6695 = vmatprep.subr.mxu0 0.0
    %6696 = vmatpush2.msra.mxu0 0.0
    %6697 = vmatprep.subr.mxu0 0.0
    %6698 = vmatpush2.msra.mxu0 0.0
    %6699 = vmatprep.mubr.f32.mxu0 0.0
    %6700 = vmatmul.mubr.f32.gmra.mxu0 %v5720
    %v6701 = vpop.f32.mrf.mxu0
    %v6702 = vadd.f32 %v6557, %v6701
    %v6703 = vpop.f32.mrf.mxu0
    %6704 = vmatprep.mubr.f32.mxu0 0.0
    %6705 = vmatmul.mubr.f32.gmra.mxu0 %v5723
    %v6706 = vpop.f32.mrf.mxu0
    %v6707 = vadd.f32 %v6562, %v6706
    %v6708 = vpop.f32.mrf.mxu0
    %6709 = vmatprep.mubr.f32.mxu0 0.0
    %6710 = vmatmul.mubr.f32.gmra.mxu0 %v5726
    %v6711 = vpop.f32.mrf.mxu0
    %v6712 = vadd.f32 %v6567, %v6711
    %v6713 = vpop.f32.mrf.mxu0
    %6714 = vmatprep.mubr.f32.mxu0 0.0
    %6715 = vmatmul.mubr.f32.gmra.mxu0 %v5729
    %v6716 = vpop.f32.mrf.mxu0
    %v6717 = vadd.f32 %v6572, %v6716
    %v6718 = vpop.f32.mrf.mxu0
    %6719 = vmatprep.mubr.f32.mxu0 0.0
    %6720 = vmatmul.mubr.f32.gmra.mxu0 %v5732
    %v6721 = vpop.f32.mrf.mxu0
    %v6722 = vadd.f32 %v6577, %v6721
    %v6723 = vpop.f32.mrf.mxu0
    %6724 = vmatprep.mubr.f32.mxu0 0.0
    %6725 = vmatmul.mubr.f32.gmra.mxu0 %v5735
    %v6726 = vpop.f32.mrf.mxu0
    %v6727 = vadd.f32 %v6582, %v6726
    %v6728 = vpop.f32.mrf.mxu0
    %6729 = vmatprep.mubr.f32.mxu0 0.0
    %6730 = vmatmul.mubr.f32.gmra.mxu0 %v5738
    %v6731 = vpop.f32.mrf.mxu0
    %v6732 = vadd.f32 %v6587, %v6731
    %v6733 = vpop.f32.mrf.mxu0
    %6734 = vmatprep.mubr.f32.mxu0 0.0
    %6735 = vmatmul.mubr.f32.gmra.mxu0 %v5741
    %v6736 = vpop.f32.mrf.mxu0
    %v6737 = vadd.f32 %v6592, %v6736
    %v6738 = vpop.f32.mrf.mxu0
    %6739 = vmatprep.mubr.f32.mxu0 0.0
    %6740 = vmatmul.mubr.f32.gmra.mxu0 %v5744
    %v6741 = vpop.f32.mrf.mxu0
    %v6742 = vadd.f32 %v6597, %v6741
    %v6743 = vpop.f32.mrf.mxu0
    %6744 = vmatprep.mubr.f32.mxu0 0.0
    %6745 = vmatmul.mubr.f32.gmra.mxu0 %v5747
    %v6746 = vpop.f32.mrf.mxu0
    %v6747 = vadd.f32 %v6602, %v6746
    %v6748 = vpop.f32.mrf.mxu0
    %6749 = vmatprep.mubr.f32.mxu0 0.0
    %6750 = vmatmul.mubr.f32.gmra.mxu0 %v5750
    %v6751 = vpop.f32.mrf.mxu0
    %v6752 = vadd.f32 %v6607, %v6751
    %v6753 = vpop.f32.mrf.mxu0
    %6754 = vmatprep.mubr.f32.mxu0 0.0
    %6755 = vmatmul.mubr.f32.gmra.mxu0 %v5753
    %v6756 = vpop.f32.mrf.mxu0
    %v6757 = vadd.f32 %v6612, %v6756
    %v6758 = vpop.f32.mrf.mxu0
    %6759 = vmatprep.mubr.f32.mxu0 0.0
    %6760 = vmatmul.mubr.f32.gmra.mxu0 %v5756
    %v6761 = vpop.f32.mrf.mxu0
    %v6762 = vadd.f32 %v6617, %v6761
    %v6763 = vpop.f32.mrf.mxu0
    %6764 = vmatprep.mubr.f32.mxu0 0.0
    %6765 = vmatmul.mubr.f32.gmra.mxu0 %v5759
    %v6766 = vpop.f32.mrf.mxu0
    %v6767 = vadd.f32 %v6622, %v6766
    %v6768 = vpop.f32.mrf.mxu0
    %6769 = vmatprep.mubr.f32.mxu0 0.0
    %6770 = vmatmul.mubr.f32.gmra.mxu0 %v5762
    %v6771 = vpop.f32.mrf.mxu0
    %v6772 = vadd.f32 %v6627, %v6771
    %v6773 = vpop.f32.mrf.mxu0
    %6774 = vmatprep.mubr.f32.mxu0 0.0
    %6775 = vmatmul.mubr.f32.gmra.mxu0 %v5765
    %v6776 = vpop.f32.mrf.mxu0
    %v6777 = vadd.f32 %v6632, %v6776
    %v6778 = vpop.f32.mrf.mxu0
    %6779 = vdwg.mxu0
    %v6780 = vadd.f32 %v6702, %v2339
    %v6781 = vadd.f32 %v6707, %v2339
    %v6782 = vadd.f32 %v6712, %v2339
    %v6783 = vadd.f32 %v6717, %v2339
    %v6784 = vadd.f32 %v6722, %v2339
    %v6785 = vadd.f32 %v6727, %v2339
    %v6786 = vadd.f32 %v6732, %v2339
    %v6787 = vadd.f32 %v6737, %v2339
    %v6788 = vadd.f32 %v6742, %v2339
    %v6789 = vadd.f32 %v6747, %v2339
    %v6790 = vadd.f32 %v6752, %v2339
    %v6791 = vadd.f32 %v6757, %v2339
    %v6792 = vadd.f32 %v6762, %v2339
    %v6793 = vadd.f32 %v6767, %v2339
    %v6794 = vadd.f32 %v6772, %v2339
    %v6795 = vadd.f32 %v6777, %v2339
    %v6796 = vtanh.pop %v6780
    %v6797 = vtanh.pop %v6781
    %v6798 = vtanh.pop %v6782
    %v6799 = vtanh.pop %v6783
    %v6800 = vtanh.pop %v6784
    %v6801 = vtanh.pop %v6785
    %v6802 = vtanh.pop %v6786
    %v6803 = vtanh.pop %v6787
    %v6804 = vtanh.pop %v6788
    %v6805 = vtanh.pop %v6789
    %v6806 = vtanh.pop %v6790
    %v6807 = vtanh.pop %v6791
    %v6808 = vtanh.pop %v6792
    %v6809 = vtanh.pop %v6793
    %v6810 = vtanh.pop %v6794
    %v6811 = vtanh.pop %v6795
    %v6812 = vsub.f32 1.0, %v5993
    %v6813 = vsub.f32 1.0, %v5995
    %v6814 = vsub.f32 1.0, %v5997
    %v6815 = vsub.f32 1.0, %v5999
    %v6816 = vsub.f32 1.0, %v6001
    %v6817 = vsub.f32 1.0, %v6003
    %v6818 = vsub.f32 1.0, %v6005
    %v6819 = vsub.f32 1.0, %v6007
    %v6820 = vsub.f32 1.0, %v6009
    %v6821 = vsub.f32 1.0, %v6011
    %v6822 = vsub.f32 1.0, %v6013
    %v6823 = vsub.f32 1.0, %v6015
    %v6824 = vsub.f32 1.0, %v6017
    %v6825 = vsub.f32 1.0, %v6019
    %v6826 = vsub.f32 1.0, %v6021
    %v6827 = vsub.f32 1.0, %v6023
    %v6828 = vmul.f32 %v6812, %v4640
    %v6829 = vmul.f32 %v6813, %v4641
    %v6830 = vmul.f32 %v6814, %v4642
    %v6831 = vmul.f32 %v6815, %v4643
    %v6832 = vmul.f32 %v6816, %v4644
    %v6833 = vmul.f32 %v6817, %v4645
    %v6834 = vmul.f32 %v6818, %v4646
    %v6835 = vmul.f32 %v6819, %v4647
    %v6836 = vmul.f32 %v6820, %v4648
    %v6837 = vmul.f32 %v6821, %v4649
    %v6838 = vmul.f32 %v6822, %v4650
    %v6839 = vmul.f32 %v6823, %v4651
    %v6840 = vmul.f32 %v6824, %v4652
    %v6841 = vmul.f32 %v6825, %v4653
    %v6842 = vmul.f32 %v6826, %v4654
    %v6843 = vmul.f32 %v6827, %v4655
    %v6844 = vmul.f32 %v5993, %v6796
    %v6845 = vmul.f32 %v5995, %v6797
    %v6846 = vmul.f32 %v5997, %v6798
    %v6847 = vmul.f32 %v5999, %v6799
    %v6848 = vmul.f32 %v6001, %v6800
    %v6849 = vmul.f32 %v6003, %v6801
    %v6850 = vmul.f32 %v6005, %v6802
    %v6851 = vmul.f32 %v6007, %v6803
    %v6852 = vmul.f32 %v6009, %v6804
    %v6853 = vmul.f32 %v6011, %v6805
    %v6854 = vmul.f32 %v6013, %v6806
    %v6855 = vmul.f32 %v6015, %v6807
    %v6856 = vmul.f32 %v6017, %v6808
    %v6857 = vmul.f32 %v6019, %v6809
    %v6858 = vmul.f32 %v6021, %v6810
    %v6859 = vmul.f32 %v6023, %v6811
    %v6860 = vadd.f32 %v6828, %v6844
    %v6861 = vadd.f32 %v6829, %v6845
    %v6862 = vadd.f32 %v6830, %v6846
    %v6863 = vadd.f32 %v6831, %v6847
    %v6864 = vadd.f32 %v6832, %v6848
    %v6865 = vadd.f32 %v6833, %v6849
    %v6866 = vadd.f32 %v6834, %v6850
    %v6867 = vadd.f32 %v6835, %v6851
    %v6868 = vadd.f32 %v6836, %v6852
    %v6869 = vadd.f32 %v6837, %v6853
    %v6870 = vadd.f32 %v6838, %v6854
    %v6871 = vadd.f32 %v6839, %v6855
    %v6872 = vadd.f32 %v6840, %v6856
    %v6873 = vadd.f32 %v6841, %v6857
    %v6874 = vadd.f32 %v6842, %v6858
    %v6875 = vadd.f32 %v6843, %v6859
    %v6876 = vld [vmem:[%s1] sm:$0xff]
    %v6877 = vld [vmem:[%s1 + $0x8] sm:$0xff]
    %v6878 = vld [vmem:[%s1 + $0x10] sm:$0xff]
    %v6879 = vld [vmem:[%s1 + $0x18] sm:$0xff]
    %v6880 = vld [vmem:[%s1 + $0x20] sm:$0xff]
    %v6881 = vld [vmem:[%s1 + $0x28] sm:$0xff]
    %v6882 = vld [vmem:[%s1 + $0x30] sm:$0xff]
    %v6883 = vld [vmem:[%s1 + $0x38] sm:$0xff]
    %v6884 = vld [vmem:[%s1 + $0x40] sm:$0xff]
    %v6885 = vld [vmem:[%s1 + $0x48] sm:$0xff]
    %v6886 = vld [vmem:[%s1 + $0x50] sm:$0xff]
    %v6887 = vld [vmem:[%s1 + $0x58] sm:$0xff]
    %v6888 = vld [vmem:[%s1 + $0x60] sm:$0xff]
    %v6889 = vld [vmem:[%s1 + $0x68] sm:$0xff]
    %v6890 = vld [vmem:[%s1 + $0x70] sm:$0xff]
    %v6891 = vld [vmem:[%s1 + $0x78] sm:$0xff]
    %v6892 = vld [vmem:[%s8] sm:$0xff]
    %v6893 = vld [vmem:[%s8 + $0x8] sm:$0xff]
    %v6894 = vld [vmem:[%s8 + $0x10] sm:$0xff]
    %v6895 = vld [vmem:[%s8 + $0x18] sm:$0xff]
    %v6896 = vld [vmem:[%s9] sm:$0xff]
    %vm6897 = vcmask 64512
    %v6899 = vsel %vm6897, %v6876, 0
    %v6902 = vsel %vm6897, %v6877, 0
    %v6905 = vsel %vm6897, %v6878, 0
    %v6908 = vsel %vm6897, %v6879, 0
    %v6911 = vsel %vm6897, %v6880, 0
    %v6914 = vsel %vm6897, %v6881, 0
    %v6917 = vsel %vm6897, %v6882, 0
    %v6920 = vsel %vm6897, %v6883, 0
    %v6923 = vsel %vm6897, %v6884, 0
    %v6926 = vsel %vm6897, %v6885, 0
    %v6929 = vsel %vm6897, %v6886, 0
    %v6932 = vsel %vm6897, %v6887, 0
    %v6935 = vsel %vm6897, %v6888, 0
    %v6938 = vsel %vm6897, %v6889, 0
    %v6941 = vsel %vm6897, %v6890, 0
    %v6944 = vsel %vm6897, %v6891, 0
    %6946 = vmatprep.subr.mxu0 0.0
    %6947 = vmatpush1.msra.mxu0 0.0
    %6948 = vmatprep.subr.mxu0 0.0
    %6949 = vmatpush1.msra.mxu0 0.0
    %6950 = vmatprep.subr.mxu0 0.0
    %6951 = vmatpush1.msra.mxu0 0.0
    %6952 = vmatprep.subr.mxu0 0.0
    %6953 = vmatpush1.msra.mxu0 0.0
    %6954 = vmatprep.subr.mxu0 0.0
    %6955 = vmatpush1.msra.mxu0 0.0
    %6956 = vmatprep.subr.mxu0 0.0
    %6957 = vmatpush1.msra.mxu0 0.0
    %6958 = vmatprep.subr.mxu0 0.0
    %6959 = vmatpush1.msra.mxu0 0.0
    %6960 = vmatprep.subr.mxu0 0.0
    %6961 = vmatpush1.msra.mxu0 0.0
    %6962 = vmatprep.subr.mxu0 0.0
    %6963 = vmatpush1.msra.mxu0 0.0
    %6964 = vmatprep.subr.mxu0 0.0
    %6965 = vmatpush1.msra.mxu0 0.0
    %6966 = vmatprep.subr.mxu0 0.0
    %6967 = vmatpush1.msra.mxu0 0.0
    %6968 = vmatprep.subr.mxu0 0.0
    %6969 = vmatpush1.msra.mxu0 0.0
    %6970 = vmatprep.subr.mxu0 0.0
    %6971 = vmatpush1.msra.mxu0 0.0
    %6972 = vmatprep.subr.mxu0 0.0
    %6973 = vmatpush1.msra.mxu0 0.0
    %6974 = vmatprep.subr.mxu0 0.0
    %6975 = vmatpush1.msra.mxu0 0.0
    %6976 = vmatprep.subr.mxu0 0.0
    %6977 = vmatpush1.msra.mxu0 %v6896
    %6978 = vmatprep.subr.mxu0 0.0
    %6979 = vmatpush2.msra.mxu0 0.0
    %6980 = vmatprep.subr.mxu0 0.0
    %6981 = vmatpush2.msra.mxu0 0.0
    %6982 = vmatprep.subr.mxu0 0.0
    %6983 = vmatpush2.msra.mxu0 0.0
    %6984 = vmatprep.subr.mxu0 0.0
    %6985 = vmatpush2.msra.mxu0 0.0
    %6986 = vmatprep.subr.mxu0 0.0
    %6987 = vmatpush2.msra.mxu0 0.0
    %6988 = vmatprep.subr.mxu0 0.0
    %6989 = vmatpush2.msra.mxu0 0.0
    %6990 = vmatprep.subr.mxu0 0.0
    %6991 = vmatpush2.msra.mxu0 0.0
    %6992 = vmatprep.subr.mxu0 0.0
    %6993 = vmatpush2.msra.mxu0 0.0
    %6994 = vmatprep.subr.mxu0 0.0
    %6995 = vmatpush2.msra.mxu0 0.0
    %6996 = vmatprep.subr.mxu0 0.0
    %6997 = vmatpush2.msra.mxu0 0.0
    %6998 = vmatprep.subr.mxu0 0.0
    %6999 = vmatpush2.msra.mxu0 0.0
    %7000 = vmatprep.subr.mxu0 0.0
    %7001 = vmatpush2.msra.mxu0 0.0
    %7002 = vmatprep.subr.mxu0 0.0
    %7003 = vmatpush2.msra.mxu0 0.0
    %7004 = vmatprep.subr.mxu0 0.0
    %7005 = vmatpush2.msra.mxu0 0.0
    %7006 = vmatprep.subr.mxu0 0.0
    %7007 = vmatpush2.msra.mxu0 0.0
    %7008 = vmatprep.subr.mxu0 0.0
    %7009 = vmatpush2.msra.mxu0 0.0
    %7010 = vmatprep.mubr.f32.mxu0 0.0
    %7011 = vmatmul.mubr.f32.gmra.mxu0 %v6899
    %v7012 = vpop.f32.mrf.mxu0
    %v7013 = vadd.f32 0.0, %v7012
    %v7014 = vpop.f32.mrf.mxu0
    %7015 = vmatprep.mubr.f32.mxu0 0.0
    %7016 = vmatmul.mubr.f32.gmra.mxu0 %v6902
    %v7017 = vpop.f32.mrf.mxu0
    %v7018 = vadd.f32 0.0, %v7017
    %v7019 = vpop.f32.mrf.mxu0
    %7020 = vmatprep.mubr.f32.mxu0 0.0
    %7021 = vmatmul.mubr.f32.gmra.mxu0 %v6905
    %v7022 = vpop.f32.mrf.mxu0
    %v7023 = vadd.f32 0.0, %v7022
    %v7024 = vpop.f32.mrf.mxu0
    %7025 = vmatprep.mubr.f32.mxu0 0.0
    %7026 = vmatmul.mubr.f32.gmra.mxu0 %v6908
    %v7027 = vpop.f32.mrf.mxu0
    %v7028 = vadd.f32 0.0, %v7027
    %v7029 = vpop.f32.mrf.mxu0
    %7030 = vmatprep.mubr.f32.mxu0 0.0
    %7031 = vmatmul.mubr.f32.gmra.mxu0 %v6911
    %v7032 = vpop.f32.mrf.mxu0
    %v7033 = vadd.f32 0.0, %v7032
    %v7034 = vpop.f32.mrf.mxu0
    %7035 = vmatprep.mubr.f32.mxu0 0.0
    %7036 = vmatmul.mubr.f32.gmra.mxu0 %v6914
    %v7037 = vpop.f32.mrf.mxu0
    %v7038 = vadd.f32 0.0, %v7037
    %v7039 = vpop.f32.mrf.mxu0
    %7040 = vmatprep.mubr.f32.mxu0 0.0
    %7041 = vmatmul.mubr.f32.gmra.mxu0 %v6917
    %v7042 = vpop.f32.mrf.mxu0
    %v7043 = vadd.f32 0.0, %v7042
    %v7044 = vpop.f32.mrf.mxu0
    %7045 = vmatprep.mubr.f32.mxu0 0.0
    %7046 = vmatmul.mubr.f32.gmra.mxu0 %v6920
    %v7047 = vpop.f32.mrf.mxu0
    %v7048 = vadd.f32 0.0, %v7047
    %v7049 = vpop.f32.mrf.mxu0
    %7050 = vmatprep.mubr.f32.mxu0 0.0
    %7051 = vmatmul.mubr.f32.gmra.mxu0 %v6923
    %v7052 = vpop.f32.mrf.mxu0
    %v7053 = vadd.f32 0.0, %v7052
    %v7054 = vpop.f32.mrf.mxu0
    %7055 = vmatprep.mubr.f32.mxu0 0.0
    %7056 = vmatmul.mubr.f32.gmra.mxu0 %v6926
    %v7057 = vpop.f32.mrf.mxu0
    %v7058 = vadd.f32 0.0, %v7057
    %v7059 = vpop.f32.mrf.mxu0
    %7060 = vmatprep.mubr.f32.mxu0 0.0
    %7061 = vmatmul.mubr.f32.gmra.mxu0 %v6929
    %v7062 = vpop.f32.mrf.mxu0
    %v7063 = vadd.f32 0.0, %v7062
    %v7064 = vpop.f32.mrf.mxu0
    %7065 = vmatprep.mubr.f32.mxu0 0.0
    %7066 = vmatmul.mubr.f32.gmra.mxu0 %v6932
    %v7067 = vpop.f32.mrf.mxu0
    %v7068 = vadd.f32 0.0, %v7067
    %v7069 = vpop.f32.mrf.mxu0
    %7070 = vmatprep.mubr.f32.mxu0 0.0
    %7071 = vmatmul.mubr.f32.gmra.mxu0 %v6935
    %v7072 = vpop.f32.mrf.mxu0
    %v7073 = vadd.f32 0.0, %v7072
    %v7074 = vpop.f32.mrf.mxu0
    %7075 = vmatprep.mubr.f32.mxu0 0.0
    %7076 = vmatmul.mubr.f32.gmra.mxu0 %v6938
    %v7077 = vpop.f32.mrf.mxu0
    %v7078 = vadd.f32 0.0, %v7077
    %v7079 = vpop.f32.mrf.mxu0
    %7080 = vmatprep.mubr.f32.mxu0 0.0
    %7081 = vmatmul.mubr.f32.gmra.mxu0 %v6941
    %v7082 = vpop.f32.mrf.mxu0
    %v7083 = vadd.f32 0.0, %v7082
    %v7084 = vpop.f32.mrf.mxu0
    %7085 = vmatprep.mubr.f32.mxu0 0.0
    %7086 = vmatmul.mubr.f32.gmra.mxu0 %v6944
    %v7087 = vpop.f32.mrf.mxu0
    %v7088 = vadd.f32 0.0, %v7087
    %v7089 = vpop.f32.mrf.mxu0
    %7090 = vdwg.mxu0
    %v7092 = vsel %vm202, %v6860, 0
    %v7095 = vsel %vm202, %v6861, 0
    %v7098 = vsel %vm202, %v6862, 0
    %v7101 = vsel %vm202, %v6863, 0
    %v7104 = vsel %vm202, %v6864, 0
    %v7107 = vsel %vm202, %v6865, 0
    %v7110 = vsel %vm202, %v6866, 0
    %v7113 = vsel %vm202, %v6867, 0
    %v7116 = vsel %vm202, %v6868, 0
    %v7119 = vsel %vm202, %v6869, 0
    %v7122 = vsel %vm202, %v6870, 0
    %v7125 = vsel %vm202, %v6871, 0
    %v7128 = vsel %vm202, %v6872, 0
    %v7131 = vsel %vm202, %v6873, 0
    %v7134 = vsel %vm202, %v6874, 0
    %v7137 = vsel %vm202, %v6875, 0
    %7139 = vmatprep.subr.mxu0 0.0
    %7140 = vmatpush1.msra.mxu0 0.0
    %7141 = vmatprep.subr.mxu0 0.0
    %7142 = vmatpush1.msra.mxu0 0.0
    %7143 = vmatprep.subr.mxu0 0.0
    %7144 = vmatpush1.msra.mxu0 0.0
    %7145 = vmatprep.subr.mxu0 0.0
    %7146 = vmatpush1.msra.mxu0 0.0
    %7147 = vmatprep.subr.mxu0 0.0
    %7148 = vmatpush1.msra.mxu0 0.0
    %7149 = vmatprep.subr.mxu0 0.0
    %7150 = vmatpush1.msra.mxu0 0.0
    %7151 = vmatprep.subr.mxu0 0.0
    %7152 = vmatpush1.msra.mxu0 0.0
    %7153 = vmatprep.subr.mxu0 0.0
    %7154 = vmatpush1.msra.mxu0 0.0
    %7155 = vmatprep.subr.mxu0 0.0
    %7156 = vmatpush1.msra.mxu0 0.0
    %7157 = vmatprep.subr.mxu0 0.0
    %7158 = vmatpush1.msra.mxu0 0.0
    %7159 = vmatprep.subr.mxu0 0.0
    %7160 = vmatpush1.msra.mxu0 0.0
    %7161 = vmatprep.subr.mxu0 0.0
    %7162 = vmatpush1.msra.mxu0 0.0
    %7163 = vmatprep.subr.mxu0 0.0
    %7164 = vmatpush1.msra.mxu0 %v6895
    %7165 = vmatprep.subr.mxu0 0.0
    %7166 = vmatpush1.msra.mxu0 %v6894
    %7167 = vmatprep.subr.mxu0 0.0
    %7168 = vmatpush1.msra.mxu0 %v6893
    %7169 = vmatprep.subr.mxu0 0.0
    %7170 = vmatpush1.msra.mxu0 %v6892
    %7171 = vmatprep.subr.mxu0 0.0
    %7172 = vmatpush2.msra.mxu0 0.0
    %7173 = vmatprep.subr.mxu0 0.0
    %7174 = vmatpush2.msra.mxu0 0.0
    %7175 = vmatprep.subr.mxu0 0.0
    %7176 = vmatpush2.msra.mxu0 0.0
    %7177 = vmatprep.subr.mxu0 0.0
    %7178 = vmatpush2.msra.mxu0 0.0
    %7179 = vmatprep.subr.mxu0 0.0
    %7180 = vmatpush2.msra.mxu0 0.0
    %7181 = vmatprep.subr.mxu0 0.0
    %7182 = vmatpush2.msra.mxu0 0.0
    %7183 = vmatprep.subr.mxu0 0.0
    %7184 = vmatpush2.msra.mxu0 0.0
    %7185 = vmatprep.subr.mxu0 0.0
    %7186 = vmatpush2.msra.mxu0 0.0
    %7187 = vmatprep.subr.mxu0 0.0
    %7188 = vmatpush2.msra.mxu0 0.0
    %7189 = vmatprep.subr.mxu0 0.0
    %7190 = vmatpush2.msra.mxu0 0.0
    %7191 = vmatprep.subr.mxu0 0.0
    %7192 = vmatpush2.msra.mxu0 0.0
    %7193 = vmatprep.subr.mxu0 0.0
    %7194 = vmatpush2.msra.mxu0 0.0
    %7195 = vmatprep.subr.mxu0 0.0
    %7196 = vmatpush2.msra.mxu0 0.0
    %7197 = vmatprep.subr.mxu0 0.0
    %7198 = vmatpush2.msra.mxu0 0.0
    %7199 = vmatprep.subr.mxu0 0.0
    %7200 = vmatpush2.msra.mxu0 0.0
    %7201 = vmatprep.subr.mxu0 0.0
    %7202 = vmatpush2.msra.mxu0 0.0
    %7203 = vmatprep.mubr.f32.mxu0 0.0
    %7204 = vmatmul.mubr.f32.gmra.mxu0 %v7092
    %v7205 = vpop.f32.mrf.mxu0
    %v7206 = vadd.f32 %v7013, %v7205
    %v7207 = vpop.f32.mrf.mxu0
    %7208 = vmatprep.mubr.f32.mxu0 0.0
    %7209 = vmatmul.mubr.f32.gmra.mxu0 %v7095
    %v7210 = vpop.f32.mrf.mxu0
    %v7211 = vadd.f32 %v7018, %v7210
    %v7212 = vpop.f32.mrf.mxu0
    %7213 = vmatprep.mubr.f32.mxu0 0.0
    %7214 = vmatmul.mubr.f32.gmra.mxu0 %v7098
    %v7215 = vpop.f32.mrf.mxu0
    %v7216 = vadd.f32 %v7023, %v7215
    %v7217 = vpop.f32.mrf.mxu0
    %7218 = vmatprep.mubr.f32.mxu0 0.0
    %7219 = vmatmul.mubr.f32.gmra.mxu0 %v7101
    %v7220 = vpop.f32.mrf.mxu0
    %v7221 = vadd.f32 %v7028, %v7220
    %v7222 = vpop.f32.mrf.mxu0
    %7223 = vmatprep.mubr.f32.mxu0 0.0
    %7224 = vmatmul.mubr.f32.gmra.mxu0 %v7104
    %v7225 = vpop.f32.mrf.mxu0
    %v7226 = vadd.f32 %v7033, %v7225
    %v7227 = vpop.f32.mrf.mxu0
    %7228 = vmatprep.mubr.f32.mxu0 0.0
    %7229 = vmatmul.mubr.f32.gmra.mxu0 %v7107
    %v7230 = vpop.f32.mrf.mxu0
    %v7231 = vadd.f32 %v7038, %v7230
    %v7232 = vpop.f32.mrf.mxu0
    %7233 = vmatprep.mubr.f32.mxu0 0.0
    %7234 = vmatmul.mubr.f32.gmra.mxu0 %v7110
    %v7235 = vpop.f32.mrf.mxu0
    %v7236 = vadd.f32 %v7043, %v7235
    %v7237 = vpop.f32.mrf.mxu0
    %7238 = vmatprep.mubr.f32.mxu0 0.0
    %7239 = vmatmul.mubr.f32.gmra.mxu0 %v7113
    %v7240 = vpop.f32.mrf.mxu0
    %v7241 = vadd.f32 %v7048, %v7240
    %v7242 = vpop.f32.mrf.mxu0
    %7243 = vmatprep.mubr.f32.mxu0 0.0
    %7244 = vmatmul.mubr.f32.gmra.mxu0 %v7116
    %v7245 = vpop.f32.mrf.mxu0
    %v7246 = vadd.f32 %v7053, %v7245
    %v7247 = vpop.f32.mrf.mxu0
    %7248 = vmatprep.mubr.f32.mxu0 0.0
    %7249 = vmatmul.mubr.f32.gmra.mxu0 %v7119
    %v7250 = vpop.f32.mrf.mxu0
    %v7251 = vadd.f32 %v7058, %v7250
    %v7252 = vpop.f32.mrf.mxu0
    %7253 = vmatprep.mubr.f32.mxu0 0.0
    %7254 = vmatmul.mubr.f32.gmra.mxu0 %v7122
    %v7255 = vpop.f32.mrf.mxu0
    %v7256 = vadd.f32 %v7063, %v7255
    %v7257 = vpop.f32.mrf.mxu0
    %7258 = vmatprep.mubr.f32.mxu0 0.0
    %7259 = vmatmul.mubr.f32.gmra.mxu0 %v7125
    %v7260 = vpop.f32.mrf.mxu0
    %v7261 = vadd.f32 %v7068, %v7260
    %v7262 = vpop.f32.mrf.mxu0
    %7263 = vmatprep.mubr.f32.mxu0 0.0
    %7264 = vmatmul.mubr.f32.gmra.mxu0 %v7128
    %v7265 = vpop.f32.mrf.mxu0
    %v7266 = vadd.f32 %v7073, %v7265
    %v7267 = vpop.f32.mrf.mxu0
    %7268 = vmatprep.mubr.f32.mxu0 0.0
    %7269 = vmatmul.mubr.f32.gmra.mxu0 %v7131
    %v7270 = vpop.f32.mrf.mxu0
    %v7271 = vadd.f32 %v7078, %v7270
    %v7272 = vpop.f32.mrf.mxu0
    %7273 = vmatprep.mubr.f32.mxu0 0.0
    %7274 = vmatmul.mubr.f32.gmra.mxu0 %v7134
    %v7275 = vpop.f32.mrf.mxu0
    %v7276 = vadd.f32 %v7083, %v7275
    %v7277 = vpop.f32.mrf.mxu0
    %7278 = vmatprep.mubr.f32.mxu0 0.0
    %7279 = vmatmul.mubr.f32.gmra.mxu0 %v7137
    %v7280 = vpop.f32.mrf.mxu0
    %v7281 = vadd.f32 %v7088, %v7280
    %v7282 = vpop.f32.mrf.mxu0
    %7283 = vdwg.mxu0
    %v7284 = vlaneseq
    %v7285 = vshrl.u32 %v7284, 7
    %v7286 = vsub.s32 3, %v7285
    %v7287 = vrot.slane %v201, %v7286
    %v7288 = vadd.f32 %v7206, %v7287
    %v7289 = vadd.f32 %v7211, %v7287
    %v7290 = vadd.f32 %v7216, %v7287
    %v7291 = vadd.f32 %v7221, %v7287
    %v7292 = vadd.f32 %v7226, %v7287
    %v7293 = vadd.f32 %v7231, %v7287
    %v7294 = vadd.f32 %v7236, %v7287
    %v7295 = vadd.f32 %v7241, %v7287
    %v7296 = vadd.f32 %v7246, %v7287
    %v7297 = vadd.f32 %v7251, %v7287
    %v7298 = vadd.f32 %v7256, %v7287
    %v7299 = vadd.f32 %v7261, %v7287
    %v7300 = vadd.f32 %v7266, %v7287
    %v7301 = vadd.f32 %v7271, %v7287
    %v7302 = vadd.f32 %v7276, %v7287
    %v7303 = vadd.f32 %v7281, %v7287
    %v7304 = vtanh.pop %v7288
    %v7305 = vtanh.pop %v7289
    %v7306 = vtanh.pop %v7290
    %v7307 = vtanh.pop %v7291
    %v7308 = vtanh.pop %v7292
    %v7309 = vtanh.pop %v7293
    %v7310 = vtanh.pop %v7294
    %v7311 = vtanh.pop %v7295
    %v7312 = vtanh.pop %v7296
    %v7313 = vtanh.pop %v7297
    %v7314 = vtanh.pop %v7298
    %v7315 = vtanh.pop %v7299
    %v7316 = vtanh.pop %v7300
    %v7317 = vtanh.pop %v7301
    %v7318 = vtanh.pop %v7302
    %v7319 = vtanh.pop %v7303
    %v7320 = vld [vmem:[%s10] sm:$0x1]
    %v7322 = vlaneseq
    %v7323 = vshrl.u32 %v7322, 7
    %v7324 = vsub.s32 0, %v7323
    %v7325 = vrot.slane %v7320, %v7324
    %v7327 = vmul.f32 %v7304, %v7325
    %v7328 = vmul.f32 %v7305, %v7325
    %v7329 = vmul.f32 %v7306, %v7325
    %v7330 = vmul.f32 %v7307, %v7325
    %v7331 = vmul.f32 %v7308, %v7325
    %v7332 = vmul.f32 %v7309, %v7325
    %v7333 = vmul.f32 %v7310, %v7325
    %v7334 = vmul.f32 %v7311, %v7325
    %v7335 = vmul.f32 %v7312, %v7325
    %v7336 = vmul.f32 %v7313, %v7325
    %v7337 = vmul.f32 %v7314, %v7325
    %v7338 = vmul.f32 %v7315, %v7325
    %v7339 = vmul.f32 %v7316, %v7325
    %v7340 = vmul.f32 %v7317, %v7325
    %v7341 = vmul.f32 %v7318, %v7325
    %v7342 = vmul.f32 %v7319, %v7325
    %v7343 = vsel %vm202, %v7327, 0.0
    %7344 = vadd.xlane.f32.xlu0 %v7343
    %v7345 = vpop.xlane.xlu0 %7344
    %v7346 = vsel %vm202, %v7328, 0.0
    %7347 = vadd.xlane.f32.xlu0 %v7346
    %v7348 = vpop.xlane.xlu0 %7347
    %v7349 = vsel %vm202, %v7329, 0.0
    %7350 = vadd.xlane.f32.xlu0 %v7349
    %v7351 = vpop.xlane.xlu0 %7350
    %v7352 = vsel %vm202, %v7330, 0.0
    %7353 = vadd.xlane.f32.xlu0 %v7352
    %v7354 = vpop.xlane.xlu0 %7353
    %v7355 = vsel %vm202, %v7331, 0.0
    %7356 = vadd.xlane.f32.xlu0 %v7355
    %v7357 = vpop.xlane.xlu0 %7356
    %v7358 = vsel %vm202, %v7332, 0.0
    %7359 = vadd.xlane.f32.xlu0 %v7358
    %v7360 = vpop.xlane.xlu0 %7359
    %v7361 = vsel %vm202, %v7333, 0.0
    %7362 = vadd.xlane.f32.xlu0 %v7361
    %v7363 = vpop.xlane.xlu0 %7362
    %v7364 = vsel %vm202, %v7334, 0.0
    %7365 = vadd.xlane.f32.xlu0 %v7364
    %v7366 = vpop.xlane.xlu0 %7365
    %v7367 = vsel %vm202, %v7335, 0.0
    %7368 = vadd.xlane.f32.xlu0 %v7367
    %v7369 = vpop.xlane.xlu0 %7368
    %v7370 = vsel %vm202, %v7336, 0.0
    %7371 = vadd.xlane.f32.xlu0 %v7370
    %v7372 = vpop.xlane.xlu0 %7371
    %v7373 = vsel %vm202, %v7337, 0.0
    %7374 = vadd.xlane.f32.xlu0 %v7373
    %v7375 = vpop.xlane.xlu0 %7374
    %v7376 = vsel %vm202, %v7338, 0.0
    %7377 = vadd.xlane.f32.xlu0 %v7376
    %v7378 = vpop.xlane.xlu0 %7377
    %v7379 = vsel %vm202, %v7339, 0.0
    %7380 = vadd.xlane.f32.xlu0 %v7379
    %v7381 = vpop.xlane.xlu0 %7380
    %v7382 = vsel %vm202, %v7340, 0.0
    %7383 = vadd.xlane.f32.xlu0 %v7382
    %v7384 = vpop.xlane.xlu0 %7383
    %v7385 = vsel %vm202, %v7341, 0.0
    %7386 = vadd.xlane.f32.xlu0 %v7385
    %v7387 = vpop.xlane.xlu0 %7386
    %v7388 = vsel %vm202, %v7342, 0.0
    %7389 = vadd.xlane.f32.xlu0 %v7388
    %v7390 = vpop.xlane.xlu0 %7389
    %v7407 = vlaneseq
    %v7408 = vand.u32 %v7407, 127
    %v7409 = vlaneseq
    %v7410 = vshrl.u32 %v7409, 7
    %v7411 = vsub.s32 %v7408, %v7410
    %v7412 = vrot.slane %v7345, %v7411
    %v7413 = vadd.s32 %v7408, 4294967288
    %v7414 = vlaneseq
    %v7415 = vshrl.u32 %v7414, 7
    %v7416 = vsub.s32 %v7413, %v7415
    %v7417 = vrot.slane %v7348, %v7416
    %vm7418 = vcmask 130112
    %v7419 = vsel %vm7418, %v7417, %v7412
    %v7420 = vadd.s32 %v7408, 4294967280
    %v7421 = vlaneseq
    %v7422 = vshrl.u32 %v7421, 7
    %v7423 = vsub.s32 %v7420, %v7422
    %v7424 = vrot.slane %v7351, %v7423
    %vm7425 = vcmask 195712
    %v7426 = vsel %vm7425, %v7424, %v7419
    %v7427 = vadd.s32 %v7408, 4294967272
    %v7428 = vlaneseq
    %v7429 = vshrl.u32 %v7428, 7
    %v7430 = vsub.s32 %v7427, %v7429
    %v7431 = vrot.slane %v7354, %v7430
    %vm7432 = vcmask 261312
    %v7433 = vsel %vm7432, %v7431, %v7426
    %v7434 = vadd.s32 %v7408, 4294967264
    %v7435 = vlaneseq
    %v7436 = vshrl.u32 %v7435, 7
    %v7437 = vsub.s32 %v7434, %v7436
    %v7438 = vrot.slane %v7357, %v7437
    %vm7439 = vcmask 326912
    %v7440 = vsel %vm7439, %v7438, %v7433
    %v7441 = vadd.s32 %v7408, 4294967256
    %v7442 = vlaneseq
    %v7443 = vshrl.u32 %v7442, 7
    %v7444 = vsub.s32 %v7441, %v7443
    %v7445 = vrot.slane %v7360, %v7444
    %vm7446 = vcmask 392512
    %v7447 = vsel %vm7446, %v7445, %v7440
    %v7448 = vadd.s32 %v7408, 4294967248
    %v7449 = vlaneseq
    %v7450 = vshrl.u32 %v7449, 7
    %v7451 = vsub.s32 %v7448, %v7450
    %v7452 = vrot.slane %v7363, %v7451
    %vm7453 = vcmask 458112
    %v7454 = vsel %vm7453, %v7452, %v7447
    %v7455 = vadd.s32 %v7408, 4294967240
    %v7456 = vlaneseq
    %v7457 = vshrl.u32 %v7456, 7
    %v7458 = vsub.s32 %v7455, %v7457
    %v7459 = vrot.slane %v7366, %v7458
    %vm7460 = vcmask 523712
    %v7461 = vsel %vm7460, %v7459, %v7454
    %v7462 = vadd.s32 %v7408, 4294967232
    %v7463 = vlaneseq
    %v7464 = vshrl.u32 %v7463, 7
    %v7465 = vsub.s32 %v7462, %v7464
    %v7466 = vrot.slane %v7369, %v7465
    %vm7467 = vcmask 589312
    %v7468 = vsel %vm7467, %v7466, %v7461
    %v7469 = vadd.s32 %v7408, 4294967224
    %v7470 = vlaneseq
    %v7471 = vshrl.u32 %v7470, 7
    %v7472 = vsub.s32 %v7469, %v7471
    %v7473 = vrot.slane %v7372, %v7472
    %vm7474 = vcmask 654912
    %v7475 = vsel %vm7474, %v7473, %v7468
    %v7476 = vadd.s32 %v7408, 4294967216
    %v7477 = vlaneseq
    %v7478 = vshrl.u32 %v7477, 7
    %v7479 = vsub.s32 %v7476, %v7478
    %v7480 = vrot.slane %v7375, %v7479
    %vm7481 = vcmask 720512
    %v7482 = vsel %vm7481, %v7480, %v7475
    %v7483 = vadd.s32 %v7408, 4294967208
    %v7484 = vlaneseq
    %v7485 = vshrl.u32 %v7484, 7
    %v7486 = vsub.s32 %v7483, %v7485
    %v7487 = vrot.slane %v7378, %v7486
    %vm7488 = vcmask 786112
    %v7489 = vsel %vm7488, %v7487, %v7482
    %v7490 = vadd.s32 %v7408, 4294967200
    %v7491 = vlaneseq
    %v7492 = vshrl.u32 %v7491, 7
    %v7493 = vsub.s32 %v7490, %v7492
    %v7494 = vrot.slane %v7381, %v7493
    %vm7495 = vcmask 851712
    %v7496 = vsel %vm7495, %v7494, %v7489
    %v7497 = vadd.s32 %v7408, 4294967192
    %v7498 = vlaneseq
    %v7499 = vshrl.u32 %v7498, 7
    %v7500 = vsub.s32 %v7497, %v7499
    %v7501 = vrot.slane %v7384, %v7500
    %vm7502 = vcmask 917312
    %v7503 = vsel %vm7502, %v7501, %v7496
    %v7504 = vadd.s32 %v7408, 4294967184
    %v7505 = vlaneseq
    %v7506 = vshrl.u32 %v7505, 7
    %v7507 = vsub.s32 %v7504, %v7506
    %v7508 = vrot.slane %v7387, %v7507
    %vm7509 = vcmask 982912
    %v7510 = vsel %vm7509, %v7508, %v7503
    %v7511 = vadd.s32 %v7408, 4294967176
    %v7512 = vlaneseq
    %v7513 = vshrl.u32 %v7512, 7
    %v7514 = vsub.s32 %v7511, %v7513
    %v7515 = vrot.slane %v7390, %v7514
    %vm7516 = vcmask 1048512
    %v7517 = vsel %vm7516, %v7515, %v7510
    %7519 = vst [vmem:[#allocation5] sm:$0x1] %v7517
    // Predicated region
    $region50: #{tpu_custom_call.1} parent=1 // pred_check
      _
    $region51: #{tpu_custom_call.1} parent=1 // pred_check_branch
      %7521 = sbr.rel (0) target = $region53
    $region52: #{tpu_custom_call.1} parent=1 // pred_region
      %s7523 = ssub.s32 16, 16
      %7524 = vsyncadd [#allocation4], %s7523
      %s7526 = sshll.u32 [#allocation5], 4
      %s7527 = int_to_ptr.vmem [resolvable:$true] %s7526
      %7529 = dma.vmem_to_hbm [thread:$0]  %s7527, 16, %s11, [#allocation4]
    $region53: #{tpu_custom_call.1} parent=1 // pred_fallthru
      _
    // Predicated region
    $region54: #{tpu_custom_call.1} parent=1 // pred_check
      _
    $region55: #{tpu_custom_call.1} parent=1 // pred_check_branch
      %7531 = sbr.rel (0) target = $region57
    $region56: #{tpu_custom_call.1} parent=1 // pred_region
      %7532 = dma.done [#allocation4], 16
    $region57: #{tpu_custom_call.1} parent=1 // pred_fallthru
      _
    %7533 = vsyncpa [#allocation3], 1
    %7534 = vsyncpa [#allocation4], 1

</llo_original>
